<compile_context>
chip_gen: v5e
topology: v5e:2x2
jax: 0.10.0
libtpu: 0.0.40
codegen_flags: <defaults>
</compile_context>

<pallas_src>
import functools

import jax
import jax.numpy as jnp
from jax.experimental import pallas as pl
from jax.experimental.pallas import tpu as pltpu


# ------------------------------ configuration --------------------------------
BEV_CH = 128                       # lane-dense channel width
NUM_CLASS = 3
NUM_ANCHORS = 2
CLS_CH = NUM_ANCHORS * NUM_CLASS   # 6
BOX_CH = NUM_ANCHORS * 7           # 14
DIR_CH = NUM_ANCHORS * 2           # 4
HEAD_CH = 32                       # 24 real head channels padded to 32 lanes


# ----------------------------- VFE kernel ------------------------------------
def _vfe_kernel(pts_ref, mask_ref, w_ref, b_ref, out_ref, *, n_points):
    # pts_ref : [P, tv, F] bf16   mask_ref: [P, tv, 1] f32
    # w_ref   : [F, C]  bf16      b_ref:    [1, C]  f32
    # out_ref : [tv, C] bf16      (max over valid points per pillar)
    def point_feat(p):
        f = jnp.dot(pts_ref[p], w_ref[...], preferred_element_type=jnp.float32)
        # ReLU first, then mask: every surviving value is >= 0, so the masked-out
        # (padded) points contribute exactly 0, which is a valid max identity.
        # NOTE: this invariant (mask applied after a non-negative activation) is
        # required for empty/padded pillars to come out as exactly zero.
        return jnp.maximum(f + b_ref[...], 0.0) * mask_ref[p]

    feats = [point_feat(p) for p in range(n_points)]
    # pairwise tree max: log2(P) dependency depth instead of a P-1 chain
    while len(feats) > 1:
        nxt = [jnp.maximum(feats[k], feats[k + 1])
               for k in range(0, len(feats) - 1, 2)]
        if len(feats) % 2:
            nxt.append(feats[-1])
        feats = nxt
    out_ref[...] = feats[0].astype(out_ref.dtype)


def vfe_forward(points_dec, point_mask, w, b, *, voxel_tile=64):
    # points_dec: [V, P, F] f32 decorated point features, point_mask: [V, P]
    # voxel_tile: raise to 256+ at realistic pillar counts (DMA amortization).
    V, P, F = points_dec.shape
    C = w.shape[1]
    tv = min(voxel_tile, V)
    while V % tv:
        tv //= 2
    assert tv >= 8 and V % tv == 0 and tv % 8 == 0

    pts = jnp.transpose(points_dec, (1, 0, 2)).astype(jnp.bfloat16)        # [P,V,F]
    msk = jnp.transpose(point_mask, (1, 0))[..., None].astype(jnp.float32)  # [P,V,1]

    kernel = functools.partial(_vfe_kernel, n_points=P)
    return pl.pallas_call(
        kernel,
        out_shape=jax.ShapeDtypeStruct((V, C), jnp.bfloat16),
        grid=(V // tv,),
        in_specs=[
            pl.BlockSpec((P, tv, F), lambda i: (0, i, 0)),
            pl.BlockSpec((P, tv, 1), lambda i: (0, i, 0)),
            pl.BlockSpec((F, C), lambda i: (0, 0)),
            pl.BlockSpec((1, C), lambda i: (0, 0)),
        ],
        out_specs=pl.BlockSpec((tv, C), lambda i: (i, 0)),
        compiler_params=pltpu.CompilerParams(
            dimension_semantics=("parallel",),
            vmem_limit_bytes=48 * 1024 * 1024),
    )(pts, msk, w.astype(jnp.bfloat16), b.astype(jnp.float32))


# ------------------- fused, row-tiled BEV backbone + head kernel --------------
def _backbone_head_kernel(top_ref, main_ref, bot_ref, maskl_ref, maskr_ref,
                          w1_ref, b1_ref, w2_ref, b2_ref, wh_ref, bh_ref,
                          sp_ref, head_ref, *, tile_rows, width, n_row_tiles):
    TR, W = tile_rows, width
    N = (TR + 4) * W                 # flattened window rows (2-row halo each side)
    i = pl.program_id(1)

    # ---- assemble the per-tile window: [top halo (2 rows) | body | bottom halo]
    # Halo blocks that fall outside the image are gated to zero (= the conv's
    # zero padding). The flat layout keeps real position (r, c) of the window at
    # flat index r*W + c ("layout A").
    gate_t = jnp.where(i > 0, 1.0, 0.0).astype(jnp.bfloat16)
    gate_b = jnp.where(i < n_row_tiles - 1, 1.0, 0.0).astype(jnp.bfloat16)
    src = jnp.concatenate(
        [top_ref[0] * gate_t, main_ref[0], bot_ref[0] * gate_b], axis=0
    ).astype(jnp.float32)                                       # [N, C], layout A

    def conv3x3(x_f32, w_ref, b_ref):
        # x_f32: [n, C] f32, layout A.  Returns relu(conv3x3 + b) as f32
        # [n - 2W, C] in "layout B": row q holds the result centred at window
        # position (q // W + 1, q % W).
        # kw taps: +/-1 sublane rolls (f32) with column-validity masks, lane-
        # concatenated into a single K=3C operand (one bf16 cast per conv).
        # kh taps: aligned static row slices of that operand (no rolls).
        n = x_f32.shape[0]
        m = n - 2 * W
        ml = maskl_ref[0:n, :]
        mr = maskr_ref[0:n, :]
        xl = pltpu.roll(x_f32, 1, axis=0) * ml        # tap column c-1 (kw = 0)
        xr = pltpu.roll(x_f32, n - 1, axis=0) * mr    # tap column c+1 (kw = 2)
        z = jnp.concatenate([xl, x_f32, xr], axis=-1).astype(jnp.bfloat16)  # [n,3C]
        # Wrap-around safety: for every row/lane that survives the masks the
        # source index q + kh*W + (kw-1) stays < n (guaranteed by the 2-row halo
        # and the column masks), so the two rolls never feed wrapped data into a
        # kept output.
        acc = jnp.dot(z[0:m], w_ref[0], preferred_element_type=jnp.float32)
        acc = acc + jnp.dot(z[W:W + m], w_ref[1],
                            preferred_element_type=jnp.float32)
        acc = acc + jnp.dot(z[2 * W:2 * W + m], w_ref[2],
                            preferred_element_type=jnp.float32)
        return jnp.maximum(acc + b_ref[...], 0.0)

    h1 = conv3x3(src, w1_ref, b1_ref)                 # [(TR+2)*W, C], layout B
    # Zero conv1 values that sit on rows outside the image so conv2 sees correct
    # zero padding (only the first/last row tiles are affected). Built in-kernel
    # from iota + program_id -- no mask DMA.
    m1 = h1.shape[0]
    q = jax.lax.broadcasted_iota(jnp.int32, (m1, 1), 0)
    keep_top = jnp.logical_or(i > 0, q >= W)
    keep_bot = jnp.logical_or(i < n_row_tiles - 1, q < m1 - W)
    h1 = h1 * jnp.logical_and(keep_top, keep_bot).astype(jnp.float32)
    # layout B -> layout A for the second conv (prepend one window row; that row
    # is only ever read through column-masked taps, so zeros are fine there).
    a2 = jnp.concatenate([jnp.zeros((W, h1.shape[1]), jnp.float32), h1], axis=0)
    h2 = conv3x3(a2, w2_ref, b2_ref)                  # [(TR+1)*W, C], layout B

    # the tile's real outputs are the contiguous flat rows [W, W + TR*W)
    h2v = h2[W:W + TR * W, :].astype(jnp.bfloat16)
    sp_ref[0] = h2v                                    # bf16 writeback
    head_ref[0] = (jnp.dot(h2v, wh_ref[...], preferred_element_type=jnp.float32)
                   + bh_ref[...])                      # 32-lane head writeback


def dense_backbone_head(bev, w1, b1, w2, b2, w_head, b_head, *, row_tile=None):
    # bev: [B, H, W, C] bf16. row_tile guidance: 16-32 on v7x (64 MiB VMEM),
    # 64-128 on v5e/v6e (raise vmem_limit_bytes to ~96 MiB there).
    B, H, W, C = bev.shape
    if row_tile is None:
        row_tile = next(t for t in (64, 32, 16, 8, 4, 2) if H % t == 0)
    TR = row_tile
    assert H % TR == 0 and TR % 2 == 0 and H % 2 == 0
    assert W % 8 == 0 and C % 128 == 0 and W >= 2
    n_tiles = H // TR
    N = (TR + 4) * W
    head_ch = w_head.shape[-1]

    bev_flat = bev.reshape(B, H * W, C)               # free metadata reshape

    # tiny i-independent column-validity masks for the kw=0 / kw=2 taps
    col = jnp.arange(N) % W
    mask_l = (col >= 1).astype(jnp.float32)[:, None]
    mask_r = (col <= W - 2).astype(jnp.float32)[:, None]

    kernel = functools.partial(_backbone_head_kernel, tile_rows=TR, width=W,
                               n_row_tiles=n_tiles)
    sp_flat, head_flat = pl.pallas_call(
        kernel,
        out_shape=(
            jax.ShapeDtypeStruct((B, H * W, C), jnp.bfloat16),
            jax.ShapeDtypeStruct((B, H * W, head_ch), jnp.float32),
        ),
        grid=(B, n_tiles),
        in_specs=[
            # top halo: the 2 rows just above the tile (clamped + gated at i==0)
            pl.BlockSpec((1, 2 * W, C),
                         lambda b, i: (b, jnp.maximum(i * (TR // 2) - 1, 0), 0)),
            # tile body
            pl.BlockSpec((1, TR * W, C), lambda b, i: (b, i, 0)),
            # bottom halo: the 2 rows just below the tile (clamped + gated at end)
            pl.BlockSpec((1, 2 * W, C),
                         lambda b, i: (b, jnp.minimum((i + 1) * (TR // 2),
                                                      H // 2 - 1), 0)),
            pl.BlockSpec((N, 1), lambda b, i: (0, 0)),
            pl.BlockSpec((N, 1), lambda b, i: (0, 0)),
            # weights: constant block index -> resident across the whole grid
            pl.BlockSpec((3, 3 * C, C), lambda b, i: (0, 0, 0)),
            pl.BlockSpec((1, C), lambda b, i: (0, 0)),
            pl.BlockSpec((3, 3 * C, C), lambda b, i: (0, 0, 0)),
            pl.BlockSpec((1, C), lambda b, i: (0, 0)),
            pl.BlockSpec((C, head_ch), lambda b, i: (0, 0)),
            pl.BlockSpec((1, head_ch), lambda b, i: (0, 0)),
        ],
        out_specs=(
            pl.BlockSpec((1, TR * W, C), lambda b, i: (b, i, 0)),
            pl.BlockSpec((1, TR * W, head_ch), lambda b, i: (b, i, 0)),
        ),
        compiler_params=pltpu.CompilerParams(
            dimension_semantics=("parallel", "parallel"),
            vmem_limit_bytes=48 * 1024 * 1024),
    )(bev_flat, bev_flat, bev_flat, mask_l, mask_r,
      w1.reshape(3, 3 * C, C).astype(jnp.bfloat16), b1.astype(jnp.float32),
      w2.reshape(3, 3 * C, C).astype(jnp.bfloat16), b2.astype(jnp.float32),
      w_head.astype(jnp.bfloat16), b_head.astype(jnp.float32))

    sp = sp_flat.reshape(B, H, W, C)
    head = head_flat.reshape(B, H, W, head_ch)
    return sp, head


# --------------------------- glue (plain JAX, wrapper) ------------------------
def decorate_points(voxel_points, voxel_mask):
    # PillarFeatureNet-style decoration: raw (x, y, z, r) + offsets from the
    # per-pillar cluster mean + point distance -> widens the VFE K to 8.
    xyz = voxel_points[..., :3]
    m = voxel_mask[..., None]
    n = jnp.clip(voxel_mask.sum(axis=1, keepdims=True), 1.0, None)[..., None]
    mean_xyz = (xyz * m).sum(axis=1, keepdims=True) / n
    f_cluster = xyz - mean_xyz
    dist = jnp.linalg.norm(xyz, axis=-1, keepdims=True)
    return jnp.concatenate([voxel_points, f_cluster, dist], axis=-1)   # [V, P, 8]


def scatter_to_bev(pillar_feats, coords, batch_size, H, W):
    # coords: [V, 3] = (batch_idx, y, x). Pillar features are >= 0 (ReLU) and
    # invalid/empty pillars are explicitly zeroed by the caller, so a max-
    # scatter onto zeros equals set() for unique coords and is harmless for
    # padding pillars that carry (0, 0, 0) coords.
    C = pillar_feats.shape[-1]
    bev = jnp.zeros((batch_size, H, W, C), pillar_feats.dtype)
    b, y, x = coords[:, 0], coords[:, 1], coords[:, 2]
    return bev.at[b, y, x].max(pillar_feats)


# ------------------------------- full forward ---------------------------------
def detector3d_forward(params, voxel_points, voxel_mask, voxel_coords,
                       batch_size, grid_hw, row_tile=None):
    H, W = grid_hw
    # 1) VFE (decorate -> linear -> ReLU -> masked max per pillar), bf16 output
    points_dec = decorate_points(voxel_points, voxel_mask)
    pillar_feats = vfe_forward(points_dec, voxel_mask,
                               params["vfe_w"], params["vfe_b"])
    # explicit validity guard for padding pillars before the BEV scatter
    pillar_valid = (voxel_mask.max(axis=1) > 0).astype(pillar_feats.dtype)[:, None]
    pillar_feats = pillar_feats * pillar_valid
    # 2) scatter to dense BEV (stand-in for the sparse 3D backbone input)
    bev = scatter_to_bev(pillar_feats, voxel_coords, batch_size, H, W)
    # 3) fused, row-tiled dense backbone + anchor head (single pallas_call)
    w_head = jnp.concatenate([params["cls_w"], params["box_w"], params["dir_w"]],
                             axis=1)
    b_head = jnp.concatenate([params["cls_b"], params["box_b"], params["dir_b"]],
                             axis=1)
    pad = HEAD_CH - w_head.shape[1]
    w_head = jnp.pad(w_head, ((0, 0), (0, pad)))
    b_head = jnp.pad(b_head, ((0, 0), (0, pad)))
    sp2d, head = dense_backbone_head(bev, params["conv1_w"], params["conv1_b"],
                                     params["conv2_w"], params["conv2_b"],
                                     w_head, b_head, row_tile=row_tile)
    cls_preds = head[..., :CLS_CH]
    box_preds = head[..., CLS_CH:CLS_CH + BOX_CH]
    dir_preds = head[..., CLS_CH + BOX_CH:CLS_CH + BOX_CH + DIR_CH]
    return {
        "pillar_features": pillar_feats,
        "spatial_features_2d": sp2d,
        "cls_preds": cls_preds,
        "box_preds": box_preds,
        "dir_cls_preds": dir_preds,
    }


def init_params(key, *, point_feat=8, bev_ch=BEV_CH):
    ks = jax.random.split(key, 12)
    w = lambda k, s: 0.1 * jax.random.normal(k, s, jnp.float32)
    return {
        "vfe_w": w(ks[0], (point_feat, bev_ch)), "vfe_b": w(ks[1], (1, bev_ch)),
        "conv1_w": w(ks[2], (3, 3, bev_ch, bev_ch)), "conv1_b": w(ks[3], (1, bev_ch)),
        "conv2_w": w(ks[4], (3, 3, bev_ch, bev_ch)), "conv2_b": w(ks[5], (1, bev_ch)),
        "cls_w": w(ks[6], (bev_ch, CLS_CH)), "cls_b": w(ks[7], (1, CLS_CH)),
        "box_w": w(ks[8], (bev_ch, BOX_CH)), "box_b": w(ks[9], (1, BOX_CH)),
        "dir_w": w(ks[10], (bev_ch, DIR_CH)), "dir_b": w(ks[11], (1, DIR_CH)),
    }


# ------------------------ pure-JAX reference (for checking) -------------------
def reference_forward(params, voxel_points, voxel_mask, voxel_coords,
                      batch_size, grid_hw):
    H, W = grid_hw
    bf = jnp.bfloat16
    points_dec = decorate_points(voxel_points, voxel_mask)
    feats = jnp.einsum("vpf,fc->vpc", points_dec.astype(bf),
                       params["vfe_w"].astype(bf),
                       preferred_element_type=jnp.float32)
    feats = jnp.maximum(feats + params["vfe_b"][None], 0.0) * voxel_mask[..., None]
    pillar_feats = feats.max(axis=1).astype(bf)
    pillar_feats = pillar_feats * (voxel_mask.max(axis=1) > 0).astype(bf)[:, None]
    bev = scatter_to_bev(pillar_feats, voxel_coords, batch_size, H, W)

    def conv3x3_relu(x, w, b):
        B, H_, W_, _ = x.shape
        xp = jnp.pad(x.astype(jnp.float32), ((0, 0), (1, 1), (1, 1), (0, 0)))
        acc = 0.0
        for kh in range(3):
            for kw in range(3):
                acc = acc + jnp.einsum(
                    "bhwc,cd->bhwd",
                    xp[:, kh:kh + H_, kw:kw + W_, :].astype(bf),
                    w[kh, kw].astype(bf),
                    preferred_element_type=jnp.float32)
        return jnp.maximum(acc + b[None, None], 0.0)

    x = conv3x3_relu(bev, params["conv1_w"], params["conv1_b"])
    x = conv3x3_relu(x, params["conv2_w"], params["conv2_b"])

    def head(w, b):
        return jnp.einsum("bhwc,cd->bhwd", x.astype(bf), w.astype(bf),
                          preferred_element_type=jnp.float32) + b[None, None]

    return {
        "pillar_features": pillar_feats,
        "spatial_features_2d": x,
        "cls_preds": head(params["cls_w"], params["cls_b"]),
        "box_preds": head(params["box_w"], params["box_b"]),
        "dir_cls_preds": head(params["dir_w"], params["dir_b"]),
    }


if __name__ == "__main__":
    B, H, W = 2, 16, 16            # BEV grid size
    V_per_b, P, F_raw = 64, 8, 4   # pillars per sample, points per pillar, raw feats
    V = B * V_per_b

    key = jax.random.PRNGKey(0)
    kp, k1, k2, k3, k4 = jax.random.split(key, 5)
    params = init_params(kp)

    voxel_points = jax.random.normal(k1, (V, P, F_raw), jnp.float32)
    npts = jax.random.randint(k2, (V,), 1, P + 1)
    voxel_mask = (jnp.arange(P)[None, :] < npts[:, None]).astype(jnp.float32)

    # unique BEV cells per batch (deterministic)
    cells0 = jax.random.permutation(k3, H * W)[:V_per_b]
    cells1 = jax.random.permutation(k4, H * W)[:V_per_b]
    cells = jnp.concatenate([cells0, cells1]).astype(jnp.int32)
    bidx = jnp.concatenate([jnp.zeros(V_per_b, jnp.int32), jnp.ones(V_per_b, jnp.int32)])
    voxel_coords = jnp.stack([bidx, cells // W, cells % W], axis=1)   # (batch, y, x)

    # row_tile=8 so the toy run exercises the multi-tile halo path (grid = (2, 2))
    fwd = jax.jit(functools.partial(detector3d_forward, batch_size=B,
                                    grid_hw=(H, W), row_tile=8))
    out = fwd(params, voxel_points, voxel_mask, voxel_coords)
    jax.block_until_ready(out)

    # mimic self.update_global_step() bookkeeping (buffer, not compute)
    global_step = 0
    global_step += 1

    # correctness check against a pure-JAX reference with the same precision
    # policy (bf16 matmul operands / pillar features, f32 accumulation)
    ref = jax.jit(functools.partial(reference_forward, batch_size=B, grid_hw=(H, W)))(
        params, voxel_points, voxel_mask, voxel_coords)
    for name in ("pillar_features", "spatial_features_2d",
                 "cls_preds", "box_preds", "dir_cls_preds"):
        got = out[name].astype(jnp.float32)
        exp = ref[name].astype(jnp.float32)
        assert jnp.allclose(got, exp, rtol=2e-2, atol=2e-2), name

    assert out["cls_preds"].shape == (B, H, W, CLS_CH)
    assert out["box_preds"].shape == (B, H, W, BOX_CH)
    assert out["dir_cls_preds"].shape == (B, H, W, DIR_CH)
    assert out["spatial_features_2d"].shape == (B, H, W, BEV_CH)
    assert out["pillar_features"].shape == (V, BEV_CH)
    print("KERNEL_OK")
</pallas_src>

<mosaic_0001>
module attributes {stable_mosaic.version = 11 : i64} {
  func.func @_vfe_kernel(%arg0: i32, %arg1: memref<8x64x8xbf16, #tpu.memory_space<vmem>>, %arg2: memref<8x64x1xf32, #tpu.memory_space<vmem>>, %arg3: memref<8x128xbf16, #tpu.memory_space<vmem>>, %arg4: memref<1x128xf32, #tpu.memory_space<vmem>>, %arg5: memref<64x128xbf16, #tpu.memory_space<vmem>>) attributes {dimension_semantics = [#tpu.dimension_semantics<parallel>], iteration_bounds = array<i64: 2>, scalar_prefetch = 0 : i64, scratch_operands = 0 : i64, tpu.core_type = #tpu.core_type<tc>, window_params = [{transform_indices = @transform_0, window_bounds = array<i64: 8, 64, 8>}, {transform_indices = @transform_1, window_bounds = array<i64: 8, 64, 1>}, {pipeline_mode = #tpu.pipeline_mode<synchronous>, transform_indices = @transform_2, window_bounds = array<i64: 8, 128>}, {pipeline_mode = #tpu.pipeline_mode<synchronous>, transform_indices = @transform_3, window_bounds = array<i64: 1, 128>}, {transform_indices = @transform_4, window_bounds = array<i64: 64, 128>}]} {
    %c0 = arith.constant 0 : index
    %c0_0 = arith.constant 0 : index
    %c0_1 = arith.constant 0 : index
    %0 = vector.load %arg1[%c0, %c0_0, %c0_1] : memref<8x64x8xbf16, #tpu.memory_space<vmem>>, vector<1x64x8xbf16>
    %1 = vector.shape_cast %0 : vector<1x64x8xbf16> to vector<64x8xbf16>
    %c0_2 = arith.constant 0 : index
    %c0_3 = arith.constant 0 : index
    %2 = vector.load %arg3[%c0_2, %c0_3] : memref<8x128xbf16, #tpu.memory_space<vmem>>, vector<8x128xbf16>
    %cst = arith.constant dense<0.000000e+00> : vector<64x128xf32>
    %3 = tpu.matmul %1, %2, %cst {dimension_numbers = #tpu.dot_dimension_numbers<[1], [0], [0], [1], [0, 0, 1, 1], [], []>} : vector<64x8xbf16>, vector<8x128xbf16>, vector<64x128xf32> -> vector<64x128xf32>
    %c0_4 = arith.constant 0 : index
    %c0_5 = arith.constant 0 : index
    %4 = vector.load %arg4[%c0_4, %c0_5] : memref<1x128xf32, #tpu.memory_space<vmem>>, vector<1x128xf32>
    %5 = vector.broadcast %4 : vector<1x128xf32> to vector<64x128xf32>
    %6 = arith.addf %3, %5 : vector<64x128xf32>
    %cst_6 = arith.constant 0.000000e+00 : f32
    %7 = vector.broadcast %cst_6 : f32 to vector<64x128xf32>
    %8 = arith.maximumf %6, %7 : vector<64x128xf32>
    %c0_7 = arith.constant 0 : index
    %c0_8 = arith.constant 0 : index
    %c0_9 = arith.constant 0 : index
    %9 = vector.load %arg2[%c0_7, %c0_8, %c0_9] : memref<8x64x1xf32, #tpu.memory_space<vmem>>, vector<1x64x1xf32>
    %10 = vector.shape_cast %9 : vector<1x64x1xf32> to vector<64x1xf32>
    %11 = vector.broadcast %10 : vector<64x1xf32> to vector<64x128xf32>
    %12 = arith.mulf %8, %11 : vector<64x128xf32>
    %c1 = arith.constant 1 : index
    %c0_10 = arith.constant 0 : index
    %c0_11 = arith.constant 0 : index
    %13 = vector.load %arg1[%c1, %c0_10, %c0_11] : memref<8x64x8xbf16, #tpu.memory_space<vmem>>, vector<1x64x8xbf16>
    %14 = vector.shape_cast %13 : vector<1x64x8xbf16> to vector<64x8xbf16>
    %c0_12 = arith.constant 0 : index
    %c0_13 = arith.constant 0 : index
    %15 = vector.load %arg3[%c0_12, %c0_13] : memref<8x128xbf16, #tpu.memory_space<vmem>>, vector<8x128xbf16>
    %cst_14 = arith.constant dense<0.000000e+00> : vector<64x128xf32>
    %16 = tpu.matmul %14, %15, %cst_14 {dimension_numbers = #tpu.dot_dimension_numbers<[1], [0], [0], [1], [0, 0, 1, 1], [], []>} : vector<64x8xbf16>, vector<8x128xbf16>, vector<64x128xf32> -> vector<64x128xf32>
    %c0_15 = arith.constant 0 : index
    %c0_16 = arith.constant 0 : index
    %17 = vector.load %arg4[%c0_15, %c0_16] : memref<1x128xf32, #tpu.memory_space<vmem>>, vector<1x128xf32>
    %18 = vector.broadcast %17 : vector<1x128xf32> to vector<64x128xf32>
    %19 = arith.addf %16, %18 : vector<64x128xf32>
    %cst_17 = arith.constant 0.000000e+00 : f32
    %20 = vector.broadcast %cst_17 : f32 to vector<64x128xf32>
    %21 = arith.maximumf %19, %20 : vector<64x128xf32>
    %c1_18 = arith.constant 1 : index
    %c0_19 = arith.constant 0 : index
    %c0_20 = arith.constant 0 : index
    %22 = vector.load %arg2[%c1_18, %c0_19, %c0_20] : memref<8x64x1xf32, #tpu.memory_space<vmem>>, vector<1x64x1xf32>
    %23 = vector.shape_cast %22 : vector<1x64x1xf32> to vector<64x1xf32>
    %24 = vector.broadcast %23 : vector<64x1xf32> to vector<64x128xf32>
    %25 = arith.mulf %21, %24 : vector<64x128xf32>
    %c2 = arith.constant 2 : index
    %c0_21 = arith.constant 0 : index
    %c0_22 = arith.constant 0 : index
    %26 = vector.load %arg1[%c2, %c0_21, %c0_22] : memref<8x64x8xbf16, #tpu.memory_space<vmem>>, vector<1x64x8xbf16>
    %27 = vector.shape_cast %26 : vector<1x64x8xbf16> to vector<64x8xbf16>
    %c0_23 = arith.constant 0 : index
    %c0_24 = arith.constant 0 : index
    %28 = vector.load %arg3[%c0_23, %c0_24] : memref<8x128xbf16, #tpu.memory_space<vmem>>, vector<8x128xbf16>
    %cst_25 = arith.constant dense<0.000000e+00> : vector<64x128xf32>
    %29 = tpu.matmul %27, %28, %cst_25 {dimension_numbers = #tpu.dot_dimension_numbers<[1], [0], [0], [1], [0, 0, 1, 1], [], []>} : vector<64x8xbf16>, vector<8x128xbf16>, vector<64x128xf32> -> vector<64x128xf32>
    %c0_26 = arith.constant 0 : index
    %c0_27 = arith.constant 0 : index
    %30 = vector.load %arg4[%c0_26, %c0_27] : memref<1x128xf32, #tpu.memory_space<vmem>>, vector<1x128xf32>
    %31 = vector.broadcast %30 : vector<1x128xf32> to vector<64x128xf32>
    %32 = arith.addf %29, %31 : vector<64x128xf32>
    %cst_28 = arith.constant 0.000000e+00 : f32
    %33 = vector.broadcast %cst_28 : f32 to vector<64x128xf32>
    %34 = arith.maximumf %32, %33 : vector<64x128xf32>
    %c2_29 = arith.constant 2 : index
    %c0_30 = arith.constant 0 : index
    %c0_31 = arith.constant 0 : index
    %35 = vector.load %arg2[%c2_29, %c0_30, %c0_31] : memref<8x64x1xf32, #tpu.memory_space<vmem>>, vector<1x64x1xf32>
    %36 = vector.shape_cast %35 : vector<1x64x1xf32> to vector<64x1xf32>
    %37 = vector.broadcast %36 : vector<64x1xf32> to vector<64x128xf32>
    %38 = arith.mulf %34, %37 : vector<64x128xf32>
    %c3 = arith.constant 3 : index
    %c0_32 = arith.constant 0 : index
    %c0_33 = arith.constant 0 : index
    %39 = vector.load %arg1[%c3, %c0_32, %c0_33] : memref<8x64x8xbf16, #tpu.memory_space<vmem>>, vector<1x64x8xbf16>
    %40 = vector.shape_cast %39 : vector<1x64x8xbf16> to vector<64x8xbf16>
    %c0_34 = arith.constant 0 : index
    %c0_35 = arith.constant 0 : index
    %41 = vector.load %arg3[%c0_34, %c0_35] : memref<8x128xbf16, #tpu.memory_space<vmem>>, vector<8x128xbf16>
    %cst_36 = arith.constant dense<0.000000e+00> : vector<64x128xf32>
    %42 = tpu.matmul %40, %41, %cst_36 {dimension_numbers = #tpu.dot_dimension_numbers<[1], [0], [0], [1], [0, 0, 1, 1], [], []>} : vector<64x8xbf16>, vector<8x128xbf16>, vector<64x128xf32> -> vector<64x128xf32>
    %c0_37 = arith.constant 0 : index
    %c0_38 = arith.constant 0 : index
    %43 = vector.load %arg4[%c0_37, %c0_38] : memref<1x128xf32, #tpu.memory_space<vmem>>, vector<1x128xf32>
    %44 = vector.broadcast %43 : vector<1x128xf32> to vector<64x128xf32>
    %45 = arith.addf %42, %44 : vector<64x128xf32>
    %cst_39 = arith.constant 0.000000e+00 : f32
    %46 = vector.broadcast %cst_39 : f32 to vector<64x128xf32>
    %47 = arith.maximumf %45, %46 : vector<64x128xf32>
    %c3_40 = arith.constant 3 : index
    %c0_41 = arith.constant 0 : index
    %c0_42 = arith.constant 0 : index
    %48 = vector.load %arg2[%c3_40, %c0_41, %c0_42] : memref<8x64x1xf32, #tpu.memory_space<vmem>>, vector<1x64x1xf32>
    %49 = vector.shape_cast %48 : vector<1x64x1xf32> to vector<64x1xf32>
    %50 = vector.broadcast %49 : vector<64x1xf32> to vector<64x128xf32>
    %51 = arith.mulf %47, %50 : vector<64x128xf32>
    %c4 = arith.constant 4 : index
    %c0_43 = arith.constant 0 : index
    %c0_44 = arith.constant 0 : index
    %52 = vector.load %arg1[%c4, %c0_43, %c0_44] : memref<8x64x8xbf16, #tpu.memory_space<vmem>>, vector<1x64x8xbf16>
    %53 = vector.shape_cast %52 : vector<1x64x8xbf16> to vector<64x8xbf16>
    %c0_45 = arith.constant 0 : index
    %c0_46 = arith.constant 0 : index
    %54 = vector.load %arg3[%c0_45, %c0_46] : memref<8x128xbf16, #tpu.memory_space<vmem>>, vector<8x128xbf16>
    %cst_47 = arith.constant dense<0.000000e+00> : vector<64x128xf32>
    %55 = tpu.matmul %53, %54, %cst_47 {dimension_numbers = #tpu.dot_dimension_numbers<[1], [0], [0], [1], [0, 0, 1, 1], [], []>} : vector<64x8xbf16>, vector<8x128xbf16>, vector<64x128xf32> -> vector<64x128xf32>
    %c0_48 = arith.constant 0 : index
    %c0_49 = arith.constant 0 : index
    %56 = vector.load %arg4[%c0_48, %c0_49] : memref<1x128xf32, #tpu.memory_space<vmem>>, vector<1x128xf32>
    %57 = vector.broadcast %56 : vector<1x128xf32> to vector<64x128xf32>
    %58 = arith.addf %55, %57 : vector<64x128xf32>
    %cst_50 = arith.constant 0.000000e+00 : f32
    %59 = vector.broadcast %cst_50 : f32 to vector<64x128xf32>
    %60 = arith.maximumf %58, %59 : vector<64x128xf32>
    %c4_51 = arith.constant 4 : index
    %c0_52 = arith.constant 0 : index
    %c0_53 = arith.constant 0 : index
    %61 = vector.load %arg2[%c4_51, %c0_52, %c0_53] : memref<8x64x1xf32, #tpu.memory_space<vmem>>, vector<1x64x1xf32>
    %62 = vector.shape_cast %61 : vector<1x64x1xf32> to vector<64x1xf32>
    %63 = vector.broadcast %62 : vector<64x1xf32> to vector<64x128xf32>
    %64 = arith.mulf %60, %63 : vector<64x128xf32>
    %c5 = arith.constant 5 : index
    %c0_54 = arith.constant 0 : index
    %c0_55 = arith.constant 0 : index
    %65 = vector.load %arg1[%c5, %c0_54, %c0_55] : memref<8x64x8xbf16, #tpu.memory_space<vmem>>, vector<1x64x8xbf16>
    %66 = vector.shape_cast %65 : vector<1x64x8xbf16> to vector<64x8xbf16>
    %c0_56 = arith.constant 0 : index
    %c0_57 = arith.constant 0 : index
    %67 = vector.load %arg3[%c0_56, %c0_57] : memref<8x128xbf16, #tpu.memory_space<vmem>>, vector<8x128xbf16>
    %cst_58 = arith.constant dense<0.000000e+00> : vector<64x128xf32>
    %68 = tpu.matmul %66, %67, %cst_58 {dimension_numbers = #tpu.dot_dimension_numbers<[1], [0], [0], [1], [0, 0, 1, 1], [], []>} : vector<64x8xbf16>, vector<8x128xbf16>, vector<64x128xf32> -> vector<64x128xf32>
    %c0_59 = arith.constant 0 : index
    %c0_60 = arith.constant 0 : index
    %69 = vector.load %arg4[%c0_59, %c0_60] : memref<1x128xf32, #tpu.memory_space<vmem>>, vector<1x128xf32>
    %70 = vector.broadcast %69 : vector<1x128xf32> to vector<64x128xf32>
    %71 = arith.addf %68, %70 : vector<64x128xf32>
    %cst_61 = arith.constant 0.000000e+00 : f32
    %72 = vector.broadcast %cst_61 : f32 to vector<64x128xf32>
    %73 = arith.maximumf %71, %72 : vector<64x128xf32>
    %c5_62 = arith.constant 5 : index
    %c0_63 = arith.constant 0 : index
    %c0_64 = arith.constant 0 : index
    %74 = vector.load %arg2[%c5_62, %c0_63, %c0_64] : memref<8x64x1xf32, #tpu.memory_space<vmem>>, vector<1x64x1xf32>
    %75 = vector.shape_cast %74 : vector<1x64x1xf32> to vector<64x1xf32>
    %76 = vector.broadcast %75 : vector<64x1xf32> to vector<64x128xf32>
    %77 = arith.mulf %73, %76 : vector<64x128xf32>
    %c6 = arith.constant 6 : index
    %c0_65 = arith.constant 0 : index
    %c0_66 = arith.constant 0 : index
    %78 = vector.load %arg1[%c6, %c0_65, %c0_66] : memref<8x64x8xbf16, #tpu.memory_space<vmem>>, vector<1x64x8xbf16>
    %79 = vector.shape_cast %78 : vector<1x64x8xbf16> to vector<64x8xbf16>
    %c0_67 = arith.constant 0 : index
    %c0_68 = arith.constant 0 : index
    %80 = vector.load %arg3[%c0_67, %c0_68] : memref<8x128xbf16, #tpu.memory_space<vmem>>, vector<8x128xbf16>
    %cst_69 = arith.constant dense<0.000000e+00> : vector<64x128xf32>
    %81 = tpu.matmul %79, %80, %cst_69 {dimension_numbers = #tpu.dot_dimension_numbers<[1], [0], [0], [1], [0, 0, 1, 1], [], []>} : vector<64x8xbf16>, vector<8x128xbf16>, vector<64x128xf32> -> vector<64x128xf32>
    %c0_70 = arith.constant 0 : index
    %c0_71 = arith.constant 0 : index
    %82 = vector.load %arg4[%c0_70, %c0_71] : memref<1x128xf32, #tpu.memory_space<vmem>>, vector<1x128xf32>
    %83 = vector.broadcast %82 : vector<1x128xf32> to vector<64x128xf32>
    %84 = arith.addf %81, %83 : vector<64x128xf32>
    %cst_72 = arith.constant 0.000000e+00 : f32
    %85 = vector.broadcast %cst_72 : f32 to vector<64x128xf32>
    %86 = arith.maximumf %84, %85 : vector<64x128xf32>
    %c6_73 = arith.constant 6 : index
    %c0_74 = arith.constant 0 : index
    %c0_75 = arith.constant 0 : index
    %87 = vector.load %arg2[%c6_73, %c0_74, %c0_75] : memref<8x64x1xf32, #tpu.memory_space<vmem>>, vector<1x64x1xf32>
    %88 = vector.shape_cast %87 : vector<1x64x1xf32> to vector<64x1xf32>
    %89 = vector.broadcast %88 : vector<64x1xf32> to vector<64x128xf32>
    %90 = arith.mulf %86, %89 : vector<64x128xf32>
    %c7 = arith.constant 7 : index
    %c0_76 = arith.constant 0 : index
    %c0_77 = arith.constant 0 : index
    %91 = vector.load %arg1[%c7, %c0_76, %c0_77] : memref<8x64x8xbf16, #tpu.memory_space<vmem>>, vector<1x64x8xbf16>
    %92 = vector.shape_cast %91 : vector<1x64x8xbf16> to vector<64x8xbf16>
    %c0_78 = arith.constant 0 : index
    %c0_79 = arith.constant 0 : index
    %93 = vector.load %arg3[%c0_78, %c0_79] : memref<8x128xbf16, #tpu.memory_space<vmem>>, vector<8x128xbf16>
    %cst_80 = arith.constant dense<0.000000e+00> : vector<64x128xf32>
    %94 = tpu.matmul %92, %93, %cst_80 {dimension_numbers = #tpu.dot_dimension_numbers<[1], [0], [0], [1], [0, 0, 1, 1], [], []>} : vector<64x8xbf16>, vector<8x128xbf16>, vector<64x128xf32> -> vector<64x128xf32>
    %c0_81 = arith.constant 0 : index
    %c0_82 = arith.constant 0 : index
    %95 = vector.load %arg4[%c0_81, %c0_82] : memref<1x128xf32, #tpu.memory_space<vmem>>, vector<1x128xf32>
    %96 = vector.broadcast %95 : vector<1x128xf32> to vector<64x128xf32>
    %97 = arith.addf %94, %96 : vector<64x128xf32>
    %cst_83 = arith.constant 0.000000e+00 : f32
    %98 = vector.broadcast %cst_83 : f32 to vector<64x128xf32>
    %99 = arith.maximumf %97, %98 : vector<64x128xf32>
    %c7_84 = arith.constant 7 : index
    %c0_85 = arith.constant 0 : index
    %c0_86 = arith.constant 0 : index
    %100 = vector.load %arg2[%c7_84, %c0_85, %c0_86] : memref<8x64x1xf32, #tpu.memory_space<vmem>>, vector<1x64x1xf32>
    %101 = vector.shape_cast %100 : vector<1x64x1xf32> to vector<64x1xf32>
    %102 = vector.broadcast %101 : vector<64x1xf32> to vector<64x128xf32>
    %103 = arith.mulf %99, %102 : vector<64x128xf32>
    %104 = arith.maximumf %12, %25 : vector<64x128xf32>
    %105 = arith.maximumf %38, %51 : vector<64x128xf32>
    %106 = arith.maximumf %64, %77 : vector<64x128xf32>
    %107 = arith.maximumf %90, %103 : vector<64x128xf32>
    %108 = arith.maximumf %104, %105 : vector<64x128xf32>
    %109 = arith.maximumf %106, %107 : vector<64x128xf32>
    %110 = arith.maximumf %108, %109 : vector<64x128xf32>
    %111 = arith.truncf %110 : vector<64x128xf32> to vector<64x128xbf16>
    %c0_87 = arith.constant 0 : index
    %c0_88 = arith.constant 0 : index
    %112 = vector.load %arg5[%c0_87, %c0_88] : memref<64x128xbf16, #tpu.memory_space<vmem>>, vector<64x128xbf16>
    tpu.vector_store %arg5[%c0_87, %c0_88], %111 {strides = array<i32>} : memref<64x128xbf16, #tpu.memory_space<vmem>>, vector<64x128xbf16>,
    return
  }
  func.func @transform_0(%arg0: i32) -> (i32, i32, i32) {
    %c0_i32 = arith.constant 0 : i32
    %c0_i32_0 = arith.constant 0 : i32
    %c0_i32_1 = arith.constant 0 : i32
    return %c0_i32, %arg0, %c0_i32_0 : i32, i32, i32
  }
  func.func @transform_1(%arg0: i32) -> (i32, i32, i32) {
    %c0_i32 = arith.constant 0 : i32
    %c0_i32_0 = arith.constant 0 : i32
    %c0_i32_1 = arith.constant 0 : i32
    return %c0_i32, %arg0, %c0_i32_0 : i32, i32, i32
  }
  func.func @transform_2(%arg0: i32) -> (i32, i32) {
    %c0_i32 = arith.constant 0 : i32
    %c0_i32_0 = arith.constant 0 : i32
    %c0_i32_1 = arith.constant 0 : i32
    return %c0_i32, %c0_i32_0 : i32, i32
  }
  func.func @transform_3(%arg0: i32) -> (i32, i32) {
    %c0_i32 = arith.constant 0 : i32
    %c0_i32_0 = arith.constant 0 : i32
    %c0_i32_1 = arith.constant 0 : i32
    return %c0_i32, %c0_i32_0 : i32, i32
  }
  func.func @transform_4(%arg0: i32) -> (i32, i32) {
    %c0_i32 = arith.constant 0 : i32
    %c0_i32_0 = arith.constant 0 : i32
    return %arg0, %c0_i32 : i32, i32
  }
}

module attributes {stable_mosaic.version = 11 : i64} {
  func.func @_backbone_head_kernel(%arg0: i32, %arg1: i32, %arg2: memref<1x32x128xbf16, #tpu.memory_space<vmem>>, %arg3: memref<1x128x128xbf16, #tpu.memory_space<vmem>>, %arg4: memref<1x32x128xbf16, #tpu.memory_space<vmem>>, %arg5: memref<192x1xf32, #tpu.memory_space<vmem>>, %arg6: memref<192x1xf32, #tpu.memory_space<vmem>>, %arg7: memref<3x384x128xbf16, #tpu.memory_space<vmem>>, %arg8: memref<1x128xf32, #tpu.memory_space<vmem>>, %arg9: memref<3x384x128xbf16, #tpu.memory_space<vmem>>, %arg10: memref<1x128xf32, #tpu.memory_space<vmem>>, %arg11: memref<128x32xbf16, #tpu.memory_space<vmem>>, %arg12: memref<1x32xf32, #tpu.memory_space<vmem>>, %arg13: memref<1x128x128xbf16, #tpu.memory_space<vmem>>, %arg14: memref<1x128x32xf32, #tpu.memory_space<vmem>>) attributes {dimension_semantics = [#tpu.dimension_semantics<parallel>, #tpu.dimension_semantics<parallel>], iteration_bounds = array<i64: 2, 2>, scalar_prefetch = 0 : i64, scratch_operands = 0 : i64, tpu.core_type = #tpu.core_type<tc>, window_params = [{transform_indices = @transform_0, window_bounds = array<i64: 1, 32, 128>}, {transform_indices = @transform_1, window_bounds = array<i64: 1, 128, 128>}, {transform_indices = @transform_2, window_bounds = array<i64: 1, 32, 128>}, {pipeline_mode = #tpu.pipeline_mode<synchronous>, transform_indices = @transform_3, window_bounds = array<i64: 192, 1>}, {pipeline_mode = #tpu.pipeline_mode<synchronous>, transform_indices = @transform_4, window_bounds = array<i64: 192, 1>}, {pipeline_mode = #tpu.pipeline_mode<synchronous>, transform_indices = @transform_5, window_bounds = array<i64: 3, 384, 128>}, {pipeline_mode = #tpu.pipeline_mode<synchronous>, transform_indices = @transform_6, window_bounds = array<i64: 1, 128>}, {pipeline_mode = #tpu.pipeline_mode<synchronous>, transform_indices = @transform_7, window_bounds = array<i64: 3, 384, 128>}, {pipeline_mode = #tpu.pipeline_mode<synchronous>, transform_indices = @transform_8, window_bounds = array<i64: 1, 128>}, {pipeline_mode = #tpu.pipeline_mode<synchronous>, transform_indices = @transform_9, window_bounds = array<i64: 128, 32>}, {pipeline_mode = #tpu.pipeline_mode<synchronous>, transform_indices = @transform_10, window_bounds = array<i64: 1, 32>}, {transform_indices = @transform_11, window_bounds = array<i64: 1, 128, 128>}, {transform_indices = @transform_12, window_bounds = array<i64: 1, 128, 32>}]} {
    %c0_i32 = arith.constant 0 : i32
    %0 = arith.cmpi sgt, %arg1, %c0_i32 : i32
    %cst = arith.constant 1.000000e+00 : f32
    %cst_0 = arith.constant 0.000000e+00 : f32
    %1 = arith.select %0, %cst, %cst_0 : f32
    %2 = arith.truncf %1 : f32 to bf16
    %c1_i32 = arith.constant 1 : i32
    %3 = arith.cmpi slt, %arg1, %c1_i32 : i32
    %cst_1 = arith.constant 1.000000e+00 : f32
    %cst_2 = arith.constant 0.000000e+00 : f32
    %4 = arith.select %3, %cst_1, %cst_2 : f32
    %5 = arith.truncf %4 : f32 to bf16
    %c0 = arith.constant 0 : index
    %c0_3 = arith.constant 0 : index
    %c0_4 = arith.constant 0 : index
    %6 = vector.load %arg2[%c0, %c0_3, %c0_4] : memref<1x32x128xbf16, #tpu.memory_space<vmem>>, vector<1x32x128xbf16>
    %7 = vector.shape_cast %6 : vector<1x32x128xbf16> to vector<32x128xbf16>
    %8 = vector.broadcast %2 : bf16 to vector<32x128xbf16>
    %9 = arith.mulf %7, %8 : vector<32x128xbf16>
    %c0_5 = arith.constant 0 : index
    %c0_6 = arith.constant 0 : index
    %c0_7 = arith.constant 0 : index
    %10 = vector.load %arg3[%c0_5, %c0_6, %c0_7] : memref<1x128x128xbf16, #tpu.memory_space<vmem>>, vector<1x128x128xbf16>
    %11 = vector.shape_cast %10 : vector<1x128x128xbf16> to vector<128x128xbf16>
    %c0_8 = arith.constant 0 : index
    %c0_9 = arith.constant 0 : index
    %c0_10 = arith.constant 0 : index
    %12 = vector.load %arg4[%c0_8, %c0_9, %c0_10] : memref<1x32x128xbf16, #tpu.memory_space<vmem>>, vector<1x32x128xbf16>
    %13 = vector.shape_cast %12 : vector<1x32x128xbf16> to vector<32x128xbf16>
    %14 = vector.broadcast %5 : bf16 to vector<32x128xbf16>
    %15 = arith.mulf %13, %14 : vector<32x128xbf16>
    %16 = tpu.concatenate %9, %11, %15 in 0 : vector<32x128xbf16>, vector<128x128xbf16>, vector<32x128xbf16> -> vector<192x128xbf16>
    %17 = arith.extf %16 : vector<192x128xbf16> to vector<192x128xf32>
    %c0_11 = arith.constant 0 : index
    %c0_12 = arith.constant 0 : index
    %18 = vector.load %arg5[%c0_11, %c0_12] : memref<192x1xf32, #tpu.memory_space<vmem>>, vector<192x1xf32>
    %c0_13 = arith.constant 0 : index
    %c0_14 = arith.constant 0 : index
    %19 = vector.load %arg6[%c0_13, %c0_14] : memref<192x1xf32, #tpu.memory_space<vmem>>, vector<192x1xf32>
    %c1_i32_15 = arith.constant 1 : i32
    %20 = tpu.dynamic_rotate %17 by %c1_i32_15 dim 0 : vector<192x128xf32>, i32 -> vector<192x128xf32>
    %21 = vector.broadcast %18 : vector<192x1xf32> to vector<192x128xf32>
    %22 = arith.mulf %20, %21 : vector<192x128xf32>
    %c191_i32 = arith.constant 191 : i32
    %23 = tpu.dynamic_rotate %17 by %c191_i32 dim 0 : vector<192x128xf32>, i32 -> vector<192x128xf32>
    %24 = vector.broadcast %19 : vector<192x1xf32> to vector<192x128xf32>
    %25 = arith.mulf %23, %24 : vector<192x128xf32>
    %26 = tpu.concatenate %22, %17, %25 in 1 : vector<192x128xf32>, vector<192x128xf32>, vector<192x128xf32> -> vector<192x384xf32>
    %27 = arith.truncf %26 : vector<192x384xf32> to vector<192x384xbf16>
    %28 = vector.extract_strided_slice %27 {offsets = [0, 0], sizes = [160, 384], strides = [1, 1]} : vector<192x384xbf16> to vector<160x384xbf16>
    %c0_16 = arith.constant 0 : index
    %c0_17 = arith.constant 0 : index
    %c0_18 = arith.constant 0 : index
    %29 = vector.load %arg7[%c0_16, %c0_17, %c0_18] : memref<3x384x128xbf16, #tpu.memory_space<vmem>>, vector<1x384x128xbf16>
    %30 = vector.shape_cast %29 : vector<1x384x128xbf16> to vector<384x128xbf16>
    %cst_19 = arith.constant dense<0.000000e+00> : vector<160x128xf32>
    %31 = tpu.matmul %28, %30, %cst_19 {dimension_numbers = #tpu.dot_dimension_numbers<[1], [0], [0], [1], [0, 0, 1, 1], [], []>} : vector<160x384xbf16>, vector<384x128xbf16>, vector<160x128xf32> -> vector<160x128xf32>
    %32 = vector.extract_strided_slice %27 {offsets = [16, 0], sizes = [160, 384], strides = [1, 1]} : vector<192x384xbf16> to vector<160x384xbf16>
    %c1 = arith.constant 1 : index
    %c0_20 = arith.constant 0 : index
    %c0_21 = arith.constant 0 : index
    %33 = vector.load %arg7[%c1, %c0_20, %c0_21] : memref<3x384x128xbf16, #tpu.memory_space<vmem>>, vector<1x384x128xbf16>
    %34 = vector.shape_cast %33 : vector<1x384x128xbf16> to vector<384x128xbf16>
    %cst_22 = arith.constant dense<0.000000e+00> : vector<160x128xf32>
    %35 = tpu.matmul %32, %34, %cst_22 {dimension_numbers = #tpu.dot_dimension_numbers<[1], [0], [0], [1], [0, 0, 1, 1], [], []>} : vector<160x384xbf16>, vector<384x128xbf16>, vector<160x128xf32> -> vector<160x128xf32>
    %36 = arith.addf %31, %35 : vector<160x128xf32>
    %37 = vector.extract_strided_slice %27 {offsets = [32, 0], sizes = [160, 384], strides = [1, 1]} : vector<192x384xbf16> to vector<160x384xbf16>
    %c2 = arith.constant 2 : index
    %c0_23 = arith.constant 0 : index
    %c0_24 = arith.constant 0 : index
    %38 = vector.load %arg7[%c2, %c0_23, %c0_24] : memref<3x384x128xbf16, #tpu.memory_space<vmem>>, vector<1x384x128xbf16>
    %39 = vector.shape_cast %38 : vector<1x384x128xbf16> to vector<384x128xbf16>
    %cst_25 = arith.constant dense<0.000000e+00> : vector<160x128xf32>
    %40 = tpu.matmul %37, %39, %cst_25 {dimension_numbers = #tpu.dot_dimension_numbers<[1], [0], [0], [1], [0, 0, 1, 1], [], []>} : vector<160x384xbf16>, vector<384x128xbf16>, vector<160x128xf32> -> vector<160x128xf32>
    %41 = arith.addf %36, %40 : vector<160x128xf32>
    %c0_26 = arith.constant 0 : index
    %c0_27 = arith.constant 0 : index
    %42 = vector.load %arg8[%c0_26, %c0_27] : memref<1x128xf32, #tpu.memory_space<vmem>>, vector<1x128xf32>
    %43 = vector.broadcast %42 : vector<1x128xf32> to vector<160x128xf32>
    %44 = arith.addf %41, %43 : vector<160x128xf32>
    %cst_28 = arith.constant 0.000000e+00 : f32
    %45 = vector.broadcast %cst_28 : f32 to vector<160x128xf32>
    %46 = arith.maximumf %44, %45 : vector<160x128xf32>
    %47 = tpu.iota {dimensions = array<i32: 0>} : vector<160x1xi32>
    %c0_i32_29 = arith.constant 0 : i32
    %48 = arith.cmpi sgt, %arg1, %c0_i32_29 : i32
    %c16_i32 = arith.constant 16 : i32
    %49 = vector.broadcast %c16_i32 : i32 to vector<160x1xi32>
    %50 = arith.cmpi sge, %47, %49 : vector<160x1xi32>
    %51 = vector.broadcast %48 : i1 to vector<160x1xi1>
    %52 = arith.ori %51, %50 : vector<160x1xi1>
    %c1_i32_30 = arith.constant 1 : i32
    %53 = arith.cmpi slt, %arg1, %c1_i32_30 : i32
    %c144_i32 = arith.constant 144 : i32
    %54 = vector.broadcast %c144_i32 : i32 to vector<160x1xi32>
    %55 = arith.cmpi slt, %47, %54 : vector<160x1xi32>
    %56 = vector.broadcast %53 : i1 to vector<160x1xi1>
    %57 = arith.ori %56, %55 : vector<160x1xi1>
    %58 = arith.andi %52, %57 : vector<160x1xi1>
    %59 = arith.extui %58 : vector<160x1xi1> to vector<160x1xi32>
    %60 = arith.sitofp %59 : vector<160x1xi32> to vector<160x1xf32>
    %61 = vector.broadcast %60 : vector<160x1xf32> to vector<160x128xf32>
    %62 = arith.mulf %46, %61 : vector<160x128xf32>
    %cst_31 = arith.constant 0.000000e+00 : f32
    %63 = vector.broadcast %cst_31 : f32 to vector<16x128xf32>
    %64 = tpu.concatenate %63, %62 in 0 : vector<16x128xf32>, vector<160x128xf32> -> vector<176x128xf32>
    %c0_32 = arith.constant 0 : index
    %c0_33 = arith.constant 0 : index
    %65 = vector.load %arg5[%c0_32, %c0_33] : memref<192x1xf32, #tpu.memory_space<vmem>>, vector<176x1xf32>
    %c0_34 = arith.constant 0 : index
    %c0_35 = arith.constant 0 : index
    %66 = vector.load %arg6[%c0_34, %c0_35] : memref<192x1xf32, #tpu.memory_space<vmem>>, vector<176x1xf32>
    %c1_i32_36 = arith.constant 1 : i32
    %67 = tpu.dynamic_rotate %64 by %c1_i32_36 dim 0 : vector<176x128xf32>, i32 -> vector<176x128xf32>
    %68 = vector.broadcast %65 : vector<176x1xf32> to vector<176x128xf32>
    %69 = arith.mulf %67, %68 : vector<176x128xf32>
    %c175_i32 = arith.constant 175 : i32
    %70 = tpu.dynamic_rotate %64 by %c175_i32 dim 0 : vector<176x128xf32>, i32 -> vector<176x128xf32>
    %71 = vector.broadcast %66 : vector<176x1xf32> to vector<176x128xf32>
    %72 = arith.mulf %70, %71 : vector<176x128xf32>
    %73 = tpu.concatenate %69, %64, %72 in 1 : vector<176x128xf32>, vector<176x128xf32>, vector<176x128xf32> -> vector<176x384xf32>
    %74 = arith.truncf %73 : vector<176x384xf32> to vector<176x384xbf16>
    %75 = vector.extract_strided_slice %74 {offsets = [0, 0], sizes = [144, 384], strides = [1, 1]} : vector<176x384xbf16> to vector<144x384xbf16>
    %c0_37 = arith.constant 0 : index
    %c0_38 = arith.constant 0 : index
    %c0_39 = arith.constant 0 : index
    %76 = vector.load %arg9[%c0_37, %c0_38, %c0_39] : memref<3x384x128xbf16, #tpu.memory_space<vmem>>, vector<1x384x128xbf16>
    %77 = vector.shape_cast %76 : vector<1x384x128xbf16> to vector<384x128xbf16>
    %cst_40 = arith.constant dense<0.000000e+00> : vector<144x128xf32>
    %78 = tpu.matmul %75, %77, %cst_40 {dimension_numbers = #tpu.dot_dimension_numbers<[1], [0], [0], [1], [0, 0, 1, 1], [], []>} : vector<144x384xbf16>, vector<384x128xbf16>, vector<144x128xf32> -> vector<144x128xf32>
    %79 = vector.extract_strided_slice %74 {offsets = [16, 0], sizes = [144, 384], strides = [1, 1]} : vector<176x384xbf16> to vector<144x384xbf16>
    %c1_41 = arith.constant 1 : index
    %c0_42 = arith.constant 0 : index
    %c0_43 = arith.constant 0 : index
    %80 = vector.load %arg9[%c1_41, %c0_42, %c0_43] : memref<3x384x128xbf16, #tpu.memory_space<vmem>>, vector<1x384x128xbf16>
    %81 = vector.shape_cast %80 : vector<1x384x128xbf16> to vector<384x128xbf16>
    %cst_44 = arith.constant dense<0.000000e+00> : vector<144x128xf32>
    %82 = tpu.matmul %79, %81, %cst_44 {dimension_numbers = #tpu.dot_dimension_numbers<[1], [0], [0], [1], [0, 0, 1, 1], [], []>} : vector<144x384xbf16>, vector<384x128xbf16>, vector<144x128xf32> -> vector<144x128xf32>
    %83 = arith.addf %78, %82 : vector<144x128xf32>
    %84 = vector.extract_strided_slice %74 {offsets = [32, 0], sizes = [144, 384], strides = [1, 1]} : vector<176x384xbf16> to vector<144x384xbf16>
    %c2_45 = arith.constant 2 : index
    %c0_46 = arith.constant 0 : index
    %c0_47 = arith.constant 0 : index
    %85 = vector.load %arg9[%c2_45, %c0_46, %c0_47] : memref<3x384x128xbf16, #tpu.memory_space<vmem>>, vector<1x384x128xbf16>
    %86 = vector.shape_cast %85 : vector<1x384x128xbf16> to vector<384x128xbf16>
    %cst_48 = arith.constant dense<0.000000e+00> : vector<144x128xf32>
    %87 = tpu.matmul %84, %86, %cst_48 {dimension_numbers = #tpu.dot_dimension_numbers<[1], [0], [0], [1], [0, 0, 1, 1], [], []>} : vector<144x384xbf16>, vector<384x128xbf16>, vector<144x128xf32> -> vector<144x128xf32>
    %88 = arith.addf %83, %87 : vector<144x128xf32>
    %c0_49 = arith.constant 0 : index
    %c0_50 = arith.constant 0 : index
    %89 = vector.load %arg10[%c0_49, %c0_50] : memref<1x128xf32, #tpu.memory_space<vmem>>, vector<1x128xf32>
    %90 = vector.broadcast %89 : vector<1x128xf32> to vector<144x128xf32>
    %91 = arith.addf %88, %90 : vector<144x128xf32>
    %cst_51 = arith.constant 0.000000e+00 : f32
    %92 = vector.broadcast %cst_51 : f32 to vector<144x128xf32>
    %93 = arith.maximumf %91, %92 : vector<144x128xf32>
    %94 = vector.extract_strided_slice %93 {offsets = [16, 0], sizes = [128, 128], strides = [1, 1]} : vector<144x128xf32> to vector<128x128xf32>
    %95 = arith.truncf %94 : vector<128x128xf32> to vector<128x128xbf16>
    %c0_52 = arith.constant 0 : index
    %c0_53 = arith.constant 0 : index
    %c0_54 = arith.constant 0 : index
    %96 = vector.load %arg13[%c0_52, %c0_53, %c0_54] : memref<1x128x128xbf16, #tpu.memory_space<vmem>>, vector<1x128x128xbf16>
    %97 = vector.shape_cast %96 : vector<1x128x128xbf16> to vector<128x128xbf16>
    %98 = vector.shape_cast %95 : vector<128x128xbf16> to vector<1x128x128xbf16>
    tpu.vector_store %arg13[%c0_52, %c0_53, %c0_54], %98 {strides = array<i32>} : memref<1x128x128xbf16, #tpu.memory_space<vmem>>, vector<1x128x128xbf16>,
    %c0_55 = arith.constant 0 : index
    %c0_56 = arith.constant 0 : index
    %99 = vector.load %arg11[%c0_55, %c0_56] : memref<128x32xbf16, #tpu.memory_space<vmem>>, vector<128x32xbf16>
    %cst_57 = arith.constant dense<0.000000e+00> : vector<128x32xf32>
    %100 = tpu.matmul %95, %99, %cst_57 {dimension_numbers = #tpu.dot_dimension_numbers<[1], [0], [0], [1], [0, 0, 1, 1], [], []>} : vector<128x128xbf16>, vector<128x32xbf16>, vector<128x32xf32> -> vector<128x32xf32>
    %c0_58 = arith.constant 0 : index
    %c0_59 = arith.constant 0 : index
    %101 = vector.load %arg12[%c0_58, %c0_59] : memref<1x32xf32, #tpu.memory_space<vmem>>, vector<1x32xf32>
    %102 = vector.broadcast %101 : vector<1x32xf32> to vector<128x32xf32>
    %103 = arith.addf %100, %102 : vector<128x32xf32>
    %c0_60 = arith.constant 0 : index
    %c0_61 = arith.constant 0 : index
    %c0_62 = arith.constant 0 : index
    %104 = vector.load %arg14[%c0_60, %c0_61, %c0_62] : memref<1x128x32xf32, #tpu.memory_space<vmem>>, vector<1x128x32xf32>
    %105 = vector.shape_cast %104 : vector<1x128x32xf32> to vector<128x32xf32>
    %106 = vector.shape_cast %103 : vector<128x32xf32> to vector<1x128x32xf32>
    tpu.vector_store %arg14[%c0_60, %c0_61, %c0_62], %106 {strides = array<i32>} : memref<1x128x32xf32, #tpu.memory_space<vmem>>, vector<1x128x32xf32>,
    return
  }
  func.func @transform_0(%arg0: i32, %arg1: i32) -> (i32, i32, i32) {
    %c4_i32 = arith.constant 4 : i32
    %0 = arith.muli %arg1, %c4_i32 : i32
    %c1_i32 = arith.constant 1 : i32
    %1 = arith.subi %0, %c1_i32 : i32
    %c0_i32 = arith.constant 0 : i32
    %2 = arith.maxsi %1, %c0_i32 : i32
    %c0_i32_0 = arith.constant 0 : i32
    %c0_i32_1 = arith.constant 0 : i32
    return %arg0, %2, %c0_i32_0 : i32, i32, i32
  }
  func.func @transform_1(%arg0: i32, %arg1: i32) -> (i32, i32, i32) {
    %c0_i32 = arith.constant 0 : i32
    %c0_i32_0 = arith.constant 0 : i32
    return %arg0, %arg1, %c0_i32 : i32, i32, i32
  }
  func.func @transform_2(%arg0: i32, %arg1: i32) -> (i32, i32, i32) {
    %c1_i32 = arith.constant 1 : i32
    %0 = arith.addi %arg1, %c1_i32 : i32
    %c4_i32 = arith.constant 4 : i32
    %1 = arith.muli %0, %c4_i32 : i32
    %c7_i32 = arith.constant 7 : i32
    %2 = arith.minsi %1, %c7_i32 : i32
    %c0_i32 = arith.constant 0 : i32
    %c0_i32_0 = arith.constant 0 : i32
    return %arg0, %2, %c0_i32 : i32, i32, i32
  }
  func.func @transform_3(%arg0: i32, %arg1: i32) -> (i32, i32) {
    %c0_i32 = arith.constant 0 : i32
    %c0_i32_0 = arith.constant 0 : i32
    %c0_i32_1 = arith.constant 0 : i32
    return %c0_i32, %c0_i32_0 : i32, i32
  }
  func.func @transform_4(%arg0: i32, %arg1: i32) -> (i32, i32) {
    %c0_i32 = arith.constant 0 : i32
    %c0_i32_0 = arith.constant 0 : i32
    %c0_i32_1 = arith.constant 0 : i32
    return %c0_i32, %c0_i32_0 : i32, i32
  }
  func.func @transform_5(%arg0: i32, %arg1: i32) -> (i32, i32, i32) {
    %c0_i32 = arith.constant 0 : i32
    %c0_i32_0 = arith.constant 0 : i32
    %c0_i32_1 = arith.constant 0 : i32
    %c0_i32_2 = arith.constant 0 : i32
    return %c0_i32, %c0_i32_0, %c0_i32_1 : i32, i32, i32
  }
  func.func @transform_6(%arg0: i32, %arg1: i32) -> (i32, i32) {
    %c0_i32 = arith.constant 0 : i32
    %c0_i32_0 = arith.constant 0 : i32
    %c0_i32_1 = arith.constant 0 : i32
    return %c0_i32, %c0_i32_0 : i32, i32
  }
  func.func @transform_7(%arg0: i32, %arg1: i32) -> (i32, i32, i32) {
    %c0_i32 = arith.constant 0 : i32
    %c0_i32_0 = arith.constant 0 : i32
    %c0_i32_1 = arith.constant 0 : i32
    %c0_i32_2 = arith.constant 0 : i32
    return %c0_i32, %c0_i32_0, %c0_i32_1 : i32, i32, i32
  }
  func.func @transform_8(%arg0: i32, %arg1: i32) -> (i32, i32) {
    %c0_i32 = arith.constant 0 : i32
    %c0_i32_0 = arith.constant 0 : i32
    %c0_i32_1 = arith.constant 0 : i32
    return %c0_i32, %c0_i32_0 : i32, i32
  }
  func.func @transform_9(%arg0: i32, %arg1: i32) -> (i32, i32) {
    %c0_i32 = arith.constant 0 : i32
    %c0_i32_0 = arith.constant 0 : i32
    %c0_i32_1 = arith.constant 0 : i32
    return %c0_i32, %c0_i32_0 : i32, i32
  }
  func.func @transform_10(%arg0: i32, %arg1: i32) -> (i32, i32) {
    %c0_i32 = arith.constant 0 : i32
    %c0_i32_0 = arith.constant 0 : i32
    %c0_i32_1 = arith.constant 0 : i32
    return %c0_i32, %c0_i32_0 : i32, i32
  }
  func.func @transform_11(%arg0: i32, %arg1: i32) -> (i32, i32, i32) {
    %c0_i32 = arith.constant 0 : i32
    %c0_i32_0 = arith.constant 0 : i32
    return %arg0, %arg1, %c0_i32 : i32, i32, i32
  }
  func.func @transform_12(%arg0: i32, %arg1: i32) -> (i32, i32, i32) {
    %c0_i32 = arith.constant 0 : i32
    %c0_i32_0 = arith.constant 0 : i32
    return %arg0, %arg1, %c0_i32 : i32, i32, i32
  }
}

</mosaic_0001>

<llo_original>
// kernel: detector3d_forward.2
$region0: #{detector3d_forward.2}
  #allocation0 [shape = 'u32[]', space=smem, size = 0x4, offset = 0x4, fixed_abs, tag = 'smem constant byte address 0x4 - core index']
  #allocation1 [shape = 'u32[72,128]{1,0:T(1,128)}', space=vmem, size = 0x9000, scoped, tag = 'internal scratch']
  %s0 = inlined_call_operand.vmem [shape: bf16[8,128,8], index: 0, kind: input, shape index: {}]
  %s1 = inlined_call_operand.vmem [shape: f32[8,128,1], index: 1, kind: input, shape index: {}]
  %s2 = inlined_call_operand.vmem [shape: bf16[8,128], index: 2, kind: input, shape index: {}]
  %s3 = inlined_call_operand.vmem [shape: f32[1,128], index: 3, kind: input, shape index: {}]
  %s4 = inlined_call_operand.vmem [shape: bf16[128,128], index: 4, kind: output, shape index: {}]
  %s5 = sld [smem:[#allocation0]]
  $region128: #{detector3d_forward.2} parent=0
    _
  %s7 = ssub.s32 1, %s5
  %s8 = scalar_select 0, %s7, %s5
  $region1: #{detector3d_forward.2} parent=0
    #allocation2 [shape = 'u8[262144]{0}', space=vmem, size = 0x40000, scoped, tag = 'input window, operand 0']
    #allocation3 [shape = 'u8[524288]{0}', space=vmem, size = 0x80000, scoped, tag = 'input window, operand 1']
    loop: start=0, step=1, limit=4
    $region2: #{detector3d_forward.2} parent=1 // loop_pre_header
      _
    $region3: #{detector3d_forward.2} parent=1 // loop_header
      %s10 = sphi 0, %s14
      %p11 = scmp.ge.s32.totalorder %s10, 4
      %s20 = sphi 0, %s22
      %s23 = sphi 0, %s20
      %s24 = sphi 0, %s23
      %s40 = sphi 0, %s24
      %s46 = sphi 0, %s48
      %s49 = sphi 0, %s46
      %s50 = sphi 0, %s49
      %s66 = sphi 0, %s50
      %s70 = sphi 0, %s70
      %s72 = sphi 0, %s70
      %s73 = sphi 0, %s72
      %s87 = sphi 0, %s73
      %s91 = sphi 0, %s91
      %s93 = sphi 0, %s91
      %s94 = sphi 0, %s93
      %s108 = sphi 0, %s94
      %s114 = sphi 0, %s116
      %s117 = sphi 0, %s114
      %s118 = sphi 0, %s117
      %s134 = sphi 0, %s118
    $region4: #{detector3d_forward.2} parent=1 // loop_header_branch
      %13 = sbr.rel (%p11) target = $region8
    $region5: #{detector3d_forward.2} parent=1 // loop_body
      %s15 = ssub.s32 %s10, 1
      %s16 = ssub.s32 %s10, 2
      %s17 = sadd.s32 %s10, 1
      %s18 = ssub.s32 %s10, %s17
      %p19 = scmp.eq.s32.totalorder %s18, 0
      %s21 = sadd.s32 %s20, 1
      %s22 = scalar_select %p19, %s20, %s21
      %p25 = pneg %p19
      %p26 = scmp.eq.s32.totalorder %s10, 1
      %p27 = por %p25, %p26
      %p28 = scmp.ne.s32.totalorder %s20, %s23
      %p29 = scmp.eq.s32.totalorder %s10, 0
      %p30 = por %p28, %p29
      %p31 = scmp.ne.s32.totalorder %s20, %s23
      %p32 = scmp.eq.s32.totalorder %s15, 1
      %p33 = por %p31, %p32
      %p34 = scmp.ne.s32.totalorder %s23, %s24
      %p35 = scmp.eq.s32.totalorder %s15, 0
      %p36 = por %p34, %p35
      %p37 = scmp.ne.s32.totalorder %s23, %s24
      %p38 = scmp.eq.s32.totalorder %s16, 1
      %p39 = por %p37, %p38
      %p41 = scmp.ne.s32.totalorder %s24, %s40
      %p42 = scmp.eq.s32.totalorder %s16, 0
      %p43 = por %p41, %p42
      %s44 = ssub.s32 %s10, %s17
      %p45 = scmp.eq.s32.totalorder %s44, 0
      %s47 = sadd.s32 %s46, 1
      %s48 = scalar_select %p45, %s46, %s47
      %p51 = pneg %p45
      %p52 = scmp.eq.s32.totalorder %s10, 1
      %p53 = por %p51, %p52
      %p54 = scmp.ne.s32.totalorder %s46, %s49
      %p55 = scmp.eq.s32.totalorder %s10, 0
      %p56 = por %p54, %p55
      %p57 = scmp.ne.s32.totalorder %s46, %s49
      %p58 = scmp.eq.s32.totalorder %s15, 1
      %p59 = por %p57, %p58
      %p60 = scmp.ne.s32.totalorder %s49, %s50
      %p61 = scmp.eq.s32.totalorder %s15, 0
      %p62 = por %p60, %p61
      %p63 = scmp.ne.s32.totalorder %s49, %s50
      %p64 = scmp.eq.s32.totalorder %s16, 1
      %p65 = por %p63, %p64
      %p67 = scmp.ne.s32.totalorder %s50, %s66
      %p68 = scmp.eq.s32.totalorder %s16, 0
      %p69 = por %p67, %p68
      %s71 = sadd.s32 %s70, 1
      %p74 = scmp.eq.s32.totalorder %s10, 1
      %p75 = scmp.ne.s32.totalorder %s70, %s72
      %p76 = scmp.eq.s32.totalorder %s10, 0
      %p77 = por %p75, %p76
      %p78 = scmp.ne.s32.totalorder %s70, %s72
      %p79 = scmp.eq.s32.totalorder %s15, 1
      %p80 = por %p78, %p79
      %p81 = scmp.ne.s32.totalorder %s72, %s73
      %p82 = scmp.eq.s32.totalorder %s15, 0
      %p83 = por %p81, %p82
      %p84 = scmp.ne.s32.totalorder %s72, %s73
      %p85 = scmp.eq.s32.totalorder %s16, 1
      %p86 = por %p84, %p85
      %p88 = scmp.ne.s32.totalorder %s73, %s87
      %p89 = scmp.eq.s32.totalorder %s16, 0
      %p90 = por %p88, %p89
      %s92 = sadd.s32 %s91, 1
      %p95 = scmp.eq.s32.totalorder %s10, 1
      %p96 = scmp.ne.s32.totalorder %s91, %s93
      %p97 = scmp.eq.s32.totalorder %s10, 0
      %p98 = por %p96, %p97
      %p99 = scmp.ne.s32.totalorder %s91, %s93
      %p100 = scmp.eq.s32.totalorder %s15, 1
      %p101 = por %p99, %p100
      %p102 = scmp.ne.s32.totalorder %s93, %s94
      %p103 = scmp.eq.s32.totalorder %s15, 0
      %p104 = por %p102, %p103
      %p105 = scmp.ne.s32.totalorder %s93, %s94
      %p106 = scmp.eq.s32.totalorder %s16, 1
      %p107 = por %p105, %p106
      %p109 = scmp.ne.s32.totalorder %s94, %s108
      %p110 = scmp.eq.s32.totalorder %s16, 0
      %p111 = por %p109, %p110
      %s112 = ssub.s32 %s10, %s17
      %p113 = scmp.eq.s32.totalorder %s112, 0
      %s115 = sadd.s32 %s114, 1
      %s116 = scalar_select %p113, %s114, %s115
      %p119 = pneg %p113
      %p120 = scmp.eq.s32.totalorder %s10, 1
      %p121 = por %p119, %p120
      %p122 = scmp.ne.s32.totalorder %s114, %s117
      %p123 = scmp.eq.s32.totalorder %s10, 0
      %p124 = por %p122, %p123
      %p125 = scmp.ne.s32.totalorder %s114, %s117
      %p126 = scmp.eq.s32.totalorder %s15, 1
      %p127 = por %p125, %p126
      %p128 = scmp.ne.s32.totalorder %s117, %s118
      %p129 = scmp.eq.s32.totalorder %s15, 0
      %p130 = por %p128, %p129
      %p131 = scmp.ne.s32.totalorder %s117, %s118
      %p132 = scmp.eq.s32.totalorder %s16, 1
      %p133 = por %p131, %p132
      %p135 = scmp.ne.s32.totalorder %s118, %s134
      %p136 = scmp.eq.s32.totalorder %s16, 0
      %p137 = por %p135, %p136
      %p138 = scmp.le.s32.totalorder 1, %s10
      %p139 = scmp.lt.s32.totalorder %s10, 3
      %p140 = pnand %p138, %p139
      %p141 = pneg %p140
      // Predicated region
      $region9: #{detector3d_forward.2} parent=5 // pred_check
        _
      $region10: #{detector3d_forward.2} parent=5 // pred_check_branch
        %143 = sbr.rel (%p140) target = $region12
      $region11: #{detector3d_forward.2} parent=5 // pred_region
        %s144 = ssub.s32 %s10, 1
        // Predicated region
        $region13: #{detector3d_forward.2} parent=11 // pred_check
          %p145 = pneg %p83
        $region14: #{detector3d_forward.2} parent=11 // pred_check_branch
          %147 = sbr.rel (%p145) target = $region16
        $region15: #{detector3d_forward.2} parent=11 // pred_region
          _
        $region16: #{detector3d_forward.2} parent=11 // pred_fallthru
          _
        // Predicated region
        $region17: #{detector3d_forward.2} parent=11 // pred_check
          %p148 = pneg %p104
        $region18: #{detector3d_forward.2} parent=11 // pred_check_branch
          %150 = sbr.rel (%p148) target = $region20
        $region19: #{detector3d_forward.2} parent=11 // pred_region
          _
        $region20: #{detector3d_forward.2} parent=11 // pred_fallthru
          _
      $region12: #{detector3d_forward.2} parent=5 // pred_fallthru
        _
      %p151 = scmp.lt.s32.totalorder %s10, 2
      // Predicated region
      $region21: #{detector3d_forward.2} parent=5 // pred_check
        %p152 = pneg %p151
      $region22: #{detector3d_forward.2} parent=5 // pred_check_branch
        %154 = sbr.rel (%p152) target = $region24
      $region23: #{detector3d_forward.2} parent=5 // pred_region
        // Predicated region
        $region25: #{detector3d_forward.2} parent=23 // pred_check
          %p155 = pneg %p30
        $region26: #{detector3d_forward.2} parent=23 // pred_check_branch
          %157 = sbr.rel (%p155) target = $region28
        $region27: #{detector3d_forward.2} parent=23 // pred_region
          %s158 = sand.u32 %s20, 1
          %s159 = sand.u32 %s20, 1
          %s160 = smul.addr %s159, 256
          %s161 = scalar_lea.vmem [#allocation2], %s160
          %s162 = smul.u32 8, %s10
          %s163 = smul.addr %s162, 4
          %s164 = scalar_lea.vmem %s0, %s163
          // Predicated region
          $region29: #{detector3d_forward.2} parent=27 // pred_check
            _
          $region30: #{detector3d_forward.2} parent=27 // pred_check_branch
            %166 = sbr.rel (0) target = $region32
          $region31: #{detector3d_forward.2} parent=27 // pred_region
            // Predicated region
            $region33: #{detector3d_forward.2} parent=31 // pred_check
              _
            $region34: #{detector3d_forward.2} parent=31 // pred_check_branch
              %168 = sbr.rel target = $region36
            $region35: #{detector3d_forward.2} parent=31 // pred_region
              // Predicated region
              $region48: #{detector3d_forward.2} parent=35 // pred_check
                _
              $region49: #{detector3d_forward.2} parent=35 // pred_check_branch
                %310 = sbr.rel (0) target = $region51
              $region50: #{detector3d_forward.2} parent=35 // pred_region
                loop: start=0, step=1, limit=1
                $region52: #{detector3d_forward.2} parent=50 // loop_pre_header
                  _
                $region53: #{detector3d_forward.2} parent=50 // loop_header
                  %s312 = sphi 0, %s316
                  %p313 = scmp.ge.s32.totalorder %s312, 1
                  %s317 = sphi %s164, %s164
                  %s318 = sphi %s161, %s161
                $region54: #{detector3d_forward.2} parent=50 // loop_header_branch
                  %315 = sbr.rel (%p313) target = $region58
                $region55: #{detector3d_forward.2} parent=50 // loop_body
                  _
                $region56: #{detector3d_forward.2} parent=50 // loop_footer
                  %s316 = sadd.s32 1, %s312
                $region57: #{detector3d_forward.2} parent=50 // loop_footer_branch
                  %311 = sbr.rel target = $region53
                $region58: #{detector3d_forward.2} parent=50 // loop_exit
                  _
                %s320 = ssub.s32 16, 1
                loop: start=0, step=1, limit=1
                $region59: #{detector3d_forward.2} parent=50 // loop_pre_header
                  _
                $region60: #{detector3d_forward.2} parent=50 // loop_header
                  %s322 = sphi 0, %s326
                  %p323 = scmp.ge.s32.totalorder %s322, 1
                  %s327 = sphi %s164, %s164
                  %s328 = sphi %s161, %s161
                $region61: #{detector3d_forward.2} parent=50 // loop_header_branch
                  %325 = sbr.rel (%p323) target = $region65
                $region62: #{detector3d_forward.2} parent=50 // loop_body
                  %v329 = vld [vmem:[%s327] sm:%s320]
                  %330 = vst [vmem:[%s328] sm:%s320] %v329
                  %v331 = vld [vmem:[%s327 + $0x4] sm:%s320]
                  %332 = vst [vmem:[%s328 + $0x4] sm:%s320] %v331
                  %v333 = vld [vmem:[%s327 + $0x8] sm:%s320]
                  %334 = vst [vmem:[%s328 + $0x8] sm:%s320] %v333
                  %v335 = vld [vmem:[%s327 + $0xc] sm:%s320]
                  %336 = vst [vmem:[%s328 + $0xc] sm:%s320] %v335
                  %v337 = vld [vmem:[%s327 + $0x10] sm:%s320]
                  %338 = vst [vmem:[%s328 + $0x10] sm:%s320] %v337
                  %v339 = vld [vmem:[%s327 + $0x14] sm:%s320]
                  %340 = vst [vmem:[%s328 + $0x14] sm:%s320] %v339
                  %v341 = vld [vmem:[%s327 + $0x18] sm:%s320]
                  %342 = vst [vmem:[%s328 + $0x18] sm:%s320] %v341
                  %v343 = vld [vmem:[%s327 + $0x1c] sm:%s320]
                  %344 = vst [vmem:[%s328 + $0x1c] sm:%s320] %v343
                  %v345 = vld [vmem:[%s327 + $0x40] sm:%s320]
                  %346 = vst [vmem:[%s328 + $0x20] sm:%s320] %v345
                  %v347 = vld [vmem:[%s327 + $0x44] sm:%s320]
                  %348 = vst [vmem:[%s328 + $0x24] sm:%s320] %v347
                  %v349 = vld [vmem:[%s327 + $0x48] sm:%s320]
                  %350 = vst [vmem:[%s328 + $0x28] sm:%s320] %v349
                  %v351 = vld [vmem:[%s327 + $0x4c] sm:%s320]
                  %352 = vst [vmem:[%s328 + $0x2c] sm:%s320] %v351
                  %v353 = vld [vmem:[%s327 + $0x50] sm:%s320]
                  %354 = vst [vmem:[%s328 + $0x30] sm:%s320] %v353
                  %v355 = vld [vmem:[%s327 + $0x54] sm:%s320]
                  %356 = vst [vmem:[%s328 + $0x34] sm:%s320] %v355
                  %v357 = vld [vmem:[%s327 + $0x58] sm:%s320]
                  %358 = vst [vmem:[%s328 + $0x38] sm:%s320] %v357
                  %v359 = vld [vmem:[%s327 + $0x5c] sm:%s320]
                  %360 = vst [vmem:[%s328 + $0x3c] sm:%s320] %v359
                  %v361 = vld [vmem:[%s327 + $0x80] sm:%s320]
                  %362 = vst [vmem:[%s328 + $0x40] sm:%s320] %v361
                  %v363 = vld [vmem:[%s327 + $0x84] sm:%s320]
                  %364 = vst [vmem:[%s328 + $0x44] sm:%s320] %v363
                  %v365 = vld [vmem:[%s327 + $0x88] sm:%s320]
                  %366 = vst [vmem:[%s328 + $0x48] sm:%s320] %v365
                  %v367 = vld [vmem:[%s327 + $0x8c] sm:%s320]
                  %368 = vst [vmem:[%s328 + $0x4c] sm:%s320] %v367
                  %v369 = vld [vmem:[%s327 + $0x90] sm:%s320]
                  %370 = vst [vmem:[%s328 + $0x50] sm:%s320] %v369
                  %v371 = vld [vmem:[%s327 + $0x94] sm:%s320]
                  %372 = vst [vmem:[%s328 + $0x54] sm:%s320] %v371
                  %v373 = vld [vmem:[%s327 + $0x98] sm:%s320]
                  %374 = vst [vmem:[%s328 + $0x58] sm:%s320] %v373
                  %v375 = vld [vmem:[%s327 + $0x9c] sm:%s320]
                  %376 = vst [vmem:[%s328 + $0x5c] sm:%s320] %v375
                  %v377 = vld [vmem:[%s327 + $0xc0] sm:%s320]
                  %378 = vst [vmem:[%s328 + $0x60] sm:%s320] %v377
                  %v379 = vld [vmem:[%s327 + $0xc4] sm:%s320]
                  %380 = vst [vmem:[%s328 + $0x64] sm:%s320] %v379
                  %v381 = vld [vmem:[%s327 + $0xc8] sm:%s320]
                  %382 = vst [vmem:[%s328 + $0x68] sm:%s320] %v381
                  %v383 = vld [vmem:[%s327 + $0xcc] sm:%s320]
                  %384 = vst [vmem:[%s328 + $0x6c] sm:%s320] %v383
                  %v385 = vld [vmem:[%s327 + $0xd0] sm:%s320]
                  %386 = vst [vmem:[%s328 + $0x70] sm:%s320] %v385
                  %v387 = vld [vmem:[%s327 + $0xd4] sm:%s320]
                  %388 = vst [vmem:[%s328 + $0x74] sm:%s320] %v387
                  %v389 = vld [vmem:[%s327 + $0xd8] sm:%s320]
                  %390 = vst [vmem:[%s328 + $0x78] sm:%s320] %v389
                  %v391 = vld [vmem:[%s327 + $0xdc] sm:%s320]
                  %392 = vst [vmem:[%s328 + $0x7c] sm:%s320] %v391
                  %v393 = vld [vmem:[%s327 + $0x100] sm:%s320]
                  %394 = vst [vmem:[%s328 + $0x80] sm:%s320] %v393
                  %v395 = vld [vmem:[%s327 + $0x104] sm:%s320]
                  %396 = vst [vmem:[%s328 + $0x84] sm:%s320] %v395
                  %v397 = vld [vmem:[%s327 + $0x108] sm:%s320]
                  %398 = vst [vmem:[%s328 + $0x88] sm:%s320] %v397
                  %v399 = vld [vmem:[%s327 + $0x10c] sm:%s320]
                  %400 = vst [vmem:[%s328 + $0x8c] sm:%s320] %v399
                  %v401 = vld [vmem:[%s327 + $0x110] sm:%s320]
                  %402 = vst [vmem:[%s328 + $0x90] sm:%s320] %v401
                  %v403 = vld [vmem:[%s327 + $0x114] sm:%s320]
                  %404 = vst [vmem:[%s328 + $0x94] sm:%s320] %v403
                  %v405 = vld [vmem:[%s327 + $0x118] sm:%s320]
                  %406 = vst [vmem:[%s328 + $0x98] sm:%s320] %v405
                  %v407 = vld [vmem:[%s327 + $0x11c] sm:%s320]
                  %408 = vst [vmem:[%s328 + $0x9c] sm:%s320] %v407
                  %v409 = vld [vmem:[%s327 + $0x140] sm:%s320]
                  %410 = vst [vmem:[%s328 + $0xa0] sm:%s320] %v409
                  %v411 = vld [vmem:[%s327 + $0x144] sm:%s320]
                  %412 = vst [vmem:[%s328 + $0xa4] sm:%s320] %v411
                  %v413 = vld [vmem:[%s327 + $0x148] sm:%s320]
                  %414 = vst [vmem:[%s328 + $0xa8] sm:%s320] %v413
                  %v415 = vld [vmem:[%s327 + $0x14c] sm:%s320]
                  %416 = vst [vmem:[%s328 + $0xac] sm:%s320] %v415
                  %v417 = vld [vmem:[%s327 + $0x150] sm:%s320]
                  %418 = vst [vmem:[%s328 + $0xb0] sm:%s320] %v417
                  %v419 = vld [vmem:[%s327 + $0x154] sm:%s320]
                  %420 = vst [vmem:[%s328 + $0xb4] sm:%s320] %v419
                  %v421 = vld [vmem:[%s327 + $0x158] sm:%s320]
                  %422 = vst [vmem:[%s328 + $0xb8] sm:%s320] %v421
                  %v423 = vld [vmem:[%s327 + $0x15c] sm:%s320]
                  %424 = vst [vmem:[%s328 + $0xbc] sm:%s320] %v423
                  %v425 = vld [vmem:[%s327 + $0x180] sm:%s320]
                  %426 = vst [vmem:[%s328 + $0xc0] sm:%s320] %v425
                  %v427 = vld [vmem:[%s327 + $0x184] sm:%s320]
                  %428 = vst [vmem:[%s328 + $0xc4] sm:%s320] %v427
                  %v429 = vld [vmem:[%s327 + $0x188] sm:%s320]
                  %430 = vst [vmem:[%s328 + $0xc8] sm:%s320] %v429
                  %v431 = vld [vmem:[%s327 + $0x18c] sm:%s320]
                  %432 = vst [vmem:[%s328 + $0xcc] sm:%s320] %v431
                  %v433 = vld [vmem:[%s327 + $0x190] sm:%s320]
                  %434 = vst [vmem:[%s328 + $0xd0] sm:%s320] %v433
                  %v435 = vld [vmem:[%s327 + $0x194] sm:%s320]
                  %436 = vst [vmem:[%s328 + $0xd4] sm:%s320] %v435
                  %v437 = vld [vmem:[%s327 + $0x198] sm:%s320]
                  %438 = vst [vmem:[%s328 + $0xd8] sm:%s320] %v437
                  %v439 = vld [vmem:[%s327 + $0x19c] sm:%s320]
                  %440 = vst [vmem:[%s328 + $0xdc] sm:%s320] %v439
                  %v441 = vld [vmem:[%s327 + $0x1c0] sm:%s320]
                  %442 = vst [vmem:[%s328 + $0xe0] sm:%s320] %v441
                  %v443 = vld [vmem:[%s327 + $0x1c4] sm:%s320]
                  %444 = vst [vmem:[%s328 + $0xe4] sm:%s320] %v443
                  %v445 = vld [vmem:[%s327 + $0x1c8] sm:%s320]
                  %446 = vst [vmem:[%s328 + $0xe8] sm:%s320] %v445
                  %v447 = vld [vmem:[%s327 + $0x1cc] sm:%s320]
                  %448 = vst [vmem:[%s328 + $0xec] sm:%s320] %v447
                  %v449 = vld [vmem:[%s327 + $0x1d0] sm:%s320]
                  %450 = vst [vmem:[%s328 + $0xf0] sm:%s320] %v449
                  %v451 = vld [vmem:[%s327 + $0x1d4] sm:%s320]
                  %452 = vst [vmem:[%s328 + $0xf4] sm:%s320] %v451
                  %v453 = vld [vmem:[%s327 + $0x1d8] sm:%s320]
                  %454 = vst [vmem:[%s328 + $0xf8] sm:%s320] %v453
                  %v455 = vld [vmem:[%s327 + $0x1dc] sm:%s320]
                  %456 = vst [vmem:[%s328 + $0xfc] sm:%s320] %v455
                $region63: #{detector3d_forward.2} parent=50 // loop_footer
                  %s326 = sadd.s32 1, %s322
                $region64: #{detector3d_forward.2} parent=50 // loop_footer_branch
                  %321 = sbr.rel target = $region60
                $region65: #{detector3d_forward.2} parent=50 // loop_exit
                  _
              $region51: #{detector3d_forward.2} parent=35 // pred_fallthru
                _
            $region36: #{detector3d_forward.2} parent=31 // pred_fallthru
              _
            // Predicated region
            $region37: #{detector3d_forward.2} parent=31 // pred_check
              _
            $region38: #{detector3d_forward.2} parent=31 // pred_check_branch
              %170 = sbr.rel (0) target = $region40
            $region39: #{detector3d_forward.2} parent=31 // pred_region
              %s172 = ssub.s32 16, 1
              loop: start=0, step=1, limit=1
              $region41: #{detector3d_forward.2} parent=39 // loop_pre_header
                _
              $region42: #{detector3d_forward.2} parent=39 // loop_header
                %s174 = sphi 0, %s178
                %p175 = scmp.ge.s32.totalorder %s174, 1
                %s179 = sphi %s164, %s164
                %s180 = sphi %s161, %s161
              $region43: #{detector3d_forward.2} parent=39 // loop_header_branch
                %177 = sbr.rel (%p175) target = $region47
              $region44: #{detector3d_forward.2} parent=39 // loop_body
                %v181 = vld [vmem:[%s179] sm:%s172]
                %182 = vst [vmem:[%s180] sm:%s172] %v181
                %v183 = vld [vmem:[%s179 + $0x4] sm:%s172]
                %184 = vst [vmem:[%s180 + $0x4] sm:%s172] %v183
                %v185 = vld [vmem:[%s179 + $0x8] sm:%s172]
                %186 = vst [vmem:[%s180 + $0x8] sm:%s172] %v185
                %v187 = vld [vmem:[%s179 + $0xc] sm:%s172]
                %188 = vst [vmem:[%s180 + $0xc] sm:%s172] %v187
                %v189 = vld [vmem:[%s179 + $0x10] sm:%s172]
                %190 = vst [vmem:[%s180 + $0x10] sm:%s172] %v189
                %v191 = vld [vmem:[%s179 + $0x14] sm:%s172]
                %192 = vst [vmem:[%s180 + $0x14] sm:%s172] %v191
                %v193 = vld [vmem:[%s179 + $0x18] sm:%s172]
                %194 = vst [vmem:[%s180 + $0x18] sm:%s172] %v193
                %v195 = vld [vmem:[%s179 + $0x1c] sm:%s172]
                %196 = vst [vmem:[%s180 + $0x1c] sm:%s172] %v195
                %v197 = vld [vmem:[%s179 + $0x40] sm:%s172]
                %198 = vst [vmem:[%s180 + $0x20] sm:%s172] %v197
                %v199 = vld [vmem:[%s179 + $0x44] sm:%s172]
                %200 = vst [vmem:[%s180 + $0x24] sm:%s172] %v199
                %v201 = vld [vmem:[%s179 + $0x48] sm:%s172]
                %202 = vst [vmem:[%s180 + $0x28] sm:%s172] %v201
                %v203 = vld [vmem:[%s179 + $0x4c] sm:%s172]
                %204 = vst [vmem:[%s180 + $0x2c] sm:%s172] %v203
                %v205 = vld [vmem:[%s179 + $0x50] sm:%s172]
                %206 = vst [vmem:[%s180 + $0x30] sm:%s172] %v205
                %v207 = vld [vmem:[%s179 + $0x54] sm:%s172]
                %208 = vst [vmem:[%s180 + $0x34] sm:%s172] %v207
                %v209 = vld [vmem:[%s179 + $0x58] sm:%s172]
                %210 = vst [vmem:[%s180 + $0x38] sm:%s172] %v209
                %v211 = vld [vmem:[%s179 + $0x5c] sm:%s172]
                %212 = vst [vmem:[%s180 + $0x3c] sm:%s172] %v211
                %v213 = vld [vmem:[%s179 + $0x80] sm:%s172]
                %214 = vst [vmem:[%s180 + $0x40] sm:%s172] %v213
                %v215 = vld [vmem:[%s179 + $0x84] sm:%s172]
                %216 = vst [vmem:[%s180 + $0x44] sm:%s172] %v215
                %v217 = vld [vmem:[%s179 + $0x88] sm:%s172]
                %218 = vst [vmem:[%s180 + $0x48] sm:%s172] %v217
                %v219 = vld [vmem:[%s179 + $0x8c] sm:%s172]
                %220 = vst [vmem:[%s180 + $0x4c] sm:%s172] %v219
                %v221 = vld [vmem:[%s179 + $0x90] sm:%s172]
                %222 = vst [vmem:[%s180 + $0x50] sm:%s172] %v221
                %v223 = vld [vmem:[%s179 + $0x94] sm:%s172]
                %224 = vst [vmem:[%s180 + $0x54] sm:%s172] %v223
                %v225 = vld [vmem:[%s179 + $0x98] sm:%s172]
                %226 = vst [vmem:[%s180 + $0x58] sm:%s172] %v225
                %v227 = vld [vmem:[%s179 + $0x9c] sm:%s172]
                %228 = vst [vmem:[%s180 + $0x5c] sm:%s172] %v227
                %v229 = vld [vmem:[%s179 + $0xc0] sm:%s172]
                %230 = vst [vmem:[%s180 + $0x60] sm:%s172] %v229
                %v231 = vld [vmem:[%s179 + $0xc4] sm:%s172]
                %232 = vst [vmem:[%s180 + $0x64] sm:%s172] %v231
                %v233 = vld [vmem:[%s179 + $0xc8] sm:%s172]
                %234 = vst [vmem:[%s180 + $0x68] sm:%s172] %v233
                %v235 = vld [vmem:[%s179 + $0xcc] sm:%s172]
                %236 = vst [vmem:[%s180 + $0x6c] sm:%s172] %v235
                %v237 = vld [vmem:[%s179 + $0xd0] sm:%s172]
                %238 = vst [vmem:[%s180 + $0x70] sm:%s172] %v237
                %v239 = vld [vmem:[%s179 + $0xd4] sm:%s172]
                %240 = vst [vmem:[%s180 + $0x74] sm:%s172] %v239
                %v241 = vld [vmem:[%s179 + $0xd8] sm:%s172]
                %242 = vst [vmem:[%s180 + $0x78] sm:%s172] %v241
                %v243 = vld [vmem:[%s179 + $0xdc] sm:%s172]
                %244 = vst [vmem:[%s180 + $0x7c] sm:%s172] %v243
                %v245 = vld [vmem:[%s179 + $0x100] sm:%s172]
                %246 = vst [vmem:[%s180 + $0x80] sm:%s172] %v245
                %v247 = vld [vmem:[%s179 + $0x104] sm:%s172]
                %248 = vst [vmem:[%s180 + $0x84] sm:%s172] %v247
                %v249 = vld [vmem:[%s179 + $0x108] sm:%s172]
                %250 = vst [vmem:[%s180 + $0x88] sm:%s172] %v249
                %v251 = vld [vmem:[%s179 + $0x10c] sm:%s172]
                %252 = vst [vmem:[%s180 + $0x8c] sm:%s172] %v251
                %v253 = vld [vmem:[%s179 + $0x110] sm:%s172]
                %254 = vst [vmem:[%s180 + $0x90] sm:%s172] %v253
                %v255 = vld [vmem:[%s179 + $0x114] sm:%s172]
                %256 = vst [vmem:[%s180 + $0x94] sm:%s172] %v255
                %v257 = vld [vmem:[%s179 + $0x118] sm:%s172]
                %258 = vst [vmem:[%s180 + $0x98] sm:%s172] %v257
                %v259 = vld [vmem:[%s179 + $0x11c] sm:%s172]
                %260 = vst [vmem:[%s180 + $0x9c] sm:%s172] %v259
                %v261 = vld [vmem:[%s179 + $0x140] sm:%s172]
                %262 = vst [vmem:[%s180 + $0xa0] sm:%s172] %v261
                %v263 = vld [vmem:[%s179 + $0x144] sm:%s172]
                %264 = vst [vmem:[%s180 + $0xa4] sm:%s172] %v263
                %v265 = vld [vmem:[%s179 + $0x148] sm:%s172]
                %266 = vst [vmem:[%s180 + $0xa8] sm:%s172] %v265
                %v267 = vld [vmem:[%s179 + $0x14c] sm:%s172]
                %268 = vst [vmem:[%s180 + $0xac] sm:%s172] %v267
                %v269 = vld [vmem:[%s179 + $0x150] sm:%s172]
                %270 = vst [vmem:[%s180 + $0xb0] sm:%s172] %v269
                %v271 = vld [vmem:[%s179 + $0x154] sm:%s172]
                %272 = vst [vmem:[%s180 + $0xb4] sm:%s172] %v271
                %v273 = vld [vmem:[%s179 + $0x158] sm:%s172]
                %274 = vst [vmem:[%s180 + $0xb8] sm:%s172] %v273
                %v275 = vld [vmem:[%s179 + $0x15c] sm:%s172]
                %276 = vst [vmem:[%s180 + $0xbc] sm:%s172] %v275
                %v277 = vld [vmem:[%s179 + $0x180] sm:%s172]
                %278 = vst [vmem:[%s180 + $0xc0] sm:%s172] %v277
                %v279 = vld [vmem:[%s179 + $0x184] sm:%s172]
                %280 = vst [vmem:[%s180 + $0xc4] sm:%s172] %v279
                %v281 = vld [vmem:[%s179 + $0x188] sm:%s172]
                %282 = vst [vmem:[%s180 + $0xc8] sm:%s172] %v281
                %v283 = vld [vmem:[%s179 + $0x18c] sm:%s172]
                %284 = vst [vmem:[%s180 + $0xcc] sm:%s172] %v283
                %v285 = vld [vmem:[%s179 + $0x190] sm:%s172]
                %286 = vst [vmem:[%s180 + $0xd0] sm:%s172] %v285
                %v287 = vld [vmem:[%s179 + $0x194] sm:%s172]
                %288 = vst [vmem:[%s180 + $0xd4] sm:%s172] %v287
                %v289 = vld [vmem:[%s179 + $0x198] sm:%s172]
                %290 = vst [vmem:[%s180 + $0xd8] sm:%s172] %v289
                %v291 = vld [vmem:[%s179 + $0x19c] sm:%s172]
                %292 = vst [vmem:[%s180 + $0xdc] sm:%s172] %v291
                %v293 = vld [vmem:[%s179 + $0x1c0] sm:%s172]
                %294 = vst [vmem:[%s180 + $0xe0] sm:%s172] %v293
                %v295 = vld [vmem:[%s179 + $0x1c4] sm:%s172]
                %296 = vst [vmem:[%s180 + $0xe4] sm:%s172] %v295
                %v297 = vld [vmem:[%s179 + $0x1c8] sm:%s172]
                %298 = vst [vmem:[%s180 + $0xe8] sm:%s172] %v297
                %v299 = vld [vmem:[%s179 + $0x1cc] sm:%s172]
                %300 = vst [vmem:[%s180 + $0xec] sm:%s172] %v299
                %v301 = vld [vmem:[%s179 + $0x1d0] sm:%s172]
                %302 = vst [vmem:[%s180 + $0xf0] sm:%s172] %v301
                %v303 = vld [vmem:[%s179 + $0x1d4] sm:%s172]
                %304 = vst [vmem:[%s180 + $0xf4] sm:%s172] %v303
                %v305 = vld [vmem:[%s179 + $0x1d8] sm:%s172]
                %306 = vst [vmem:[%s180 + $0xf8] sm:%s172] %v305
                %v307 = vld [vmem:[%s179 + $0x1dc] sm:%s172]
                %308 = vst [vmem:[%s180 + $0xfc] sm:%s172] %v307
              $region45: #{detector3d_forward.2} parent=39 // loop_footer
                %s178 = sadd.s32 1, %s174
              $region46: #{detector3d_forward.2} parent=39 // loop_footer_branch
                %173 = sbr.rel target = $region42
              $region47: #{detector3d_forward.2} parent=39 // loop_exit
                _
            $region40: #{detector3d_forward.2} parent=31 // pred_fallthru
              _
          $region32: #{detector3d_forward.2} parent=27 // pred_fallthru
            _
          %457 = vnop
        $region28: #{detector3d_forward.2} parent=23 // pred_fallthru
          _
        // Predicated region
        $region66: #{detector3d_forward.2} parent=23 // pred_check
          %p458 = pneg %p56
        $region67: #{detector3d_forward.2} parent=23 // pred_check_branch
          %460 = sbr.rel (%p458) target = $region69
        $region68: #{detector3d_forward.2} parent=23 // pred_region
          %s461 = sand.u32 %s46, 1
          %s462 = sand.u32 %s46, 1
          %s463 = smul.addr %s462, 512
          %s464 = scalar_lea.vmem [#allocation3], %s463
          %s465 = smul.u32 8, %s10
          %s466 = smul.addr %s465, 8
          %s467 = scalar_lea.vmem %s1, %s466
          // Predicated region
          $region70: #{detector3d_forward.2} parent=68 // pred_check
            _
          $region71: #{detector3d_forward.2} parent=68 // pred_check_branch
            %469 = sbr.rel (0) target = $region73
          $region72: #{detector3d_forward.2} parent=68 // pred_region
            // Predicated region
            $region74: #{detector3d_forward.2} parent=72 // pred_check
              _
            $region75: #{detector3d_forward.2} parent=72 // pred_check_branch
              %471 = sbr.rel (0) target = $region77
            $region76: #{detector3d_forward.2} parent=72 // pred_region
              // Predicated region
              $region89: #{detector3d_forward.2} parent=76 // pred_check
                _
              $region90: #{detector3d_forward.2} parent=76 // pred_check_branch
                %613 = sbr.rel (0) target = $region92
              $region91: #{detector3d_forward.2} parent=76 // pred_region
                loop: start=0, step=1, limit=1
                $region93: #{detector3d_forward.2} parent=91 // loop_pre_header
                  _
                $region94: #{detector3d_forward.2} parent=91 // loop_header
                  %s615 = sphi 0, %s619
                  %p616 = scmp.ge.s32.totalorder %s615, 1
                  %s620 = sphi %s467, %s467
                  %s621 = sphi %s464, %s464
                $region95: #{detector3d_forward.2} parent=91 // loop_header_branch
                  %618 = sbr.rel (%p616) target = $region99
                $region96: #{detector3d_forward.2} parent=91 // loop_body
                  %v622 = vld [vmem:[%s620] sm:$0xff]
                  %623 = vst [vmem:[%s621] sm:$0xff] %v622
                  %v624 = vld [vmem:[%s620 + $0x8] sm:$0xff]
                  %625 = vst [vmem:[%s621 + $0x8] sm:$0xff] %v624
                  %v626 = vld [vmem:[%s620 + $0x10] sm:$0xff]
                  %627 = vst [vmem:[%s621 + $0x10] sm:$0xff] %v626
                  %v628 = vld [vmem:[%s620 + $0x18] sm:$0xff]
                  %629 = vst [vmem:[%s621 + $0x18] sm:$0xff] %v628
                  %v630 = vld [vmem:[%s620 + $0x20] sm:$0xff]
                  %631 = vst [vmem:[%s621 + $0x20] sm:$0xff] %v630
                  %v632 = vld [vmem:[%s620 + $0x28] sm:$0xff]
                  %633 = vst [vmem:[%s621 + $0x28] sm:$0xff] %v632
                  %v634 = vld [vmem:[%s620 + $0x30] sm:$0xff]
                  %635 = vst [vmem:[%s621 + $0x30] sm:$0xff] %v634
                  %v636 = vld [vmem:[%s620 + $0x38] sm:$0xff]
                  %637 = vst [vmem:[%s621 + $0x38] sm:$0xff] %v636
                  %v638 = vld [vmem:[%s620 + $0x80] sm:$0xff]
                  %639 = vst [vmem:[%s621 + $0x40] sm:$0xff] %v638
                  %v640 = vld [vmem:[%s620 + $0x88] sm:$0xff]
                  %641 = vst [vmem:[%s621 + $0x48] sm:$0xff] %v640
                  %v642 = vld [vmem:[%s620 + $0x90] sm:$0xff]
                  %643 = vst [vmem:[%s621 + $0x50] sm:$0xff] %v642
                  %v644 = vld [vmem:[%s620 + $0x98] sm:$0xff]
                  %645 = vst [vmem:[%s621 + $0x58] sm:$0xff] %v644
                  %v646 = vld [vmem:[%s620 + $0xa0] sm:$0xff]
                  %647 = vst [vmem:[%s621 + $0x60] sm:$0xff] %v646
                  %v648 = vld [vmem:[%s620 + $0xa8] sm:$0xff]
                  %649 = vst [vmem:[%s621 + $0x68] sm:$0xff] %v648
                  %v650 = vld [vmem:[%s620 + $0xb0] sm:$0xff]
                  %651 = vst [vmem:[%s621 + $0x70] sm:$0xff] %v650
                  %v652 = vld [vmem:[%s620 + $0xb8] sm:$0xff]
                  %653 = vst [vmem:[%s621 + $0x78] sm:$0xff] %v652
                  %v654 = vld [vmem:[%s620 + $0x100] sm:$0xff]
                  %655 = vst [vmem:[%s621 + $0x80] sm:$0xff] %v654
                  %v656 = vld [vmem:[%s620 + $0x108] sm:$0xff]
                  %657 = vst [vmem:[%s621 + $0x88] sm:$0xff] %v656
                  %v658 = vld [vmem:[%s620 + $0x110] sm:$0xff]
                  %659 = vst [vmem:[%s621 + $0x90] sm:$0xff] %v658
                  %v660 = vld [vmem:[%s620 + $0x118] sm:$0xff]
                  %661 = vst [vmem:[%s621 + $0x98] sm:$0xff] %v660
                  %v662 = vld [vmem:[%s620 + $0x120] sm:$0xff]
                  %663 = vst [vmem:[%s621 + $0xa0] sm:$0xff] %v662
                  %v664 = vld [vmem:[%s620 + $0x128] sm:$0xff]
                  %665 = vst [vmem:[%s621 + $0xa8] sm:$0xff] %v664
                  %v666 = vld [vmem:[%s620 + $0x130] sm:$0xff]
                  %667 = vst [vmem:[%s621 + $0xb0] sm:$0xff] %v666
                  %v668 = vld [vmem:[%s620 + $0x138] sm:$0xff]
                  %669 = vst [vmem:[%s621 + $0xb8] sm:$0xff] %v668
                  %v670 = vld [vmem:[%s620 + $0x180] sm:$0xff]
                  %671 = vst [vmem:[%s621 + $0xc0] sm:$0xff] %v670
                  %v672 = vld [vmem:[%s620 + $0x188] sm:$0xff]
                  %673 = vst [vmem:[%s621 + $0xc8] sm:$0xff] %v672
                  %v674 = vld [vmem:[%s620 + $0x190] sm:$0xff]
                  %675 = vst [vmem:[%s621 + $0xd0] sm:$0xff] %v674
                  %v676 = vld [vmem:[%s620 + $0x198] sm:$0xff]
                  %677 = vst [vmem:[%s621 + $0xd8] sm:$0xff] %v676
                  %v678 = vld [vmem:[%s620 + $0x1a0] sm:$0xff]
                  %679 = vst [vmem:[%s621 + $0xe0] sm:$0xff] %v678
                  %v680 = vld [vmem:[%s620 + $0x1a8] sm:$0xff]
                  %681 = vst [vmem:[%s621 + $0xe8] sm:$0xff] %v680
                  %v682 = vld [vmem:[%s620 + $0x1b0] sm:$0xff]
                  %683 = vst [vmem:[%s621 + $0xf0] sm:$0xff] %v682
                  %v684 = vld [vmem:[%s620 + $0x1b8] sm:$0xff]
                  %685 = vst [vmem:[%s621 + $0xf8] sm:$0xff] %v684
                  %v686 = vld [vmem:[%s620 + $0x200] sm:$0xff]
                  %687 = vst [vmem:[%s621 + $0x100] sm:$0xff] %v686
                  %v688 = vld [vmem:[%s620 + $0x208] sm:$0xff]
                  %689 = vst [vmem:[%s621 + $0x108] sm:$0xff] %v688
                  %v690 = vld [vmem:[%s620 + $0x210] sm:$0xff]
                  %691 = vst [vmem:[%s621 + $0x110] sm:$0xff] %v690
                  %v692 = vld [vmem:[%s620 + $0x218] sm:$0xff]
                  %693 = vst [vmem:[%s621 + $0x118] sm:$0xff] %v692
                  %v694 = vld [vmem:[%s620 + $0x220] sm:$0xff]
                  %695 = vst [vmem:[%s621 + $0x120] sm:$0xff] %v694
                  %v696 = vld [vmem:[%s620 + $0x228] sm:$0xff]
                  %697 = vst [vmem:[%s621 + $0x128] sm:$0xff] %v696
                  %v698 = vld [vmem:[%s620 + $0x230] sm:$0xff]
                  %699 = vst [vmem:[%s621 + $0x130] sm:$0xff] %v698
                  %v700 = vld [vmem:[%s620 + $0x238] sm:$0xff]
                  %701 = vst [vmem:[%s621 + $0x138] sm:$0xff] %v700
                  %v702 = vld [vmem:[%s620 + $0x280] sm:$0xff]
                  %703 = vst [vmem:[%s621 + $0x140] sm:$0xff] %v702
                  %v704 = vld [vmem:[%s620 + $0x288] sm:$0xff]
                  %705 = vst [vmem:[%s621 + $0x148] sm:$0xff] %v704
                  %v706 = vld [vmem:[%s620 + $0x290] sm:$0xff]
                  %707 = vst [vmem:[%s621 + $0x150] sm:$0xff] %v706
                  %v708 = vld [vmem:[%s620 + $0x298] sm:$0xff]
                  %709 = vst [vmem:[%s621 + $0x158] sm:$0xff] %v708
                  %v710 = vld [vmem:[%s620 + $0x2a0] sm:$0xff]
                  %711 = vst [vmem:[%s621 + $0x160] sm:$0xff] %v710
                  %v712 = vld [vmem:[%s620 + $0x2a8] sm:$0xff]
                  %713 = vst [vmem:[%s621 + $0x168] sm:$0xff] %v712
                  %v714 = vld [vmem:[%s620 + $0x2b0] sm:$0xff]
                  %715 = vst [vmem:[%s621 + $0x170] sm:$0xff] %v714
                  %v716 = vld [vmem:[%s620 + $0x2b8] sm:$0xff]
                  %717 = vst [vmem:[%s621 + $0x178] sm:$0xff] %v716
                  %v718 = vld [vmem:[%s620 + $0x300] sm:$0xff]
                  %719 = vst [vmem:[%s621 + $0x180] sm:$0xff] %v718
                  %v720 = vld [vmem:[%s620 + $0x308] sm:$0xff]
                  %721 = vst [vmem:[%s621 + $0x188] sm:$0xff] %v720
                  %v722 = vld [vmem:[%s620 + $0x310] sm:$0xff]
                  %723 = vst [vmem:[%s621 + $0x190] sm:$0xff] %v722
                  %v724 = vld [vmem:[%s620 + $0x318] sm:$0xff]
                  %725 = vst [vmem:[%s621 + $0x198] sm:$0xff] %v724
                  %v726 = vld [vmem:[%s620 + $0x320] sm:$0xff]
                  %727 = vst [vmem:[%s621 + $0x1a0] sm:$0xff] %v726
                  %v728 = vld [vmem:[%s620 + $0x328] sm:$0xff]
                  %729 = vst [vmem:[%s621 + $0x1a8] sm:$0xff] %v728
                  %v730 = vld [vmem:[%s620 + $0x330] sm:$0xff]
                  %731 = vst [vmem:[%s621 + $0x1b0] sm:$0xff] %v730
                  %v732 = vld [vmem:[%s620 + $0x338] sm:$0xff]
                  %733 = vst [vmem:[%s621 + $0x1b8] sm:$0xff] %v732
                  %v734 = vld [vmem:[%s620 + $0x380] sm:$0xff]
                  %735 = vst [vmem:[%s621 + $0x1c0] sm:$0xff] %v734
                  %v736 = vld [vmem:[%s620 + $0x388] sm:$0xff]
                  %737 = vst [vmem:[%s621 + $0x1c8] sm:$0xff] %v736
                  %v738 = vld [vmem:[%s620 + $0x390] sm:$0xff]
                  %739 = vst [vmem:[%s621 + $0x1d0] sm:$0xff] %v738
                  %v740 = vld [vmem:[%s620 + $0x398] sm:$0xff]
                  %741 = vst [vmem:[%s621 + $0x1d8] sm:$0xff] %v740
                  %v742 = vld [vmem:[%s620 + $0x3a0] sm:$0xff]
                  %743 = vst [vmem:[%s621 + $0x1e0] sm:$0xff] %v742
                  %v744 = vld [vmem:[%s620 + $0x3a8] sm:$0xff]
                  %745 = vst [vmem:[%s621 + $0x1e8] sm:$0xff] %v744
                  %v746 = vld [vmem:[%s620 + $0x3b0] sm:$0xff]
                  %747 = vst [vmem:[%s621 + $0x1f0] sm:$0xff] %v746
                  %v748 = vld [vmem:[%s620 + $0x3b8] sm:$0xff]
                  %749 = vst [vmem:[%s621 + $0x1f8] sm:$0xff] %v748
                $region97: #{detector3d_forward.2} parent=91 // loop_footer
                  %s619 = sadd.s32 1, %s615
                $region98: #{detector3d_forward.2} parent=91 // loop_footer_branch
                  %614 = sbr.rel target = $region94
                $region99: #{detector3d_forward.2} parent=91 // loop_exit
                  _
              $region92: #{detector3d_forward.2} parent=76 // pred_fallthru
                _
              // Predicated region
              $region100: #{detector3d_forward.2} parent=76 // pred_check
                _
              $region101: #{detector3d_forward.2} parent=76 // pred_check_branch
                %751 = sbr.rel target = $region103
              $region102: #{detector3d_forward.2} parent=76 // pred_region
                _
              $region103: #{detector3d_forward.2} parent=76 // pred_fallthru
                _
            $region77: #{detector3d_forward.2} parent=72 // pred_fallthru
              _
            // Predicated region
            $region78: #{detector3d_forward.2} parent=72 // pred_check
              _
            $region79: #{detector3d_forward.2} parent=72 // pred_check_branch
              %473 = sbr.rel target = $region81
            $region80: #{detector3d_forward.2} parent=72 // pred_region
              %s475 = ssub.s32 256, 1
              loop: start=0, step=1, limit=1
              $region82: #{detector3d_forward.2} parent=80 // loop_pre_header
                _
              $region83: #{detector3d_forward.2} parent=80 // loop_header
                %s477 = sphi 0, %s481
                %p478 = scmp.ge.s32.totalorder %s477, 1
                %s482 = sphi %s467, %s467
                %s483 = sphi %s464, %s464
              $region84: #{detector3d_forward.2} parent=80 // loop_header_branch
                %480 = sbr.rel (%p478) target = $region88
              $region85: #{detector3d_forward.2} parent=80 // loop_body
                %v484 = vld [vmem:[%s482] sm:%s475]
                %485 = vst [vmem:[%s483] sm:%s475] %v484
                %v486 = vld [vmem:[%s482 + $0x8] sm:%s475]
                %487 = vst [vmem:[%s483 + $0x8] sm:%s475] %v486
                %v488 = vld [vmem:[%s482 + $0x10] sm:%s475]
                %489 = vst [vmem:[%s483 + $0x10] sm:%s475] %v488
                %v490 = vld [vmem:[%s482 + $0x18] sm:%s475]
                %491 = vst [vmem:[%s483 + $0x18] sm:%s475] %v490
                %v492 = vld [vmem:[%s482 + $0x20] sm:%s475]
                %493 = vst [vmem:[%s483 + $0x20] sm:%s475] %v492
                %v494 = vld [vmem:[%s482 + $0x28] sm:%s475]
                %495 = vst [vmem:[%s483 + $0x28] sm:%s475] %v494
                %v496 = vld [vmem:[%s482 + $0x30] sm:%s475]
                %497 = vst [vmem:[%s483 + $0x30] sm:%s475] %v496
                %v498 = vld [vmem:[%s482 + $0x38] sm:%s475]
                %499 = vst [vmem:[%s483 + $0x38] sm:%s475] %v498
                %v500 = vld [vmem:[%s482 + $0x80] sm:%s475]
                %501 = vst [vmem:[%s483 + $0x40] sm:%s475] %v500
                %v502 = vld [vmem:[%s482 + $0x88] sm:%s475]
                %503 = vst [vmem:[%s483 + $0x48] sm:%s475] %v502
                %v504 = vld [vmem:[%s482 + $0x90] sm:%s475]
                %505 = vst [vmem:[%s483 + $0x50] sm:%s475] %v504
                %v506 = vld [vmem:[%s482 + $0x98] sm:%s475]
                %507 = vst [vmem:[%s483 + $0x58] sm:%s475] %v506
                %v508 = vld [vmem:[%s482 + $0xa0] sm:%s475]
                %509 = vst [vmem:[%s483 + $0x60] sm:%s475] %v508
                %v510 = vld [vmem:[%s482 + $0xa8] sm:%s475]
                %511 = vst [vmem:[%s483 + $0x68] sm:%s475] %v510
                %v512 = vld [vmem:[%s482 + $0xb0] sm:%s475]
                %513 = vst [vmem:[%s483 + $0x70] sm:%s475] %v512
                %v514 = vld [vmem:[%s482 + $0xb8] sm:%s475]
                %515 = vst [vmem:[%s483 + $0x78] sm:%s475] %v514
                %v516 = vld [vmem:[%s482 + $0x100] sm:%s475]
                %517 = vst [vmem:[%s483 + $0x80] sm:%s475] %v516
                %v518 = vld [vmem:[%s482 + $0x108] sm:%s475]
                %519 = vst [vmem:[%s483 + $0x88] sm:%s475] %v518
                %v520 = vld [vmem:[%s482 + $0x110] sm:%s475]
                %521 = vst [vmem:[%s483 + $0x90] sm:%s475] %v520
                %v522 = vld [vmem:[%s482 + $0x118] sm:%s475]
                %523 = vst [vmem:[%s483 + $0x98] sm:%s475] %v522
                %v524 = vld [vmem:[%s482 + $0x120] sm:%s475]
                %525 = vst [vmem:[%s483 + $0xa0] sm:%s475] %v524
                %v526 = vld [vmem:[%s482 + $0x128] sm:%s475]
                %527 = vst [vmem:[%s483 + $0xa8] sm:%s475] %v526
                %v528 = vld [vmem:[%s482 + $0x130] sm:%s475]
                %529 = vst [vmem:[%s483 + $0xb0] sm:%s475] %v528
                %v530 = vld [vmem:[%s482 + $0x138] sm:%s475]
                %531 = vst [vmem:[%s483 + $0xb8] sm:%s475] %v530
                %v532 = vld [vmem:[%s482 + $0x180] sm:%s475]
                %533 = vst [vmem:[%s483 + $0xc0] sm:%s475] %v532
                %v534 = vld [vmem:[%s482 + $0x188] sm:%s475]
                %535 = vst [vmem:[%s483 + $0xc8] sm:%s475] %v534
                %v536 = vld [vmem:[%s482 + $0x190] sm:%s475]
                %537 = vst [vmem:[%s483 + $0xd0] sm:%s475] %v536
                %v538 = vld [vmem:[%s482 + $0x198] sm:%s475]
                %539 = vst [vmem:[%s483 + $0xd8] sm:%s475] %v538
                %v540 = vld [vmem:[%s482 + $0x1a0] sm:%s475]
                %541 = vst [vmem:[%s483 + $0xe0] sm:%s475] %v540
                %v542 = vld [vmem:[%s482 + $0x1a8] sm:%s475]
                %543 = vst [vmem:[%s483 + $0xe8] sm:%s475] %v542
                %v544 = vld [vmem:[%s482 + $0x1b0] sm:%s475]
                %545 = vst [vmem:[%s483 + $0xf0] sm:%s475] %v544
                %v546 = vld [vmem:[%s482 + $0x1b8] sm:%s475]
                %547 = vst [vmem:[%s483 + $0xf8] sm:%s475] %v546
                %v548 = vld [vmem:[%s482 + $0x200] sm:%s475]
                %549 = vst [vmem:[%s483 + $0x100] sm:%s475] %v548
                %v550 = vld [vmem:[%s482 + $0x208] sm:%s475]
                %551 = vst [vmem:[%s483 + $0x108] sm:%s475] %v550
                %v552 = vld [vmem:[%s482 + $0x210] sm:%s475]
                %553 = vst [vmem:[%s483 + $0x110] sm:%s475] %v552
                %v554 = vld [vmem:[%s482 + $0x218] sm:%s475]
                %555 = vst [vmem:[%s483 + $0x118] sm:%s475] %v554
                %v556 = vld [vmem:[%s482 + $0x220] sm:%s475]
                %557 = vst [vmem:[%s483 + $0x120] sm:%s475] %v556
                %v558 = vld [vmem:[%s482 + $0x228] sm:%s475]
                %559 = vst [vmem:[%s483 + $0x128] sm:%s475] %v558
                %v560 = vld [vmem:[%s482 + $0x230] sm:%s475]
                %561 = vst [vmem:[%s483 + $0x130] sm:%s475] %v560
                %v562 = vld [vmem:[%s482 + $0x238] sm:%s475]
                %563 = vst [vmem:[%s483 + $0x138] sm:%s475] %v562
                %v564 = vld [vmem:[%s482 + $0x280] sm:%s475]
                %565 = vst [vmem:[%s483 + $0x140] sm:%s475] %v564
                %v566 = vld [vmem:[%s482 + $0x288] sm:%s475]
                %567 = vst [vmem:[%s483 + $0x148] sm:%s475] %v566
                %v568 = vld [vmem:[%s482 + $0x290] sm:%s475]
                %569 = vst [vmem:[%s483 + $0x150] sm:%s475] %v568
                %v570 = vld [vmem:[%s482 + $0x298] sm:%s475]
                %571 = vst [vmem:[%s483 + $0x158] sm:%s475] %v570
                %v572 = vld [vmem:[%s482 + $0x2a0] sm:%s475]
                %573 = vst [vmem:[%s483 + $0x160] sm:%s475] %v572
                %v574 = vld [vmem:[%s482 + $0x2a8] sm:%s475]
                %575 = vst [vmem:[%s483 + $0x168] sm:%s475] %v574
                %v576 = vld [vmem:[%s482 + $0x2b0] sm:%s475]
                %577 = vst [vmem:[%s483 + $0x170] sm:%s475] %v576
                %v578 = vld [vmem:[%s482 + $0x2b8] sm:%s475]
                %579 = vst [vmem:[%s483 + $0x178] sm:%s475] %v578
                %v580 = vld [vmem:[%s482 + $0x300] sm:%s475]
                %581 = vst [vmem:[%s483 + $0x180] sm:%s475] %v580
                %v582 = vld [vmem:[%s482 + $0x308] sm:%s475]
                %583 = vst [vmem:[%s483 + $0x188] sm:%s475] %v582
                %v584 = vld [vmem:[%s482 + $0x310] sm:%s475]
                %585 = vst [vmem:[%s483 + $0x190] sm:%s475] %v584
                %v586 = vld [vmem:[%s482 + $0x318] sm:%s475]
                %587 = vst [vmem:[%s483 + $0x198] sm:%s475] %v586
                %v588 = vld [vmem:[%s482 + $0x320] sm:%s475]
                %589 = vst [vmem:[%s483 + $0x1a0] sm:%s475] %v588
                %v590 = vld [vmem:[%s482 + $0x328] sm:%s475]
                %591 = vst [vmem:[%s483 + $0x1a8] sm:%s475] %v590
                %v592 = vld [vmem:[%s482 + $0x330] sm:%s475]
                %593 = vst [vmem:[%s483 + $0x1b0] sm:%s475] %v592
                %v594 = vld [vmem:[%s482 + $0x338] sm:%s475]
                %595 = vst [vmem:[%s483 + $0x1b8] sm:%s475] %v594
                %v596 = vld [vmem:[%s482 + $0x380] sm:%s475]
                %597 = vst [vmem:[%s483 + $0x1c0] sm:%s475] %v596
                %v598 = vld [vmem:[%s482 + $0x388] sm:%s475]
                %599 = vst [vmem:[%s483 + $0x1c8] sm:%s475] %v598
                %v600 = vld [vmem:[%s482 + $0x390] sm:%s475]
                %601 = vst [vmem:[%s483 + $0x1d0] sm:%s475] %v600
                %v602 = vld [vmem:[%s482 + $0x398] sm:%s475]
                %603 = vst [vmem:[%s483 + $0x1d8] sm:%s475] %v602
                %v604 = vld [vmem:[%s482 + $0x3a0] sm:%s475]
                %605 = vst [vmem:[%s483 + $0x1e0] sm:%s475] %v604
                %v606 = vld [vmem:[%s482 + $0x3a8] sm:%s475]
                %607 = vst [vmem:[%s483 + $0x1e8] sm:%s475] %v606
                %v608 = vld [vmem:[%s482 + $0x3b0] sm:%s475]
                %609 = vst [vmem:[%s483 + $0x1f0] sm:%s475] %v608
                %v610 = vld [vmem:[%s482 + $0x3b8] sm:%s475]
                %611 = vst [vmem:[%s483 + $0x1f8] sm:%s475] %v610
              $region86: #{detector3d_forward.2} parent=80 // loop_footer
                %s481 = sadd.s32 1, %s477
              $region87: #{detector3d_forward.2} parent=80 // loop_footer_branch
                %476 = sbr.rel target = $region83
              $region88: #{detector3d_forward.2} parent=80 // loop_exit
                _
            $region81: #{detector3d_forward.2} parent=72 // pred_fallthru
              _
          $region73: #{detector3d_forward.2} parent=68 // pred_fallthru
            _
          %752 = vnop
        $region69: #{detector3d_forward.2} parent=23 // pred_fallthru
          _
      $region24: #{detector3d_forward.2} parent=5 // pred_fallthru
        _
      %p753 = scmp.le.s32.totalorder 1, %s10
      %p754 = scmp.lt.s32.totalorder %s10, 3
      %p755 = pnand %p753, %p754
      %p756 = pneg %p755
      // Predicated region
      $region104: #{detector3d_forward.2} parent=5 // pred_check
        _
      $region105: #{detector3d_forward.2} parent=5 // pred_check_branch
        %758 = sbr.rel (%p755) target = $region107
      $region106: #{detector3d_forward.2} parent=5 // pred_region
        %s759 = ssub.s32 %s10, 1
        %s760 = sand.u32 %s23, 1
        %s761 = sand.u32 %s23, 1
        %s762 = smul.addr %s761, 256
        %s763 = scalar_lea.vmem [#allocation2], %s762
        // Predicated region
        $region108: #{detector3d_forward.2} parent=106 // pred_check
          %p764 = pneg %p36
        $region109: #{detector3d_forward.2} parent=106 // pred_check_branch
          %766 = sbr.rel (%p764) target = $region111
        $region110: #{detector3d_forward.2} parent=106 // pred_region
          _
        $region111: #{detector3d_forward.2} parent=106 // pred_fallthru
          _
        %s767 = sand.u32 %s49, 1
        %s768 = sand.u32 %s49, 1
        %s769 = smul.addr %s768, 512
        %s770 = scalar_lea.vmem [#allocation3], %s769
        // Predicated region
        $region112: #{detector3d_forward.2} parent=106 // pred_check
          %p771 = pneg %p62
        $region113: #{detector3d_forward.2} parent=106 // pred_check_branch
          %773 = sbr.rel (%p771) target = $region115
        $region114: #{detector3d_forward.2} parent=106 // pred_region
          _
        $region115: #{detector3d_forward.2} parent=106 // pred_fallthru
          _
        %s774 = sand.u32 %s23, 1
        %s775 = sand.u32 %s23, 1
        %s776 = smul.addr %s775, 256
        %s777 = scalar_lea.vmem [#allocation2], %s776
        %p778 = pneg %p36
        %p779 = pneg %p33
        %s780 = sand.u32 %s49, 1
        %s781 = sand.u32 %s49, 1
        %s782 = smul.addr %s781, 512
        %s783 = scalar_lea.vmem [#allocation3], %s782
        %p784 = pneg %p62
        %p785 = pneg %p59
        %p786 = pneg %p83
        %p787 = pneg %p80
        %p788 = pneg %p104
        %p789 = pneg %p101
        %p790 = pneg %p130
        %p791 = pneg %p127
        %s792 = smul.u32 8, %s15
        %p793 = scmp.lt.s32.totalorder %s792, 15
        %s794 = scalar_select %p793, %s792, 15
        %s795 = smul.addr %s794, 4
        %s796 = scalar_lea.vmem %s4, %s795
        %s797 = smul.u32 8, %s15
        %s798 = smul.u32 8, %s15
        %s799 = smul.u32 8, %s15
        %p800 = scmp.lt.s32.totalorder %s799, 15
        %s801 = scalar_select %p800, %s799, 15
        %s802 = smul.addr %s801, 4
        %s803 = scalar_lea.vmem %s4, %s802
        %s804 = smul.u32 8, %s15
        %v806 = vld [vmem:[%s763] sm:$0xf]
        %v807 = vld [vmem:[%s763 + $0x4] sm:$0xf]
        %v808 = vld [vmem:[%s763 + $0x8] sm:$0xf]
        %v809 = vld [vmem:[%s763 + $0xc] sm:$0xf]
        %v810 = vld [vmem:[%s763 + $0x10] sm:$0xf]
        %v811 = vld [vmem:[%s763 + $0x14] sm:$0xf]
        %v812 = vld [vmem:[%s763 + $0x18] sm:$0xf]
        %v813 = vld [vmem:[%s763 + $0x1c] sm:$0xf]
        %v814 = vld [vmem:[%s2] sm:$0xf]
        %v815 = vld [vmem:[%s3] sm:$0x1]
        %v817 = vperm.slane %v815, 0
        %v827 = vunpack.c.l.b16 %v806
        %v828 = vunpack.c.l.b16 %v807
        %v829 = vunpack.c.l.b16 %v808
        %v830 = vunpack.c.l.b16 %v809
        %v831 = vunpack.c.l.b16 %v810
        %v832 = vunpack.c.l.b16 %v811
        %v833 = vunpack.c.l.b16 %v812
        %v834 = vunpack.c.l.b16 %v813
        %v835 = vpack.c.b16 %v828, %v827
        %v836 = vpack.c.b16 %v830, %v829
        %v837 = vpack.c.b16 %v832, %v831
        %v838 = vpack.c.b16 %v834, %v833
        %vm839 = vcmask 64512
        %v841 = vsel %vm839, %v835, 0
        %v844 = vsel %vm839, %v836, 0
        %v847 = vsel %vm839, %v837, 0
        %v850 = vsel %vm839, %v838, 0
        %vm852 = vcmask 1043456
        %v854 = vsel %vm852, %v814, 0
        %856 = vmatpush.bf16.msra.mxu0 0
        %857 = vmatpush.bf16.msra.mxu0 0
        %858 = vmatpush.bf16.msra.mxu0 0
        %859 = vmatpush.bf16.msra.mxu0 0
        %860 = vmatpush.bf16.msra.mxu0 0
        %861 = vmatpush.bf16.msra.mxu0 0
        %862 = vmatpush.bf16.msra.mxu0 0
        %863 = vmatpush.bf16.msra.mxu0 %v854
        %864 = vmatmul.bf16.gmra.mxu0 %v841
        %v865 = vpop.f32.mrf.mxu0
        %v866 = vadd.f32 %v817, %v865
        %v867 = vpop.f32.mrf.mxu0
        %v868 = vadd.f32 %v817, %v867
        %869 = vmatmul.bf16.gmra.mxu0 %v844
        %v870 = vpop.f32.mrf.mxu0
        %v871 = vadd.f32 %v817, %v870
        %v872 = vpop.f32.mrf.mxu0
        %v873 = vadd.f32 %v817, %v872
        %874 = vmatmul.bf16.gmra.mxu0 %v847
        %v875 = vpop.f32.mrf.mxu0
        %v876 = vadd.f32 %v817, %v875
        %v877 = vpop.f32.mrf.mxu0
        %v878 = vadd.f32 %v817, %v877
        %879 = vmatmul.bf16.gmra.mxu0 %v850
        %v880 = vpop.f32.mrf.mxu0
        %v881 = vadd.f32 %v817, %v880
        %v882 = vpop.f32.mrf.mxu0
        %v883 = vadd.f32 %v817, %v882
        %884 = vdwg.mxu0
        %v885 = vmax.f32 %v866, 0.0
        %v886 = vmax.f32 %v868, 0.0
        %v887 = vmax.f32 %v871, 0.0
        %v888 = vmax.f32 %v873, 0.0
        %v889 = vmax.f32 %v876, 0.0
        %v890 = vmax.f32 %v878, 0.0
        %v891 = vmax.f32 %v881, 0.0
        %v892 = vmax.f32 %v883, 0.0
        %v893 = vld [vmem:[%s770] sm:$0xff]
        %v894 = vld [vmem:[%s770 + $0x8] sm:$0xff]
        %v895 = vld [vmem:[%s770 + $0x10] sm:$0xff]
        %v896 = vld [vmem:[%s770 + $0x18] sm:$0xff]
        %v897 = vld [vmem:[%s770 + $0x20] sm:$0xff]
        %v898 = vld [vmem:[%s770 + $0x28] sm:$0xff]
        %v899 = vld [vmem:[%s770 + $0x30] sm:$0xff]
        %v900 = vld [vmem:[%s770 + $0x38] sm:$0xff]
        %902 = vset.pattern.permute.xlu0 0
        %903 = vperm.xlu0 %902, %v893
        %v904 = vpop.permute.xlu0 %903
        %907 = vset.pattern.permute.xlu0 0
        %908 = vperm.xlu0 %907, %v894
        %v909 = vpop.permute.xlu0 %908
        %912 = vset.pattern.permute.xlu0 0
        %913 = vperm.xlu0 %912, %v895
        %v914 = vpop.permute.xlu0 %913
        %917 = vset.pattern.permute.xlu0 0
        %918 = vperm.xlu0 %917, %v896
        %v919 = vpop.permute.xlu0 %918
        %922 = vset.pattern.permute.xlu0 0
        %923 = vperm.xlu0 %922, %v897
        %v924 = vpop.permute.xlu0 %923
        %927 = vset.pattern.permute.xlu0 0
        %928 = vperm.xlu0 %927, %v898
        %v929 = vpop.permute.xlu0 %928
        %932 = vset.pattern.permute.xlu0 0
        %933 = vperm.xlu0 %932, %v899
        %v934 = vpop.permute.xlu0 %933
        %937 = vset.pattern.permute.xlu0 0
        %938 = vperm.xlu0 %937, %v900
        %v939 = vpop.permute.xlu0 %938
        %v941 = vmul.f32 %v885, %v904
        %v942 = vmul.f32 %v886, %v909
        %v943 = vmul.f32 %v887, %v914
        %v944 = vmul.f32 %v888, %v919
        %v945 = vmul.f32 %v889, %v924
        %v946 = vmul.f32 %v890, %v929
        %v947 = vmul.f32 %v891, %v934
        %v948 = vmul.f32 %v892, %v939
        %s949 = scalar_lea.vmem %s763, 32 [#allocation2]
        %v950 = vld [vmem:[%s949] sm:$0xf]
        %v951 = vld [vmem:[%s949 + $0x4] sm:$0xf]
        %v952 = vld [vmem:[%s949 + $0x8] sm:$0xf]
        %v953 = vld [vmem:[%s949 + $0xc] sm:$0xf]
        %v954 = vld [vmem:[%s949 + $0x10] sm:$0xf]
        %v955 = vld [vmem:[%s949 + $0x14] sm:$0xf]
        %v956 = vld [vmem:[%s949 + $0x18] sm:$0xf]
        %v957 = vld [vmem:[%s949 + $0x1c] sm:$0xf]
        %v966 = vunpack.c.l.b16 %v950
        %v967 = vunpack.c.l.b16 %v951
        %v968 = vunpack.c.l.b16 %v952
        %v969 = vunpack.c.l.b16 %v953
        %v970 = vunpack.c.l.b16 %v954
        %v971 = vunpack.c.l.b16 %v955
        %v972 = vunpack.c.l.b16 %v956
        %v973 = vunpack.c.l.b16 %v957
        %v974 = vpack.c.b16 %v967, %v966
        %v975 = vpack.c.b16 %v969, %v968
        %v976 = vpack.c.b16 %v971, %v970
        %v977 = vpack.c.b16 %v973, %v972
        %v979 = vsel %vm839, %v974, 0
        %v982 = vsel %vm839, %v975, 0
        %v985 = vsel %vm839, %v976, 0
        %v988 = vsel %vm839, %v977, 0
        %990 = vmatpush.bf16.msra.mxu0 0
        %991 = vmatpush.bf16.msra.mxu0 0
        %992 = vmatpush.bf16.msra.mxu0 0
        %993 = vmatpush.bf16.msra.mxu0 0
        %994 = vmatpush.bf16.msra.mxu0 0
        %995 = vmatpush.bf16.msra.mxu0 0
        %996 = vmatpush.bf16.msra.mxu0 0
        %997 = vmatpush.bf16.msra.mxu0 %v854
        %998 = vmatmul.bf16.gmra.mxu0 %v979
        %v999 = vpop.f32.mrf.mxu0
        %v1000 = vadd.f32 %v817, %v999
        %v1001 = vpop.f32.mrf.mxu0
        %v1002 = vadd.f32 %v817, %v1001
        %1003 = vmatmul.bf16.gmra.mxu0 %v982
        %v1004 = vpop.f32.mrf.mxu0
        %v1005 = vadd.f32 %v817, %v1004
        %v1006 = vpop.f32.mrf.mxu0
        %v1007 = vadd.f32 %v817, %v1006
        %1008 = vmatmul.bf16.gmra.mxu0 %v985
        %v1009 = vpop.f32.mrf.mxu0
        %v1010 = vadd.f32 %v817, %v1009
        %v1011 = vpop.f32.mrf.mxu0
        %v1012 = vadd.f32 %v817, %v1011
        %1013 = vmatmul.bf16.gmra.mxu0 %v988
        %v1014 = vpop.f32.mrf.mxu0
        %v1015 = vadd.f32 %v817, %v1014
        %v1016 = vpop.f32.mrf.mxu0
        %v1017 = vadd.f32 %v817, %v1016
        %1018 = vdwg.mxu0
        %v1019 = vmax.f32 %v1000, 0.0
        %v1020 = vmax.f32 %v1002, 0.0
        %v1021 = vmax.f32 %v1005, 0.0
        %v1022 = vmax.f32 %v1007, 0.0
        %v1023 = vmax.f32 %v1010, 0.0
        %v1024 = vmax.f32 %v1012, 0.0
        %v1025 = vmax.f32 %v1015, 0.0
        %v1026 = vmax.f32 %v1017, 0.0
        %s1027 = scalar_lea.vmem %s770, 64 [#allocation3]
        %v1028 = vld [vmem:[%s1027] sm:$0xff]
        %v1029 = vld [vmem:[%s1027 + $0x8] sm:$0xff]
        %v1030 = vld [vmem:[%s1027 + $0x10] sm:$0xff]
        %v1031 = vld [vmem:[%s1027 + $0x18] sm:$0xff]
        %v1032 = vld [vmem:[%s1027 + $0x20] sm:$0xff]
        %v1033 = vld [vmem:[%s1027 + $0x28] sm:$0xff]
        %v1034 = vld [vmem:[%s1027 + $0x30] sm:$0xff]
        %v1035 = vld [vmem:[%s1027 + $0x38] sm:$0xff]
        %1037 = vset.pattern.permute.xlu0 0
        %1038 = vperm.xlu0 %1037, %v1028
        %v1039 = vpop.permute.xlu0 %1038
        %1042 = vset.pattern.permute.xlu0 0
        %1043 = vperm.xlu0 %1042, %v1029
        %v1044 = vpop.permute.xlu0 %1043
        %1047 = vset.pattern.permute.xlu0 0
        %1048 = vperm.xlu0 %1047, %v1030
        %v1049 = vpop.permute.xlu0 %1048
        %1052 = vset.pattern.permute.xlu0 0
        %1053 = vperm.xlu0 %1052, %v1031
        %v1054 = vpop.permute.xlu0 %1053
        %1057 = vset.pattern.permute.xlu0 0
        %1058 = vperm.xlu0 %1057, %v1032
        %v1059 = vpop.permute.xlu0 %1058
        %1062 = vset.pattern.permute.xlu0 0
        %1063 = vperm.xlu0 %1062, %v1033
        %v1064 = vpop.permute.xlu0 %1063
        %1067 = vset.pattern.permute.xlu0 0
        %1068 = vperm.xlu0 %1067, %v1034
        %v1069 = vpop.permute.xlu0 %1068
        %1072 = vset.pattern.permute.xlu0 0
        %1073 = vperm.xlu0 %1072, %v1035
        %v1074 = vpop.permute.xlu0 %1073
        %v1076 = vmul.f32 %v1019, %v1039
        %v1077 = vmul.f32 %v1020, %v1044
        %v1078 = vmul.f32 %v1021, %v1049
        %v1079 = vmul.f32 %v1022, %v1054
        %v1080 = vmul.f32 %v1023, %v1059
        %v1081 = vmul.f32 %v1024, %v1064
        %v1082 = vmul.f32 %v1025, %v1069
        %v1083 = vmul.f32 %v1026, %v1074
        %s1084 = scalar_lea.vmem %s763, 64 [#allocation2]
        %v1085 = vld [vmem:[%s1084] sm:$0xf]
        %v1086 = vld [vmem:[%s1084 + $0x4] sm:$0xf]
        %v1087 = vld [vmem:[%s1084 + $0x8] sm:$0xf]
        %v1088 = vld [vmem:[%s1084 + $0xc] sm:$0xf]
        %v1089 = vld [vmem:[%s1084 + $0x10] sm:$0xf]
        %v1090 = vld [vmem:[%s1084 + $0x14] sm:$0xf]
        %v1091 = vld [vmem:[%s1084 + $0x18] sm:$0xf]
        %v1092 = vld [vmem:[%s1084 + $0x1c] sm:$0xf]
        %v1101 = vunpack.c.l.b16 %v1085
        %v1102 = vunpack.c.l.b16 %v1086
        %v1103 = vunpack.c.l.b16 %v1087
        %v1104 = vunpack.c.l.b16 %v1088
        %v1105 = vunpack.c.l.b16 %v1089
        %v1106 = vunpack.c.l.b16 %v1090
        %v1107 = vunpack.c.l.b16 %v1091
        %v1108 = vunpack.c.l.b16 %v1092
        %v1109 = vpack.c.b16 %v1102, %v1101
        %v1110 = vpack.c.b16 %v1104, %v1103
        %v1111 = vpack.c.b16 %v1106, %v1105
        %v1112 = vpack.c.b16 %v1108, %v1107
        %v1114 = vsel %vm839, %v1109, 0
        %v1117 = vsel %vm839, %v1110, 0
        %v1120 = vsel %vm839, %v1111, 0
        %v1123 = vsel %vm839, %v1112, 0
        %1125 = vmatpush.bf16.msra.mxu0 0
        %1126 = vmatpush.bf16.msra.mxu0 0
        %1127 = vmatpush.bf16.msra.mxu0 0
        %1128 = vmatpush.bf16.msra.mxu0 0
        %1129 = vmatpush.bf16.msra.mxu0 0
        %1130 = vmatpush.bf16.msra.mxu0 0
        %1131 = vmatpush.bf16.msra.mxu0 0
        %1132 = vmatpush.bf16.msra.mxu0 %v854
        %1133 = vmatmul.bf16.gmra.mxu0 %v1114
        %v1134 = vpop.f32.mrf.mxu0
        %v1135 = vadd.f32 %v817, %v1134
        %v1136 = vpop.f32.mrf.mxu0
        %v1137 = vadd.f32 %v817, %v1136
        %1138 = vmatmul.bf16.gmra.mxu0 %v1117
        %v1139 = vpop.f32.mrf.mxu0
        %v1140 = vadd.f32 %v817, %v1139
        %v1141 = vpop.f32.mrf.mxu0
        %v1142 = vadd.f32 %v817, %v1141
        %1143 = vmatmul.bf16.gmra.mxu0 %v1120
        %v1144 = vpop.f32.mrf.mxu0
        %v1145 = vadd.f32 %v817, %v1144
        %v1146 = vpop.f32.mrf.mxu0
        %v1147 = vadd.f32 %v817, %v1146
        %1148 = vmatmul.bf16.gmra.mxu0 %v1123
        %v1149 = vpop.f32.mrf.mxu0
        %v1150 = vadd.f32 %v817, %v1149
        %v1151 = vpop.f32.mrf.mxu0
        %v1152 = vadd.f32 %v817, %v1151
        %1153 = vdwg.mxu0
        %v1154 = vmax.f32 %v1135, 0.0
        %v1155 = vmax.f32 %v1137, 0.0
        %v1156 = vmax.f32 %v1140, 0.0
        %v1157 = vmax.f32 %v1142, 0.0
        %v1158 = vmax.f32 %v1145, 0.0
        %v1159 = vmax.f32 %v1147, 0.0
        %v1160 = vmax.f32 %v1150, 0.0
        %v1161 = vmax.f32 %v1152, 0.0
        %s1162 = scalar_lea.vmem %s770, 128 [#allocation3]
        %v1163 = vld [vmem:[%s1162] sm:$0xff]
        %v1164 = vld [vmem:[%s1162 + $0x8] sm:$0xff]
        %v1165 = vld [vmem:[%s1162 + $0x10] sm:$0xff]
        %v1166 = vld [vmem:[%s1162 + $0x18] sm:$0xff]
        %v1167 = vld [vmem:[%s1162 + $0x20] sm:$0xff]
        %v1168 = vld [vmem:[%s1162 + $0x28] sm:$0xff]
        %v1169 = vld [vmem:[%s1162 + $0x30] sm:$0xff]
        %v1170 = vld [vmem:[%s1162 + $0x38] sm:$0xff]
        %1172 = vset.pattern.permute.xlu0 0
        %1173 = vperm.xlu0 %1172, %v1163
        %v1174 = vpop.permute.xlu0 %1173
        %1177 = vset.pattern.permute.xlu0 0
        %1178 = vperm.xlu0 %1177, %v1164
        %v1179 = vpop.permute.xlu0 %1178
        %1182 = vset.pattern.permute.xlu0 0
        %1183 = vperm.xlu0 %1182, %v1165
        %v1184 = vpop.permute.xlu0 %1183
        %1187 = vset.pattern.permute.xlu0 0
        %1188 = vperm.xlu0 %1187, %v1166
        %v1189 = vpop.permute.xlu0 %1188
        %1192 = vset.pattern.permute.xlu0 0
        %1193 = vperm.xlu0 %1192, %v1167
        %v1194 = vpop.permute.xlu0 %1193
        %1197 = vset.pattern.permute.xlu0 0
        %1198 = vperm.xlu0 %1197, %v1168
        %v1199 = vpop.permute.xlu0 %1198
        %1202 = vset.pattern.permute.xlu0 0
        %1203 = vperm.xlu0 %1202, %v1169
        %v1204 = vpop.permute.xlu0 %1203
        %1207 = vset.pattern.permute.xlu0 0
        %1208 = vperm.xlu0 %1207, %v1170
        %v1209 = vpop.permute.xlu0 %1208
        %v1211 = vmul.f32 %v1154, %v1174
        %v1212 = vmul.f32 %v1155, %v1179
        %v1213 = vmul.f32 %v1156, %v1184
        %v1214 = vmul.f32 %v1157, %v1189
        %v1215 = vmul.f32 %v1158, %v1194
        %v1216 = vmul.f32 %v1159, %v1199
        %v1217 = vmul.f32 %v1160, %v1204
        %v1218 = vmul.f32 %v1161, %v1209
        %s1219 = scalar_lea.vmem %s763, 96 [#allocation2]
        %v1220 = vld [vmem:[%s1219] sm:$0xf]
        %v1221 = vld [vmem:[%s1219 + $0x4] sm:$0xf]
        %v1222 = vld [vmem:[%s1219 + $0x8] sm:$0xf]
        %v1223 = vld [vmem:[%s1219 + $0xc] sm:$0xf]
        %v1224 = vld [vmem:[%s1219 + $0x10] sm:$0xf]
        %v1225 = vld [vmem:[%s1219 + $0x14] sm:$0xf]
        %v1226 = vld [vmem:[%s1219 + $0x18] sm:$0xf]
        %v1227 = vld [vmem:[%s1219 + $0x1c] sm:$0xf]
        %v1236 = vunpack.c.l.b16 %v1220
        %v1237 = vunpack.c.l.b16 %v1221
        %v1238 = vunpack.c.l.b16 %v1222
        %v1239 = vunpack.c.l.b16 %v1223
        %v1240 = vunpack.c.l.b16 %v1224
        %v1241 = vunpack.c.l.b16 %v1225
        %v1242 = vunpack.c.l.b16 %v1226
        %v1243 = vunpack.c.l.b16 %v1227
        %v1244 = vpack.c.b16 %v1237, %v1236
        %v1245 = vpack.c.b16 %v1239, %v1238
        %v1246 = vpack.c.b16 %v1241, %v1240
        %v1247 = vpack.c.b16 %v1243, %v1242
        %v1249 = vsel %vm839, %v1244, 0
        %v1252 = vsel %vm839, %v1245, 0
        %v1255 = vsel %vm839, %v1246, 0
        %v1258 = vsel %vm839, %v1247, 0
        %1260 = vmatpush.bf16.msra.mxu0 0
        %1261 = vmatpush.bf16.msra.mxu0 0
        %1262 = vmatpush.bf16.msra.mxu0 0
        %1263 = vmatpush.bf16.msra.mxu0 0
        %1264 = vmatpush.bf16.msra.mxu0 0
        %1265 = vmatpush.bf16.msra.mxu0 0
        %1266 = vmatpush.bf16.msra.mxu0 0
        %1267 = vmatpush.bf16.msra.mxu0 %v854
        %1268 = vmatmul.bf16.gmra.mxu0 %v1249
        %v1269 = vpop.f32.mrf.mxu0
        %v1270 = vadd.f32 %v817, %v1269
        %v1271 = vpop.f32.mrf.mxu0
        %v1272 = vadd.f32 %v817, %v1271
        %1273 = vmatmul.bf16.gmra.mxu0 %v1252
        %v1274 = vpop.f32.mrf.mxu0
        %v1275 = vadd.f32 %v817, %v1274
        %v1276 = vpop.f32.mrf.mxu0
        %v1277 = vadd.f32 %v817, %v1276
        %1278 = vmatmul.bf16.gmra.mxu0 %v1255
        %v1279 = vpop.f32.mrf.mxu0
        %v1280 = vadd.f32 %v817, %v1279
        %v1281 = vpop.f32.mrf.mxu0
        %v1282 = vadd.f32 %v817, %v1281
        %1283 = vmatmul.bf16.gmra.mxu0 %v1258
        %v1284 = vpop.f32.mrf.mxu0
        %v1285 = vadd.f32 %v817, %v1284
        %v1286 = vpop.f32.mrf.mxu0
        %v1287 = vadd.f32 %v817, %v1286
        %1288 = vdwg.mxu0
        %v1289 = vmax.f32 %v1270, 0.0
        %v1290 = vmax.f32 %v1272, 0.0
        %v1291 = vmax.f32 %v1275, 0.0
        %v1292 = vmax.f32 %v1277, 0.0
        %v1293 = vmax.f32 %v1280, 0.0
        %v1294 = vmax.f32 %v1282, 0.0
        %v1295 = vmax.f32 %v1285, 0.0
        %v1296 = vmax.f32 %v1287, 0.0
        %s1297 = scalar_lea.vmem %s770, 192 [#allocation3]
        %v1298 = vld [vmem:[%s1297] sm:$0xff]
        %v1299 = vld [vmem:[%s1297 + $0x8] sm:$0xff]
        %v1300 = vld [vmem:[%s1297 + $0x10] sm:$0xff]
        %v1301 = vld [vmem:[%s1297 + $0x18] sm:$0xff]
        %v1302 = vld [vmem:[%s1297 + $0x20] sm:$0xff]
        %v1303 = vld [vmem:[%s1297 + $0x28] sm:$0xff]
        %v1304 = vld [vmem:[%s1297 + $0x30] sm:$0xff]
        %v1305 = vld [vmem:[%s1297 + $0x38] sm:$0xff]
        %1307 = vset.pattern.permute.xlu0 0
        %1308 = vperm.xlu0 %1307, %v1298
        %v1309 = vpop.permute.xlu0 %1308
        %1312 = vset.pattern.permute.xlu0 0
        %1313 = vperm.xlu0 %1312, %v1299
        %v1314 = vpop.permute.xlu0 %1313
        %1317 = vset.pattern.permute.xlu0 0
        %1318 = vperm.xlu0 %1317, %v1300
        %v1319 = vpop.permute.xlu0 %1318
        %1322 = vset.pattern.permute.xlu0 0
        %1323 = vperm.xlu0 %1322, %v1301
        %v1324 = vpop.permute.xlu0 %1323
        %1327 = vset.pattern.permute.xlu0 0
        %1328 = vperm.xlu0 %1327, %v1302
        %v1329 = vpop.permute.xlu0 %1328
        %1332 = vset.pattern.permute.xlu0 0
        %1333 = vperm.xlu0 %1332, %v1303
        %v1334 = vpop.permute.xlu0 %1333
        %1337 = vset.pattern.permute.xlu0 0
        %1338 = vperm.xlu0 %1337, %v1304
        %v1339 = vpop.permute.xlu0 %1338
        %1342 = vset.pattern.permute.xlu0 0
        %1343 = vperm.xlu0 %1342, %v1305
        %v1344 = vpop.permute.xlu0 %1343
        %v1346 = vmul.f32 %v1289, %v1309
        %v1347 = vmul.f32 %v1290, %v1314
        %v1348 = vmul.f32 %v1291, %v1319
        %v1349 = vmul.f32 %v1292, %v1324
        %v1350 = vmul.f32 %v1293, %v1329
        %v1351 = vmul.f32 %v1294, %v1334
        %v1352 = vmul.f32 %v1295, %v1339
        %v1353 = vmul.f32 %v1296, %v1344
        %s1354 = scalar_lea.vmem %s763, 128 [#allocation2]
        %v1355 = vld [vmem:[%s1354] sm:$0xf]
        %v1356 = vld [vmem:[%s1354 + $0x4] sm:$0xf]
        %v1357 = vld [vmem:[%s1354 + $0x8] sm:$0xf]
        %v1358 = vld [vmem:[%s1354 + $0xc] sm:$0xf]
        %v1359 = vld [vmem:[%s1354 + $0x10] sm:$0xf]
        %v1360 = vld [vmem:[%s1354 + $0x14] sm:$0xf]
        %v1361 = vld [vmem:[%s1354 + $0x18] sm:$0xf]
        %v1362 = vld [vmem:[%s1354 + $0x1c] sm:$0xf]
        %v1371 = vunpack.c.l.b16 %v1355
        %v1372 = vunpack.c.l.b16 %v1356
        %v1373 = vunpack.c.l.b16 %v1357
        %v1374 = vunpack.c.l.b16 %v1358
        %v1375 = vunpack.c.l.b16 %v1359
        %v1376 = vunpack.c.l.b16 %v1360
        %v1377 = vunpack.c.l.b16 %v1361
        %v1378 = vunpack.c.l.b16 %v1362
        %v1379 = vpack.c.b16 %v1372, %v1371
        %v1380 = vpack.c.b16 %v1374, %v1373
        %v1381 = vpack.c.b16 %v1376, %v1375
        %v1382 = vpack.c.b16 %v1378, %v1377
        %v1384 = vsel %vm839, %v1379, 0
        %v1387 = vsel %vm839, %v1380, 0
        %v1390 = vsel %vm839, %v1381, 0
        %v1393 = vsel %vm839, %v1382, 0
        %1395 = vmatpush.bf16.msra.mxu0 0
        %1396 = vmatpush.bf16.msra.mxu0 0
        %1397 = vmatpush.bf16.msra.mxu0 0
        %1398 = vmatpush.bf16.msra.mxu0 0
        %1399 = vmatpush.bf16.msra.mxu0 0
        %1400 = vmatpush.bf16.msra.mxu0 0
        %1401 = vmatpush.bf16.msra.mxu0 0
        %1402 = vmatpush.bf16.msra.mxu0 %v854
        %1403 = vmatmul.bf16.gmra.mxu0 %v1384
        %v1404 = vpop.f32.mrf.mxu0
        %v1405 = vadd.f32 %v817, %v1404
        %v1406 = vpop.f32.mrf.mxu0
        %v1407 = vadd.f32 %v817, %v1406
        %1408 = vmatmul.bf16.gmra.mxu0 %v1387
        %v1409 = vpop.f32.mrf.mxu0
        %v1410 = vadd.f32 %v817, %v1409
        %v1411 = vpop.f32.mrf.mxu0
        %v1412 = vadd.f32 %v817, %v1411
        %1413 = vmatmul.bf16.gmra.mxu0 %v1390
        %v1414 = vpop.f32.mrf.mxu0
        %v1415 = vadd.f32 %v817, %v1414
        %v1416 = vpop.f32.mrf.mxu0
        %v1417 = vadd.f32 %v817, %v1416
        %1418 = vmatmul.bf16.gmra.mxu0 %v1393
        %v1419 = vpop.f32.mrf.mxu0
        %v1420 = vadd.f32 %v817, %v1419
        %v1421 = vpop.f32.mrf.mxu0
        %v1422 = vadd.f32 %v817, %v1421
        %1423 = vdwg.mxu0
        %v1424 = vmax.f32 %v1405, 0.0
        %v1425 = vmax.f32 %v1407, 0.0
        %v1426 = vmax.f32 %v1410, 0.0
        %v1427 = vmax.f32 %v1412, 0.0
        %v1428 = vmax.f32 %v1415, 0.0
        %v1429 = vmax.f32 %v1417, 0.0
        %v1430 = vmax.f32 %v1420, 0.0
        %v1431 = vmax.f32 %v1422, 0.0
        %s1432 = scalar_lea.vmem %s770, 256 [#allocation3]
        %v1433 = vld [vmem:[%s1432] sm:$0xff]
        %v1434 = vld [vmem:[%s1432 + $0x8] sm:$0xff]
        %v1435 = vld [vmem:[%s1432 + $0x10] sm:$0xff]
        %v1436 = vld [vmem:[%s1432 + $0x18] sm:$0xff]
        %v1437 = vld [vmem:[%s1432 + $0x20] sm:$0xff]
        %v1438 = vld [vmem:[%s1432 + $0x28] sm:$0xff]
        %v1439 = vld [vmem:[%s1432 + $0x30] sm:$0xff]
        %v1440 = vld [vmem:[%s1432 + $0x38] sm:$0xff]
        %1442 = vset.pattern.permute.xlu0 0
        %1443 = vperm.xlu0 %1442, %v1433
        %v1444 = vpop.permute.xlu0 %1443
        %1447 = vset.pattern.permute.xlu0 0
        %1448 = vperm.xlu0 %1447, %v1434
        %v1449 = vpop.permute.xlu0 %1448
        %1452 = vset.pattern.permute.xlu0 0
        %1453 = vperm.xlu0 %1452, %v1435
        %v1454 = vpop.permute.xlu0 %1453
        %1457 = vset.pattern.permute.xlu0 0
        %1458 = vperm.xlu0 %1457, %v1436
        %v1459 = vpop.permute.xlu0 %1458
        %1462 = vset.pattern.permute.xlu0 0
        %1463 = vperm.xlu0 %1462, %v1437
        %v1464 = vpop.permute.xlu0 %1463
        %1467 = vset.pattern.permute.xlu0 0
        %1468 = vperm.xlu0 %1467, %v1438
        %v1469 = vpop.permute.xlu0 %1468
        %1472 = vset.pattern.permute.xlu0 0
        %1473 = vperm.xlu0 %1472, %v1439
        %v1474 = vpop.permute.xlu0 %1473
        %1477 = vset.pattern.permute.xlu0 0
        %1478 = vperm.xlu0 %1477, %v1440
        %v1479 = vpop.permute.xlu0 %1478
        %v1481 = vmul.f32 %v1424, %v1444
        %v1482 = vmul.f32 %v1425, %v1449
        %v1483 = vmul.f32 %v1426, %v1454
        %v1484 = vmul.f32 %v1427, %v1459
        %v1485 = vmul.f32 %v1428, %v1464
        %v1486 = vmul.f32 %v1429, %v1469
        %v1487 = vmul.f32 %v1430, %v1474
        %v1488 = vmul.f32 %v1431, %v1479
        %s1489 = scalar_lea.vmem %s763, 160 [#allocation2]
        %v1490 = vld [vmem:[%s1489] sm:$0xf]
        %v1491 = vld [vmem:[%s1489 + $0x4] sm:$0xf]
        %v1492 = vld [vmem:[%s1489 + $0x8] sm:$0xf]
        %v1493 = vld [vmem:[%s1489 + $0xc] sm:$0xf]
        %v1494 = vld [vmem:[%s1489 + $0x10] sm:$0xf]
        %v1495 = vld [vmem:[%s1489 + $0x14] sm:$0xf]
        %v1496 = vld [vmem:[%s1489 + $0x18] sm:$0xf]
        %v1497 = vld [vmem:[%s1489 + $0x1c] sm:$0xf]
        %v1506 = vunpack.c.l.b16 %v1490
        %v1507 = vunpack.c.l.b16 %v1491
        %v1508 = vunpack.c.l.b16 %v1492
        %v1509 = vunpack.c.l.b16 %v1493
        %v1510 = vunpack.c.l.b16 %v1494
        %v1511 = vunpack.c.l.b16 %v1495
        %v1512 = vunpack.c.l.b16 %v1496
        %v1513 = vunpack.c.l.b16 %v1497
        %v1514 = vpack.c.b16 %v1507, %v1506
        %v1515 = vpack.c.b16 %v1509, %v1508
        %v1516 = vpack.c.b16 %v1511, %v1510
        %v1517 = vpack.c.b16 %v1513, %v1512
        %v1519 = vsel %vm839, %v1514, 0
        %v1522 = vsel %vm839, %v1515, 0
        %v1525 = vsel %vm839, %v1516, 0
        %v1528 = vsel %vm839, %v1517, 0
        %1530 = vmatpush.bf16.msra.mxu0 0
        %1531 = vmatpush.bf16.msra.mxu0 0
        %1532 = vmatpush.bf16.msra.mxu0 0
        %1533 = vmatpush.bf16.msra.mxu0 0
        %1534 = vmatpush.bf16.msra.mxu0 0
        %1535 = vmatpush.bf16.msra.mxu0 0
        %1536 = vmatpush.bf16.msra.mxu0 0
        %1537 = vmatpush.bf16.msra.mxu0 %v854
        %1538 = vmatmul.bf16.gmra.mxu0 %v1519
        %v1539 = vpop.f32.mrf.mxu0
        %v1540 = vadd.f32 %v817, %v1539
        %v1541 = vpop.f32.mrf.mxu0
        %v1542 = vadd.f32 %v817, %v1541
        %1543 = vmatmul.bf16.gmra.mxu0 %v1522
        %v1544 = vpop.f32.mrf.mxu0
        %v1545 = vadd.f32 %v817, %v1544
        %v1546 = vpop.f32.mrf.mxu0
        %v1547 = vadd.f32 %v817, %v1546
        %1548 = vmatmul.bf16.gmra.mxu0 %v1525
        %v1549 = vpop.f32.mrf.mxu0
        %v1550 = vadd.f32 %v817, %v1549
        %v1551 = vpop.f32.mrf.mxu0
        %v1552 = vadd.f32 %v817, %v1551
        %1553 = vmatmul.bf16.gmra.mxu0 %v1528
        %v1554 = vpop.f32.mrf.mxu0
        %v1555 = vadd.f32 %v817, %v1554
        %v1556 = vpop.f32.mrf.mxu0
        %v1557 = vadd.f32 %v817, %v1556
        %1558 = vdwg.mxu0
        %v1559 = vmax.f32 %v1540, 0.0
        %v1560 = vmax.f32 %v1542, 0.0
        %v1561 = vmax.f32 %v1545, 0.0
        %v1562 = vmax.f32 %v1547, 0.0
        %v1563 = vmax.f32 %v1550, 0.0
        %v1564 = vmax.f32 %v1552, 0.0
        %v1565 = vmax.f32 %v1555, 0.0
        %v1566 = vmax.f32 %v1557, 0.0
        %s1567 = scalar_lea.vmem %s770, 320 [#allocation3]
        %v1568 = vld [vmem:[%s1567] sm:$0xff]
        %v1569 = vld [vmem:[%s1567 + $0x8] sm:$0xff]
        %v1570 = vld [vmem:[%s1567 + $0x10] sm:$0xff]
        %v1571 = vld [vmem:[%s1567 + $0x18] sm:$0xff]
        %v1572 = vld [vmem:[%s1567 + $0x20] sm:$0xff]
        %v1573 = vld [vmem:[%s1567 + $0x28] sm:$0xff]
        %v1574 = vld [vmem:[%s1567 + $0x30] sm:$0xff]
        %v1575 = vld [vmem:[%s1567 + $0x38] sm:$0xff]
        %1577 = vset.pattern.permute.xlu0 0
        %1578 = vperm.xlu0 %1577, %v1568
        %v1579 = vpop.permute.xlu0 %1578
        %1582 = vset.pattern.permute.xlu0 0
        %1583 = vperm.xlu0 %1582, %v1569
        %v1584 = vpop.permute.xlu0 %1583
        %1587 = vset.pattern.permute.xlu0 0
        %1588 = vperm.xlu0 %1587, %v1570
        %v1589 = vpop.permute.xlu0 %1588
        %1592 = vset.pattern.permute.xlu0 0
        %1593 = vperm.xlu0 %1592, %v1571
        %v1594 = vpop.permute.xlu0 %1593
        %1597 = vset.pattern.permute.xlu0 0
        %1598 = vperm.xlu0 %1597, %v1572
        %v1599 = vpop.permute.xlu0 %1598
        %1602 = vset.pattern.permute.xlu0 0
        %1603 = vperm.xlu0 %1602, %v1573
        %v1604 = vpop.permute.xlu0 %1603
        %1607 = vset.pattern.permute.xlu0 0
        %1608 = vperm.xlu0 %1607, %v1574
        %v1609 = vpop.permute.xlu0 %1608
        %1612 = vset.pattern.permute.xlu0 0
        %1613 = vperm.xlu0 %1612, %v1575
        %v1614 = vpop.permute.xlu0 %1613
        %v1616 = vmul.f32 %v1559, %v1579
        %v1617 = vmul.f32 %v1560, %v1584
        %v1618 = vmul.f32 %v1561, %v1589
        %v1619 = vmul.f32 %v1562, %v1594
        %v1620 = vmul.f32 %v1563, %v1599
        %v1621 = vmul.f32 %v1564, %v1604
        %v1622 = vmul.f32 %v1565, %v1609
        %v1623 = vmul.f32 %v1566, %v1614
        %s1624 = scalar_lea.vmem %s763, 192 [#allocation2]
        %v1625 = vld [vmem:[%s1624] sm:$0xf]
        %v1626 = vld [vmem:[%s1624 + $0x4] sm:$0xf]
        %v1627 = vld [vmem:[%s1624 + $0x8] sm:$0xf]
        %v1628 = vld [vmem:[%s1624 + $0xc] sm:$0xf]
        %v1629 = vld [vmem:[%s1624 + $0x10] sm:$0xf]
        %v1630 = vld [vmem:[%s1624 + $0x14] sm:$0xf]
        %v1631 = vld [vmem:[%s1624 + $0x18] sm:$0xf]
        %v1632 = vld [vmem:[%s1624 + $0x1c] sm:$0xf]
        %v1641 = vunpack.c.l.b16 %v1625
        %v1642 = vunpack.c.l.b16 %v1626
        %v1643 = vunpack.c.l.b16 %v1627
        %v1644 = vunpack.c.l.b16 %v1628
        %v1645 = vunpack.c.l.b16 %v1629
        %v1646 = vunpack.c.l.b16 %v1630
        %v1647 = vunpack.c.l.b16 %v1631
        %v1648 = vunpack.c.l.b16 %v1632
        %v1649 = vpack.c.b16 %v1642, %v1641
        %v1650 = vpack.c.b16 %v1644, %v1643
        %v1651 = vpack.c.b16 %v1646, %v1645
        %v1652 = vpack.c.b16 %v1648, %v1647
        %v1654 = vsel %vm839, %v1649, 0
        %v1657 = vsel %vm839, %v1650, 0
        %v1660 = vsel %vm839, %v1651, 0
        %v1663 = vsel %vm839, %v1652, 0
        %1665 = vmatpush.bf16.msra.mxu0 0
        %1666 = vmatpush.bf16.msra.mxu0 0
        %1667 = vmatpush.bf16.msra.mxu0 0
        %1668 = vmatpush.bf16.msra.mxu0 0
        %1669 = vmatpush.bf16.msra.mxu0 0
        %1670 = vmatpush.bf16.msra.mxu0 0
        %1671 = vmatpush.bf16.msra.mxu0 0
        %1672 = vmatpush.bf16.msra.mxu0 %v854
        %1673 = vmatmul.bf16.gmra.mxu0 %v1654
        %v1674 = vpop.f32.mrf.mxu0
        %v1675 = vadd.f32 %v817, %v1674
        %v1676 = vpop.f32.mrf.mxu0
        %v1677 = vadd.f32 %v817, %v1676
        %1678 = vmatmul.bf16.gmra.mxu0 %v1657
        %v1679 = vpop.f32.mrf.mxu0
        %v1680 = vadd.f32 %v817, %v1679
        %v1681 = vpop.f32.mrf.mxu0
        %v1682 = vadd.f32 %v817, %v1681
        %1683 = vmatmul.bf16.gmra.mxu0 %v1660
        %v1684 = vpop.f32.mrf.mxu0
        %v1685 = vadd.f32 %v817, %v1684
        %v1686 = vpop.f32.mrf.mxu0
        %v1687 = vadd.f32 %v817, %v1686
        %1688 = vmatmul.bf16.gmra.mxu0 %v1663
        %v1689 = vpop.f32.mrf.mxu0
        %v1690 = vadd.f32 %v817, %v1689
        %v1691 = vpop.f32.mrf.mxu0
        %v1692 = vadd.f32 %v817, %v1691
        %1693 = vdwg.mxu0
        %v1694 = vmax.f32 %v1675, 0.0
        %v1695 = vmax.f32 %v1677, 0.0
        %v1696 = vmax.f32 %v1680, 0.0
        %v1697 = vmax.f32 %v1682, 0.0
        %v1698 = vmax.f32 %v1685, 0.0
        %v1699 = vmax.f32 %v1687, 0.0
        %v1700 = vmax.f32 %v1690, 0.0
        %v1701 = vmax.f32 %v1692, 0.0
        %s1702 = scalar_lea.vmem %s770, 384 [#allocation3]
        %v1703 = vld [vmem:[%s1702] sm:$0xff]
        %v1704 = vld [vmem:[%s1702 + $0x8] sm:$0xff]
        %v1705 = vld [vmem:[%s1702 + $0x10] sm:$0xff]
        %v1706 = vld [vmem:[%s1702 + $0x18] sm:$0xff]
        %v1707 = vld [vmem:[%s1702 + $0x20] sm:$0xff]
        %v1708 = vld [vmem:[%s1702 + $0x28] sm:$0xff]
        %v1709 = vld [vmem:[%s1702 + $0x30] sm:$0xff]
        %v1710 = vld [vmem:[%s1702 + $0x38] sm:$0xff]
        %1712 = vset.pattern.permute.xlu0 0
        %1713 = vperm.xlu0 %1712, %v1703
        %v1714 = vpop.permute.xlu0 %1713
        %1717 = vset.pattern.permute.xlu0 0
        %1718 = vperm.xlu0 %1717, %v1704
        %v1719 = vpop.permute.xlu0 %1718
        %1722 = vset.pattern.permute.xlu0 0
        %1723 = vperm.xlu0 %1722, %v1705
        %v1724 = vpop.permute.xlu0 %1723
        %1727 = vset.pattern.permute.xlu0 0
        %1728 = vperm.xlu0 %1727, %v1706
        %v1729 = vpop.permute.xlu0 %1728
        %1732 = vset.pattern.permute.xlu0 0
        %1733 = vperm.xlu0 %1732, %v1707
        %v1734 = vpop.permute.xlu0 %1733
        %1737 = vset.pattern.permute.xlu0 0
        %1738 = vperm.xlu0 %1737, %v1708
        %v1739 = vpop.permute.xlu0 %1738
        %1742 = vset.pattern.permute.xlu0 0
        %1743 = vperm.xlu0 %1742, %v1709
        %v1744 = vpop.permute.xlu0 %1743
        %1747 = vset.pattern.permute.xlu0 0
        %1748 = vperm.xlu0 %1747, %v1710
        %v1749 = vpop.permute.xlu0 %1748
        %v1751 = vmul.f32 %v1694, %v1714
        %v1752 = vmul.f32 %v1695, %v1719
        %v1753 = vmul.f32 %v1696, %v1724
        %v1754 = vmul.f32 %v1697, %v1729
        %v1755 = vmul.f32 %v1698, %v1734
        %v1756 = vmul.f32 %v1699, %v1739
        %v1757 = vmul.f32 %v1700, %v1744
        %v1758 = vmul.f32 %v1701, %v1749
        %s1759 = scalar_lea.vmem %s763, 224 [#allocation2]
        %v1760 = vld [vmem:[%s1759] sm:$0xf]
        %v1761 = vld [vmem:[%s1759 + $0x4] sm:$0xf]
        %v1762 = vld [vmem:[%s1759 + $0x8] sm:$0xf]
        %v1763 = vld [vmem:[%s1759 + $0xc] sm:$0xf]
        %v1764 = vld [vmem:[%s1759 + $0x10] sm:$0xf]
        %v1765 = vld [vmem:[%s1759 + $0x14] sm:$0xf]
        %v1766 = vld [vmem:[%s1759 + $0x18] sm:$0xf]
        %v1767 = vld [vmem:[%s1759 + $0x1c] sm:$0xf]
        %v1776 = vunpack.c.l.b16 %v1760
        %v1777 = vunpack.c.l.b16 %v1761
        %v1778 = vunpack.c.l.b16 %v1762
        %v1779 = vunpack.c.l.b16 %v1763
        %v1780 = vunpack.c.l.b16 %v1764
        %v1781 = vunpack.c.l.b16 %v1765
        %v1782 = vunpack.c.l.b16 %v1766
        %v1783 = vunpack.c.l.b16 %v1767
        %v1784 = vpack.c.b16 %v1777, %v1776
        %v1785 = vpack.c.b16 %v1779, %v1778
        %v1786 = vpack.c.b16 %v1781, %v1780
        %v1787 = vpack.c.b16 %v1783, %v1782
        %v1789 = vsel %vm839, %v1784, 0
        %v1792 = vsel %vm839, %v1785, 0
        %v1795 = vsel %vm839, %v1786, 0
        %v1798 = vsel %vm839, %v1787, 0
        %1800 = vmatpush.bf16.msra.mxu0 0
        %1801 = vmatpush.bf16.msra.mxu0 0
        %1802 = vmatpush.bf16.msra.mxu0 0
        %1803 = vmatpush.bf16.msra.mxu0 0
        %1804 = vmatpush.bf16.msra.mxu0 0
        %1805 = vmatpush.bf16.msra.mxu0 0
        %1806 = vmatpush.bf16.msra.mxu0 0
        %1807 = vmatpush.bf16.msra.mxu0 %v854
        %1808 = vmatmul.bf16.gmra.mxu0 %v1789
        %v1809 = vpop.f32.mrf.mxu0
        %v1810 = vadd.f32 %v817, %v1809
        %v1811 = vpop.f32.mrf.mxu0
        %v1812 = vadd.f32 %v817, %v1811
        %1813 = vmatmul.bf16.gmra.mxu0 %v1792
        %v1814 = vpop.f32.mrf.mxu0
        %v1815 = vadd.f32 %v817, %v1814
        %v1816 = vpop.f32.mrf.mxu0
        %v1817 = vadd.f32 %v817, %v1816
        %1818 = vmatmul.bf16.gmra.mxu0 %v1795
        %v1819 = vpop.f32.mrf.mxu0
        %v1820 = vadd.f32 %v817, %v1819
        %v1821 = vpop.f32.mrf.mxu0
        %v1822 = vadd.f32 %v817, %v1821
        %1823 = vmatmul.bf16.gmra.mxu0 %v1798
        %v1824 = vpop.f32.mrf.mxu0
        %v1825 = vadd.f32 %v817, %v1824
        %v1826 = vpop.f32.mrf.mxu0
        %v1827 = vadd.f32 %v817, %v1826
        %1828 = vdwg.mxu0
        %v1829 = vmax.f32 %v1810, 0.0
        %v1830 = vmax.f32 %v1812, 0.0
        %v1831 = vmax.f32 %v1815, 0.0
        %v1832 = vmax.f32 %v1817, 0.0
        %v1833 = vmax.f32 %v1820, 0.0
        %v1834 = vmax.f32 %v1822, 0.0
        %v1835 = vmax.f32 %v1825, 0.0
        %v1836 = vmax.f32 %v1827, 0.0
        %s1837 = scalar_lea.vmem %s770, 448 [#allocation3]
        %v1838 = vld [vmem:[%s1837] sm:$0xff]
        %v1839 = vld [vmem:[%s1837 + $0x8] sm:$0xff]
        %v1840 = vld [vmem:[%s1837 + $0x10] sm:$0xff]
        %v1841 = vld [vmem:[%s1837 + $0x18] sm:$0xff]
        %v1842 = vld [vmem:[%s1837 + $0x20] sm:$0xff]
        %v1843 = vld [vmem:[%s1837 + $0x28] sm:$0xff]
        %v1844 = vld [vmem:[%s1837 + $0x30] sm:$0xff]
        %v1845 = vld [vmem:[%s1837 + $0x38] sm:$0xff]
        %1847 = vset.pattern.permute.xlu0 0
        %1848 = vperm.xlu0 %1847, %v1838
        %v1849 = vpop.permute.xlu0 %1848
        %1852 = vset.pattern.permute.xlu0 0
        %1853 = vperm.xlu0 %1852, %v1839
        %v1854 = vpop.permute.xlu0 %1853
        %1857 = vset.pattern.permute.xlu0 0
        %1858 = vperm.xlu0 %1857, %v1840
        %v1859 = vpop.permute.xlu0 %1858
        %1862 = vset.pattern.permute.xlu0 0
        %1863 = vperm.xlu0 %1862, %v1841
        %v1864 = vpop.permute.xlu0 %1863
        %1867 = vset.pattern.permute.xlu0 0
        %1868 = vperm.xlu0 %1867, %v1842
        %v1869 = vpop.permute.xlu0 %1868
        %1872 = vset.pattern.permute.xlu0 0
        %1873 = vperm.xlu0 %1872, %v1843
        %v1874 = vpop.permute.xlu0 %1873
        %1877 = vset.pattern.permute.xlu0 0
        %1878 = vperm.xlu0 %1877, %v1844
        %v1879 = vpop.permute.xlu0 %1878
        %1882 = vset.pattern.permute.xlu0 0
        %1883 = vperm.xlu0 %1882, %v1845
        %v1884 = vpop.permute.xlu0 %1883
        %v1886 = vmul.f32 %v1829, %v1849
        %v1887 = vmul.f32 %v1830, %v1854
        %v1888 = vmul.f32 %v1831, %v1859
        %v1889 = vmul.f32 %v1832, %v1864
        %v1890 = vmul.f32 %v1833, %v1869
        %v1891 = vmul.f32 %v1834, %v1874
        %v1892 = vmul.f32 %v1835, %v1879
        %v1893 = vmul.f32 %v1836, %v1884
        %v1894 = vmax.f32 %v941, %v1076
        %v1895 = vmax.f32 %v942, %v1077
        %v1896 = vmax.f32 %v943, %v1078
        %v1897 = vmax.f32 %v944, %v1079
        %v1898 = vmax.f32 %v945, %v1080
        %v1899 = vmax.f32 %v946, %v1081
        %v1900 = vmax.f32 %v947, %v1082
        %v1901 = vmax.f32 %v948, %v1083
        %v1902 = vmax.f32 %v1211, %v1346
        %v1903 = vmax.f32 %v1212, %v1347
        %v1904 = vmax.f32 %v1213, %v1348
        %v1905 = vmax.f32 %v1214, %v1349
        %v1906 = vmax.f32 %v1215, %v1350
        %v1907 = vmax.f32 %v1216, %v1351
        %v1908 = vmax.f32 %v1217, %v1352
        %v1909 = vmax.f32 %v1218, %v1353
        %v1910 = vmax.f32 %v1481, %v1616
        %v1911 = vmax.f32 %v1482, %v1617
        %v1912 = vmax.f32 %v1483, %v1618
        %v1913 = vmax.f32 %v1484, %v1619
        %v1914 = vmax.f32 %v1485, %v1620
        %v1915 = vmax.f32 %v1486, %v1621
        %v1916 = vmax.f32 %v1487, %v1622
        %v1917 = vmax.f32 %v1488, %v1623
        %v1918 = vmax.f32 %v1751, %v1886
        %v1919 = vmax.f32 %v1752, %v1887
        %v1920 = vmax.f32 %v1753, %v1888
        %v1921 = vmax.f32 %v1754, %v1889
        %v1922 = vmax.f32 %v1755, %v1890
        %v1923 = vmax.f32 %v1756, %v1891
        %v1924 = vmax.f32 %v1757, %v1892
        %v1925 = vmax.f32 %v1758, %v1893
        %v1926 = vmax.f32 %v1894, %v1902
        %v1927 = vmax.f32 %v1895, %v1903
        %v1928 = vmax.f32 %v1896, %v1904
        %v1929 = vmax.f32 %v1897, %v1905
        %v1930 = vmax.f32 %v1898, %v1906
        %v1931 = vmax.f32 %v1899, %v1907
        %v1932 = vmax.f32 %v1900, %v1908
        %v1933 = vmax.f32 %v1901, %v1909
        %v1934 = vmax.f32 %v1910, %v1918
        %v1935 = vmax.f32 %v1911, %v1919
        %v1936 = vmax.f32 %v1912, %v1920
        %v1937 = vmax.f32 %v1913, %v1921
        %v1938 = vmax.f32 %v1914, %v1922
        %v1939 = vmax.f32 %v1915, %v1923
        %v1940 = vmax.f32 %v1916, %v1924
        %v1941 = vmax.f32 %v1917, %v1925
        %v1942 = vmax.f32 %v1926, %v1934
        %v1943 = vmax.f32 %v1927, %v1935
        %v1944 = vmax.f32 %v1928, %v1936
        %v1945 = vmax.f32 %v1929, %v1937
        %v1946 = vmax.f32 %v1930, %v1938
        %v1947 = vmax.f32 %v1931, %v1939
        %v1948 = vmax.f32 %v1932, %v1940
        %v1949 = vmax.f32 %v1933, %v1941
        %v1950 = vpack.c.bf16 %v1942, %v1942
        %v1951 = vpack.c.bf16 %v1943, %v1943
        %v1952 = vpack.c.bf16 %v1944, %v1944
        %v1953 = vpack.c.bf16 %v1945, %v1945
        %v1954 = vpack.c.bf16 %v1946, %v1946
        %v1955 = vpack.c.bf16 %v1947, %v1947
        %v1956 = vpack.c.bf16 %v1948, %v1948
        %v1957 = vpack.c.bf16 %v1949, %v1949
        %1958 = vst [vmem:[%s803] sm:$0xf] %v1950
        %1959 = vst [vmem:[%s803 + $0x4] sm:$0xf] %v1951
        %1960 = vst [vmem:[%s803 + $0x8] sm:$0xf] %v1952
        %1961 = vst [vmem:[%s803 + $0xc] sm:$0xf] %v1953
        %1962 = vst [vmem:[%s803 + $0x10] sm:$0xf] %v1954
        %1963 = vst [vmem:[%s803 + $0x14] sm:$0xf] %v1955
        %1964 = vst [vmem:[%s803 + $0x18] sm:$0xf] %v1956
        %1965 = vst [vmem:[%s803 + $0x1c] sm:$0xf] %v1957
        %s1966 = smul.u32 8, %s15
        %p1967 = scmp.lt.s32.totalorder %s1966, 15
        %s1968 = scalar_select %p1967, %s1966, 15
        %s1969 = smul.addr %s1968, 4
        %s1970 = scalar_lea.vmem %s4, %s1969
        // Predicated region
        $region116: #{detector3d_forward.2} parent=106 // pred_check
          %p1971 = pneg %p127
        $region117: #{detector3d_forward.2} parent=106 // pred_check_branch
          %1973 = sbr.rel (%p1971) target = $region119
        $region118: #{detector3d_forward.2} parent=106 // pred_region
          %s1974 = smul.u32 8, %s15
        $region119: #{detector3d_forward.2} parent=106 // pred_fallthru
          _
      $region107: #{detector3d_forward.2} parent=5 // pred_fallthru
        _
      %p1975 = scmp.le.s32.totalorder 2, %s10
      // Predicated region
      $region120: #{detector3d_forward.2} parent=5 // pred_check
        %p1976 = pneg %p1975
      $region121: #{detector3d_forward.2} parent=5 // pred_check_branch
        %1978 = sbr.rel (%p1976) target = $region123
      $region122: #{detector3d_forward.2} parent=5 // pred_region
        %s1979 = ssub.s32 %s10, 2
        // Predicated region
        $region124: #{detector3d_forward.2} parent=122 // pred_check
          %p1980 = pneg %p133
        $region125: #{detector3d_forward.2} parent=122 // pred_check_branch
          %1982 = sbr.rel (%p1980) target = $region127
        $region126: #{detector3d_forward.2} parent=122 // pred_region
          %s1983 = smul.u32 8, %s16
          %p1984 = scmp.lt.s32.totalorder %s1983, 15
          %s1985 = scalar_select %p1984, %s1983, 15
          %s1986 = smul.addr %s1985, 4
          %s1987 = scalar_lea.vmem %s4, %s1986
        $region127: #{detector3d_forward.2} parent=122 // pred_fallthru
          _
      $region123: #{detector3d_forward.2} parent=5 // pred_fallthru
        _
    $region6: #{detector3d_forward.2} parent=1 // loop_footer
      %s14 = sadd.s32 1, %s10
    $region7: #{detector3d_forward.2} parent=1 // loop_footer_branch
      %9 = sbr.rel target = $region3
    $region8: #{detector3d_forward.2} parent=1 // loop_exit
      _

// kernel: detector3d_forward.3
$region0: #{detector3d_forward.3}
  #allocation0 [shape = 'u32[]', space=smem, size = 0x4, offset = 0x4, fixed_abs, tag = 'smem constant byte address 0x4 - core index']
  #allocation1 [shape = 'u32[72,128]{1,0:T(1,128)}', space=vmem, size = 0x9000, scoped, tag = 'internal scratch']
  %s0 = inlined_call_operand.vmem [shape: bf16[2,256,128], index: 0, kind: input, shape index: {}, may-alias: {0,1,2}]
  %s1 = inlined_call_operand.vmem [shape: bf16[2,256,128], index: 1, kind: input, shape index: {}, may-alias: {0,1,2}]
  %s2 = inlined_call_operand.vmem [shape: bf16[2,256,128], index: 2, kind: input, shape index: {}, may-alias: {0,1,2}]
  %s3 = inlined_call_operand.vmem [shape: f32[192,1], index: 3, kind: input, shape index: {}]
  %s4 = inlined_call_operand.vmem [shape: f32[192,1], index: 4, kind: input, shape index: {}]
  %s5 = inlined_call_operand.vmem [shape: bf16[3,384,128], index: 5, kind: input, shape index: {}]
  %s6 = inlined_call_operand.vmem [shape: f32[1,128], index: 6, kind: input, shape index: {}]
  %s7 = inlined_call_operand.vmem [shape: bf16[3,384,128], index: 7, kind: input, shape index: {}]
  %s8 = inlined_call_operand.vmem [shape: f32[1,128], index: 8, kind: input, shape index: {}]
  %s9 = inlined_call_operand.vmem [shape: bf16[128,32], index: 9, kind: input, shape index: {}]
  %s10 = inlined_call_operand.vmem [shape: f32[1,32], index: 10, kind: input, shape index: {}]
  %s11 = inlined_call_operand.hbm [shape: bf16[2,256,128], index: 11, kind: output, shape index: {0}]
  %s12 = inlined_call_operand.vmem [shape: f32[2,256,32], index: 12, kind: output, shape index: {1}]
  %13 = xla_tuple %s11, %s12
  %s14 = sld [smem:[#allocation0]]
  $region85: #{detector3d_forward.3} parent=0
    _
  %s16 = ssub.s32 1, %s14
  %s17 = scalar_select 0, %s16, %s14
  $region1: #{detector3d_forward.3} parent=0
    #allocation2 [shape = 'u8[65536]{0}', space=vmem, size = 0x10000, scoped, tag = 'output window, operand 0']
    #allocation3 [shape = 's32[2]{0}', space=sflag, size = 0x8, scoped, tag = 'scoped memory for detector3d_forward.3']
    %18 = vsyncpa [#allocation3], 0
    %s19 = scalar_lea.sflag [#allocation3], 1
    %20 = vsyncpa %s19, 0
    loop: start=0, step=1, limit=6
    $region2: #{detector3d_forward.3} parent=1 // loop_pre_header
      _
    $region3: #{detector3d_forward.3} parent=1 // loop_header
      %s22 = sphi 0, %s26
      %p23 = scmp.ge.s32.totalorder %s22, 6
      %s29 = sphi 0, %s41
      %s30 = sphi 0, %s37
      %s31 = sphi 0, %s29
      %s32 = sphi 0, %s30
      %s33 = sphi 0, %s31
      %s34 = sphi 0, %s32
      %s54 = sphi 0, %s56
      %s57 = sphi 0, %s54
      %s58 = sphi 0, %s57
      %s74 = sphi 0, %s58
      %s82 = sphi 0, %s84
      %s85 = sphi 0, %s82
      %s86 = sphi 0, %s85
      %s102 = sphi 0, %s86
      %s118 = sphi 0, %s120
      %s121 = sphi 0, %s118
      %s122 = sphi 0, %s121
      %s138 = sphi 0, %s122
      %s142 = sphi 0, %s142
      %s144 = sphi 0, %s142
      %s145 = sphi 0, %s144
      %s159 = sphi 0, %s145
      %s163 = sphi 0, %s163
      %s165 = sphi 0, %s163
      %s166 = sphi 0, %s165
      %s180 = sphi 0, %s166
      %s184 = sphi 0, %s184
      %s186 = sphi 0, %s184
      %s187 = sphi 0, %s186
      %s201 = sphi 0, %s187
      %s205 = sphi 0, %s205
      %s207 = sphi 0, %s205
      %s208 = sphi 0, %s207
      %s222 = sphi 0, %s208
      %s226 = sphi 0, %s226
      %s228 = sphi 0, %s226
      %s229 = sphi 0, %s228
      %s243 = sphi 0, %s229
      %s247 = sphi 0, %s247
      %s249 = sphi 0, %s247
      %s250 = sphi 0, %s249
      %s264 = sphi 0, %s250
      %s268 = sphi 0, %s268
      %s270 = sphi 0, %s268
      %s271 = sphi 0, %s270
      %s285 = sphi 0, %s271
      %s289 = sphi 0, %s289
      %s291 = sphi 0, %s289
      %s292 = sphi 0, %s291
      %s306 = sphi 0, %s292
      %s314 = sphi 0, %s316
      %s317 = sphi 0, %s314
      %s318 = sphi 0, %s317
      %s334 = sphi 0, %s318
      %s342 = sphi 0, %s344
      %s345 = sphi 0, %s342
      %s346 = sphi 0, %s345
      %s362 = sphi 0, %s346
    $region4: #{detector3d_forward.3} parent=1 // loop_header_branch
      %25 = sbr.rel (%p23) target = $region8
    $region5: #{detector3d_forward.3} parent=1 // loop_body
      %s27 = ssub.s32 %s22, 1
      %s28 = ssub.s32 %s22, 2
      %s35 = sadd.s32 1, %s30
      %p36 = scmp.ge.s32.totalorder %s35, 2
      %s37 = scalar_select %p36, 0, %s35
      %s38 = sadd.s32 1, %s29
      %s39 = scalar_select %p36, %s38, %s29
      %p40 = scmp.ge.s32.totalorder %s39, 2
      %s41 = scalar_select %p40, 0, %s39
      %s42 = smul.u32 %s30, 4
      %s43 = ssub.s32 %s42, 1
      %p44 = scmp.gt.s32.totalorder %s43, 0
      %s45 = scalar_select %p44, %s43, 0
      %s46 = smul.u32 %s37, 4
      %s47 = ssub.s32 %s46, 1
      %p48 = scmp.gt.s32.totalorder %s47, 0
      %s49 = scalar_select %p48, %s47, 0
      %s50 = ssub.s32 %s29, %s41
      %s51 = ssub.s32 %s45, %s49
      %s52 = sor.u32 %s50, %s51
      %p53 = scmp.eq.s32.totalorder %s52, 0
      %s55 = sadd.s32 %s54, 1
      %s56 = scalar_select %p53, %s54, %s55
      %p59 = pneg %p53
      %p60 = scmp.eq.s32.totalorder %s22, 3
      %p61 = por %p59, %p60
      %p62 = scmp.ne.s32.totalorder %s54, %s57
      %p63 = scmp.eq.s32.totalorder %s22, 0
      %p64 = por %p62, %p63
      %p65 = scmp.ne.s32.totalorder %s54, %s57
      %p66 = scmp.eq.s32.totalorder %s27, 3
      %p67 = por %p65, %p66
      %p68 = scmp.ne.s32.totalorder %s57, %s58
      %p69 = scmp.eq.s32.totalorder %s27, 0
      %p70 = por %p68, %p69
      %p71 = scmp.ne.s32.totalorder %s57, %s58
      %p72 = scmp.eq.s32.totalorder %s28, 3
      %p73 = por %p71, %p72
      %p75 = scmp.ne.s32.totalorder %s58, %s74
      %p76 = scmp.eq.s32.totalorder %s28, 0
      %p77 = por %p75, %p76
      %s78 = ssub.s32 %s29, %s41
      %s79 = ssub.s32 %s30, %s37
      %s80 = sor.u32 %s78, %s79
      %p81 = scmp.eq.s32.totalorder %s80, 0
      %s83 = sadd.s32 %s82, 1
      %s84 = scalar_select %p81, %s82, %s83
      %p87 = pneg %p81
      %p88 = scmp.eq.s32.totalorder %s22, 3
      %p89 = por %p87, %p88
      %p90 = scmp.ne.s32.totalorder %s82, %s85
      %p91 = scmp.eq.s32.totalorder %s22, 0
      %p92 = por %p90, %p91
      %p93 = scmp.ne.s32.totalorder %s82, %s85
      %p94 = scmp.eq.s32.totalorder %s27, 3
      %p95 = por %p93, %p94
      %p96 = scmp.ne.s32.totalorder %s85, %s86
      %p97 = scmp.eq.s32.totalorder %s27, 0
      %p98 = por %p96, %p97
      %p99 = scmp.ne.s32.totalorder %s85, %s86
      %p100 = scmp.eq.s32.totalorder %s28, 3
      %p101 = por %p99, %p100
      %p103 = scmp.ne.s32.totalorder %s86, %s102
      %p104 = scmp.eq.s32.totalorder %s28, 0
      %p105 = por %p103, %p104
      %s106 = sadd.s32 %s30, 1
      %s107 = smul.u32 %s106, 4
      %p108 = scmp.lt.s32.totalorder %s107, 7
      %s109 = scalar_select %p108, %s107, 7
      %s110 = sadd.s32 %s37, 1
      %s111 = smul.u32 %s110, 4
      %p112 = scmp.lt.s32.totalorder %s111, 7
      %s113 = scalar_select %p112, %s111, 7
      %s114 = ssub.s32 %s29, %s41
      %s115 = ssub.s32 %s109, %s113
      %s116 = sor.u32 %s114, %s115
      %p117 = scmp.eq.s32.totalorder %s116, 0
      %s119 = sadd.s32 %s118, 1
      %s120 = scalar_select %p117, %s118, %s119
      %p123 = pneg %p117
      %p124 = scmp.eq.s32.totalorder %s22, 3
      %p125 = por %p123, %p124
      %p126 = scmp.ne.s32.totalorder %s118, %s121
      %p127 = scmp.eq.s32.totalorder %s22, 0
      %p128 = por %p126, %p127
      %p129 = scmp.ne.s32.totalorder %s118, %s121
      %p130 = scmp.eq.s32.totalorder %s27, 3
      %p131 = por %p129, %p130
      %p132 = scmp.ne.s32.totalorder %s121, %s122
      %p133 = scmp.eq.s32.totalorder %s27, 0
      %p134 = por %p132, %p133
      %p135 = scmp.ne.s32.totalorder %s121, %s122
      %p136 = scmp.eq.s32.totalorder %s28, 3
      %p137 = por %p135, %p136
      %p139 = scmp.ne.s32.totalorder %s122, %s138
      %p140 = scmp.eq.s32.totalorder %s28, 0
      %p141 = por %p139, %p140
      %s143 = sadd.s32 %s142, 1
      %p146 = scmp.eq.s32.totalorder %s22, 3
      %p147 = scmp.ne.s32.totalorder %s142, %s144
      %p148 = scmp.eq.s32.totalorder %s22, 0
      %p149 = por %p147, %p148
      %p150 = scmp.ne.s32.totalorder %s142, %s144
      %p151 = scmp.eq.s32.totalorder %s27, 3
      %p152 = por %p150, %p151
      %p153 = scmp.ne.s32.totalorder %s144, %s145
      %p154 = scmp.eq.s32.totalorder %s27, 0
      %p155 = por %p153, %p154
      %p156 = scmp.ne.s32.totalorder %s144, %s145
      %p157 = scmp.eq.s32.totalorder %s28, 3
      %p158 = por %p156, %p157
      %p160 = scmp.ne.s32.totalorder %s145, %s159
      %p161 = scmp.eq.s32.totalorder %s28, 0
      %p162 = por %p160, %p161
      %s164 = sadd.s32 %s163, 1
      %p167 = scmp.eq.s32.totalorder %s22, 3
      %p168 = scmp.ne.s32.totalorder %s163, %s165
      %p169 = scmp.eq.s32.totalorder %s22, 0
      %p170 = por %p168, %p169
      %p171 = scmp.ne.s32.totalorder %s163, %s165
      %p172 = scmp.eq.s32.totalorder %s27, 3
      %p173 = por %p171, %p172
      %p174 = scmp.ne.s32.totalorder %s165, %s166
      %p175 = scmp.eq.s32.totalorder %s27, 0
      %p176 = por %p174, %p175
      %p177 = scmp.ne.s32.totalorder %s165, %s166
      %p178 = scmp.eq.s32.totalorder %s28, 3
      %p179 = por %p177, %p178
      %p181 = scmp.ne.s32.totalorder %s166, %s180
      %p182 = scmp.eq.s32.totalorder %s28, 0
      %p183 = por %p181, %p182
      %s185 = sadd.s32 %s184, 1
      %p188 = scmp.eq.s32.totalorder %s22, 3
      %p189 = scmp.ne.s32.totalorder %s184, %s186
      %p190 = scmp.eq.s32.totalorder %s22, 0
      %p191 = por %p189, %p190
      %p192 = scmp.ne.s32.totalorder %s184, %s186
      %p193 = scmp.eq.s32.totalorder %s27, 3
      %p194 = por %p192, %p193
      %p195 = scmp.ne.s32.totalorder %s186, %s187
      %p196 = scmp.eq.s32.totalorder %s27, 0
      %p197 = por %p195, %p196
      %p198 = scmp.ne.s32.totalorder %s186, %s187
      %p199 = scmp.eq.s32.totalorder %s28, 3
      %p200 = por %p198, %p199
      %p202 = scmp.ne.s32.totalorder %s187, %s201
      %p203 = scmp.eq.s32.totalorder %s28, 0
      %p204 = por %p202, %p203
      %s206 = sadd.s32 %s205, 1
      %p209 = scmp.eq.s32.totalorder %s22, 3
      %p210 = scmp.ne.s32.totalorder %s205, %s207
      %p211 = scmp.eq.s32.totalorder %s22, 0
      %p212 = por %p210, %p211
      %p213 = scmp.ne.s32.totalorder %s205, %s207
      %p214 = scmp.eq.s32.totalorder %s27, 3
      %p215 = por %p213, %p214
      %p216 = scmp.ne.s32.totalorder %s207, %s208
      %p217 = scmp.eq.s32.totalorder %s27, 0
      %p218 = por %p216, %p217
      %p219 = scmp.ne.s32.totalorder %s207, %s208
      %p220 = scmp.eq.s32.totalorder %s28, 3
      %p221 = por %p219, %p220
      %p223 = scmp.ne.s32.totalorder %s208, %s222
      %p224 = scmp.eq.s32.totalorder %s28, 0
      %p225 = por %p223, %p224
      %s227 = sadd.s32 %s226, 1
      %p230 = scmp.eq.s32.totalorder %s22, 3
      %p231 = scmp.ne.s32.totalorder %s226, %s228
      %p232 = scmp.eq.s32.totalorder %s22, 0
      %p233 = por %p231, %p232
      %p234 = scmp.ne.s32.totalorder %s226, %s228
      %p235 = scmp.eq.s32.totalorder %s27, 3
      %p236 = por %p234, %p235
      %p237 = scmp.ne.s32.totalorder %s228, %s229
      %p238 = scmp.eq.s32.totalorder %s27, 0
      %p239 = por %p237, %p238
      %p240 = scmp.ne.s32.totalorder %s228, %s229
      %p241 = scmp.eq.s32.totalorder %s28, 3
      %p242 = por %p240, %p241
      %p244 = scmp.ne.s32.totalorder %s229, %s243
      %p245 = scmp.eq.s32.totalorder %s28, 0
      %p246 = por %p244, %p245
      %s248 = sadd.s32 %s247, 1
      %p251 = scmp.eq.s32.totalorder %s22, 3
      %p252 = scmp.ne.s32.totalorder %s247, %s249
      %p253 = scmp.eq.s32.totalorder %s22, 0
      %p254 = por %p252, %p253
      %p255 = scmp.ne.s32.totalorder %s247, %s249
      %p256 = scmp.eq.s32.totalorder %s27, 3
      %p257 = por %p255, %p256
      %p258 = scmp.ne.s32.totalorder %s249, %s250
      %p259 = scmp.eq.s32.totalorder %s27, 0
      %p260 = por %p258, %p259
      %p261 = scmp.ne.s32.totalorder %s249, %s250
      %p262 = scmp.eq.s32.totalorder %s28, 3
      %p263 = por %p261, %p262
      %p265 = scmp.ne.s32.totalorder %s250, %s264
      %p266 = scmp.eq.s32.totalorder %s28, 0
      %p267 = por %p265, %p266
      %s269 = sadd.s32 %s268, 1
      %p272 = scmp.eq.s32.totalorder %s22, 3
      %p273 = scmp.ne.s32.totalorder %s268, %s270
      %p274 = scmp.eq.s32.totalorder %s22, 0
      %p275 = por %p273, %p274
      %p276 = scmp.ne.s32.totalorder %s268, %s270
      %p277 = scmp.eq.s32.totalorder %s27, 3
      %p278 = por %p276, %p277
      %p279 = scmp.ne.s32.totalorder %s270, %s271
      %p280 = scmp.eq.s32.totalorder %s27, 0
      %p281 = por %p279, %p280
      %p282 = scmp.ne.s32.totalorder %s270, %s271
      %p283 = scmp.eq.s32.totalorder %s28, 3
      %p284 = por %p282, %p283
      %p286 = scmp.ne.s32.totalorder %s271, %s285
      %p287 = scmp.eq.s32.totalorder %s28, 0
      %p288 = por %p286, %p287
      %s290 = sadd.s32 %s289, 1
      %p293 = scmp.eq.s32.totalorder %s22, 3
      %p294 = scmp.ne.s32.totalorder %s289, %s291
      %p295 = scmp.eq.s32.totalorder %s22, 0
      %p296 = por %p294, %p295
      %p297 = scmp.ne.s32.totalorder %s289, %s291
      %p298 = scmp.eq.s32.totalorder %s27, 3
      %p299 = por %p297, %p298
      %p300 = scmp.ne.s32.totalorder %s291, %s292
      %p301 = scmp.eq.s32.totalorder %s27, 0
      %p302 = por %p300, %p301
      %p303 = scmp.ne.s32.totalorder %s291, %s292
      %p304 = scmp.eq.s32.totalorder %s28, 3
      %p305 = por %p303, %p304
      %p307 = scmp.ne.s32.totalorder %s292, %s306
      %p308 = scmp.eq.s32.totalorder %s28, 0
      %p309 = por %p307, %p308
      %s310 = ssub.s32 %s29, %s41
      %s311 = ssub.s32 %s30, %s37
      %s312 = sor.u32 %s310, %s311
      %p313 = scmp.eq.s32.totalorder %s312, 0
      %s315 = sadd.s32 %s314, 1
      %s316 = scalar_select %p313, %s314, %s315
      %p319 = pneg %p313
      %p320 = scmp.eq.s32.totalorder %s22, 3
      %p321 = por %p319, %p320
      %p322 = scmp.ne.s32.totalorder %s314, %s317
      %p323 = scmp.eq.s32.totalorder %s22, 0
      %p324 = por %p322, %p323
      %p325 = scmp.ne.s32.totalorder %s314, %s317
      %p326 = scmp.eq.s32.totalorder %s27, 3
      %p327 = por %p325, %p326
      %p328 = scmp.ne.s32.totalorder %s317, %s318
      %p329 = scmp.eq.s32.totalorder %s27, 0
      %p330 = por %p328, %p329
      %p331 = scmp.ne.s32.totalorder %s317, %s318
      %p332 = scmp.eq.s32.totalorder %s28, 3
      %p333 = por %p331, %p332
      %p335 = scmp.ne.s32.totalorder %s318, %s334
      %p336 = scmp.eq.s32.totalorder %s28, 0
      %p337 = por %p335, %p336
      %s338 = ssub.s32 %s29, %s41
      %s339 = ssub.s32 %s30, %s37
      %s340 = sor.u32 %s338, %s339
      %p341 = scmp.eq.s32.totalorder %s340, 0
      %s343 = sadd.s32 %s342, 1
      %s344 = scalar_select %p341, %s342, %s343
      %p347 = pneg %p341
      %p348 = scmp.eq.s32.totalorder %s22, 3
      %p349 = por %p347, %p348
      %p350 = scmp.ne.s32.totalorder %s342, %s345
      %p351 = scmp.eq.s32.totalorder %s22, 0
      %p352 = por %p350, %p351
      %p353 = scmp.ne.s32.totalorder %s342, %s345
      %p354 = scmp.eq.s32.totalorder %s27, 3
      %p355 = por %p353, %p354
      %p356 = scmp.ne.s32.totalorder %s345, %s346
      %p357 = scmp.eq.s32.totalorder %s27, 0
      %p358 = por %p356, %p357
      %p359 = scmp.ne.s32.totalorder %s345, %s346
      %p360 = scmp.eq.s32.totalorder %s28, 3
      %p361 = por %p359, %p360
      %p363 = scmp.ne.s32.totalorder %s346, %s362
      %p364 = scmp.eq.s32.totalorder %s28, 0
      %p365 = por %p363, %p364
      %p366 = scmp.le.s32.totalorder 1, %s22
      %p367 = scmp.lt.s32.totalorder %s22, 5
      %p368 = pnand %p366, %p367
      %p369 = pneg %p368
      // Predicated region
      $region9: #{detector3d_forward.3} parent=5 // pred_check
        _
      $region10: #{detector3d_forward.3} parent=5 // pred_check_branch
        %371 = sbr.rel (%p368) target = $region12
      $region11: #{detector3d_forward.3} parent=5 // pred_region
        %s372 = ssub.s32 %s22, 1
        // Predicated region
        $region13: #{detector3d_forward.3} parent=11 // pred_check
          %p373 = pneg %p155
        $region14: #{detector3d_forward.3} parent=11 // pred_check_branch
          %375 = sbr.rel (%p373) target = $region16
        $region15: #{detector3d_forward.3} parent=11 // pred_region
          _
        $region16: #{detector3d_forward.3} parent=11 // pred_fallthru
          _
        // Predicated region
        $region17: #{detector3d_forward.3} parent=11 // pred_check
          %p376 = pneg %p176
        $region18: #{detector3d_forward.3} parent=11 // pred_check_branch
          %378 = sbr.rel (%p376) target = $region20
        $region19: #{detector3d_forward.3} parent=11 // pred_region
          _
        $region20: #{detector3d_forward.3} parent=11 // pred_fallthru
          _
        // Predicated region
        $region21: #{detector3d_forward.3} parent=11 // pred_check
          %p379 = pneg %p197
        $region22: #{detector3d_forward.3} parent=11 // pred_check_branch
          %381 = sbr.rel (%p379) target = $region24
        $region23: #{detector3d_forward.3} parent=11 // pred_region
          _
        $region24: #{detector3d_forward.3} parent=11 // pred_fallthru
          _
        // Predicated region
        $region25: #{detector3d_forward.3} parent=11 // pred_check
          %p382 = pneg %p218
        $region26: #{detector3d_forward.3} parent=11 // pred_check_branch
          %384 = sbr.rel (%p382) target = $region28
        $region27: #{detector3d_forward.3} parent=11 // pred_region
          _
        $region28: #{detector3d_forward.3} parent=11 // pred_fallthru
          _
        // Predicated region
        $region29: #{detector3d_forward.3} parent=11 // pred_check
          %p385 = pneg %p239
        $region30: #{detector3d_forward.3} parent=11 // pred_check_branch
          %387 = sbr.rel (%p385) target = $region32
        $region31: #{detector3d_forward.3} parent=11 // pred_region
          _
        $region32: #{detector3d_forward.3} parent=11 // pred_fallthru
          _
        // Predicated region
        $region33: #{detector3d_forward.3} parent=11 // pred_check
          %p388 = pneg %p260
        $region34: #{detector3d_forward.3} parent=11 // pred_check_branch
          %390 = sbr.rel (%p388) target = $region36
        $region35: #{detector3d_forward.3} parent=11 // pred_region
          _
        $region36: #{detector3d_forward.3} parent=11 // pred_fallthru
          _
        // Predicated region
        $region37: #{detector3d_forward.3} parent=11 // pred_check
          %p391 = pneg %p281
        $region38: #{detector3d_forward.3} parent=11 // pred_check_branch
          %393 = sbr.rel (%p391) target = $region40
        $region39: #{detector3d_forward.3} parent=11 // pred_region
          _
        $region40: #{detector3d_forward.3} parent=11 // pred_fallthru
          _
        // Predicated region
        $region41: #{detector3d_forward.3} parent=11 // pred_check
          %p394 = pneg %p302
        $region42: #{detector3d_forward.3} parent=11 // pred_check_branch
          %396 = sbr.rel (%p394) target = $region44
        $region43: #{detector3d_forward.3} parent=11 // pred_region
          _
        $region44: #{detector3d_forward.3} parent=11 // pred_fallthru
          _
      $region12: #{detector3d_forward.3} parent=5 // pred_fallthru
        _
      %p397 = scmp.lt.s32.totalorder %s22, 4
      // Predicated region
      $region45: #{detector3d_forward.3} parent=5 // pred_check
        %p398 = pneg %p397
      $region46: #{detector3d_forward.3} parent=5 // pred_check_branch
        %400 = sbr.rel (%p398) target = $region48
      $region47: #{detector3d_forward.3} parent=5 // pred_region
        // Predicated region
        $region49: #{detector3d_forward.3} parent=47 // pred_check
          %p401 = pneg %p64
        $region50: #{detector3d_forward.3} parent=47 // pred_check_branch
          %403 = sbr.rel (%p401) target = $region52
        $region51: #{detector3d_forward.3} parent=47 // pred_region
          %s404 = smul.u32 %s30, 4
          %s405 = ssub.s32 %s404, 1
          %p406 = scmp.gt.s32.totalorder %s405, 0
          %s407 = scalar_select %p406, %s405, 0
          %s408 = smul.u32 4, %s407
          %p409 = scmp.lt.s32.totalorder %s29, 1
          %s410 = scalar_select %p409, %s29, 1
          %p411 = scmp.lt.s32.totalorder %s408, 31
          %s412 = scalar_select %p411, %s408, 31
          %s413 = smul.addr %s410, 32
          %s414 = sadd.s32 %s412, %s413
          %s415 = smul.addr %s414, 4
          %s416 = scalar_lea.vmem %s0, %s415
          %s417 = smul.u32 %s30, 4
          %s418 = ssub.s32 %s417, 1
          %p419 = scmp.gt.s32.totalorder %s418, 0
          %s420 = scalar_select %p419, %s418, 0
          %s421 = smul.u32 4, %s420
        $region52: #{detector3d_forward.3} parent=47 // pred_fallthru
          _
        // Predicated region
        $region53: #{detector3d_forward.3} parent=47 // pred_check
          %p422 = pneg %p92
        $region54: #{detector3d_forward.3} parent=47 // pred_check_branch
          %424 = sbr.rel (%p422) target = $region56
        $region55: #{detector3d_forward.3} parent=47 // pred_region
          %s425 = smul.u32 16, %s30
          %p426 = scmp.lt.s32.totalorder %s29, 1
          %s427 = scalar_select %p426, %s29, 1
          %p428 = scmp.lt.s32.totalorder %s425, 31
          %s429 = scalar_select %p428, %s425, 31
          %s430 = smul.addr %s427, 32
          %s431 = sadd.s32 %s429, %s430
          %s432 = smul.addr %s431, 4
          %s433 = scalar_lea.vmem %s1, %s432
          %s434 = smul.u32 16, %s30
        $region56: #{detector3d_forward.3} parent=47 // pred_fallthru
          _
        // Predicated region
        $region57: #{detector3d_forward.3} parent=47 // pred_check
          %p435 = pneg %p128
        $region58: #{detector3d_forward.3} parent=47 // pred_check_branch
          %437 = sbr.rel (%p435) target = $region60
        $region59: #{detector3d_forward.3} parent=47 // pred_region
          %s438 = sadd.s32 %s30, 1
          %s439 = smul.u32 %s438, 4
          %p440 = scmp.lt.s32.totalorder %s439, 7
          %s441 = scalar_select %p440, %s439, 7
          %s442 = smul.u32 4, %s441
          %p443 = scmp.lt.s32.totalorder %s29, 1
          %s444 = scalar_select %p443, %s29, 1
          %p445 = scmp.lt.s32.totalorder %s442, 31
          %s446 = scalar_select %p445, %s442, 31
          %s447 = smul.addr %s444, 32
          %s448 = sadd.s32 %s446, %s447
          %s449 = smul.addr %s448, 4
          %s450 = scalar_lea.vmem %s2, %s449
          %s451 = sadd.s32 %s30, 1
          %s452 = smul.u32 %s451, 4
          %p453 = scmp.lt.s32.totalorder %s452, 7
          %s454 = scalar_select %p453, %s452, 7
          %s455 = smul.u32 4, %s454
        $region60: #{detector3d_forward.3} parent=47 // pred_fallthru
          _
      $region48: #{detector3d_forward.3} parent=5 // pred_fallthru
        _
      %p456 = scmp.le.s32.totalorder 1, %s22
      %p457 = scmp.lt.s32.totalorder %s22, 5
      %p458 = pnand %p456, %p457
      %p459 = pneg %p458
      // Predicated region
      $region61: #{detector3d_forward.3} parent=5 // pred_check
        _
      $region62: #{detector3d_forward.3} parent=5 // pred_check_branch
        %461 = sbr.rel (%p458) target = $region64
      $region63: #{detector3d_forward.3} parent=5 // pred_region
        %s462 = ssub.s32 %s22, 1
        %s463 = smul.u32 %s32, 4
        %s464 = ssub.s32 %s463, 1
        %p465 = scmp.gt.s32.totalorder %s464, 0
        %s466 = scalar_select %p465, %s464, 0
        %s467 = smul.u32 4, %s466
        %p468 = scmp.lt.s32.totalorder %s31, 1
        %s469 = scalar_select %p468, %s31, 1
        %p470 = scmp.lt.s32.totalorder %s467, 31
        %s471 = scalar_select %p470, %s467, 31
        %s472 = smul.addr %s469, 32
        %s473 = sadd.s32 %s471, %s472
        %s474 = smul.addr %s473, 4
        %s475 = scalar_lea.vmem %s0, %s474
        %p476 = pneg %p70
        %p477 = pneg %p67
        %s478 = smul.u32 16, %s32
        %p479 = scmp.lt.s32.totalorder %s31, 1
        %s480 = scalar_select %p479, %s31, 1
        %p481 = scmp.lt.s32.totalorder %s478, 31
        %s482 = scalar_select %p481, %s478, 31
        %s483 = smul.addr %s480, 32
        %s484 = sadd.s32 %s482, %s483
        %s485 = smul.addr %s484, 4
        %s486 = scalar_lea.vmem %s1, %s485
        %p487 = pneg %p98
        %p488 = pneg %p95
        %s489 = sadd.s32 %s32, 1
        %s490 = smul.u32 %s489, 4
        %p491 = scmp.lt.s32.totalorder %s490, 7
        %s492 = scalar_select %p491, %s490, 7
        %s493 = smul.u32 4, %s492
        %p494 = scmp.lt.s32.totalorder %s31, 1
        %s495 = scalar_select %p494, %s31, 1
        %p496 = scmp.lt.s32.totalorder %s493, 31
        %s497 = scalar_select %p496, %s493, 31
        %s498 = smul.addr %s495, 32
        %s499 = sadd.s32 %s497, %s498
        %s500 = smul.addr %s499, 4
        %s501 = scalar_lea.vmem %s2, %s500
        %p502 = pneg %p134
        %p503 = pneg %p131
        %p504 = pneg %p155
        %p505 = pneg %p152
        %p506 = pneg %p176
        %p507 = pneg %p173
        %p508 = pneg %p197
        %p509 = pneg %p194
        %p510 = pneg %p218
        %p511 = pneg %p215
        %p512 = pneg %p239
        %p513 = pneg %p236
        %p514 = pneg %p260
        %p515 = pneg %p257
        %p516 = pneg %p281
        %p517 = pneg %p278
        %p518 = pneg %p302
        %p519 = pneg %p299
        %p520 = pneg %p330
        %p521 = pneg %p327
        %s522 = sand.u32 %s317, 1
        %s523 = scalar_lea.sflag [#allocation3], %s522
        %s524 = sand.u32 %s317, 1
        %s525 = smul.addr %s524, 64
        %s526 = scalar_lea.vmem [#allocation2], %s525
        %p527 = pneg %p358
        %p528 = pneg %p355
        %s529 = smul.u32 16, %s32
        %p530 = scmp.lt.s32.totalorder %s31, 1
        %s531 = scalar_select %p530, %s31, 1
        %p532 = scmp.lt.s32.totalorder %s529, 31
        %s533 = scalar_select %p532, %s529, 31
        %s534 = smul.addr %s531, 32
        %s535 = sadd.s32 %s533, %s534
        %s536 = smul.addr %s535, 8
        %s537 = scalar_lea.vmem %s12, %s536
        %s538 = smul.u32 %s32, 4
        %s539 = ssub.s32 %s538, 1
        %p540 = scmp.gt.s32.totalorder %s539, 0
        %s541 = scalar_select %p540, %s539, 0
        %s542 = smul.u32 4, %s541
        %p543 = scmp.lt.s32.totalorder %s31, 1
        %s544 = scalar_select %p543, %s31, 1
        %p545 = scmp.lt.s32.totalorder %s542, 31
        %s546 = scalar_select %p545, %s542, 31
        %s547 = smul.addr %s544, 32
        %s548 = sadd.s32 %s546, %s547
        %s549 = smul.addr %s548, 4
        %s550 = scalar_lea.vmem %s0, %s549
        %s551 = smul.u32 %s32, 4
        %s552 = ssub.s32 %s551, 1
        %p553 = scmp.gt.s32.totalorder %s552, 0
        %s554 = scalar_select %p553, %s552, 0
        %s555 = smul.u32 4, %s554
        %s556 = smul.u32 16, %s32
        %p557 = scmp.lt.s32.totalorder %s31, 1
        %s558 = scalar_select %p557, %s31, 1
        %p559 = scmp.lt.s32.totalorder %s556, 31
        %s560 = scalar_select %p559, %s556, 31
        %s561 = smul.addr %s558, 32
        %s562 = sadd.s32 %s560, %s561
        %s563 = smul.addr %s562, 4
        %s564 = scalar_lea.vmem %s1, %s563
        %s565 = smul.u32 16, %s32
        %s566 = sadd.s32 %s32, 1
        %s567 = smul.u32 %s566, 4
        %p568 = scmp.lt.s32.totalorder %s567, 7
        %s569 = scalar_select %p568, %s567, 7
        %s570 = smul.u32 4, %s569
        %p571 = scmp.lt.s32.totalorder %s31, 1
        %s572 = scalar_select %p571, %s31, 1
        %p573 = scmp.lt.s32.totalorder %s570, 31
        %s574 = scalar_select %p573, %s570, 31
        %s575 = smul.addr %s572, 32
        %s576 = sadd.s32 %s574, %s575
        %s577 = smul.addr %s576, 4
        %s578 = scalar_lea.vmem %s2, %s577
        %s579 = sadd.s32 %s32, 1
        %s580 = smul.u32 %s579, 4
        %p581 = scmp.lt.s32.totalorder %s580, 7
        %s582 = scalar_select %p581, %s580, 7
        %s583 = smul.u32 4, %s582
        %s584 = smul.u32 16, %s32
        %s585 = smul.u32 16, %s32
        %p586 = scmp.lt.s32.totalorder %s31, 1
        %s587 = scalar_select %p586, %s31, 1
        %p588 = scmp.lt.s32.totalorder %s585, 31
        %s589 = scalar_select %p588, %s585, 31
        %s590 = smul.addr %s587, 32
        %s591 = sadd.s32 %s589, %s590
        %s592 = smul.addr %s591, 8
        %s593 = scalar_lea.vmem %s12, %s592
        %s594 = smul.u32 16, %s32
        %p595 = scmp.gt.s32.totalorder %s32, 0
        %s596 = scalar_select %p595, 1.0, 0.0
        %p598 = scmp.ne.f32.partialorder %s596, %s596
        %s599 = sshrl.u32 %s596, 16
        %s600 = sand.u32 %s599, 1
        %s601 = sadd.s32 32767, %s600
        %s602 = sadd.s32 %s596, %s601
        %s603 = sand.u32 %s602, 4294901760
        %s604 = scalar_select %p598, 2143289344, %s603
        %s606 = sshrl.u32 %s604, 16
        %p607 = scmp.lt.s32.totalorder %s32, 1
        %s608 = scalar_select %p607, 1.0, 0.0
        %p610 = scmp.ne.f32.partialorder %s608, %s608
        %s611 = sshrl.u32 %s608, 16
        %s612 = sand.u32 %s611, 1
        %s613 = sadd.s32 32767, %s612
        %s614 = sadd.s32 %s608, %s613
        %s615 = sand.u32 %s614, 4294901760
        %s616 = scalar_select %p610, 2143289344, %s615
        %s618 = sshrl.u32 %s616, 16
        %v619 = vld [vmem:[%s550] sm:$0xf]
        %v620 = vld [vmem:[%s550 + $0x4] sm:$0xf]
        %v621 = vld [vmem:[%s550 + $0x8] sm:$0xf]
        %v622 = vld [vmem:[%s550 + $0xc] sm:$0xf]
        %s623 = sshll.u32 %s606, 16
        %s624 = sor.u32 %s606, %s623
        %v625 = vstv %s624
        %v627 = vunpack.c.l.bf16 %v619
        %v628 = vunpack.c.l.bf16 %v620
        %v629 = vunpack.c.l.bf16 %v621
        %v630 = vunpack.c.l.bf16 %v622
        %v631 = vunpack.c.l.bf16 %v625
        %v632 = vmul.f32 %v627, %v631
        %v633 = vmul.f32 %v628, %v631
        %v634 = vmul.f32 %v629, %v631
        %v635 = vmul.f32 %v630, %v631
        %v636 = vpack.c.bf16 %v632, %v632
        %v637 = vpack.c.bf16 %v633, %v633
        %v638 = vpack.c.bf16 %v634, %v634
        %v639 = vpack.c.bf16 %v635, %v635
        %v640 = vld [vmem:[%s564] sm:$0xf]
        %v641 = vld [vmem:[%s564 + $0x4] sm:$0xf]
        %v642 = vld [vmem:[%s564 + $0x8] sm:$0xf]
        %v643 = vld [vmem:[%s564 + $0xc] sm:$0xf]
        %v644 = vld [vmem:[%s564 + $0x10] sm:$0xf]
        %v645 = vld [vmem:[%s564 + $0x14] sm:$0xf]
        %v646 = vld [vmem:[%s564 + $0x18] sm:$0xf]
        %v647 = vld [vmem:[%s564 + $0x1c] sm:$0xf]
        %v648 = vld [vmem:[%s564 + $0x20] sm:$0xf]
        %v649 = vld [vmem:[%s564 + $0x24] sm:$0xf]
        %v650 = vld [vmem:[%s564 + $0x28] sm:$0xf]
        %v651 = vld [vmem:[%s564 + $0x2c] sm:$0xf]
        %v652 = vld [vmem:[%s564 + $0x30] sm:$0xf]
        %v653 = vld [vmem:[%s564 + $0x34] sm:$0xf]
        %v654 = vld [vmem:[%s564 + $0x38] sm:$0xf]
        %v655 = vld [vmem:[%s564 + $0x3c] sm:$0xf]
        %v656 = vld [vmem:[%s578] sm:$0xf]
        %v657 = vld [vmem:[%s578 + $0x4] sm:$0xf]
        %v658 = vld [vmem:[%s578 + $0x8] sm:$0xf]
        %v659 = vld [vmem:[%s578 + $0xc] sm:$0xf]
        %s660 = sshll.u32 %s618, 16
        %s661 = sor.u32 %s618, %s660
        %v662 = vstv %s661
        %v664 = vunpack.c.l.bf16 %v656
        %v665 = vunpack.c.l.bf16 %v657
        %v666 = vunpack.c.l.bf16 %v658
        %v667 = vunpack.c.l.bf16 %v659
        %v668 = vunpack.c.l.bf16 %v662
        %v669 = vmul.f32 %v664, %v668
        %v670 = vmul.f32 %v665, %v668
        %v671 = vmul.f32 %v666, %v668
        %v672 = vmul.f32 %v667, %v668
        %v673 = vpack.c.bf16 %v669, %v669
        %v674 = vpack.c.bf16 %v670, %v670
        %v675 = vpack.c.bf16 %v671, %v671
        %v676 = vpack.c.bf16 %v672, %v672
        %v681 = vunpack.c.l.b16 %v636
        %v682 = vunpack.c.l.b16 %v637
        %v683 = vunpack.c.l.b16 %v638
        %v684 = vunpack.c.l.b16 %v639
        %v685 = vpack.c.b16 %v682, %v681
        %v686 = vpack.c.b16 %v684, %v683
        %v705 = vunpack.c.l.b16 %v640
        %v706 = vunpack.c.l.b16 %v641
        %v707 = vunpack.c.l.b16 %v642
        %v708 = vunpack.c.l.b16 %v643
        %v709 = vunpack.c.l.b16 %v644
        %v710 = vunpack.c.l.b16 %v645
        %v711 = vunpack.c.l.b16 %v646
        %v712 = vunpack.c.l.b16 %v647
        %v713 = vunpack.c.l.b16 %v648
        %v714 = vunpack.c.l.b16 %v649
        %v715 = vunpack.c.l.b16 %v650
        %v716 = vunpack.c.l.b16 %v651
        %v717 = vunpack.c.l.b16 %v652
        %v718 = vunpack.c.l.b16 %v653
        %v719 = vunpack.c.l.b16 %v654
        %v720 = vunpack.c.l.b16 %v655
        %v721 = vpack.c.b16 %v706, %v705
        %v722 = vpack.c.b16 %v708, %v707
        %v723 = vpack.c.b16 %v710, %v709
        %v724 = vpack.c.b16 %v712, %v711
        %v725 = vpack.c.b16 %v714, %v713
        %v726 = vpack.c.b16 %v716, %v715
        %v727 = vpack.c.b16 %v718, %v717
        %v728 = vpack.c.b16 %v720, %v719
        %v741 = vunpack.c.l.b16 %v673
        %v742 = vunpack.c.l.b16 %v674
        %v743 = vunpack.c.l.b16 %v675
        %v744 = vunpack.c.l.b16 %v676
        %v745 = vpack.c.b16 %v742, %v741
        %v746 = vpack.c.b16 %v744, %v743
        %v749 = vunpack.c.l.bf16 %v685
        %v750 = vunpack.c.h.bf16 %v685
        %v751 = vunpack.c.l.bf16 %v686
        %v752 = vunpack.c.h.bf16 %v686
        %v753 = vunpack.c.l.bf16 %v721
        %v754 = vunpack.c.h.bf16 %v721
        %v755 = vunpack.c.l.bf16 %v722
        %v756 = vunpack.c.h.bf16 %v722
        %v757 = vunpack.c.l.bf16 %v723
        %v758 = vunpack.c.h.bf16 %v723
        %v759 = vunpack.c.l.bf16 %v724
        %v760 = vunpack.c.h.bf16 %v724
        %v761 = vunpack.c.l.bf16 %v725
        %v762 = vunpack.c.h.bf16 %v725
        %v763 = vunpack.c.l.bf16 %v726
        %v764 = vunpack.c.h.bf16 %v726
        %v765 = vunpack.c.l.bf16 %v727
        %v766 = vunpack.c.h.bf16 %v727
        %v767 = vunpack.c.l.bf16 %v728
        %v768 = vunpack.c.h.bf16 %v728
        %v769 = vunpack.c.l.bf16 %v745
        %v770 = vunpack.c.h.bf16 %v745
        %v771 = vunpack.c.l.bf16 %v746
        %v772 = vunpack.c.h.bf16 %v746
        %v773 = vld [vmem:[%s3] sm:$0xff]
        %v774 = vld [vmem:[%s3 + $0x8] sm:$0xff]
        %v775 = vld [vmem:[%s3 + $0x10] sm:$0xff]
        %v776 = vld [vmem:[%s3 + $0x18] sm:$0xff]
        %v777 = vld [vmem:[%s3 + $0x20] sm:$0xff]
        %v778 = vld [vmem:[%s3 + $0x28] sm:$0xff]
        %v779 = vld [vmem:[%s3 + $0x30] sm:$0xff]
        %v780 = vld [vmem:[%s3 + $0x38] sm:$0xff]
        %v781 = vld [vmem:[%s3 + $0x40] sm:$0xff]
        %v782 = vld [vmem:[%s3 + $0x48] sm:$0xff]
        %v783 = vld [vmem:[%s3 + $0x50] sm:$0xff]
        %v784 = vld [vmem:[%s3 + $0x58] sm:$0xff]
        %v785 = vld [vmem:[%s3 + $0x60] sm:$0xff]
        %v786 = vld [vmem:[%s3 + $0x68] sm:$0xff]
        %v787 = vld [vmem:[%s3 + $0x70] sm:$0xff]
        %v788 = vld [vmem:[%s3 + $0x78] sm:$0xff]
        %v789 = vld [vmem:[%s3 + $0x80] sm:$0xff]
        %v790 = vld [vmem:[%s3 + $0x88] sm:$0xff]
        %v791 = vld [vmem:[%s3 + $0x90] sm:$0xff]
        %v792 = vld [vmem:[%s3 + $0x98] sm:$0xff]
        %v793 = vld [vmem:[%s3 + $0xa0] sm:$0xff]
        %v794 = vld [vmem:[%s3 + $0xa8] sm:$0xff]
        %v795 = vld [vmem:[%s3 + $0xb0] sm:$0xff]
        %v796 = vld [vmem:[%s3 + $0xb8] sm:$0xff]
        %v797 = vld [vmem:[%s4] sm:$0xff]
        %v798 = vld [vmem:[%s4 + $0x8] sm:$0xff]
        %v799 = vld [vmem:[%s4 + $0x10] sm:$0xff]
        %v800 = vld [vmem:[%s4 + $0x18] sm:$0xff]
        %v801 = vld [vmem:[%s4 + $0x20] sm:$0xff]
        %v802 = vld [vmem:[%s4 + $0x28] sm:$0xff]
        %v803 = vld [vmem:[%s4 + $0x30] sm:$0xff]
        %v804 = vld [vmem:[%s4 + $0x38] sm:$0xff]
        %v805 = vld [vmem:[%s4 + $0x40] sm:$0xff]
        %v806 = vld [vmem:[%s4 + $0x48] sm:$0xff]
        %v807 = vld [vmem:[%s4 + $0x50] sm:$0xff]
        %v808 = vld [vmem:[%s4 + $0x58] sm:$0xff]
        %v809 = vld [vmem:[%s4 + $0x60] sm:$0xff]
        %v810 = vld [vmem:[%s4 + $0x68] sm:$0xff]
        %v811 = vld [vmem:[%s4 + $0x70] sm:$0xff]
        %v812 = vld [vmem:[%s4 + $0x78] sm:$0xff]
        %v813 = vld [vmem:[%s4 + $0x80] sm:$0xff]
        %v814 = vld [vmem:[%s4 + $0x88] sm:$0xff]
        %v815 = vld [vmem:[%s4 + $0x90] sm:$0xff]
        %v816 = vld [vmem:[%s4 + $0x98] sm:$0xff]
        %v817 = vld [vmem:[%s4 + $0xa0] sm:$0xff]
        %v818 = vld [vmem:[%s4 + $0xa8] sm:$0xff]
        %v819 = vld [vmem:[%s4 + $0xb0] sm:$0xff]
        %v820 = vld [vmem:[%s4 + $0xb8] sm:$0xff]
        %v821 = vrot.slane %v749, 7
        %v822 = vrot.slane %v750, 7
        %v823 = vrot.slane %v751, 7
        %v824 = vrot.slane %v752, 7
        %v825 = vrot.slane %v753, 7
        %v826 = vrot.slane %v754, 7
        %v827 = vrot.slane %v755, 7
        %v828 = vrot.slane %v756, 7
        %v829 = vrot.slane %v757, 7
        %v830 = vrot.slane %v758, 7
        %v831 = vrot.slane %v759, 7
        %v832 = vrot.slane %v760, 7
        %v833 = vrot.slane %v761, 7
        %v834 = vrot.slane %v762, 7
        %v835 = vrot.slane %v763, 7
        %v836 = vrot.slane %v764, 7
        %v837 = vrot.slane %v765, 7
        %v838 = vrot.slane %v766, 7
        %v839 = vrot.slane %v767, 7
        %v840 = vrot.slane %v768, 7
        %v841 = vrot.slane %v769, 7
        %v842 = vrot.slane %v770, 7
        %v843 = vrot.slane %v771, 7
        %v844 = vrot.slane %v772, 7
        %v845 = vlaneseq
        %v846 = vshrl.u32 %v845, 7
        %vm847 = vcmp.lt.s32.totalorder %v846, 1
        %v848 = vsel %vm847, %v843, %v844
        %v849 = vsel %vm847, %v842, %v843
        %v850 = vsel %vm847, %v841, %v842
        %v851 = vsel %vm847, %v840, %v841
        %v852 = vsel %vm847, %v839, %v840
        %v853 = vsel %vm847, %v838, %v839
        %v854 = vsel %vm847, %v837, %v838
        %v855 = vsel %vm847, %v836, %v837
        %v856 = vsel %vm847, %v835, %v836
        %v857 = vsel %vm847, %v834, %v835
        %v858 = vsel %vm847, %v833, %v834
        %v859 = vsel %vm847, %v832, %v833
        %v860 = vsel %vm847, %v831, %v832
        %v861 = vsel %vm847, %v830, %v831
        %v862 = vsel %vm847, %v829, %v830
        %v863 = vsel %vm847, %v828, %v829
        %v864 = vsel %vm847, %v827, %v828
        %v865 = vsel %vm847, %v826, %v827
        %v866 = vsel %vm847, %v825, %v826
        %v867 = vsel %vm847, %v824, %v825
        %v868 = vsel %vm847, %v823, %v824
        %v869 = vsel %vm847, %v822, %v823
        %v870 = vsel %vm847, %v821, %v822
        %v871 = vsel %vm847, %v844, %v821
        %873 = vset.pattern.permute.xlu0 0
        %874 = vperm.xlu0 %873, %v773
        %v875 = vpop.permute.xlu0 %874
        %878 = vset.pattern.permute.xlu0 0
        %879 = vperm.xlu0 %878, %v774
        %v880 = vpop.permute.xlu0 %879
        %883 = vset.pattern.permute.xlu0 0
        %884 = vperm.xlu0 %883, %v775
        %v885 = vpop.permute.xlu0 %884
        %888 = vset.pattern.permute.xlu0 0
        %889 = vperm.xlu0 %888, %v776
        %v890 = vpop.permute.xlu0 %889
        %893 = vset.pattern.permute.xlu0 0
        %894 = vperm.xlu0 %893, %v777
        %v895 = vpop.permute.xlu0 %894
        %898 = vset.pattern.permute.xlu0 0
        %899 = vperm.xlu0 %898, %v778
        %v900 = vpop.permute.xlu0 %899
        %903 = vset.pattern.permute.xlu0 0
        %904 = vperm.xlu0 %903, %v779
        %v905 = vpop.permute.xlu0 %904
        %908 = vset.pattern.permute.xlu0 0
        %909 = vperm.xlu0 %908, %v780
        %v910 = vpop.permute.xlu0 %909
        %913 = vset.pattern.permute.xlu0 0
        %914 = vperm.xlu0 %913, %v781
        %v915 = vpop.permute.xlu0 %914
        %918 = vset.pattern.permute.xlu0 0
        %919 = vperm.xlu0 %918, %v782
        %v920 = vpop.permute.xlu0 %919
        %923 = vset.pattern.permute.xlu0 0
        %924 = vperm.xlu0 %923, %v783
        %v925 = vpop.permute.xlu0 %924
        %928 = vset.pattern.permute.xlu0 0
        %929 = vperm.xlu0 %928, %v784
        %v930 = vpop.permute.xlu0 %929
        %933 = vset.pattern.permute.xlu0 0
        %934 = vperm.xlu0 %933, %v785
        %v935 = vpop.permute.xlu0 %934
        %938 = vset.pattern.permute.xlu0 0
        %939 = vperm.xlu0 %938, %v786
        %v940 = vpop.permute.xlu0 %939
        %943 = vset.pattern.permute.xlu0 0
        %944 = vperm.xlu0 %943, %v787
        %v945 = vpop.permute.xlu0 %944
        %948 = vset.pattern.permute.xlu0 0
        %949 = vperm.xlu0 %948, %v788
        %v950 = vpop.permute.xlu0 %949
        %953 = vset.pattern.permute.xlu0 0
        %954 = vperm.xlu0 %953, %v789
        %v955 = vpop.permute.xlu0 %954
        %958 = vset.pattern.permute.xlu0 0
        %959 = vperm.xlu0 %958, %v790
        %v960 = vpop.permute.xlu0 %959
        %963 = vset.pattern.permute.xlu0 0
        %964 = vperm.xlu0 %963, %v791
        %v965 = vpop.permute.xlu0 %964
        %968 = vset.pattern.permute.xlu0 0
        %969 = vperm.xlu0 %968, %v792
        %v970 = vpop.permute.xlu0 %969
        %973 = vset.pattern.permute.xlu0 0
        %974 = vperm.xlu0 %973, %v793
        %v975 = vpop.permute.xlu0 %974
        %978 = vset.pattern.permute.xlu0 0
        %979 = vperm.xlu0 %978, %v794
        %v980 = vpop.permute.xlu0 %979
        %983 = vset.pattern.permute.xlu0 0
        %984 = vperm.xlu0 %983, %v795
        %v985 = vpop.permute.xlu0 %984
        %988 = vset.pattern.permute.xlu0 0
        %989 = vperm.xlu0 %988, %v796
        %v990 = vpop.permute.xlu0 %989
        %v992 = vmul.f32 %v871, %v875
        %v993 = vmul.f32 %v870, %v880
        %v994 = vmul.f32 %v869, %v885
        %v995 = vmul.f32 %v868, %v890
        %v996 = vmul.f32 %v867, %v895
        %v997 = vmul.f32 %v866, %v900
        %v998 = vmul.f32 %v865, %v905
        %v999 = vmul.f32 %v864, %v910
        %v1000 = vmul.f32 %v863, %v915
        %v1001 = vmul.f32 %v862, %v920
        %v1002 = vmul.f32 %v861, %v925
        %v1003 = vmul.f32 %v860, %v930
        %v1004 = vmul.f32 %v859, %v935
        %v1005 = vmul.f32 %v858, %v940
        %v1006 = vmul.f32 %v857, %v945
        %v1007 = vmul.f32 %v856, %v950
        %v1008 = vmul.f32 %v855, %v955
        %v1009 = vmul.f32 %v854, %v960
        %v1010 = vmul.f32 %v853, %v965
        %v1011 = vmul.f32 %v852, %v970
        %v1012 = vmul.f32 %v851, %v975
        %v1013 = vmul.f32 %v850, %v980
        %v1014 = vmul.f32 %v849, %v985
        %v1015 = vmul.f32 %v848, %v990
        %v1016 = vrot.slane %v749, 1
        %v1017 = vrot.slane %v750, 1
        %v1018 = vrot.slane %v751, 1
        %v1019 = vrot.slane %v752, 1
        %v1020 = vrot.slane %v753, 1
        %v1021 = vrot.slane %v754, 1
        %v1022 = vrot.slane %v755, 1
        %v1023 = vrot.slane %v756, 1
        %v1024 = vrot.slane %v757, 1
        %v1025 = vrot.slane %v758, 1
        %v1026 = vrot.slane %v759, 1
        %v1027 = vrot.slane %v760, 1
        %v1028 = vrot.slane %v761, 1
        %v1029 = vrot.slane %v762, 1
        %v1030 = vrot.slane %v763, 1
        %v1031 = vrot.slane %v764, 1
        %v1032 = vrot.slane %v765, 1
        %v1033 = vrot.slane %v766, 1
        %v1034 = vrot.slane %v767, 1
        %v1035 = vrot.slane %v768, 1
        %v1036 = vrot.slane %v769, 1
        %v1037 = vrot.slane %v770, 1
        %v1038 = vrot.slane %v771, 1
        %v1039 = vrot.slane %v772, 1
        %vm1040 = vcmp.lt.s32.totalorder %v846, 7
        %v1041 = vsel %vm1040, %v1038, %v1039
        %v1042 = vsel %vm1040, %v1037, %v1038
        %v1043 = vsel %vm1040, %v1036, %v1037
        %v1044 = vsel %vm1040, %v1035, %v1036
        %v1045 = vsel %vm1040, %v1034, %v1035
        %v1046 = vsel %vm1040, %v1033, %v1034
        %v1047 = vsel %vm1040, %v1032, %v1033
        %v1048 = vsel %vm1040, %v1031, %v1032
        %v1049 = vsel %vm1040, %v1030, %v1031
        %v1050 = vsel %vm1040, %v1029, %v1030
        %v1051 = vsel %vm1040, %v1028, %v1029
        %v1052 = vsel %vm1040, %v1027, %v1028
        %v1053 = vsel %vm1040, %v1026, %v1027
        %v1054 = vsel %vm1040, %v1025, %v1026
        %v1055 = vsel %vm1040, %v1024, %v1025
        %v1056 = vsel %vm1040, %v1023, %v1024
        %v1057 = vsel %vm1040, %v1022, %v1023
        %v1058 = vsel %vm1040, %v1021, %v1022
        %v1059 = vsel %vm1040, %v1020, %v1021
        %v1060 = vsel %vm1040, %v1019, %v1020
        %v1061 = vsel %vm1040, %v1018, %v1019
        %v1062 = vsel %vm1040, %v1017, %v1018
        %v1063 = vsel %vm1040, %v1016, %v1017
        %v1064 = vsel %vm1040, %v1039, %v1016
        %1066 = vset.pattern.permute.xlu0 0
        %1067 = vperm.xlu0 %1066, %v797
        %v1068 = vpop.permute.xlu0 %1067
        %1071 = vset.pattern.permute.xlu0 0
        %1072 = vperm.xlu0 %1071, %v798
        %v1073 = vpop.permute.xlu0 %1072
        %1076 = vset.pattern.permute.xlu0 0
        %1077 = vperm.xlu0 %1076, %v799
        %v1078 = vpop.permute.xlu0 %1077
        %1081 = vset.pattern.permute.xlu0 0
        %1082 = vperm.xlu0 %1081, %v800
        %v1083 = vpop.permute.xlu0 %1082
        %1086 = vset.pattern.permute.xlu0 0
        %1087 = vperm.xlu0 %1086, %v801
        %v1088 = vpop.permute.xlu0 %1087
        %1091 = vset.pattern.permute.xlu0 0
        %1092 = vperm.xlu0 %1091, %v802
        %v1093 = vpop.permute.xlu0 %1092
        %1096 = vset.pattern.permute.xlu0 0
        %1097 = vperm.xlu0 %1096, %v803
        %v1098 = vpop.permute.xlu0 %1097
        %1101 = vset.pattern.permute.xlu0 0
        %1102 = vperm.xlu0 %1101, %v804
        %v1103 = vpop.permute.xlu0 %1102
        %1106 = vset.pattern.permute.xlu0 0
        %1107 = vperm.xlu0 %1106, %v805
        %v1108 = vpop.permute.xlu0 %1107
        %1111 = vset.pattern.permute.xlu0 0
        %1112 = vperm.xlu0 %1111, %v806
        %v1113 = vpop.permute.xlu0 %1112
        %1116 = vset.pattern.permute.xlu0 0
        %1117 = vperm.xlu0 %1116, %v807
        %v1118 = vpop.permute.xlu0 %1117
        %1121 = vset.pattern.permute.xlu0 0
        %1122 = vperm.xlu0 %1121, %v808
        %v1123 = vpop.permute.xlu0 %1122
        %1126 = vset.pattern.permute.xlu0 0
        %1127 = vperm.xlu0 %1126, %v809
        %v1128 = vpop.permute.xlu0 %1127
        %1131 = vset.pattern.permute.xlu0 0
        %1132 = vperm.xlu0 %1131, %v810
        %v1133 = vpop.permute.xlu0 %1132
        %1136 = vset.pattern.permute.xlu0 0
        %1137 = vperm.xlu0 %1136, %v811
        %v1138 = vpop.permute.xlu0 %1137
        %1141 = vset.pattern.permute.xlu0 0
        %1142 = vperm.xlu0 %1141, %v812
        %v1143 = vpop.permute.xlu0 %1142
        %1146 = vset.pattern.permute.xlu0 0
        %1147 = vperm.xlu0 %1146, %v813
        %v1148 = vpop.permute.xlu0 %1147
        %1151 = vset.pattern.permute.xlu0 0
        %1152 = vperm.xlu0 %1151, %v814
        %v1153 = vpop.permute.xlu0 %1152
        %1156 = vset.pattern.permute.xlu0 0
        %1157 = vperm.xlu0 %1156, %v815
        %v1158 = vpop.permute.xlu0 %1157
        %1161 = vset.pattern.permute.xlu0 0
        %1162 = vperm.xlu0 %1161, %v816
        %v1163 = vpop.permute.xlu0 %1162
        %1166 = vset.pattern.permute.xlu0 0
        %1167 = vperm.xlu0 %1166, %v817
        %v1168 = vpop.permute.xlu0 %1167
        %1171 = vset.pattern.permute.xlu0 0
        %1172 = vperm.xlu0 %1171, %v818
        %v1173 = vpop.permute.xlu0 %1172
        %1176 = vset.pattern.permute.xlu0 0
        %1177 = vperm.xlu0 %1176, %v819
        %v1178 = vpop.permute.xlu0 %1177
        %1181 = vset.pattern.permute.xlu0 0
        %1182 = vperm.xlu0 %1181, %v820
        %v1183 = vpop.permute.xlu0 %1182
        %v1185 = vmul.f32 %v1063, %v1068
        %v1186 = vmul.f32 %v1062, %v1073
        %v1187 = vmul.f32 %v1061, %v1078
        %v1188 = vmul.f32 %v1060, %v1083
        %v1189 = vmul.f32 %v1059, %v1088
        %v1190 = vmul.f32 %v1058, %v1093
        %v1191 = vmul.f32 %v1057, %v1098
        %v1192 = vmul.f32 %v1056, %v1103
        %v1193 = vmul.f32 %v1055, %v1108
        %v1194 = vmul.f32 %v1054, %v1113
        %v1195 = vmul.f32 %v1053, %v1118
        %v1196 = vmul.f32 %v1052, %v1123
        %v1197 = vmul.f32 %v1051, %v1128
        %v1198 = vmul.f32 %v1050, %v1133
        %v1199 = vmul.f32 %v1049, %v1138
        %v1200 = vmul.f32 %v1048, %v1143
        %v1201 = vmul.f32 %v1047, %v1148
        %v1202 = vmul.f32 %v1046, %v1153
        %v1203 = vmul.f32 %v1045, %v1158
        %v1204 = vmul.f32 %v1044, %v1163
        %v1205 = vmul.f32 %v1043, %v1168
        %v1206 = vmul.f32 %v1042, %v1173
        %v1207 = vmul.f32 %v1041, %v1178
        %v1208 = vmul.f32 %v1064, %v1183
        %v1209 = vpack.c.bf16 %v749, %v992
        %v1210 = vpack.c.bf16 %v1185, %v1185
        %v1211 = vpack.c.bf16 %v750, %v993
        %v1212 = vpack.c.bf16 %v1186, %v1186
        %v1213 = vpack.c.bf16 %v751, %v994
        %v1214 = vpack.c.bf16 %v1187, %v1187
        %v1215 = vpack.c.bf16 %v752, %v995
        %v1216 = vpack.c.bf16 %v1188, %v1188
        %v1217 = vpack.c.bf16 %v753, %v996
        %v1218 = vpack.c.bf16 %v1189, %v1189
        %v1219 = vpack.c.bf16 %v754, %v997
        %v1220 = vpack.c.bf16 %v1190, %v1190
        %v1221 = vpack.c.bf16 %v755, %v998
        %v1222 = vpack.c.bf16 %v1191, %v1191
        %v1223 = vpack.c.bf16 %v756, %v999
        %v1224 = vpack.c.bf16 %v1192, %v1192
        %v1225 = vpack.c.bf16 %v757, %v1000
        %v1226 = vpack.c.bf16 %v1193, %v1193
        %v1227 = vpack.c.bf16 %v758, %v1001
        %v1228 = vpack.c.bf16 %v1194, %v1194
        %v1229 = vpack.c.bf16 %v759, %v1002
        %v1230 = vpack.c.bf16 %v1195, %v1195
        %v1231 = vpack.c.bf16 %v760, %v1003
        %v1232 = vpack.c.bf16 %v1196, %v1196
        %v1233 = vpack.c.bf16 %v761, %v1004
        %v1234 = vpack.c.bf16 %v1197, %v1197
        %v1235 = vpack.c.bf16 %v762, %v1005
        %v1236 = vpack.c.bf16 %v1198, %v1198
        %v1237 = vpack.c.bf16 %v763, %v1006
        %v1238 = vpack.c.bf16 %v1199, %v1199
        %v1239 = vpack.c.bf16 %v764, %v1007
        %v1240 = vpack.c.bf16 %v1200, %v1200
        %v1241 = vpack.c.bf16 %v765, %v1008
        %v1242 = vpack.c.bf16 %v1201, %v1201
        %v1243 = vpack.c.bf16 %v766, %v1009
        %v1244 = vpack.c.bf16 %v1202, %v1202
        %v1245 = vpack.c.bf16 %v767, %v1010
        %v1246 = vpack.c.bf16 %v1203, %v1203
        %v1247 = vpack.c.bf16 %v768, %v1011
        %v1248 = vpack.c.bf16 %v1204, %v1204
        %v1249 = vpack.c.bf16 %v769, %v1012
        %v1250 = vpack.c.bf16 %v1205, %v1205
        %v1251 = vpack.c.bf16 %v770, %v1013
        %v1252 = vpack.c.bf16 %v1206, %v1206
        %v1253 = vpack.c.bf16 %v771, %v1014
        %v1254 = vpack.c.bf16 %v1207, %v1207
        %v1255 = vpack.c.bf16 %v772, %v1015
        %v1256 = vpack.c.bf16 %v1208, %v1208
        %v1257 = vld [vmem:[%s5] sm:$0xf]
        %v1258 = vld [vmem:[%s5 + $0x4] sm:$0xf]
        %v1259 = vld [vmem:[%s5 + $0x8] sm:$0xf]
        %v1260 = vld [vmem:[%s5 + $0xc] sm:$0xf]
        %v1261 = vld [vmem:[%s5 + $0x10] sm:$0xf]
        %v1262 = vld [vmem:[%s5 + $0x14] sm:$0xf]
        %v1263 = vld [vmem:[%s5 + $0x18] sm:$0xf]
        %v1264 = vld [vmem:[%s5 + $0x1c] sm:$0xf]
        %v1265 = vld [vmem:[%s5 + $0x20] sm:$0xf]
        %v1266 = vld [vmem:[%s5 + $0x24] sm:$0xf]
        %v1267 = vld [vmem:[%s5 + $0x28] sm:$0xf]
        %v1268 = vld [vmem:[%s5 + $0x2c] sm:$0xf]
        %v1269 = vld [vmem:[%s5 + $0x30] sm:$0xf]
        %v1270 = vld [vmem:[%s5 + $0x34] sm:$0xf]
        %v1271 = vld [vmem:[%s5 + $0x38] sm:$0xf]
        %v1272 = vld [vmem:[%s5 + $0x3c] sm:$0xf]
        %v1273 = vld [vmem:[%s5 + $0x40] sm:$0xf]
        %v1274 = vld [vmem:[%s5 + $0x44] sm:$0xf]
        %v1275 = vld [vmem:[%s5 + $0x48] sm:$0xf]
        %v1276 = vld [vmem:[%s5 + $0x4c] sm:$0xf]
        %v1277 = vld [vmem:[%s5 + $0x50] sm:$0xf]
        %v1278 = vld [vmem:[%s5 + $0x54] sm:$0xf]
        %v1279 = vld [vmem:[%s5 + $0x58] sm:$0xf]
        %v1280 = vld [vmem:[%s5 + $0x5c] sm:$0xf]
        %v1281 = vld [vmem:[%s5 + $0x60] sm:$0xf]
        %v1282 = vld [vmem:[%s5 + $0x64] sm:$0xf]
        %v1283 = vld [vmem:[%s5 + $0x68] sm:$0xf]
        %v1284 = vld [vmem:[%s5 + $0x6c] sm:$0xf]
        %v1285 = vld [vmem:[%s5 + $0x70] sm:$0xf]
        %v1286 = vld [vmem:[%s5 + $0x74] sm:$0xf]
        %v1287 = vld [vmem:[%s5 + $0x78] sm:$0xf]
        %v1288 = vld [vmem:[%s5 + $0x7c] sm:$0xf]
        %v1289 = vld [vmem:[%s5 + $0x80] sm:$0xf]
        %v1290 = vld [vmem:[%s5 + $0x84] sm:$0xf]
        %v1291 = vld [vmem:[%s5 + $0x88] sm:$0xf]
        %v1292 = vld [vmem:[%s5 + $0x8c] sm:$0xf]
        %v1293 = vld [vmem:[%s5 + $0x90] sm:$0xf]
        %v1294 = vld [vmem:[%s5 + $0x94] sm:$0xf]
        %v1295 = vld [vmem:[%s5 + $0x98] sm:$0xf]
        %v1296 = vld [vmem:[%s5 + $0x9c] sm:$0xf]
        %v1297 = vld [vmem:[%s5 + $0xa0] sm:$0xf]
        %v1298 = vld [vmem:[%s5 + $0xa4] sm:$0xf]
        %v1299 = vld [vmem:[%s5 + $0xa8] sm:$0xf]
        %v1300 = vld [vmem:[%s5 + $0xac] sm:$0xf]
        %v1301 = vld [vmem:[%s5 + $0xb0] sm:$0xf]
        %v1302 = vld [vmem:[%s5 + $0xb4] sm:$0xf]
        %v1303 = vld [vmem:[%s5 + $0xb8] sm:$0xf]
        %v1304 = vld [vmem:[%s5 + $0xbc] sm:$0xf]
        %s1305 = scalar_lea.vmem %s5, 192
        %v1306 = vld [vmem:[%s1305] sm:$0xf]
        %v1307 = vld [vmem:[%s1305 + $0x4] sm:$0xf]
        %v1308 = vld [vmem:[%s1305 + $0x8] sm:$0xf]
        %v1309 = vld [vmem:[%s1305 + $0xc] sm:$0xf]
        %v1310 = vld [vmem:[%s1305 + $0x10] sm:$0xf]
        %v1311 = vld [vmem:[%s1305 + $0x14] sm:$0xf]
        %v1312 = vld [vmem:[%s1305 + $0x18] sm:$0xf]
        %v1313 = vld [vmem:[%s1305 + $0x1c] sm:$0xf]
        %v1314 = vld [vmem:[%s1305 + $0x20] sm:$0xf]
        %v1315 = vld [vmem:[%s1305 + $0x24] sm:$0xf]
        %v1316 = vld [vmem:[%s1305 + $0x28] sm:$0xf]
        %v1317 = vld [vmem:[%s1305 + $0x2c] sm:$0xf]
        %v1318 = vld [vmem:[%s1305 + $0x30] sm:$0xf]
        %v1319 = vld [vmem:[%s1305 + $0x34] sm:$0xf]
        %v1320 = vld [vmem:[%s1305 + $0x38] sm:$0xf]
        %v1321 = vld [vmem:[%s1305 + $0x3c] sm:$0xf]
        %v1322 = vld [vmem:[%s1305 + $0x40] sm:$0xf]
        %v1323 = vld [vmem:[%s1305 + $0x44] sm:$0xf]
        %v1324 = vld [vmem:[%s1305 + $0x48] sm:$0xf]
        %v1325 = vld [vmem:[%s1305 + $0x4c] sm:$0xf]
        %v1326 = vld [vmem:[%s1305 + $0x50] sm:$0xf]
        %v1327 = vld [vmem:[%s1305 + $0x54] sm:$0xf]
        %v1328 = vld [vmem:[%s1305 + $0x58] sm:$0xf]
        %v1329 = vld [vmem:[%s1305 + $0x5c] sm:$0xf]
        %v1330 = vld [vmem:[%s1305 + $0x60] sm:$0xf]
        %v1331 = vld [vmem:[%s1305 + $0x64] sm:$0xf]
        %v1332 = vld [vmem:[%s1305 + $0x68] sm:$0xf]
        %v1333 = vld [vmem:[%s1305 + $0x6c] sm:$0xf]
        %v1334 = vld [vmem:[%s1305 + $0x70] sm:$0xf]
        %v1335 = vld [vmem:[%s1305 + $0x74] sm:$0xf]
        %v1336 = vld [vmem:[%s1305 + $0x78] sm:$0xf]
        %v1337 = vld [vmem:[%s1305 + $0x7c] sm:$0xf]
        %v1338 = vld [vmem:[%s1305 + $0x80] sm:$0xf]
        %v1339 = vld [vmem:[%s1305 + $0x84] sm:$0xf]
        %v1340 = vld [vmem:[%s1305 + $0x88] sm:$0xf]
        %v1341 = vld [vmem:[%s1305 + $0x8c] sm:$0xf]
        %v1342 = vld [vmem:[%s1305 + $0x90] sm:$0xf]
        %v1343 = vld [vmem:[%s1305 + $0x94] sm:$0xf]
        %v1344 = vld [vmem:[%s1305 + $0x98] sm:$0xf]
        %v1345 = vld [vmem:[%s1305 + $0x9c] sm:$0xf]
        %v1346 = vld [vmem:[%s1305 + $0xa0] sm:$0xf]
        %v1347 = vld [vmem:[%s1305 + $0xa4] sm:$0xf]
        %v1348 = vld [vmem:[%s1305 + $0xa8] sm:$0xf]
        %v1349 = vld [vmem:[%s1305 + $0xac] sm:$0xf]
        %v1350 = vld [vmem:[%s1305 + $0xb0] sm:$0xf]
        %v1351 = vld [vmem:[%s1305 + $0xb4] sm:$0xf]
        %v1352 = vld [vmem:[%s1305 + $0xb8] sm:$0xf]
        %v1353 = vld [vmem:[%s1305 + $0xbc] sm:$0xf]
        %v1394 = vunpack.c.l.b16 %v1213
        %v1395 = vunpack.c.h.b16 %v1213
        %v1396 = vunpack.c.l.b16 %v1214
        %v1397 = vunpack.c.l.b16 %v1215
        %v1398 = vunpack.c.h.b16 %v1215
        %v1399 = vunpack.c.l.b16 %v1216
        %v1400 = vunpack.c.l.b16 %v1217
        %v1401 = vunpack.c.h.b16 %v1217
        %v1402 = vunpack.c.l.b16 %v1218
        %v1403 = vunpack.c.l.b16 %v1219
        %v1404 = vunpack.c.h.b16 %v1219
        %v1405 = vunpack.c.l.b16 %v1220
        %v1406 = vunpack.c.l.b16 %v1221
        %v1407 = vunpack.c.h.b16 %v1221
        %v1408 = vunpack.c.l.b16 %v1222
        %v1409 = vunpack.c.l.b16 %v1223
        %v1410 = vunpack.c.h.b16 %v1223
        %v1411 = vunpack.c.l.b16 %v1224
        %v1412 = vunpack.c.l.b16 %v1225
        %v1413 = vunpack.c.h.b16 %v1225
        %v1414 = vunpack.c.l.b16 %v1226
        %v1415 = vunpack.c.l.b16 %v1227
        %v1416 = vunpack.c.h.b16 %v1227
        %v1417 = vunpack.c.l.b16 %v1228
        %v1418 = vunpack.c.l.b16 %v1229
        %v1419 = vunpack.c.h.b16 %v1229
        %v1420 = vunpack.c.l.b16 %v1230
        %v1421 = vunpack.c.l.b16 %v1231
        %v1422 = vunpack.c.h.b16 %v1231
        %v1423 = vunpack.c.l.b16 %v1232
        %v1424 = vunpack.c.l.b16 %v1233
        %v1425 = vunpack.c.h.b16 %v1233
        %v1426 = vunpack.c.l.b16 %v1234
        %v1427 = vunpack.c.l.b16 %v1235
        %v1428 = vunpack.c.h.b16 %v1235
        %v1429 = vunpack.c.l.b16 %v1236
        %v1430 = vunpack.c.l.b16 %v1237
        %v1431 = vunpack.c.h.b16 %v1237
        %v1432 = vunpack.c.l.b16 %v1238
        %v1433 = vunpack.c.l.b16 %v1239
        %v1434 = vunpack.c.h.b16 %v1239
        %v1435 = vunpack.c.l.b16 %v1240
        %v1436 = vunpack.c.l.b16 %v1241
        %v1437 = vunpack.c.h.b16 %v1241
        %v1438 = vunpack.c.l.b16 %v1242
        %v1439 = vunpack.c.l.b16 %v1243
        %v1440 = vunpack.c.h.b16 %v1243
        %v1441 = vunpack.c.l.b16 %v1244
        %v1442 = vunpack.c.l.b16 %v1245
        %v1443 = vunpack.c.h.b16 %v1245
        %v1444 = vunpack.c.l.b16 %v1246
        %v1445 = vunpack.c.l.b16 %v1247
        %v1446 = vunpack.c.h.b16 %v1247
        %v1447 = vunpack.c.l.b16 %v1248
        %v1448 = vunpack.c.l.b16 %v1249
        %v1449 = vunpack.c.h.b16 %v1249
        %v1450 = vunpack.c.l.b16 %v1250
        %v1451 = vunpack.c.l.b16 %v1251
        %v1452 = vunpack.c.h.b16 %v1251
        %v1453 = vunpack.c.l.b16 %v1252
        %v1454 = vpack.c.b16 %v1397, %v1394
        %v1455 = vpack.c.b16 %v1398, %v1395
        %v1456 = vpack.c.b16 %v1399, %v1396
        %v1457 = vpack.c.b16 %v1403, %v1400
        %v1458 = vpack.c.b16 %v1404, %v1401
        %v1459 = vpack.c.b16 %v1405, %v1402
        %v1460 = vpack.c.b16 %v1409, %v1406
        %v1461 = vpack.c.b16 %v1410, %v1407
        %v1462 = vpack.c.b16 %v1411, %v1408
        %v1463 = vpack.c.b16 %v1415, %v1412
        %v1464 = vpack.c.b16 %v1416, %v1413
        %v1465 = vpack.c.b16 %v1417, %v1414
        %v1466 = vpack.c.b16 %v1421, %v1418
        %v1467 = vpack.c.b16 %v1422, %v1419
        %v1468 = vpack.c.b16 %v1423, %v1420
        %v1469 = vpack.c.b16 %v1427, %v1424
        %v1470 = vpack.c.b16 %v1428, %v1425
        %v1471 = vpack.c.b16 %v1429, %v1426
        %v1472 = vpack.c.b16 %v1433, %v1430
        %v1473 = vpack.c.b16 %v1434, %v1431
        %v1474 = vpack.c.b16 %v1435, %v1432
        %v1475 = vpack.c.b16 %v1439, %v1436
        %v1476 = vpack.c.b16 %v1440, %v1437
        %v1477 = vpack.c.b16 %v1441, %v1438
        %v1478 = vpack.c.b16 %v1445, %v1442
        %v1479 = vpack.c.b16 %v1446, %v1443
        %v1480 = vpack.c.b16 %v1447, %v1444
        %v1481 = vpack.c.b16 %v1451, %v1448
        %v1482 = vpack.c.b16 %v1452, %v1449
        %v1483 = vpack.c.b16 %v1453, %v1450
        %v1562 = vunpack.c.l.b16 %v1306
        %v1563 = vunpack.c.l.b16 %v1307
        %v1564 = vunpack.c.l.b16 %v1308
        %v1565 = vunpack.c.l.b16 %v1309
        %v1566 = vunpack.c.l.b16 %v1310
        %v1567 = vunpack.c.l.b16 %v1311
        %v1568 = vunpack.c.l.b16 %v1312
        %v1569 = vunpack.c.l.b16 %v1313
        %v1570 = vunpack.c.l.b16 %v1314
        %v1571 = vunpack.c.l.b16 %v1315
        %v1572 = vunpack.c.l.b16 %v1316
        %v1573 = vunpack.c.l.b16 %v1317
        %v1574 = vunpack.c.l.b16 %v1318
        %v1575 = vunpack.c.l.b16 %v1319
        %v1576 = vunpack.c.l.b16 %v1320
        %v1577 = vunpack.c.l.b16 %v1321
        %v1578 = vunpack.c.l.b16 %v1322
        %v1579 = vunpack.c.l.b16 %v1323
        %v1580 = vunpack.c.l.b16 %v1324
        %v1581 = vunpack.c.l.b16 %v1325
        %v1582 = vunpack.c.l.b16 %v1326
        %v1583 = vunpack.c.l.b16 %v1327
        %v1584 = vunpack.c.l.b16 %v1328
        %v1585 = vunpack.c.l.b16 %v1329
        %v1586 = vunpack.c.l.b16 %v1330
        %v1587 = vunpack.c.l.b16 %v1331
        %v1588 = vunpack.c.l.b16 %v1332
        %v1589 = vunpack.c.l.b16 %v1333
        %v1590 = vunpack.c.l.b16 %v1334
        %v1591 = vunpack.c.l.b16 %v1335
        %v1592 = vunpack.c.l.b16 %v1336
        %v1593 = vunpack.c.l.b16 %v1337
        %v1594 = vunpack.c.l.b16 %v1338
        %v1595 = vunpack.c.l.b16 %v1339
        %v1596 = vunpack.c.l.b16 %v1340
        %v1597 = vunpack.c.l.b16 %v1341
        %v1598 = vunpack.c.l.b16 %v1342
        %v1599 = vunpack.c.l.b16 %v1343
        %v1600 = vunpack.c.l.b16 %v1344
        %v1601 = vunpack.c.l.b16 %v1345
        %v1602 = vunpack.c.l.b16 %v1346
        %v1603 = vunpack.c.l.b16 %v1347
        %v1604 = vunpack.c.l.b16 %v1348
        %v1605 = vunpack.c.l.b16 %v1349
        %v1606 = vunpack.c.l.b16 %v1350
        %v1607 = vunpack.c.l.b16 %v1351
        %v1608 = vunpack.c.l.b16 %v1352
        %v1609 = vunpack.c.l.b16 %v1353
        %v1610 = vpack.c.b16 %v1563, %v1562
        %v1611 = vpack.c.b16 %v1565, %v1564
        %v1612 = vpack.c.b16 %v1567, %v1566
        %v1613 = vpack.c.b16 %v1569, %v1568
        %v1614 = vpack.c.b16 %v1571, %v1570
        %v1615 = vpack.c.b16 %v1573, %v1572
        %v1616 = vpack.c.b16 %v1575, %v1574
        %v1617 = vpack.c.b16 %v1577, %v1576
        %v1618 = vpack.c.b16 %v1579, %v1578
        %v1619 = vpack.c.b16 %v1581, %v1580
        %v1620 = vpack.c.b16 %v1583, %v1582
        %v1621 = vpack.c.b16 %v1585, %v1584
        %v1622 = vpack.c.b16 %v1587, %v1586
        %v1623 = vpack.c.b16 %v1589, %v1588
        %v1624 = vpack.c.b16 %v1591, %v1590
        %v1625 = vpack.c.b16 %v1593, %v1592
        %v1626 = vpack.c.b16 %v1595, %v1594
        %v1627 = vpack.c.b16 %v1597, %v1596
        %v1628 = vpack.c.b16 %v1599, %v1598
        %v1629 = vpack.c.b16 %v1601, %v1600
        %v1630 = vpack.c.b16 %v1603, %v1602
        %v1631 = vpack.c.b16 %v1605, %v1604
        %v1632 = vpack.c.b16 %v1607, %v1606
        %v1633 = vpack.c.b16 %v1609, %v1608
        %1658 = vmatpush.bf16.msra.mxu0 %v1617
        %1659 = vmatpush.bf16.msra.mxu0 %v1616
        %1660 = vmatpush.bf16.msra.mxu0 %v1615
        %1661 = vmatpush.bf16.msra.mxu0 %v1614
        %1662 = vmatpush.bf16.msra.mxu0 %v1613
        %1663 = vmatpush.bf16.msra.mxu0 %v1612
        %1664 = vmatpush.bf16.msra.mxu0 %v1611
        %1665 = vmatpush.bf16.msra.mxu0 %v1610
        %1666 = vmatmul.bf16.gmra.mxu0 %v1454
        %v1667 = vpop.f32.mrf.mxu0
        %v1668 = vadd.f32 0.0, %v1667
        %v1669 = vpop.f32.mrf.mxu0
        %v1670 = vadd.f32 0.0, %v1669
        %1671 = vmatmul.bf16.gmra.mxu0 %v1457
        %v1672 = vpop.f32.mrf.mxu0
        %v1673 = vadd.f32 0.0, %v1672
        %v1674 = vpop.f32.mrf.mxu0
        %v1675 = vadd.f32 0.0, %v1674
        %1676 = vmatmul.bf16.gmra.mxu0 %v1460
        %v1677 = vpop.f32.mrf.mxu0
        %v1678 = vadd.f32 0.0, %v1677
        %v1679 = vpop.f32.mrf.mxu0
        %v1680 = vadd.f32 0.0, %v1679
        %1681 = vmatmul.bf16.gmra.mxu0 %v1463
        %v1682 = vpop.f32.mrf.mxu0
        %v1683 = vadd.f32 0.0, %v1682
        %v1684 = vpop.f32.mrf.mxu0
        %v1685 = vadd.f32 0.0, %v1684
        %1686 = vmatmul.bf16.gmra.mxu0 %v1466
        %v1687 = vpop.f32.mrf.mxu0
        %v1688 = vadd.f32 0.0, %v1687
        %v1689 = vpop.f32.mrf.mxu0
        %v1690 = vadd.f32 0.0, %v1689
        %1691 = vmatmul.bf16.gmra.mxu0 %v1469
        %v1692 = vpop.f32.mrf.mxu0
        %v1693 = vadd.f32 0.0, %v1692
        %v1694 = vpop.f32.mrf.mxu0
        %v1695 = vadd.f32 0.0, %v1694
        %1696 = vmatmul.bf16.gmra.mxu0 %v1472
        %v1697 = vpop.f32.mrf.mxu0
        %v1698 = vadd.f32 0.0, %v1697
        %v1699 = vpop.f32.mrf.mxu0
        %v1700 = vadd.f32 0.0, %v1699
        %1701 = vmatmul.bf16.gmra.mxu0 %v1475
        %v1702 = vpop.f32.mrf.mxu0
        %v1703 = vadd.f32 0.0, %v1702
        %v1704 = vpop.f32.mrf.mxu0
        %v1705 = vadd.f32 0.0, %v1704
        %1706 = vmatmul.bf16.gmra.mxu0 %v1478
        %v1707 = vpop.f32.mrf.mxu0
        %v1708 = vadd.f32 0.0, %v1707
        %v1709 = vpop.f32.mrf.mxu0
        %v1710 = vadd.f32 0.0, %v1709
        %1711 = vmatmul.bf16.gmra.mxu0 %v1481
        %v1712 = vpop.f32.mrf.mxu0
        %v1713 = vadd.f32 0.0, %v1712
        %v1714 = vpop.f32.mrf.mxu0
        %v1715 = vadd.f32 0.0, %v1714
        %1716 = vdwg.mxu0
        %1717 = vmatpush.bf16.msra.mxu0 %v1625
        %1718 = vmatpush.bf16.msra.mxu0 %v1624
        %1719 = vmatpush.bf16.msra.mxu0 %v1623
        %1720 = vmatpush.bf16.msra.mxu0 %v1622
        %1721 = vmatpush.bf16.msra.mxu0 %v1621
        %1722 = vmatpush.bf16.msra.mxu0 %v1620
        %1723 = vmatpush.bf16.msra.mxu0 %v1619
        %1724 = vmatpush.bf16.msra.mxu0 %v1618
        %1725 = vmatmul.bf16.gmra.mxu0 %v1455
        %v1726 = vpop.f32.mrf.mxu0
        %v1727 = vadd.f32 %v1668, %v1726
        %v1728 = vpop.f32.mrf.mxu0
        %v1729 = vadd.f32 %v1670, %v1728
        %1730 = vmatmul.bf16.gmra.mxu0 %v1458
        %v1731 = vpop.f32.mrf.mxu0
        %v1732 = vadd.f32 %v1673, %v1731
        %v1733 = vpop.f32.mrf.mxu0
        %v1734 = vadd.f32 %v1675, %v1733
        %1735 = vmatmul.bf16.gmra.mxu0 %v1461
        %v1736 = vpop.f32.mrf.mxu0
        %v1737 = vadd.f32 %v1678, %v1736
        %v1738 = vpop.f32.mrf.mxu0
        %v1739 = vadd.f32 %v1680, %v1738
        %1740 = vmatmul.bf16.gmra.mxu0 %v1464
        %v1741 = vpop.f32.mrf.mxu0
        %v1742 = vadd.f32 %v1683, %v1741
        %v1743 = vpop.f32.mrf.mxu0
        %v1744 = vadd.f32 %v1685, %v1743
        %1745 = vmatmul.bf16.gmra.mxu0 %v1467
        %v1746 = vpop.f32.mrf.mxu0
        %v1747 = vadd.f32 %v1688, %v1746
        %v1748 = vpop.f32.mrf.mxu0
        %v1749 = vadd.f32 %v1690, %v1748
        %1750 = vmatmul.bf16.gmra.mxu0 %v1470
        %v1751 = vpop.f32.mrf.mxu0
        %v1752 = vadd.f32 %v1693, %v1751
        %v1753 = vpop.f32.mrf.mxu0
        %v1754 = vadd.f32 %v1695, %v1753
        %1755 = vmatmul.bf16.gmra.mxu0 %v1473
        %v1756 = vpop.f32.mrf.mxu0
        %v1757 = vadd.f32 %v1698, %v1756
        %v1758 = vpop.f32.mrf.mxu0
        %v1759 = vadd.f32 %v1700, %v1758
        %1760 = vmatmul.bf16.gmra.mxu0 %v1476
        %v1761 = vpop.f32.mrf.mxu0
        %v1762 = vadd.f32 %v1703, %v1761
        %v1763 = vpop.f32.mrf.mxu0
        %v1764 = vadd.f32 %v1705, %v1763
        %1765 = vmatmul.bf16.gmra.mxu0 %v1479
        %v1766 = vpop.f32.mrf.mxu0
        %v1767 = vadd.f32 %v1708, %v1766
        %v1768 = vpop.f32.mrf.mxu0
        %v1769 = vadd.f32 %v1710, %v1768
        %1770 = vmatmul.bf16.gmra.mxu0 %v1482
        %v1771 = vpop.f32.mrf.mxu0
        %v1772 = vadd.f32 %v1713, %v1771
        %v1773 = vpop.f32.mrf.mxu0
        %v1774 = vadd.f32 %v1715, %v1773
        %1775 = vdwg.mxu0
        %1776 = vmatpush.bf16.msra.mxu0 %v1633
        %1777 = vmatpush.bf16.msra.mxu0 %v1632
        %1778 = vmatpush.bf16.msra.mxu0 %v1631
        %1779 = vmatpush.bf16.msra.mxu0 %v1630
        %1780 = vmatpush.bf16.msra.mxu0 %v1629
        %1781 = vmatpush.bf16.msra.mxu0 %v1628
        %1782 = vmatpush.bf16.msra.mxu0 %v1627
        %1783 = vmatpush.bf16.msra.mxu0 %v1626
        %1784 = vmatmul.bf16.gmra.mxu0 %v1456
        %v1785 = vpop.f32.mrf.mxu0
        %v1786 = vadd.f32 %v1727, %v1785
        %v1787 = vpop.f32.mrf.mxu0
        %v1788 = vadd.f32 %v1729, %v1787
        %1789 = vmatmul.bf16.gmra.mxu0 %v1459
        %v1790 = vpop.f32.mrf.mxu0
        %v1791 = vadd.f32 %v1732, %v1790
        %v1792 = vpop.f32.mrf.mxu0
        %v1793 = vadd.f32 %v1734, %v1792
        %1794 = vmatmul.bf16.gmra.mxu0 %v1462
        %v1795 = vpop.f32.mrf.mxu0
        %v1796 = vadd.f32 %v1737, %v1795
        %v1797 = vpop.f32.mrf.mxu0
        %v1798 = vadd.f32 %v1739, %v1797
        %1799 = vmatmul.bf16.gmra.mxu0 %v1465
        %v1800 = vpop.f32.mrf.mxu0
        %v1801 = vadd.f32 %v1742, %v1800
        %v1802 = vpop.f32.mrf.mxu0
        %v1803 = vadd.f32 %v1744, %v1802
        %1804 = vmatmul.bf16.gmra.mxu0 %v1468
        %v1805 = vpop.f32.mrf.mxu0
        %v1806 = vadd.f32 %v1747, %v1805
        %v1807 = vpop.f32.mrf.mxu0
        %v1808 = vadd.f32 %v1749, %v1807
        %1809 = vmatmul.bf16.gmra.mxu0 %v1471
        %v1810 = vpop.f32.mrf.mxu0
        %v1811 = vadd.f32 %v1752, %v1810
        %v1812 = vpop.f32.mrf.mxu0
        %v1813 = vadd.f32 %v1754, %v1812
        %1814 = vmatmul.bf16.gmra.mxu0 %v1474
        %v1815 = vpop.f32.mrf.mxu0
        %v1816 = vadd.f32 %v1757, %v1815
        %v1817 = vpop.f32.mrf.mxu0
        %v1818 = vadd.f32 %v1759, %v1817
        %1819 = vmatmul.bf16.gmra.mxu0 %v1477
        %v1820 = vpop.f32.mrf.mxu0
        %v1821 = vadd.f32 %v1762, %v1820
        %v1822 = vpop.f32.mrf.mxu0
        %v1823 = vadd.f32 %v1764, %v1822
        %1824 = vmatmul.bf16.gmra.mxu0 %v1480
        %v1825 = vpop.f32.mrf.mxu0
        %v1826 = vadd.f32 %v1767, %v1825
        %v1827 = vpop.f32.mrf.mxu0
        %v1828 = vadd.f32 %v1769, %v1827
        %1829 = vmatmul.bf16.gmra.mxu0 %v1483
        %v1830 = vpop.f32.mrf.mxu0
        %v1831 = vadd.f32 %v1772, %v1830
        %v1832 = vpop.f32.mrf.mxu0
        %v1833 = vadd.f32 %v1774, %v1832
        %1834 = vdwg.mxu0
        %v1839 = vunpack.c.l.b16 %v1209
        %v1840 = vunpack.c.h.b16 %v1209
        %v1841 = vunpack.c.l.b16 %v1210
        %v1842 = vunpack.c.l.b16 %v1211
        %v1843 = vunpack.c.h.b16 %v1211
        %v1844 = vunpack.c.l.b16 %v1212
        %v1845 = vpack.c.b16 %v1842, %v1839
        %v1846 = vpack.c.b16 %v1843, %v1840
        %v1847 = vpack.c.b16 %v1844, %v1841
        %v1899 = vunpack.c.l.b16 %v1257
        %v1900 = vunpack.c.l.b16 %v1258
        %v1901 = vunpack.c.l.b16 %v1259
        %v1902 = vunpack.c.l.b16 %v1260
        %v1903 = vunpack.c.l.b16 %v1261
        %v1904 = vunpack.c.l.b16 %v1262
        %v1905 = vunpack.c.l.b16 %v1263
        %v1906 = vunpack.c.l.b16 %v1264
        %v1907 = vunpack.c.l.b16 %v1265
        %v1908 = vunpack.c.l.b16 %v1266
        %v1909 = vunpack.c.l.b16 %v1267
        %v1910 = vunpack.c.l.b16 %v1268
        %v1911 = vunpack.c.l.b16 %v1269
        %v1912 = vunpack.c.l.b16 %v1270
        %v1913 = vunpack.c.l.b16 %v1271
        %v1914 = vunpack.c.l.b16 %v1272
        %v1915 = vunpack.c.l.b16 %v1273
        %v1916 = vunpack.c.l.b16 %v1274
        %v1917 = vunpack.c.l.b16 %v1275
        %v1918 = vunpack.c.l.b16 %v1276
        %v1919 = vunpack.c.l.b16 %v1277
        %v1920 = vunpack.c.l.b16 %v1278
        %v1921 = vunpack.c.l.b16 %v1279
        %v1922 = vunpack.c.l.b16 %v1280
        %v1923 = vunpack.c.l.b16 %v1281
        %v1924 = vunpack.c.l.b16 %v1282
        %v1925 = vunpack.c.l.b16 %v1283
        %v1926 = vunpack.c.l.b16 %v1284
        %v1927 = vunpack.c.l.b16 %v1285
        %v1928 = vunpack.c.l.b16 %v1286
        %v1929 = vunpack.c.l.b16 %v1287
        %v1930 = vunpack.c.l.b16 %v1288
        %v1931 = vunpack.c.l.b16 %v1289
        %v1932 = vunpack.c.l.b16 %v1290
        %v1933 = vunpack.c.l.b16 %v1291
        %v1934 = vunpack.c.l.b16 %v1292
        %v1935 = vunpack.c.l.b16 %v1293
        %v1936 = vunpack.c.l.b16 %v1294
        %v1937 = vunpack.c.l.b16 %v1295
        %v1938 = vunpack.c.l.b16 %v1296
        %v1939 = vunpack.c.l.b16 %v1297
        %v1940 = vunpack.c.l.b16 %v1298
        %v1941 = vunpack.c.l.b16 %v1299
        %v1942 = vunpack.c.l.b16 %v1300
        %v1943 = vunpack.c.l.b16 %v1301
        %v1944 = vunpack.c.l.b16 %v1302
        %v1945 = vunpack.c.l.b16 %v1303
        %v1946 = vunpack.c.l.b16 %v1304
        %v1947 = vpack.c.b16 %v1900, %v1899
        %v1948 = vpack.c.b16 %v1902, %v1901
        %v1949 = vpack.c.b16 %v1904, %v1903
        %v1950 = vpack.c.b16 %v1906, %v1905
        %v1951 = vpack.c.b16 %v1908, %v1907
        %v1952 = vpack.c.b16 %v1910, %v1909
        %v1953 = vpack.c.b16 %v1912, %v1911
        %v1954 = vpack.c.b16 %v1914, %v1913
        %v1955 = vpack.c.b16 %v1916, %v1915
        %v1956 = vpack.c.b16 %v1918, %v1917
        %v1957 = vpack.c.b16 %v1920, %v1919
        %v1958 = vpack.c.b16 %v1922, %v1921
        %v1959 = vpack.c.b16 %v1924, %v1923
        %v1960 = vpack.c.b16 %v1926, %v1925
        %v1961 = vpack.c.b16 %v1928, %v1927
        %v1962 = vpack.c.b16 %v1930, %v1929
        %v1963 = vpack.c.b16 %v1932, %v1931
        %v1964 = vpack.c.b16 %v1934, %v1933
        %v1965 = vpack.c.b16 %v1936, %v1935
        %v1966 = vpack.c.b16 %v1938, %v1937
        %v1967 = vpack.c.b16 %v1940, %v1939
        %v1968 = vpack.c.b16 %v1942, %v1941
        %v1969 = vpack.c.b16 %v1944, %v1943
        %v1970 = vpack.c.b16 %v1946, %v1945
        %1995 = vmatpush.bf16.msra.mxu0 %v1954
        %1996 = vmatpush.bf16.msra.mxu0 %v1953
        %1997 = vmatpush.bf16.msra.mxu0 %v1952
        %1998 = vmatpush.bf16.msra.mxu0 %v1951
        %1999 = vmatpush.bf16.msra.mxu0 %v1950
        %2000 = vmatpush.bf16.msra.mxu0 %v1949
        %2001 = vmatpush.bf16.msra.mxu0 %v1948
        %2002 = vmatpush.bf16.msra.mxu0 %v1947
        %2003 = vmatmul.bf16.gmra.mxu0 %v1845
        %v2004 = vpop.f32.mrf.mxu0
        %v2005 = vadd.f32 %v1786, %v2004
        %v2006 = vpop.f32.mrf.mxu0
        %v2007 = vadd.f32 %v1788, %v2006
        %2008 = vmatmul.bf16.gmra.mxu0 %v1454
        %v2009 = vpop.f32.mrf.mxu0
        %v2010 = vadd.f32 %v1791, %v2009
        %v2011 = vpop.f32.mrf.mxu0
        %v2012 = vadd.f32 %v1793, %v2011
        %2013 = vmatmul.bf16.gmra.mxu0 %v1457
        %v2014 = vpop.f32.mrf.mxu0
        %v2015 = vadd.f32 %v1796, %v2014
        %v2016 = vpop.f32.mrf.mxu0
        %v2017 = vadd.f32 %v1798, %v2016
        %2018 = vmatmul.bf16.gmra.mxu0 %v1460
        %v2019 = vpop.f32.mrf.mxu0
        %v2020 = vadd.f32 %v1801, %v2019
        %v2021 = vpop.f32.mrf.mxu0
        %v2022 = vadd.f32 %v1803, %v2021
        %2023 = vmatmul.bf16.gmra.mxu0 %v1463
        %v2024 = vpop.f32.mrf.mxu0
        %v2025 = vadd.f32 %v1806, %v2024
        %v2026 = vpop.f32.mrf.mxu0
        %v2027 = vadd.f32 %v1808, %v2026
        %2028 = vmatmul.bf16.gmra.mxu0 %v1466
        %v2029 = vpop.f32.mrf.mxu0
        %v2030 = vadd.f32 %v1811, %v2029
        %v2031 = vpop.f32.mrf.mxu0
        %v2032 = vadd.f32 %v1813, %v2031
        %2033 = vmatmul.bf16.gmra.mxu0 %v1469
        %v2034 = vpop.f32.mrf.mxu0
        %v2035 = vadd.f32 %v1816, %v2034
        %v2036 = vpop.f32.mrf.mxu0
        %v2037 = vadd.f32 %v1818, %v2036
        %2038 = vmatmul.bf16.gmra.mxu0 %v1472
        %v2039 = vpop.f32.mrf.mxu0
        %v2040 = vadd.f32 %v1821, %v2039
        %v2041 = vpop.f32.mrf.mxu0
        %v2042 = vadd.f32 %v1823, %v2041
        %2043 = vmatmul.bf16.gmra.mxu0 %v1475
        %v2044 = vpop.f32.mrf.mxu0
        %v2045 = vadd.f32 %v1826, %v2044
        %v2046 = vpop.f32.mrf.mxu0
        %v2047 = vadd.f32 %v1828, %v2046
        %2048 = vmatmul.bf16.gmra.mxu0 %v1478
        %v2049 = vpop.f32.mrf.mxu0
        %v2050 = vadd.f32 %v1831, %v2049
        %v2051 = vpop.f32.mrf.mxu0
        %v2052 = vadd.f32 %v1833, %v2051
        %2053 = vdwg.mxu0
        %2054 = vmatpush.bf16.msra.mxu0 %v1962
        %2055 = vmatpush.bf16.msra.mxu0 %v1961
        %2056 = vmatpush.bf16.msra.mxu0 %v1960
        %2057 = vmatpush.bf16.msra.mxu0 %v1959
        %2058 = vmatpush.bf16.msra.mxu0 %v1958
        %2059 = vmatpush.bf16.msra.mxu0 %v1957
        %2060 = vmatpush.bf16.msra.mxu0 %v1956
        %2061 = vmatpush.bf16.msra.mxu0 %v1955
        %2062 = vmatmul.bf16.gmra.mxu0 %v1846
        %v2063 = vpop.f32.mrf.mxu0
        %v2064 = vadd.f32 %v2005, %v2063
        %v2065 = vpop.f32.mrf.mxu0
        %v2066 = vadd.f32 %v2007, %v2065
        %2067 = vmatmul.bf16.gmra.mxu0 %v1455
        %v2068 = vpop.f32.mrf.mxu0
        %v2069 = vadd.f32 %v2010, %v2068
        %v2070 = vpop.f32.mrf.mxu0
        %v2071 = vadd.f32 %v2012, %v2070
        %2072 = vmatmul.bf16.gmra.mxu0 %v1458
        %v2073 = vpop.f32.mrf.mxu0
        %v2074 = vadd.f32 %v2015, %v2073
        %v2075 = vpop.f32.mrf.mxu0
        %v2076 = vadd.f32 %v2017, %v2075
        %2077 = vmatmul.bf16.gmra.mxu0 %v1461
        %v2078 = vpop.f32.mrf.mxu0
        %v2079 = vadd.f32 %v2020, %v2078
        %v2080 = vpop.f32.mrf.mxu0
        %v2081 = vadd.f32 %v2022, %v2080
        %2082 = vmatmul.bf16.gmra.mxu0 %v1464
        %v2083 = vpop.f32.mrf.mxu0
        %v2084 = vadd.f32 %v2025, %v2083
        %v2085 = vpop.f32.mrf.mxu0
        %v2086 = vadd.f32 %v2027, %v2085
        %2087 = vmatmul.bf16.gmra.mxu0 %v1467
        %v2088 = vpop.f32.mrf.mxu0
        %v2089 = vadd.f32 %v2030, %v2088
        %v2090 = vpop.f32.mrf.mxu0
        %v2091 = vadd.f32 %v2032, %v2090
        %2092 = vmatmul.bf16.gmra.mxu0 %v1470
        %v2093 = vpop.f32.mrf.mxu0
        %v2094 = vadd.f32 %v2035, %v2093
        %v2095 = vpop.f32.mrf.mxu0
        %v2096 = vadd.f32 %v2037, %v2095
        %2097 = vmatmul.bf16.gmra.mxu0 %v1473
        %v2098 = vpop.f32.mrf.mxu0
        %v2099 = vadd.f32 %v2040, %v2098
        %v2100 = vpop.f32.mrf.mxu0
        %v2101 = vadd.f32 %v2042, %v2100
        %2102 = vmatmul.bf16.gmra.mxu0 %v1476
        %v2103 = vpop.f32.mrf.mxu0
        %v2104 = vadd.f32 %v2045, %v2103
        %v2105 = vpop.f32.mrf.mxu0
        %v2106 = vadd.f32 %v2047, %v2105
        %2107 = vmatmul.bf16.gmra.mxu0 %v1479
        %v2108 = vpop.f32.mrf.mxu0
        %v2109 = vadd.f32 %v2050, %v2108
        %v2110 = vpop.f32.mrf.mxu0
        %v2111 = vadd.f32 %v2052, %v2110
        %2112 = vdwg.mxu0
        %2113 = vmatpush.bf16.msra.mxu0 %v1970
        %2114 = vmatpush.bf16.msra.mxu0 %v1969
        %2115 = vmatpush.bf16.msra.mxu0 %v1968
        %2116 = vmatpush.bf16.msra.mxu0 %v1967
        %2117 = vmatpush.bf16.msra.mxu0 %v1966
        %2118 = vmatpush.bf16.msra.mxu0 %v1965
        %2119 = vmatpush.bf16.msra.mxu0 %v1964
        %2120 = vmatpush.bf16.msra.mxu0 %v1963
        %2121 = vmatmul.bf16.gmra.mxu0 %v1847
        %v2122 = vpop.f32.mrf.mxu0
        %v2123 = vadd.f32 %v2064, %v2122
        %v2124 = vpop.f32.mrf.mxu0
        %v2125 = vadd.f32 %v2066, %v2124
        %2126 = vmatmul.bf16.gmra.mxu0 %v1456
        %v2127 = vpop.f32.mrf.mxu0
        %v2128 = vadd.f32 %v2069, %v2127
        %v2129 = vpop.f32.mrf.mxu0
        %v2130 = vadd.f32 %v2071, %v2129
        %2131 = vmatmul.bf16.gmra.mxu0 %v1459
        %v2132 = vpop.f32.mrf.mxu0
        %v2133 = vadd.f32 %v2074, %v2132
        %v2134 = vpop.f32.mrf.mxu0
        %v2135 = vadd.f32 %v2076, %v2134
        %2136 = vmatmul.bf16.gmra.mxu0 %v1462
        %v2137 = vpop.f32.mrf.mxu0
        %v2138 = vadd.f32 %v2079, %v2137
        %v2139 = vpop.f32.mrf.mxu0
        %v2140 = vadd.f32 %v2081, %v2139
        %2141 = vmatmul.bf16.gmra.mxu0 %v1465
        %v2142 = vpop.f32.mrf.mxu0
        %v2143 = vadd.f32 %v2084, %v2142
        %v2144 = vpop.f32.mrf.mxu0
        %v2145 = vadd.f32 %v2086, %v2144
        %2146 = vmatmul.bf16.gmra.mxu0 %v1468
        %v2147 = vpop.f32.mrf.mxu0
        %v2148 = vadd.f32 %v2089, %v2147
        %v2149 = vpop.f32.mrf.mxu0
        %v2150 = vadd.f32 %v2091, %v2149
        %2151 = vmatmul.bf16.gmra.mxu0 %v1471
        %v2152 = vpop.f32.mrf.mxu0
        %v2153 = vadd.f32 %v2094, %v2152
        %v2154 = vpop.f32.mrf.mxu0
        %v2155 = vadd.f32 %v2096, %v2154
        %2156 = vmatmul.bf16.gmra.mxu0 %v1474
        %v2157 = vpop.f32.mrf.mxu0
        %v2158 = vadd.f32 %v2099, %v2157
        %v2159 = vpop.f32.mrf.mxu0
        %v2160 = vadd.f32 %v2101, %v2159
        %2161 = vmatmul.bf16.gmra.mxu0 %v1477
        %v2162 = vpop.f32.mrf.mxu0
        %v2163 = vadd.f32 %v2104, %v2162
        %v2164 = vpop.f32.mrf.mxu0
        %v2165 = vadd.f32 %v2106, %v2164
        %2166 = vmatmul.bf16.gmra.mxu0 %v1480
        %v2167 = vpop.f32.mrf.mxu0
        %v2168 = vadd.f32 %v2109, %v2167
        %v2169 = vpop.f32.mrf.mxu0
        %v2170 = vadd.f32 %v2111, %v2169
        %2171 = vdwg.mxu0
        %s2172 = scalar_lea.vmem %s5, 384
        %v2173 = vld [vmem:[%s2172] sm:$0xf]
        %v2174 = vld [vmem:[%s2172 + $0x4] sm:$0xf]
        %v2175 = vld [vmem:[%s2172 + $0x8] sm:$0xf]
        %v2176 = vld [vmem:[%s2172 + $0xc] sm:$0xf]
        %v2177 = vld [vmem:[%s2172 + $0x10] sm:$0xf]
        %v2178 = vld [vmem:[%s2172 + $0x14] sm:$0xf]
        %v2179 = vld [vmem:[%s2172 + $0x18] sm:$0xf]
        %v2180 = vld [vmem:[%s2172 + $0x1c] sm:$0xf]
        %v2181 = vld [vmem:[%s2172 + $0x20] sm:$0xf]
        %v2182 = vld [vmem:[%s2172 + $0x24] sm:$0xf]
        %v2183 = vld [vmem:[%s2172 + $0x28] sm:$0xf]
        %v2184 = vld [vmem:[%s2172 + $0x2c] sm:$0xf]
        %v2185 = vld [vmem:[%s2172 + $0x30] sm:$0xf]
        %v2186 = vld [vmem:[%s2172 + $0x34] sm:$0xf]
        %v2187 = vld [vmem:[%s2172 + $0x38] sm:$0xf]
        %v2188 = vld [vmem:[%s2172 + $0x3c] sm:$0xf]
        %v2189 = vld [vmem:[%s2172 + $0x40] sm:$0xf]
        %v2190 = vld [vmem:[%s2172 + $0x44] sm:$0xf]
        %v2191 = vld [vmem:[%s2172 + $0x48] sm:$0xf]
        %v2192 = vld [vmem:[%s2172 + $0x4c] sm:$0xf]
        %v2193 = vld [vmem:[%s2172 + $0x50] sm:$0xf]
        %v2194 = vld [vmem:[%s2172 + $0x54] sm:$0xf]
        %v2195 = vld [vmem:[%s2172 + $0x58] sm:$0xf]
        %v2196 = vld [vmem:[%s2172 + $0x5c] sm:$0xf]
        %v2197 = vld [vmem:[%s2172 + $0x60] sm:$0xf]
        %v2198 = vld [vmem:[%s2172 + $0x64] sm:$0xf]
        %v2199 = vld [vmem:[%s2172 + $0x68] sm:$0xf]
        %v2200 = vld [vmem:[%s2172 + $0x6c] sm:$0xf]
        %v2201 = vld [vmem:[%s2172 + $0x70] sm:$0xf]
        %v2202 = vld [vmem:[%s2172 + $0x74] sm:$0xf]
        %v2203 = vld [vmem:[%s2172 + $0x78] sm:$0xf]
        %v2204 = vld [vmem:[%s2172 + $0x7c] sm:$0xf]
        %v2205 = vld [vmem:[%s2172 + $0x80] sm:$0xf]
        %v2206 = vld [vmem:[%s2172 + $0x84] sm:$0xf]
        %v2207 = vld [vmem:[%s2172 + $0x88] sm:$0xf]
        %v2208 = vld [vmem:[%s2172 + $0x8c] sm:$0xf]
        %v2209 = vld [vmem:[%s2172 + $0x90] sm:$0xf]
        %v2210 = vld [vmem:[%s2172 + $0x94] sm:$0xf]
        %v2211 = vld [vmem:[%s2172 + $0x98] sm:$0xf]
        %v2212 = vld [vmem:[%s2172 + $0x9c] sm:$0xf]
        %v2213 = vld [vmem:[%s2172 + $0xa0] sm:$0xf]
        %v2214 = vld [vmem:[%s2172 + $0xa4] sm:$0xf]
        %v2215 = vld [vmem:[%s2172 + $0xa8] sm:$0xf]
        %v2216 = vld [vmem:[%s2172 + $0xac] sm:$0xf]
        %v2217 = vld [vmem:[%s2172 + $0xb0] sm:$0xf]
        %v2218 = vld [vmem:[%s2172 + $0xb4] sm:$0xf]
        %v2219 = vld [vmem:[%s2172 + $0xb8] sm:$0xf]
        %v2220 = vld [vmem:[%s2172 + $0xbc] sm:$0xf]
        %v2225 = vunpack.c.l.b16 %v1253
        %v2226 = vunpack.c.h.b16 %v1253
        %v2227 = vunpack.c.l.b16 %v1254
        %v2228 = vunpack.c.l.b16 %v1255
        %v2229 = vunpack.c.h.b16 %v1255
        %v2230 = vunpack.c.l.b16 %v1256
        %v2231 = vpack.c.b16 %v2228, %v2225
        %v2232 = vpack.c.b16 %v2229, %v2226
        %v2233 = vpack.c.b16 %v2230, %v2227
        %v2285 = vunpack.c.l.b16 %v2173
        %v2286 = vunpack.c.l.b16 %v2174
        %v2287 = vunpack.c.l.b16 %v2175
        %v2288 = vunpack.c.l.b16 %v2176
        %v2289 = vunpack.c.l.b16 %v2177
        %v2290 = vunpack.c.l.b16 %v2178
        %v2291 = vunpack.c.l.b16 %v2179
        %v2292 = vunpack.c.l.b16 %v2180
        %v2293 = vunpack.c.l.b16 %v2181
        %v2294 = vunpack.c.l.b16 %v2182
        %v2295 = vunpack.c.l.b16 %v2183
        %v2296 = vunpack.c.l.b16 %v2184
        %v2297 = vunpack.c.l.b16 %v2185
        %v2298 = vunpack.c.l.b16 %v2186
        %v2299 = vunpack.c.l.b16 %v2187
        %v2300 = vunpack.c.l.b16 %v2188
        %v2301 = vunpack.c.l.b16 %v2189
        %v2302 = vunpack.c.l.b16 %v2190
        %v2303 = vunpack.c.l.b16 %v2191
        %v2304 = vunpack.c.l.b16 %v2192
        %v2305 = vunpack.c.l.b16 %v2193
        %v2306 = vunpack.c.l.b16 %v2194
        %v2307 = vunpack.c.l.b16 %v2195
        %v2308 = vunpack.c.l.b16 %v2196
        %v2309 = vunpack.c.l.b16 %v2197
        %v2310 = vunpack.c.l.b16 %v2198
        %v2311 = vunpack.c.l.b16 %v2199
        %v2312 = vunpack.c.l.b16 %v2200
        %v2313 = vunpack.c.l.b16 %v2201
        %v2314 = vunpack.c.l.b16 %v2202
        %v2315 = vunpack.c.l.b16 %v2203
        %v2316 = vunpack.c.l.b16 %v2204
        %v2317 = vunpack.c.l.b16 %v2205
        %v2318 = vunpack.c.l.b16 %v2206
        %v2319 = vunpack.c.l.b16 %v2207
        %v2320 = vunpack.c.l.b16 %v2208
        %v2321 = vunpack.c.l.b16 %v2209
        %v2322 = vunpack.c.l.b16 %v2210
        %v2323 = vunpack.c.l.b16 %v2211
        %v2324 = vunpack.c.l.b16 %v2212
        %v2325 = vunpack.c.l.b16 %v2213
        %v2326 = vunpack.c.l.b16 %v2214
        %v2327 = vunpack.c.l.b16 %v2215
        %v2328 = vunpack.c.l.b16 %v2216
        %v2329 = vunpack.c.l.b16 %v2217
        %v2330 = vunpack.c.l.b16 %v2218
        %v2331 = vunpack.c.l.b16 %v2219
        %v2332 = vunpack.c.l.b16 %v2220
        %v2333 = vpack.c.b16 %v2286, %v2285
        %v2334 = vpack.c.b16 %v2288, %v2287
        %v2335 = vpack.c.b16 %v2290, %v2289
        %v2336 = vpack.c.b16 %v2292, %v2291
        %v2337 = vpack.c.b16 %v2294, %v2293
        %v2338 = vpack.c.b16 %v2296, %v2295
        %v2339 = vpack.c.b16 %v2298, %v2297
        %v2340 = vpack.c.b16 %v2300, %v2299
        %v2341 = vpack.c.b16 %v2302, %v2301
        %v2342 = vpack.c.b16 %v2304, %v2303
        %v2343 = vpack.c.b16 %v2306, %v2305
        %v2344 = vpack.c.b16 %v2308, %v2307
        %v2345 = vpack.c.b16 %v2310, %v2309
        %v2346 = vpack.c.b16 %v2312, %v2311
        %v2347 = vpack.c.b16 %v2314, %v2313
        %v2348 = vpack.c.b16 %v2316, %v2315
        %v2349 = vpack.c.b16 %v2318, %v2317
        %v2350 = vpack.c.b16 %v2320, %v2319
        %v2351 = vpack.c.b16 %v2322, %v2321
        %v2352 = vpack.c.b16 %v2324, %v2323
        %v2353 = vpack.c.b16 %v2326, %v2325
        %v2354 = vpack.c.b16 %v2328, %v2327
        %v2355 = vpack.c.b16 %v2330, %v2329
        %v2356 = vpack.c.b16 %v2332, %v2331
        %2381 = vmatpush.bf16.msra.mxu0 %v2340
        %2382 = vmatpush.bf16.msra.mxu0 %v2339
        %2383 = vmatpush.bf16.msra.mxu0 %v2338
        %2384 = vmatpush.bf16.msra.mxu0 %v2337
        %2385 = vmatpush.bf16.msra.mxu0 %v2336
        %2386 = vmatpush.bf16.msra.mxu0 %v2335
        %2387 = vmatpush.bf16.msra.mxu0 %v2334
        %2388 = vmatpush.bf16.msra.mxu0 %v2333
        %2389 = vmatmul.bf16.gmra.mxu0 %v1457
        %v2390 = vpop.f32.mrf.mxu0
        %v2391 = vadd.f32 0.0, %v2390
        %v2392 = vpop.f32.mrf.mxu0
        %v2393 = vadd.f32 0.0, %v2392
        %2394 = vmatmul.bf16.gmra.mxu0 %v1460
        %v2395 = vpop.f32.mrf.mxu0
        %v2396 = vadd.f32 0.0, %v2395
        %v2397 = vpop.f32.mrf.mxu0
        %v2398 = vadd.f32 0.0, %v2397
        %2399 = vmatmul.bf16.gmra.mxu0 %v1463
        %v2400 = vpop.f32.mrf.mxu0
        %v2401 = vadd.f32 0.0, %v2400
        %v2402 = vpop.f32.mrf.mxu0
        %v2403 = vadd.f32 0.0, %v2402
        %2404 = vmatmul.bf16.gmra.mxu0 %v1466
        %v2405 = vpop.f32.mrf.mxu0
        %v2406 = vadd.f32 0.0, %v2405
        %v2407 = vpop.f32.mrf.mxu0
        %v2408 = vadd.f32 0.0, %v2407
        %2409 = vmatmul.bf16.gmra.mxu0 %v1469
        %v2410 = vpop.f32.mrf.mxu0
        %v2411 = vadd.f32 0.0, %v2410
        %v2412 = vpop.f32.mrf.mxu0
        %v2413 = vadd.f32 0.0, %v2412
        %2414 = vmatmul.bf16.gmra.mxu0 %v1472
        %v2415 = vpop.f32.mrf.mxu0
        %v2416 = vadd.f32 0.0, %v2415
        %v2417 = vpop.f32.mrf.mxu0
        %v2418 = vadd.f32 0.0, %v2417
        %2419 = vmatmul.bf16.gmra.mxu0 %v1475
        %v2420 = vpop.f32.mrf.mxu0
        %v2421 = vadd.f32 0.0, %v2420
        %v2422 = vpop.f32.mrf.mxu0
        %v2423 = vadd.f32 0.0, %v2422
        %2424 = vmatmul.bf16.gmra.mxu0 %v1478
        %v2425 = vpop.f32.mrf.mxu0
        %v2426 = vadd.f32 0.0, %v2425
        %v2427 = vpop.f32.mrf.mxu0
        %v2428 = vadd.f32 0.0, %v2427
        %2429 = vmatmul.bf16.gmra.mxu0 %v1481
        %v2430 = vpop.f32.mrf.mxu0
        %v2431 = vadd.f32 0.0, %v2430
        %v2432 = vpop.f32.mrf.mxu0
        %v2433 = vadd.f32 0.0, %v2432
        %2434 = vmatmul.bf16.gmra.mxu0 %v2231
        %v2435 = vpop.f32.mrf.mxu0
        %v2436 = vadd.f32 0.0, %v2435
        %v2437 = vpop.f32.mrf.mxu0
        %v2438 = vadd.f32 0.0, %v2437
        %2439 = vdwg.mxu0
        %2440 = vmatpush.bf16.msra.mxu0 %v2348
        %2441 = vmatpush.bf16.msra.mxu0 %v2347
        %2442 = vmatpush.bf16.msra.mxu0 %v2346
        %2443 = vmatpush.bf16.msra.mxu0 %v2345
        %2444 = vmatpush.bf16.msra.mxu0 %v2344
        %2445 = vmatpush.bf16.msra.mxu0 %v2343
        %2446 = vmatpush.bf16.msra.mxu0 %v2342
        %2447 = vmatpush.bf16.msra.mxu0 %v2341
        %2448 = vmatmul.bf16.gmra.mxu0 %v1458
        %v2449 = vpop.f32.mrf.mxu0
        %v2450 = vadd.f32 %v2391, %v2449
        %v2451 = vpop.f32.mrf.mxu0
        %v2452 = vadd.f32 %v2393, %v2451
        %2453 = vmatmul.bf16.gmra.mxu0 %v1461
        %v2454 = vpop.f32.mrf.mxu0
        %v2455 = vadd.f32 %v2396, %v2454
        %v2456 = vpop.f32.mrf.mxu0
        %v2457 = vadd.f32 %v2398, %v2456
        %2458 = vmatmul.bf16.gmra.mxu0 %v1464
        %v2459 = vpop.f32.mrf.mxu0
        %v2460 = vadd.f32 %v2401, %v2459
        %v2461 = vpop.f32.mrf.mxu0
        %v2462 = vadd.f32 %v2403, %v2461
        %2463 = vmatmul.bf16.gmra.mxu0 %v1467
        %v2464 = vpop.f32.mrf.mxu0
        %v2465 = vadd.f32 %v2406, %v2464
        %v2466 = vpop.f32.mrf.mxu0
        %v2467 = vadd.f32 %v2408, %v2466
        %2468 = vmatmul.bf16.gmra.mxu0 %v1470
        %v2469 = vpop.f32.mrf.mxu0
        %v2470 = vadd.f32 %v2411, %v2469
        %v2471 = vpop.f32.mrf.mxu0
        %v2472 = vadd.f32 %v2413, %v2471
        %2473 = vmatmul.bf16.gmra.mxu0 %v1473
        %v2474 = vpop.f32.mrf.mxu0
        %v2475 = vadd.f32 %v2416, %v2474
        %v2476 = vpop.f32.mrf.mxu0
        %v2477 = vadd.f32 %v2418, %v2476
        %2478 = vmatmul.bf16.gmra.mxu0 %v1476
        %v2479 = vpop.f32.mrf.mxu0
        %v2480 = vadd.f32 %v2421, %v2479
        %v2481 = vpop.f32.mrf.mxu0
        %v2482 = vadd.f32 %v2423, %v2481
        %2483 = vmatmul.bf16.gmra.mxu0 %v1479
        %v2484 = vpop.f32.mrf.mxu0
        %v2485 = vadd.f32 %v2426, %v2484
        %v2486 = vpop.f32.mrf.mxu0
        %v2487 = vadd.f32 %v2428, %v2486
        %2488 = vmatmul.bf16.gmra.mxu0 %v1482
        %v2489 = vpop.f32.mrf.mxu0
        %v2490 = vadd.f32 %v2431, %v2489
        %v2491 = vpop.f32.mrf.mxu0
        %v2492 = vadd.f32 %v2433, %v2491
        %2493 = vmatmul.bf16.gmra.mxu0 %v2232
        %v2494 = vpop.f32.mrf.mxu0
        %v2495 = vadd.f32 %v2436, %v2494
        %v2496 = vpop.f32.mrf.mxu0
        %v2497 = vadd.f32 %v2438, %v2496
        %2498 = vdwg.mxu0
        %2499 = vmatpush.bf16.msra.mxu0 %v2356
        %2500 = vmatpush.bf16.msra.mxu0 %v2355
        %2501 = vmatpush.bf16.msra.mxu0 %v2354
        %2502 = vmatpush.bf16.msra.mxu0 %v2353
        %2503 = vmatpush.bf16.msra.mxu0 %v2352
        %2504 = vmatpush.bf16.msra.mxu0 %v2351
        %2505 = vmatpush.bf16.msra.mxu0 %v2350
        %2506 = vmatpush.bf16.msra.mxu0 %v2349
        %2507 = vmatmul.bf16.gmra.mxu0 %v1459
        %v2508 = vpop.f32.mrf.mxu0
        %v2509 = vadd.f32 %v2450, %v2508
        %v2510 = vpop.f32.mrf.mxu0
        %v2511 = vadd.f32 %v2452, %v2510
        %2512 = vmatmul.bf16.gmra.mxu0 %v1462
        %v2513 = vpop.f32.mrf.mxu0
        %v2514 = vadd.f32 %v2455, %v2513
        %v2515 = vpop.f32.mrf.mxu0
        %v2516 = vadd.f32 %v2457, %v2515
        %2517 = vmatmul.bf16.gmra.mxu0 %v1465
        %v2518 = vpop.f32.mrf.mxu0
        %v2519 = vadd.f32 %v2460, %v2518
        %v2520 = vpop.f32.mrf.mxu0
        %v2521 = vadd.f32 %v2462, %v2520
        %2522 = vmatmul.bf16.gmra.mxu0 %v1468
        %v2523 = vpop.f32.mrf.mxu0
        %v2524 = vadd.f32 %v2465, %v2523
        %v2525 = vpop.f32.mrf.mxu0
        %v2526 = vadd.f32 %v2467, %v2525
        %2527 = vmatmul.bf16.gmra.mxu0 %v1471
        %v2528 = vpop.f32.mrf.mxu0
        %v2529 = vadd.f32 %v2470, %v2528
        %v2530 = vpop.f32.mrf.mxu0
        %v2531 = vadd.f32 %v2472, %v2530
        %2532 = vmatmul.bf16.gmra.mxu0 %v1474
        %v2533 = vpop.f32.mrf.mxu0
        %v2534 = vadd.f32 %v2475, %v2533
        %v2535 = vpop.f32.mrf.mxu0
        %v2536 = vadd.f32 %v2477, %v2535
        %2537 = vmatmul.bf16.gmra.mxu0 %v1477
        %v2538 = vpop.f32.mrf.mxu0
        %v2539 = vadd.f32 %v2480, %v2538
        %v2540 = vpop.f32.mrf.mxu0
        %v2541 = vadd.f32 %v2482, %v2540
        %2542 = vmatmul.bf16.gmra.mxu0 %v1480
        %v2543 = vpop.f32.mrf.mxu0
        %v2544 = vadd.f32 %v2485, %v2543
        %v2545 = vpop.f32.mrf.mxu0
        %v2546 = vadd.f32 %v2487, %v2545
        %2547 = vmatmul.bf16.gmra.mxu0 %v1483
        %v2548 = vpop.f32.mrf.mxu0
        %v2549 = vadd.f32 %v2490, %v2548
        %v2550 = vpop.f32.mrf.mxu0
        %v2551 = vadd.f32 %v2492, %v2550
        %2552 = vmatmul.bf16.gmra.mxu0 %v2233
        %v2553 = vpop.f32.mrf.mxu0
        %v2554 = vadd.f32 %v2495, %v2553
        %v2555 = vpop.f32.mrf.mxu0
        %v2556 = vadd.f32 %v2497, %v2555
        %2557 = vdwg.mxu0
        %v2558 = vadd.f32 %v2123, %v2509
        %v2559 = vadd.f32 %v2125, %v2511
        %v2560 = vadd.f32 %v2128, %v2514
        %v2561 = vadd.f32 %v2130, %v2516
        %v2562 = vadd.f32 %v2133, %v2519
        %v2563 = vadd.f32 %v2135, %v2521
        %v2564 = vadd.f32 %v2138, %v2524
        %v2565 = vadd.f32 %v2140, %v2526
        %v2566 = vadd.f32 %v2143, %v2529
        %v2567 = vadd.f32 %v2145, %v2531
        %v2568 = vadd.f32 %v2148, %v2534
        %v2569 = vadd.f32 %v2150, %v2536
        %v2570 = vadd.f32 %v2153, %v2539
        %v2571 = vadd.f32 %v2155, %v2541
        %v2572 = vadd.f32 %v2158, %v2544
        %v2573 = vadd.f32 %v2160, %v2546
        %v2574 = vadd.f32 %v2163, %v2549
        %v2575 = vadd.f32 %v2165, %v2551
        %v2576 = vadd.f32 %v2168, %v2554
        %v2577 = vadd.f32 %v2170, %v2556
        %v2578 = vld [vmem:[%s6] sm:$0x1]
        %v2580 = vperm.slane %v2578, 0
        %v2582 = vadd.f32 %v2558, %v2580
        %v2583 = vadd.f32 %v2559, %v2580
        %v2584 = vadd.f32 %v2560, %v2580
        %v2585 = vadd.f32 %v2561, %v2580
        %v2586 = vadd.f32 %v2562, %v2580
        %v2587 = vadd.f32 %v2563, %v2580
        %v2588 = vadd.f32 %v2564, %v2580
        %v2589 = vadd.f32 %v2565, %v2580
        %v2590 = vadd.f32 %v2566, %v2580
        %v2591 = vadd.f32 %v2567, %v2580
        %v2592 = vadd.f32 %v2568, %v2580
        %v2593 = vadd.f32 %v2569, %v2580
        %v2594 = vadd.f32 %v2570, %v2580
        %v2595 = vadd.f32 %v2571, %v2580
        %v2596 = vadd.f32 %v2572, %v2580
        %v2597 = vadd.f32 %v2573, %v2580
        %v2598 = vadd.f32 %v2574, %v2580
        %v2599 = vadd.f32 %v2575, %v2580
        %v2600 = vadd.f32 %v2576, %v2580
        %v2601 = vadd.f32 %v2577, %v2580
        %v2602 = vmax.f32 %v2582, 0.0
        %v2603 = vmax.f32 %v2583, 0.0
        %v2604 = vmax.f32 %v2584, 0.0
        %v2605 = vmax.f32 %v2585, 0.0
        %v2606 = vmax.f32 %v2586, 0.0
        %v2607 = vmax.f32 %v2587, 0.0
        %v2608 = vmax.f32 %v2588, 0.0
        %v2609 = vmax.f32 %v2589, 0.0
        %v2610 = vmax.f32 %v2590, 0.0
        %v2611 = vmax.f32 %v2591, 0.0
        %v2612 = vmax.f32 %v2592, 0.0
        %v2613 = vmax.f32 %v2593, 0.0
        %v2614 = vmax.f32 %v2594, 0.0
        %v2615 = vmax.f32 %v2595, 0.0
        %v2616 = vmax.f32 %v2596, 0.0
        %v2617 = vmax.f32 %v2597, 0.0
        %v2618 = vmax.f32 %v2598, 0.0
        %v2619 = vmax.f32 %v2599, 0.0
        %v2620 = vmax.f32 %v2600, 0.0
        %v2621 = vmax.f32 %v2601, 0.0
        %v2622 = vadd.s32 %v846, 8
        %v2623 = vadd.s32 %v846, 16
        %v2624 = vadd.s32 %v846, 24
        %v2625 = vadd.s32 %v846, 32
        %v2626 = vadd.s32 %v846, 40
        %v2627 = vadd.s32 %v846, 48
        %v2628 = vadd.s32 %v846, 56
        %v2629 = vadd.s32 %v846, 64
        %v2630 = vadd.s32 %v846, 72
        %v2631 = vadd.s32 %v846, 80
        %v2632 = vadd.s32 %v846, 88
        %v2633 = vadd.s32 %v846, 96
        %v2634 = vadd.s32 %v846, 104
        %v2635 = vadd.s32 %v846, 112
        %v2636 = vadd.s32 %v846, 120
        %v2637 = vadd.s32 %v846, 128
        %v2638 = vadd.s32 %v846, 136
        %v2639 = vadd.s32 %v846, 144
        %v2640 = vadd.s32 %v846, 152
        %vm2641 = vcmp.ge.s32.totalorder %v846, 16
        %vm2642 = vcmp.ge.s32.totalorder %v2622, 16
        %vm2643 = vcmp.ge.s32.totalorder %v2623, 16
        %vm2644 = vcmp.ge.s32.totalorder %v2624, 16
        %vm2645 = vcmp.ge.s32.totalorder %v2625, 16
        %vm2646 = vcmp.ge.s32.totalorder %v2626, 16
        %vm2647 = vcmp.ge.s32.totalorder %v2627, 16
        %vm2648 = vcmp.ge.s32.totalorder %v2628, 16
        %vm2649 = vcmp.ge.s32.totalorder %v2629, 16
        %vm2650 = vcmp.ge.s32.totalorder %v2630, 16
        %vm2651 = vcmp.ge.s32.totalorder %v2631, 16
        %vm2652 = vcmp.ge.s32.totalorder %v2632, 16
        %vm2653 = vcmp.ge.s32.totalorder %v2633, 16
        %vm2654 = vcmp.ge.s32.totalorder %v2634, 16
        %vm2655 = vcmp.ge.s32.totalorder %v2635, 16
        %vm2656 = vcmp.ge.s32.totalorder %v2636, 16
        %vm2657 = vcmp.ge.s32.totalorder %v2637, 16
        %vm2658 = vcmp.ge.s32.totalorder %v2638, 16
        %vm2659 = vcmp.ge.s32.totalorder %v2639, 16
        %vm2660 = vcmp.ge.s32.totalorder %v2640, 16
        %s2661 = scalar_select %p595, 1, 0
        %v2662 = vstv %s2661
        %vm2663 = vcmp.eq.s32.totalorder %v2662, 1
        %vm2664 = vmor %vm2663, %vm2641
        %vm2665 = vmor %vm2663, %vm2642
        %vm2666 = vmor %vm2663, %vm2643
        %vm2667 = vmor %vm2663, %vm2644
        %vm2668 = vmor %vm2663, %vm2645
        %vm2669 = vmor %vm2663, %vm2646
        %vm2670 = vmor %vm2663, %vm2647
        %vm2671 = vmor %vm2663, %vm2648
        %vm2672 = vmor %vm2663, %vm2649
        %vm2673 = vmor %vm2663, %vm2650
        %vm2674 = vmor %vm2663, %vm2651
        %vm2675 = vmor %vm2663, %vm2652
        %vm2676 = vmor %vm2663, %vm2653
        %vm2677 = vmor %vm2663, %vm2654
        %vm2678 = vmor %vm2663, %vm2655
        %vm2679 = vmor %vm2663, %vm2656
        %vm2680 = vmor %vm2663, %vm2657
        %vm2681 = vmor %vm2663, %vm2658
        %vm2682 = vmor %vm2663, %vm2659
        %vm2683 = vmor %vm2663, %vm2660
        %vm2684 = vcmp.lt.s32.totalorder %v846, 144
        %vm2685 = vcmp.lt.s32.totalorder %v2622, 144
        %vm2686 = vcmp.lt.s32.totalorder %v2623, 144
        %vm2687 = vcmp.lt.s32.totalorder %v2624, 144
        %vm2688 = vcmp.lt.s32.totalorder %v2625, 144
        %vm2689 = vcmp.lt.s32.totalorder %v2626, 144
        %vm2690 = vcmp.lt.s32.totalorder %v2627, 144
        %vm2691 = vcmp.lt.s32.totalorder %v2628, 144
        %vm2692 = vcmp.lt.s32.totalorder %v2629, 144
        %vm2693 = vcmp.lt.s32.totalorder %v2630, 144
        %vm2694 = vcmp.lt.s32.totalorder %v2631, 144
        %vm2695 = vcmp.lt.s32.totalorder %v2632, 144
        %vm2696 = vcmp.lt.s32.totalorder %v2633, 144
        %vm2697 = vcmp.lt.s32.totalorder %v2634, 144
        %vm2698 = vcmp.lt.s32.totalorder %v2635, 144
        %vm2699 = vcmp.lt.s32.totalorder %v2636, 144
        %vm2700 = vcmp.lt.s32.totalorder %v2637, 144
        %vm2701 = vcmp.lt.s32.totalorder %v2638, 144
        %vm2702 = vcmp.lt.s32.totalorder %v2639, 144
        %vm2703 = vcmp.lt.s32.totalorder %v2640, 144
        %s2704 = scalar_select %p607, 1, 0
        %v2705 = vstv %s2704
        %vm2706 = vcmp.eq.s32.totalorder %v2705, 1
        %vm2707 = vmor %vm2706, %vm2684
        %vm2708 = vmor %vm2706, %vm2685
        %vm2709 = vmor %vm2706, %vm2686
        %vm2710 = vmor %vm2706, %vm2687
        %vm2711 = vmor %vm2706, %vm2688
        %vm2712 = vmor %vm2706, %vm2689
        %vm2713 = vmor %vm2706, %vm2690
        %vm2714 = vmor %vm2706, %vm2691
        %vm2715 = vmor %vm2706, %vm2692
        %vm2716 = vmor %vm2706, %vm2693
        %vm2717 = vmor %vm2706, %vm2694
        %vm2718 = vmor %vm2706, %vm2695
        %vm2719 = vmor %vm2706, %vm2696
        %vm2720 = vmor %vm2706, %vm2697
        %vm2721 = vmor %vm2706, %vm2698
        %vm2722 = vmor %vm2706, %vm2699
        %vm2723 = vmor %vm2706, %vm2700
        %vm2724 = vmor %vm2706, %vm2701
        %vm2725 = vmor %vm2706, %vm2702
        %vm2726 = vmor %vm2706, %vm2703
        %vm2727 = vmand %vm2664, %vm2707
        %vm2728 = vmand %vm2665, %vm2708
        %vm2729 = vmand %vm2666, %vm2709
        %vm2730 = vmand %vm2667, %vm2710
        %vm2731 = vmand %vm2668, %vm2711
        %vm2732 = vmand %vm2669, %vm2712
        %vm2733 = vmand %vm2670, %vm2713
        %vm2734 = vmand %vm2671, %vm2714
        %vm2735 = vmand %vm2672, %vm2715
        %vm2736 = vmand %vm2673, %vm2716
        %vm2737 = vmand %vm2674, %vm2717
        %vm2738 = vmand %vm2675, %vm2718
        %vm2739 = vmand %vm2676, %vm2719
        %vm2740 = vmand %vm2677, %vm2720
        %vm2741 = vmand %vm2678, %vm2721
        %vm2742 = vmand %vm2679, %vm2722
        %vm2743 = vmand %vm2680, %vm2723
        %vm2744 = vmand %vm2681, %vm2724
        %vm2745 = vmand %vm2682, %vm2725
        %vm2746 = vmand %vm2683, %vm2726
        %v2747 = vsel %vm2727, 1, 0
        %v2748 = vsel %vm2728, 1, 0
        %v2749 = vsel %vm2729, 1, 0
        %v2750 = vsel %vm2730, 1, 0
        %v2751 = vsel %vm2731, 1, 0
        %v2752 = vsel %vm2732, 1, 0
        %v2753 = vsel %vm2733, 1, 0
        %v2754 = vsel %vm2734, 1, 0
        %v2755 = vsel %vm2735, 1, 0
        %v2756 = vsel %vm2736, 1, 0
        %v2757 = vsel %vm2737, 1, 0
        %v2758 = vsel %vm2738, 1, 0
        %v2759 = vsel %vm2739, 1, 0
        %v2760 = vsel %vm2740, 1, 0
        %v2761 = vsel %vm2741, 1, 0
        %v2762 = vsel %vm2742, 1, 0
        %v2763 = vsel %vm2743, 1, 0
        %v2764 = vsel %vm2744, 1, 0
        %v2765 = vsel %vm2745, 1, 0
        %v2766 = vsel %vm2746, 1, 0
        %v2767 = vcvt.s32.f32 %v2747
        %v2768 = vcvt.s32.f32 %v2748
        %v2769 = vcvt.s32.f32 %v2749
        %v2770 = vcvt.s32.f32 %v2750
        %v2771 = vcvt.s32.f32 %v2751
        %v2772 = vcvt.s32.f32 %v2752
        %v2773 = vcvt.s32.f32 %v2753
        %v2774 = vcvt.s32.f32 %v2754
        %v2775 = vcvt.s32.f32 %v2755
        %v2776 = vcvt.s32.f32 %v2756
        %v2777 = vcvt.s32.f32 %v2757
        %v2778 = vcvt.s32.f32 %v2758
        %v2779 = vcvt.s32.f32 %v2759
        %v2780 = vcvt.s32.f32 %v2760
        %v2781 = vcvt.s32.f32 %v2761
        %v2782 = vcvt.s32.f32 %v2762
        %v2783 = vcvt.s32.f32 %v2763
        %v2784 = vcvt.s32.f32 %v2764
        %v2785 = vcvt.s32.f32 %v2765
        %v2786 = vcvt.s32.f32 %v2766
        %v2787 = vmul.f32 %v2602, %v2767
        %v2788 = vmul.f32 %v2603, %v2768
        %v2789 = vmul.f32 %v2604, %v2769
        %v2790 = vmul.f32 %v2605, %v2770
        %v2791 = vmul.f32 %v2606, %v2771
        %v2792 = vmul.f32 %v2607, %v2772
        %v2793 = vmul.f32 %v2608, %v2773
        %v2794 = vmul.f32 %v2609, %v2774
        %v2795 = vmul.f32 %v2610, %v2775
        %v2796 = vmul.f32 %v2611, %v2776
        %v2797 = vmul.f32 %v2612, %v2777
        %v2798 = vmul.f32 %v2613, %v2778
        %v2799 = vmul.f32 %v2614, %v2779
        %v2800 = vmul.f32 %v2615, %v2780
        %v2801 = vmul.f32 %v2616, %v2781
        %v2802 = vmul.f32 %v2617, %v2782
        %v2803 = vmul.f32 %v2618, %v2783
        %v2804 = vmul.f32 %v2619, %v2784
        %v2805 = vmul.f32 %v2620, %v2785
        %v2806 = vmul.f32 %v2621, %v2786
        %v2807 = vld [vmem:[%s3] sm:$0xff]
        %v2808 = vld [vmem:[%s3 + $0x8] sm:$0xff]
        %v2809 = vld [vmem:[%s3 + $0x10] sm:$0xff]
        %v2810 = vld [vmem:[%s3 + $0x18] sm:$0xff]
        %v2811 = vld [vmem:[%s3 + $0x20] sm:$0xff]
        %v2812 = vld [vmem:[%s3 + $0x28] sm:$0xff]
        %v2813 = vld [vmem:[%s3 + $0x30] sm:$0xff]
        %v2814 = vld [vmem:[%s3 + $0x38] sm:$0xff]
        %v2815 = vld [vmem:[%s3 + $0x40] sm:$0xff]
        %v2816 = vld [vmem:[%s3 + $0x48] sm:$0xff]
        %v2817 = vld [vmem:[%s3 + $0x50] sm:$0xff]
        %v2818 = vld [vmem:[%s3 + $0x58] sm:$0xff]
        %v2819 = vld [vmem:[%s3 + $0x60] sm:$0xff]
        %v2820 = vld [vmem:[%s3 + $0x68] sm:$0xff]
        %v2821 = vld [vmem:[%s3 + $0x70] sm:$0xff]
        %v2822 = vld [vmem:[%s3 + $0x78] sm:$0xff]
        %v2823 = vld [vmem:[%s3 + $0x80] sm:$0xff]
        %v2824 = vld [vmem:[%s3 + $0x88] sm:$0xff]
        %v2825 = vld [vmem:[%s3 + $0x90] sm:$0xff]
        %v2826 = vld [vmem:[%s3 + $0x98] sm:$0xff]
        %v2827 = vld [vmem:[%s3 + $0xa0] sm:$0xff]
        %v2828 = vld [vmem:[%s3 + $0xa8] sm:$0xff]
        %v2829 = vld [vmem:[%s4] sm:$0xff]
        %v2830 = vld [vmem:[%s4 + $0x8] sm:$0xff]
        %v2831 = vld [vmem:[%s4 + $0x10] sm:$0xff]
        %v2832 = vld [vmem:[%s4 + $0x18] sm:$0xff]
        %v2833 = vld [vmem:[%s4 + $0x20] sm:$0xff]
        %v2834 = vld [vmem:[%s4 + $0x28] sm:$0xff]
        %v2835 = vld [vmem:[%s4 + $0x30] sm:$0xff]
        %v2836 = vld [vmem:[%s4 + $0x38] sm:$0xff]
        %v2837 = vld [vmem:[%s4 + $0x40] sm:$0xff]
        %v2838 = vld [vmem:[%s4 + $0x48] sm:$0xff]
        %v2839 = vld [vmem:[%s4 + $0x50] sm:$0xff]
        %v2840 = vld [vmem:[%s4 + $0x58] sm:$0xff]
        %v2841 = vld [vmem:[%s4 + $0x60] sm:$0xff]
        %v2842 = vld [vmem:[%s4 + $0x68] sm:$0xff]
        %v2843 = vld [vmem:[%s4 + $0x70] sm:$0xff]
        %v2844 = vld [vmem:[%s4 + $0x78] sm:$0xff]
        %v2845 = vld [vmem:[%s4 + $0x80] sm:$0xff]
        %v2846 = vld [vmem:[%s4 + $0x88] sm:$0xff]
        %v2847 = vld [vmem:[%s4 + $0x90] sm:$0xff]
        %v2848 = vld [vmem:[%s4 + $0x98] sm:$0xff]
        %v2849 = vld [vmem:[%s4 + $0xa0] sm:$0xff]
        %v2850 = vld [vmem:[%s4 + $0xa8] sm:$0xff]
        %v2851 = vrot.slane %v2787, 7
        %v2852 = vrot.slane %v2788, 7
        %v2853 = vrot.slane %v2789, 7
        %v2854 = vrot.slane %v2790, 7
        %v2855 = vrot.slane %v2791, 7
        %v2856 = vrot.slane %v2792, 7
        %v2857 = vrot.slane %v2793, 7
        %v2858 = vrot.slane %v2794, 7
        %v2859 = vrot.slane %v2795, 7
        %v2860 = vrot.slane %v2796, 7
        %v2861 = vrot.slane %v2797, 7
        %v2862 = vrot.slane %v2798, 7
        %v2863 = vrot.slane %v2799, 7
        %v2864 = vrot.slane %v2800, 7
        %v2865 = vrot.slane %v2801, 7
        %v2866 = vrot.slane %v2802, 7
        %v2867 = vrot.slane %v2803, 7
        %v2868 = vrot.slane %v2804, 7
        %v2869 = vrot.slane %v2805, 7
        %v2870 = vrot.slane %v2806, 7
        %v2871 = vsel %vm847, %v2869, %v2870
        %v2872 = vsel %vm847, %v2868, %v2869
        %v2873 = vsel %vm847, %v2867, %v2868
        %v2874 = vsel %vm847, %v2866, %v2867
        %v2875 = vsel %vm847, %v2865, %v2866
        %v2876 = vsel %vm847, %v2864, %v2865
        %v2877 = vsel %vm847, %v2863, %v2864
        %v2878 = vsel %vm847, %v2862, %v2863
        %v2879 = vsel %vm847, %v2861, %v2862
        %v2880 = vsel %vm847, %v2860, %v2861
        %v2881 = vsel %vm847, %v2859, %v2860
        %v2882 = vsel %vm847, %v2858, %v2859
        %v2883 = vsel %vm847, %v2857, %v2858
        %v2884 = vsel %vm847, %v2856, %v2857
        %v2885 = vsel %vm847, %v2855, %v2856
        %v2886 = vsel %vm847, %v2854, %v2855
        %v2887 = vsel %vm847, %v2853, %v2854
        %v2888 = vsel %vm847, %v2852, %v2853
        %v2889 = vsel %vm847, %v2851, %v2852
        %v2890 = vsel %vm847, 0.0, %v2851
        %v2891 = vsel %vm847, %v2870, 0.0
        %2893 = vset.pattern.permute.xlu0 0
        %2894 = vperm.xlu0 %2893, %v2807
        %v2895 = vpop.permute.xlu0 %2894
        %2898 = vset.pattern.permute.xlu0 0
        %2899 = vperm.xlu0 %2898, %v2808
        %v2900 = vpop.permute.xlu0 %2899
        %2903 = vset.pattern.permute.xlu0 0
        %2904 = vperm.xlu0 %2903, %v2809
        %v2905 = vpop.permute.xlu0 %2904
        %2908 = vset.pattern.permute.xlu0 0
        %2909 = vperm.xlu0 %2908, %v2810
        %v2910 = vpop.permute.xlu0 %2909
        %2913 = vset.pattern.permute.xlu0 0
        %2914 = vperm.xlu0 %2913, %v2811
        %v2915 = vpop.permute.xlu0 %2914
        %2918 = vset.pattern.permute.xlu0 0
        %2919 = vperm.xlu0 %2918, %v2812
        %v2920 = vpop.permute.xlu0 %2919
        %2923 = vset.pattern.permute.xlu0 0
        %2924 = vperm.xlu0 %2923, %v2813
        %v2925 = vpop.permute.xlu0 %2924
        %2928 = vset.pattern.permute.xlu0 0
        %2929 = vperm.xlu0 %2928, %v2814
        %v2930 = vpop.permute.xlu0 %2929
        %2933 = vset.pattern.permute.xlu0 0
        %2934 = vperm.xlu0 %2933, %v2815
        %v2935 = vpop.permute.xlu0 %2934
        %2938 = vset.pattern.permute.xlu0 0
        %2939 = vperm.xlu0 %2938, %v2816
        %v2940 = vpop.permute.xlu0 %2939
        %2943 = vset.pattern.permute.xlu0 0
        %2944 = vperm.xlu0 %2943, %v2817
        %v2945 = vpop.permute.xlu0 %2944
        %2948 = vset.pattern.permute.xlu0 0
        %2949 = vperm.xlu0 %2948, %v2818
        %v2950 = vpop.permute.xlu0 %2949
        %2953 = vset.pattern.permute.xlu0 0
        %2954 = vperm.xlu0 %2953, %v2819
        %v2955 = vpop.permute.xlu0 %2954
        %2958 = vset.pattern.permute.xlu0 0
        %2959 = vperm.xlu0 %2958, %v2820
        %v2960 = vpop.permute.xlu0 %2959
        %2963 = vset.pattern.permute.xlu0 0
        %2964 = vperm.xlu0 %2963, %v2821
        %v2965 = vpop.permute.xlu0 %2964
        %2968 = vset.pattern.permute.xlu0 0
        %2969 = vperm.xlu0 %2968, %v2822
        %v2970 = vpop.permute.xlu0 %2969
        %2973 = vset.pattern.permute.xlu0 0
        %2974 = vperm.xlu0 %2973, %v2823
        %v2975 = vpop.permute.xlu0 %2974
        %2978 = vset.pattern.permute.xlu0 0
        %2979 = vperm.xlu0 %2978, %v2824
        %v2980 = vpop.permute.xlu0 %2979
        %2983 = vset.pattern.permute.xlu0 0
        %2984 = vperm.xlu0 %2983, %v2825
        %v2985 = vpop.permute.xlu0 %2984
        %2988 = vset.pattern.permute.xlu0 0
        %2989 = vperm.xlu0 %2988, %v2826
        %v2990 = vpop.permute.xlu0 %2989
        %2993 = vset.pattern.permute.xlu0 0
        %2994 = vperm.xlu0 %2993, %v2827
        %v2995 = vpop.permute.xlu0 %2994
        %2998 = vset.pattern.permute.xlu0 0
        %2999 = vperm.xlu0 %2998, %v2828
        %v3000 = vpop.permute.xlu0 %2999
        %v3002 = vmul.f32 %v2891, %v2895
        %v3003 = vmul.f32 0.0, %v2900
        %v3004 = vmul.f32 %v2890, %v2905
        %v3005 = vmul.f32 %v2889, %v2910
        %v3006 = vmul.f32 %v2888, %v2915
        %v3007 = vmul.f32 %v2887, %v2920
        %v3008 = vmul.f32 %v2886, %v2925
        %v3009 = vmul.f32 %v2885, %v2930
        %v3010 = vmul.f32 %v2884, %v2935
        %v3011 = vmul.f32 %v2883, %v2940
        %v3012 = vmul.f32 %v2882, %v2945
        %v3013 = vmul.f32 %v2881, %v2950
        %v3014 = vmul.f32 %v2880, %v2955
        %v3015 = vmul.f32 %v2879, %v2960
        %v3016 = vmul.f32 %v2878, %v2965
        %v3017 = vmul.f32 %v2877, %v2970
        %v3018 = vmul.f32 %v2876, %v2975
        %v3019 = vmul.f32 %v2875, %v2980
        %v3020 = vmul.f32 %v2874, %v2985
        %v3021 = vmul.f32 %v2873, %v2990
        %v3022 = vmul.f32 %v2872, %v2995
        %v3023 = vmul.f32 %v2871, %v3000
        %v3024 = vrot.slane %v2787, 1
        %v3025 = vrot.slane %v2788, 1
        %v3026 = vrot.slane %v2789, 1
        %v3027 = vrot.slane %v2790, 1
        %v3028 = vrot.slane %v2791, 1
        %v3029 = vrot.slane %v2792, 1
        %v3030 = vrot.slane %v2793, 1
        %v3031 = vrot.slane %v2794, 1
        %v3032 = vrot.slane %v2795, 1
        %v3033 = vrot.slane %v2796, 1
        %v3034 = vrot.slane %v2797, 1
        %v3035 = vrot.slane %v2798, 1
        %v3036 = vrot.slane %v2799, 1
        %v3037 = vrot.slane %v2800, 1
        %v3038 = vrot.slane %v2801, 1
        %v3039 = vrot.slane %v2802, 1
        %v3040 = vrot.slane %v2803, 1
        %v3041 = vrot.slane %v2804, 1
        %v3042 = vrot.slane %v2805, 1
        %v3043 = vrot.slane %v2806, 1
        %v3044 = vsel %vm1040, %v3042, %v3043
        %v3045 = vsel %vm1040, %v3041, %v3042
        %v3046 = vsel %vm1040, %v3040, %v3041
        %v3047 = vsel %vm1040, %v3039, %v3040
        %v3048 = vsel %vm1040, %v3038, %v3039
        %v3049 = vsel %vm1040, %v3037, %v3038
        %v3050 = vsel %vm1040, %v3036, %v3037
        %v3051 = vsel %vm1040, %v3035, %v3036
        %v3052 = vsel %vm1040, %v3034, %v3035
        %v3053 = vsel %vm1040, %v3033, %v3034
        %v3054 = vsel %vm1040, %v3032, %v3033
        %v3055 = vsel %vm1040, %v3031, %v3032
        %v3056 = vsel %vm1040, %v3030, %v3031
        %v3057 = vsel %vm1040, %v3029, %v3030
        %v3058 = vsel %vm1040, %v3028, %v3029
        %v3059 = vsel %vm1040, %v3027, %v3028
        %v3060 = vsel %vm1040, %v3026, %v3027
        %v3061 = vsel %vm1040, %v3025, %v3026
        %v3062 = vsel %vm1040, %v3024, %v3025
        %v3063 = vsel %vm1040, 0.0, %v3024
        %v3064 = vsel %vm1040, %v3043, 0.0
        %3066 = vset.pattern.permute.xlu0 0
        %3067 = vperm.xlu0 %3066, %v2829
        %v3068 = vpop.permute.xlu0 %3067
        %3071 = vset.pattern.permute.xlu0 0
        %3072 = vperm.xlu0 %3071, %v2830
        %v3073 = vpop.permute.xlu0 %3072
        %3076 = vset.pattern.permute.xlu0 0
        %3077 = vperm.xlu0 %3076, %v2831
        %v3078 = vpop.permute.xlu0 %3077
        %3081 = vset.pattern.permute.xlu0 0
        %3082 = vperm.xlu0 %3081, %v2832
        %v3083 = vpop.permute.xlu0 %3082
        %3086 = vset.pattern.permute.xlu0 0
        %3087 = vperm.xlu0 %3086, %v2833
        %v3088 = vpop.permute.xlu0 %3087
        %3091 = vset.pattern.permute.xlu0 0
        %3092 = vperm.xlu0 %3091, %v2834
        %v3093 = vpop.permute.xlu0 %3092
        %3096 = vset.pattern.permute.xlu0 0
        %3097 = vperm.xlu0 %3096, %v2835
        %v3098 = vpop.permute.xlu0 %3097
        %3101 = vset.pattern.permute.xlu0 0
        %3102 = vperm.xlu0 %3101, %v2836
        %v3103 = vpop.permute.xlu0 %3102
        %3106 = vset.pattern.permute.xlu0 0
        %3107 = vperm.xlu0 %3106, %v2837
        %v3108 = vpop.permute.xlu0 %3107
        %3111 = vset.pattern.permute.xlu0 0
        %3112 = vperm.xlu0 %3111, %v2838
        %v3113 = vpop.permute.xlu0 %3112
        %3116 = vset.pattern.permute.xlu0 0
        %3117 = vperm.xlu0 %3116, %v2839
        %v3118 = vpop.permute.xlu0 %3117
        %3121 = vset.pattern.permute.xlu0 0
        %3122 = vperm.xlu0 %3121, %v2840
        %v3123 = vpop.permute.xlu0 %3122
        %3126 = vset.pattern.permute.xlu0 0
        %3127 = vperm.xlu0 %3126, %v2841
        %v3128 = vpop.permute.xlu0 %3127
        %3131 = vset.pattern.permute.xlu0 0
        %3132 = vperm.xlu0 %3131, %v2842
        %v3133 = vpop.permute.xlu0 %3132
        %3136 = vset.pattern.permute.xlu0 0
        %3137 = vperm.xlu0 %3136, %v2843
        %v3138 = vpop.permute.xlu0 %3137
        %3141 = vset.pattern.permute.xlu0 0
        %3142 = vperm.xlu0 %3141, %v2844
        %v3143 = vpop.permute.xlu0 %3142
        %3146 = vset.pattern.permute.xlu0 0
        %3147 = vperm.xlu0 %3146, %v2845
        %v3148 = vpop.permute.xlu0 %3147
        %3151 = vset.pattern.permute.xlu0 0
        %3152 = vperm.xlu0 %3151, %v2846
        %v3153 = vpop.permute.xlu0 %3152
        %3156 = vset.pattern.permute.xlu0 0
        %3157 = vperm.xlu0 %3156, %v2847
        %v3158 = vpop.permute.xlu0 %3157
        %3161 = vset.pattern.permute.xlu0 0
        %3162 = vperm.xlu0 %3161, %v2848
        %v3163 = vpop.permute.xlu0 %3162
        %3166 = vset.pattern.permute.xlu0 0
        %3167 = vperm.xlu0 %3166, %v2849
        %v3168 = vpop.permute.xlu0 %3167
        %3171 = vset.pattern.permute.xlu0 0
        %3172 = vperm.xlu0 %3171, %v2850
        %v3173 = vpop.permute.xlu0 %3172
        %v3175 = vmul.f32 0.0, %v3068
        %v3176 = vmul.f32 %v3063, %v3073
        %v3177 = vmul.f32 %v3062, %v3078
        %v3178 = vmul.f32 %v3061, %v3083
        %v3179 = vmul.f32 %v3060, %v3088
        %v3180 = vmul.f32 %v3059, %v3093
        %v3181 = vmul.f32 %v3058, %v3098
        %v3182 = vmul.f32 %v3057, %v3103
        %v3183 = vmul.f32 %v3056, %v3108
        %v3184 = vmul.f32 %v3055, %v3113
        %v3185 = vmul.f32 %v3054, %v3118
        %v3186 = vmul.f32 %v3053, %v3123
        %v3187 = vmul.f32 %v3052, %v3128
        %v3188 = vmul.f32 %v3051, %v3133
        %v3189 = vmul.f32 %v3050, %v3138
        %v3190 = vmul.f32 %v3049, %v3143
        %v3191 = vmul.f32 %v3048, %v3148
        %v3192 = vmul.f32 %v3047, %v3153
        %v3193 = vmul.f32 %v3046, %v3158
        %v3194 = vmul.f32 %v3045, %v3163
        %v3195 = vmul.f32 %v3044, %v3168
        %v3196 = vmul.f32 %v3064, %v3173
        %v3197 = vpack.c.bf16 0.0, %v3002
        %v3198 = vpack.c.bf16 %v3175, %v3175
        %v3199 = vpack.c.bf16 0.0, %v3003
        %v3200 = vpack.c.bf16 %v3176, %v3176
        %v3201 = vpack.c.bf16 %v2787, %v3004
        %v3202 = vpack.c.bf16 %v3177, %v3177
        %v3203 = vpack.c.bf16 %v2788, %v3005
        %v3204 = vpack.c.bf16 %v3178, %v3178
        %v3205 = vpack.c.bf16 %v2789, %v3006
        %v3206 = vpack.c.bf16 %v3179, %v3179
        %v3207 = vpack.c.bf16 %v2790, %v3007
        %v3208 = vpack.c.bf16 %v3180, %v3180
        %v3209 = vpack.c.bf16 %v2791, %v3008
        %v3210 = vpack.c.bf16 %v3181, %v3181
        %v3211 = vpack.c.bf16 %v2792, %v3009
        %v3212 = vpack.c.bf16 %v3182, %v3182
        %v3213 = vpack.c.bf16 %v2793, %v3010
        %v3214 = vpack.c.bf16 %v3183, %v3183
        %v3215 = vpack.c.bf16 %v2794, %v3011
        %v3216 = vpack.c.bf16 %v3184, %v3184
        %v3217 = vpack.c.bf16 %v2795, %v3012
        %v3218 = vpack.c.bf16 %v3185, %v3185
        %v3219 = vpack.c.bf16 %v2796, %v3013
        %v3220 = vpack.c.bf16 %v3186, %v3186
        %v3221 = vpack.c.bf16 %v2797, %v3014
        %v3222 = vpack.c.bf16 %v3187, %v3187
        %v3223 = vpack.c.bf16 %v2798, %v3015
        %v3224 = vpack.c.bf16 %v3188, %v3188
        %v3225 = vpack.c.bf16 %v2799, %v3016
        %v3226 = vpack.c.bf16 %v3189, %v3189
        %v3227 = vpack.c.bf16 %v2800, %v3017
        %v3228 = vpack.c.bf16 %v3190, %v3190
        %v3229 = vpack.c.bf16 %v2801, %v3018
        %v3230 = vpack.c.bf16 %v3191, %v3191
        %v3231 = vpack.c.bf16 %v2802, %v3019
        %v3232 = vpack.c.bf16 %v3192, %v3192
        %v3233 = vpack.c.bf16 %v2803, %v3020
        %v3234 = vpack.c.bf16 %v3193, %v3193
        %v3235 = vpack.c.bf16 %v2804, %v3021
        %v3236 = vpack.c.bf16 %v3194, %v3194
        %v3237 = vpack.c.bf16 %v2805, %v3022
        %v3238 = vpack.c.bf16 %v3195, %v3195
        %v3239 = vpack.c.bf16 %v2806, %v3023
        %v3240 = vpack.c.bf16 %v3196, %v3196
        %v3241 = vld [vmem:[%s7] sm:$0xf]
        %v3242 = vld [vmem:[%s7 + $0x4] sm:$0xf]
        %v3243 = vld [vmem:[%s7 + $0x8] sm:$0xf]
        %v3244 = vld [vmem:[%s7 + $0xc] sm:$0xf]
        %v3245 = vld [vmem:[%s7 + $0x10] sm:$0xf]
        %v3246 = vld [vmem:[%s7 + $0x14] sm:$0xf]
        %v3247 = vld [vmem:[%s7 + $0x18] sm:$0xf]
        %v3248 = vld [vmem:[%s7 + $0x1c] sm:$0xf]
        %v3249 = vld [vmem:[%s7 + $0x20] sm:$0xf]
        %v3250 = vld [vmem:[%s7 + $0x24] sm:$0xf]
        %v3251 = vld [vmem:[%s7 + $0x28] sm:$0xf]
        %v3252 = vld [vmem:[%s7 + $0x2c] sm:$0xf]
        %v3253 = vld [vmem:[%s7 + $0x30] sm:$0xf]
        %v3254 = vld [vmem:[%s7 + $0x34] sm:$0xf]
        %v3255 = vld [vmem:[%s7 + $0x38] sm:$0xf]
        %v3256 = vld [vmem:[%s7 + $0x3c] sm:$0xf]
        %v3257 = vld [vmem:[%s7 + $0x40] sm:$0xf]
        %v3258 = vld [vmem:[%s7 + $0x44] sm:$0xf]
        %v3259 = vld [vmem:[%s7 + $0x48] sm:$0xf]
        %v3260 = vld [vmem:[%s7 + $0x4c] sm:$0xf]
        %v3261 = vld [vmem:[%s7 + $0x50] sm:$0xf]
        %v3262 = vld [vmem:[%s7 + $0x54] sm:$0xf]
        %v3263 = vld [vmem:[%s7 + $0x58] sm:$0xf]
        %v3264 = vld [vmem:[%s7 + $0x5c] sm:$0xf]
        %v3265 = vld [vmem:[%s7 + $0x60] sm:$0xf]
        %v3266 = vld [vmem:[%s7 + $0x64] sm:$0xf]
        %v3267 = vld [vmem:[%s7 + $0x68] sm:$0xf]
        %v3268 = vld [vmem:[%s7 + $0x6c] sm:$0xf]
        %v3269 = vld [vmem:[%s7 + $0x70] sm:$0xf]
        %v3270 = vld [vmem:[%s7 + $0x74] sm:$0xf]
        %v3271 = vld [vmem:[%s7 + $0x78] sm:$0xf]
        %v3272 = vld [vmem:[%s7 + $0x7c] sm:$0xf]
        %v3273 = vld [vmem:[%s7 + $0x80] sm:$0xf]
        %v3274 = vld [vmem:[%s7 + $0x84] sm:$0xf]
        %v3275 = vld [vmem:[%s7 + $0x88] sm:$0xf]
        %v3276 = vld [vmem:[%s7 + $0x8c] sm:$0xf]
        %v3277 = vld [vmem:[%s7 + $0x90] sm:$0xf]
        %v3278 = vld [vmem:[%s7 + $0x94] sm:$0xf]
        %v3279 = vld [vmem:[%s7 + $0x98] sm:$0xf]
        %v3280 = vld [vmem:[%s7 + $0x9c] sm:$0xf]
        %v3281 = vld [vmem:[%s7 + $0xa0] sm:$0xf]
        %v3282 = vld [vmem:[%s7 + $0xa4] sm:$0xf]
        %v3283 = vld [vmem:[%s7 + $0xa8] sm:$0xf]
        %v3284 = vld [vmem:[%s7 + $0xac] sm:$0xf]
        %v3285 = vld [vmem:[%s7 + $0xb0] sm:$0xf]
        %v3286 = vld [vmem:[%s7 + $0xb4] sm:$0xf]
        %v3287 = vld [vmem:[%s7 + $0xb8] sm:$0xf]
        %v3288 = vld [vmem:[%s7 + $0xbc] sm:$0xf]
        %s3289 = scalar_lea.vmem %s7, 192
        %v3290 = vld [vmem:[%s3289] sm:$0xf]
        %v3291 = vld [vmem:[%s3289 + $0x4] sm:$0xf]
        %v3292 = vld [vmem:[%s3289 + $0x8] sm:$0xf]
        %v3293 = vld [vmem:[%s3289 + $0xc] sm:$0xf]
        %v3294 = vld [vmem:[%s3289 + $0x10] sm:$0xf]
        %v3295 = vld [vmem:[%s3289 + $0x14] sm:$0xf]
        %v3296 = vld [vmem:[%s3289 + $0x18] sm:$0xf]
        %v3297 = vld [vmem:[%s3289 + $0x1c] sm:$0xf]
        %v3298 = vld [vmem:[%s3289 + $0x20] sm:$0xf]
        %v3299 = vld [vmem:[%s3289 + $0x24] sm:$0xf]
        %v3300 = vld [vmem:[%s3289 + $0x28] sm:$0xf]
        %v3301 = vld [vmem:[%s3289 + $0x2c] sm:$0xf]
        %v3302 = vld [vmem:[%s3289 + $0x30] sm:$0xf]
        %v3303 = vld [vmem:[%s3289 + $0x34] sm:$0xf]
        %v3304 = vld [vmem:[%s3289 + $0x38] sm:$0xf]
        %v3305 = vld [vmem:[%s3289 + $0x3c] sm:$0xf]
        %v3306 = vld [vmem:[%s3289 + $0x40] sm:$0xf]
        %v3307 = vld [vmem:[%s3289 + $0x44] sm:$0xf]
        %v3308 = vld [vmem:[%s3289 + $0x48] sm:$0xf]
        %v3309 = vld [vmem:[%s3289 + $0x4c] sm:$0xf]
        %v3310 = vld [vmem:[%s3289 + $0x50] sm:$0xf]
        %v3311 = vld [vmem:[%s3289 + $0x54] sm:$0xf]
        %v3312 = vld [vmem:[%s3289 + $0x58] sm:$0xf]
        %v3313 = vld [vmem:[%s3289 + $0x5c] sm:$0xf]
        %v3314 = vld [vmem:[%s3289 + $0x60] sm:$0xf]
        %v3315 = vld [vmem:[%s3289 + $0x64] sm:$0xf]
        %v3316 = vld [vmem:[%s3289 + $0x68] sm:$0xf]
        %v3317 = vld [vmem:[%s3289 + $0x6c] sm:$0xf]
        %v3318 = vld [vmem:[%s3289 + $0x70] sm:$0xf]
        %v3319 = vld [vmem:[%s3289 + $0x74] sm:$0xf]
        %v3320 = vld [vmem:[%s3289 + $0x78] sm:$0xf]
        %v3321 = vld [vmem:[%s3289 + $0x7c] sm:$0xf]
        %v3322 = vld [vmem:[%s3289 + $0x80] sm:$0xf]
        %v3323 = vld [vmem:[%s3289 + $0x84] sm:$0xf]
        %v3324 = vld [vmem:[%s3289 + $0x88] sm:$0xf]
        %v3325 = vld [vmem:[%s3289 + $0x8c] sm:$0xf]
        %v3326 = vld [vmem:[%s3289 + $0x90] sm:$0xf]
        %v3327 = vld [vmem:[%s3289 + $0x94] sm:$0xf]
        %v3328 = vld [vmem:[%s3289 + $0x98] sm:$0xf]
        %v3329 = vld [vmem:[%s3289 + $0x9c] sm:$0xf]
        %v3330 = vld [vmem:[%s3289 + $0xa0] sm:$0xf]
        %v3331 = vld [vmem:[%s3289 + $0xa4] sm:$0xf]
        %v3332 = vld [vmem:[%s3289 + $0xa8] sm:$0xf]
        %v3333 = vld [vmem:[%s3289 + $0xac] sm:$0xf]
        %v3334 = vld [vmem:[%s3289 + $0xb0] sm:$0xf]
        %v3335 = vld [vmem:[%s3289 + $0xb4] sm:$0xf]
        %v3336 = vld [vmem:[%s3289 + $0xb8] sm:$0xf]
        %v3337 = vld [vmem:[%s3289 + $0xbc] sm:$0xf]
        %v3374 = vunpack.c.l.b16 %v3201
        %v3375 = vunpack.c.h.b16 %v3201
        %v3376 = vunpack.c.l.b16 %v3202
        %v3377 = vunpack.c.l.b16 %v3203
        %v3378 = vunpack.c.h.b16 %v3203
        %v3379 = vunpack.c.l.b16 %v3204
        %v3380 = vunpack.c.l.b16 %v3205
        %v3381 = vunpack.c.h.b16 %v3205
        %v3382 = vunpack.c.l.b16 %v3206
        %v3383 = vunpack.c.l.b16 %v3207
        %v3384 = vunpack.c.h.b16 %v3207
        %v3385 = vunpack.c.l.b16 %v3208
        %v3386 = vunpack.c.l.b16 %v3209
        %v3387 = vunpack.c.h.b16 %v3209
        %v3388 = vunpack.c.l.b16 %v3210
        %v3389 = vunpack.c.l.b16 %v3211
        %v3390 = vunpack.c.h.b16 %v3211
        %v3391 = vunpack.c.l.b16 %v3212
        %v3392 = vunpack.c.l.b16 %v3213
        %v3393 = vunpack.c.h.b16 %v3213
        %v3394 = vunpack.c.l.b16 %v3214
        %v3395 = vunpack.c.l.b16 %v3215
        %v3396 = vunpack.c.h.b16 %v3215
        %v3397 = vunpack.c.l.b16 %v3216
        %v3398 = vunpack.c.l.b16 %v3217
        %v3399 = vunpack.c.h.b16 %v3217
        %v3400 = vunpack.c.l.b16 %v3218
        %v3401 = vunpack.c.l.b16 %v3219
        %v3402 = vunpack.c.h.b16 %v3219
        %v3403 = vunpack.c.l.b16 %v3220
        %v3404 = vunpack.c.l.b16 %v3221
        %v3405 = vunpack.c.h.b16 %v3221
        %v3406 = vunpack.c.l.b16 %v3222
        %v3407 = vunpack.c.l.b16 %v3223
        %v3408 = vunpack.c.h.b16 %v3223
        %v3409 = vunpack.c.l.b16 %v3224
        %v3410 = vunpack.c.l.b16 %v3225
        %v3411 = vunpack.c.h.b16 %v3225
        %v3412 = vunpack.c.l.b16 %v3226
        %v3413 = vunpack.c.l.b16 %v3227
        %v3414 = vunpack.c.h.b16 %v3227
        %v3415 = vunpack.c.l.b16 %v3228
        %v3416 = vunpack.c.l.b16 %v3229
        %v3417 = vunpack.c.h.b16 %v3229
        %v3418 = vunpack.c.l.b16 %v3230
        %v3419 = vunpack.c.l.b16 %v3231
        %v3420 = vunpack.c.h.b16 %v3231
        %v3421 = vunpack.c.l.b16 %v3232
        %v3422 = vunpack.c.l.b16 %v3233
        %v3423 = vunpack.c.h.b16 %v3233
        %v3424 = vunpack.c.l.b16 %v3234
        %v3425 = vunpack.c.l.b16 %v3235
        %v3426 = vunpack.c.h.b16 %v3235
        %v3427 = vunpack.c.l.b16 %v3236
        %v3428 = vpack.c.b16 %v3377, %v3374
        %v3429 = vpack.c.b16 %v3378, %v3375
        %v3430 = vpack.c.b16 %v3379, %v3376
        %v3431 = vpack.c.b16 %v3383, %v3380
        %v3432 = vpack.c.b16 %v3384, %v3381
        %v3433 = vpack.c.b16 %v3385, %v3382
        %v3434 = vpack.c.b16 %v3389, %v3386
        %v3435 = vpack.c.b16 %v3390, %v3387
        %v3436 = vpack.c.b16 %v3391, %v3388
        %v3437 = vpack.c.b16 %v3395, %v3392
        %v3438 = vpack.c.b16 %v3396, %v3393
        %v3439 = vpack.c.b16 %v3397, %v3394
        %v3440 = vpack.c.b16 %v3401, %v3398
        %v3441 = vpack.c.b16 %v3402, %v3399
        %v3442 = vpack.c.b16 %v3403, %v3400
        %v3443 = vpack.c.b16 %v3407, %v3404
        %v3444 = vpack.c.b16 %v3408, %v3405
        %v3445 = vpack.c.b16 %v3409, %v3406
        %v3446 = vpack.c.b16 %v3413, %v3410
        %v3447 = vpack.c.b16 %v3414, %v3411
        %v3448 = vpack.c.b16 %v3415, %v3412
        %v3449 = vpack.c.b16 %v3419, %v3416
        %v3450 = vpack.c.b16 %v3420, %v3417
        %v3451 = vpack.c.b16 %v3421, %v3418
        %v3452 = vpack.c.b16 %v3425, %v3422
        %v3453 = vpack.c.b16 %v3426, %v3423
        %v3454 = vpack.c.b16 %v3427, %v3424
        %v3530 = vunpack.c.l.b16 %v3290
        %v3531 = vunpack.c.l.b16 %v3291
        %v3532 = vunpack.c.l.b16 %v3292
        %v3533 = vunpack.c.l.b16 %v3293
        %v3534 = vunpack.c.l.b16 %v3294
        %v3535 = vunpack.c.l.b16 %v3295
        %v3536 = vunpack.c.l.b16 %v3296
        %v3537 = vunpack.c.l.b16 %v3297
        %v3538 = vunpack.c.l.b16 %v3298
        %v3539 = vunpack.c.l.b16 %v3299
        %v3540 = vunpack.c.l.b16 %v3300
        %v3541 = vunpack.c.l.b16 %v3301
        %v3542 = vunpack.c.l.b16 %v3302
        %v3543 = vunpack.c.l.b16 %v3303
        %v3544 = vunpack.c.l.b16 %v3304
        %v3545 = vunpack.c.l.b16 %v3305
        %v3546 = vunpack.c.l.b16 %v3306
        %v3547 = vunpack.c.l.b16 %v3307
        %v3548 = vunpack.c.l.b16 %v3308
        %v3549 = vunpack.c.l.b16 %v3309
        %v3550 = vunpack.c.l.b16 %v3310
        %v3551 = vunpack.c.l.b16 %v3311
        %v3552 = vunpack.c.l.b16 %v3312
        %v3553 = vunpack.c.l.b16 %v3313
        %v3554 = vunpack.c.l.b16 %v3314
        %v3555 = vunpack.c.l.b16 %v3315
        %v3556 = vunpack.c.l.b16 %v3316
        %v3557 = vunpack.c.l.b16 %v3317
        %v3558 = vunpack.c.l.b16 %v3318
        %v3559 = vunpack.c.l.b16 %v3319
        %v3560 = vunpack.c.l.b16 %v3320
        %v3561 = vunpack.c.l.b16 %v3321
        %v3562 = vunpack.c.l.b16 %v3322
        %v3563 = vunpack.c.l.b16 %v3323
        %v3564 = vunpack.c.l.b16 %v3324
        %v3565 = vunpack.c.l.b16 %v3325
        %v3566 = vunpack.c.l.b16 %v3326
        %v3567 = vunpack.c.l.b16 %v3327
        %v3568 = vunpack.c.l.b16 %v3328
        %v3569 = vunpack.c.l.b16 %v3329
        %v3570 = vunpack.c.l.b16 %v3330
        %v3571 = vunpack.c.l.b16 %v3331
        %v3572 = vunpack.c.l.b16 %v3332
        %v3573 = vunpack.c.l.b16 %v3333
        %v3574 = vunpack.c.l.b16 %v3334
        %v3575 = vunpack.c.l.b16 %v3335
        %v3576 = vunpack.c.l.b16 %v3336
        %v3577 = vunpack.c.l.b16 %v3337
        %v3578 = vpack.c.b16 %v3531, %v3530
        %v3579 = vpack.c.b16 %v3533, %v3532
        %v3580 = vpack.c.b16 %v3535, %v3534
        %v3581 = vpack.c.b16 %v3537, %v3536
        %v3582 = vpack.c.b16 %v3539, %v3538
        %v3583 = vpack.c.b16 %v3541, %v3540
        %v3584 = vpack.c.b16 %v3543, %v3542
        %v3585 = vpack.c.b16 %v3545, %v3544
        %v3586 = vpack.c.b16 %v3547, %v3546
        %v3587 = vpack.c.b16 %v3549, %v3548
        %v3588 = vpack.c.b16 %v3551, %v3550
        %v3589 = vpack.c.b16 %v3553, %v3552
        %v3590 = vpack.c.b16 %v3555, %v3554
        %v3591 = vpack.c.b16 %v3557, %v3556
        %v3592 = vpack.c.b16 %v3559, %v3558
        %v3593 = vpack.c.b16 %v3561, %v3560
        %v3594 = vpack.c.b16 %v3563, %v3562
        %v3595 = vpack.c.b16 %v3565, %v3564
        %v3596 = vpack.c.b16 %v3567, %v3566
        %v3597 = vpack.c.b16 %v3569, %v3568
        %v3598 = vpack.c.b16 %v3571, %v3570
        %v3599 = vpack.c.b16 %v3573, %v3572
        %v3600 = vpack.c.b16 %v3575, %v3574
        %v3601 = vpack.c.b16 %v3577, %v3576
        %3626 = vmatpush.bf16.msra.mxu0 %v3585
        %3627 = vmatpush.bf16.msra.mxu0 %v3584
        %3628 = vmatpush.bf16.msra.mxu0 %v3583
        %3629 = vmatpush.bf16.msra.mxu0 %v3582
        %3630 = vmatpush.bf16.msra.mxu0 %v3581
        %3631 = vmatpush.bf16.msra.mxu0 %v3580
        %3632 = vmatpush.bf16.msra.mxu0 %v3579
        %3633 = vmatpush.bf16.msra.mxu0 %v3578
        %3634 = vmatmul.bf16.gmra.mxu0 %v3428
        %v3635 = vpop.f32.mrf.mxu0
        %v3636 = vpop.f32.mrf.mxu0
        %3637 = vmatmul.bf16.gmra.mxu0 %v3431
        %v3638 = vpop.f32.mrf.mxu0
        %v3639 = vadd.f32 0.0, %v3638
        %v3640 = vpop.f32.mrf.mxu0
        %v3641 = vadd.f32 0.0, %v3640
        %3642 = vmatmul.bf16.gmra.mxu0 %v3434
        %v3643 = vpop.f32.mrf.mxu0
        %v3644 = vadd.f32 0.0, %v3643
        %v3645 = vpop.f32.mrf.mxu0
        %v3646 = vadd.f32 0.0, %v3645
        %3647 = vmatmul.bf16.gmra.mxu0 %v3437
        %v3648 = vpop.f32.mrf.mxu0
        %v3649 = vadd.f32 0.0, %v3648
        %v3650 = vpop.f32.mrf.mxu0
        %v3651 = vadd.f32 0.0, %v3650
        %3652 = vmatmul.bf16.gmra.mxu0 %v3440
        %v3653 = vpop.f32.mrf.mxu0
        %v3654 = vadd.f32 0.0, %v3653
        %v3655 = vpop.f32.mrf.mxu0
        %v3656 = vadd.f32 0.0, %v3655
        %3657 = vmatmul.bf16.gmra.mxu0 %v3443
        %v3658 = vpop.f32.mrf.mxu0
        %v3659 = vadd.f32 0.0, %v3658
        %v3660 = vpop.f32.mrf.mxu0
        %v3661 = vadd.f32 0.0, %v3660
        %3662 = vmatmul.bf16.gmra.mxu0 %v3446
        %v3663 = vpop.f32.mrf.mxu0
        %v3664 = vadd.f32 0.0, %v3663
        %v3665 = vpop.f32.mrf.mxu0
        %v3666 = vadd.f32 0.0, %v3665
        %3667 = vmatmul.bf16.gmra.mxu0 %v3449
        %v3668 = vpop.f32.mrf.mxu0
        %v3669 = vadd.f32 0.0, %v3668
        %v3670 = vpop.f32.mrf.mxu0
        %v3671 = vadd.f32 0.0, %v3670
        %3672 = vmatmul.bf16.gmra.mxu0 %v3452
        %v3673 = vpop.f32.mrf.mxu0
        %v3674 = vadd.f32 0.0, %v3673
        %v3675 = vpop.f32.mrf.mxu0
        %v3676 = vadd.f32 0.0, %v3675
        %3677 = vdwg.mxu0
        %3678 = vmatpush.bf16.msra.mxu0 %v3593
        %3679 = vmatpush.bf16.msra.mxu0 %v3592
        %3680 = vmatpush.bf16.msra.mxu0 %v3591
        %3681 = vmatpush.bf16.msra.mxu0 %v3590
        %3682 = vmatpush.bf16.msra.mxu0 %v3589
        %3683 = vmatpush.bf16.msra.mxu0 %v3588
        %3684 = vmatpush.bf16.msra.mxu0 %v3587
        %3685 = vmatpush.bf16.msra.mxu0 %v3586
        %3686 = vmatmul.bf16.gmra.mxu0 %v3429
        %v3687 = vpop.f32.mrf.mxu0
        %v3688 = vpop.f32.mrf.mxu0
        %3689 = vmatmul.bf16.gmra.mxu0 %v3432
        %v3690 = vpop.f32.mrf.mxu0
        %v3691 = vadd.f32 %v3639, %v3690
        %v3692 = vpop.f32.mrf.mxu0
        %v3693 = vadd.f32 %v3641, %v3692
        %3694 = vmatmul.bf16.gmra.mxu0 %v3435
        %v3695 = vpop.f32.mrf.mxu0
        %v3696 = vadd.f32 %v3644, %v3695
        %v3697 = vpop.f32.mrf.mxu0
        %v3698 = vadd.f32 %v3646, %v3697
        %3699 = vmatmul.bf16.gmra.mxu0 %v3438
        %v3700 = vpop.f32.mrf.mxu0
        %v3701 = vadd.f32 %v3649, %v3700
        %v3702 = vpop.f32.mrf.mxu0
        %v3703 = vadd.f32 %v3651, %v3702
        %3704 = vmatmul.bf16.gmra.mxu0 %v3441
        %v3705 = vpop.f32.mrf.mxu0
        %v3706 = vadd.f32 %v3654, %v3705
        %v3707 = vpop.f32.mrf.mxu0
        %v3708 = vadd.f32 %v3656, %v3707
        %3709 = vmatmul.bf16.gmra.mxu0 %v3444
        %v3710 = vpop.f32.mrf.mxu0
        %v3711 = vadd.f32 %v3659, %v3710
        %v3712 = vpop.f32.mrf.mxu0
        %v3713 = vadd.f32 %v3661, %v3712
        %3714 = vmatmul.bf16.gmra.mxu0 %v3447
        %v3715 = vpop.f32.mrf.mxu0
        %v3716 = vadd.f32 %v3664, %v3715
        %v3717 = vpop.f32.mrf.mxu0
        %v3718 = vadd.f32 %v3666, %v3717
        %3719 = vmatmul.bf16.gmra.mxu0 %v3450
        %v3720 = vpop.f32.mrf.mxu0
        %v3721 = vadd.f32 %v3669, %v3720
        %v3722 = vpop.f32.mrf.mxu0
        %v3723 = vadd.f32 %v3671, %v3722
        %3724 = vmatmul.bf16.gmra.mxu0 %v3453
        %v3725 = vpop.f32.mrf.mxu0
        %v3726 = vadd.f32 %v3674, %v3725
        %v3727 = vpop.f32.mrf.mxu0
        %v3728 = vadd.f32 %v3676, %v3727
        %3729 = vdwg.mxu0
        %3730 = vmatpush.bf16.msra.mxu0 %v3601
        %3731 = vmatpush.bf16.msra.mxu0 %v3600
        %3732 = vmatpush.bf16.msra.mxu0 %v3599
        %3733 = vmatpush.bf16.msra.mxu0 %v3598
        %3734 = vmatpush.bf16.msra.mxu0 %v3597
        %3735 = vmatpush.bf16.msra.mxu0 %v3596
        %3736 = vmatpush.bf16.msra.mxu0 %v3595
        %3737 = vmatpush.bf16.msra.mxu0 %v3594
        %3738 = vmatmul.bf16.gmra.mxu0 %v3430
        %v3739 = vpop.f32.mrf.mxu0
        %v3740 = vpop.f32.mrf.mxu0
        %3741 = vmatmul.bf16.gmra.mxu0 %v3433
        %v3742 = vpop.f32.mrf.mxu0
        %v3743 = vadd.f32 %v3691, %v3742
        %v3744 = vpop.f32.mrf.mxu0
        %v3745 = vadd.f32 %v3693, %v3744
        %3746 = vmatmul.bf16.gmra.mxu0 %v3436
        %v3747 = vpop.f32.mrf.mxu0
        %v3748 = vadd.f32 %v3696, %v3747
        %v3749 = vpop.f32.mrf.mxu0
        %v3750 = vadd.f32 %v3698, %v3749
        %3751 = vmatmul.bf16.gmra.mxu0 %v3439
        %v3752 = vpop.f32.mrf.mxu0
        %v3753 = vadd.f32 %v3701, %v3752
        %v3754 = vpop.f32.mrf.mxu0
        %v3755 = vadd.f32 %v3703, %v3754
        %3756 = vmatmul.bf16.gmra.mxu0 %v3442
        %v3757 = vpop.f32.mrf.mxu0
        %v3758 = vadd.f32 %v3706, %v3757
        %v3759 = vpop.f32.mrf.mxu0
        %v3760 = vadd.f32 %v3708, %v3759
        %3761 = vmatmul.bf16.gmra.mxu0 %v3445
        %v3762 = vpop.f32.mrf.mxu0
        %v3763 = vadd.f32 %v3711, %v3762
        %v3764 = vpop.f32.mrf.mxu0
        %v3765 = vadd.f32 %v3713, %v3764
        %3766 = vmatmul.bf16.gmra.mxu0 %v3448
        %v3767 = vpop.f32.mrf.mxu0
        %v3768 = vadd.f32 %v3716, %v3767
        %v3769 = vpop.f32.mrf.mxu0
        %v3770 = vadd.f32 %v3718, %v3769
        %3771 = vmatmul.bf16.gmra.mxu0 %v3451
        %v3772 = vpop.f32.mrf.mxu0
        %v3773 = vadd.f32 %v3721, %v3772
        %v3774 = vpop.f32.mrf.mxu0
        %v3775 = vadd.f32 %v3723, %v3774
        %3776 = vmatmul.bf16.gmra.mxu0 %v3454
        %v3777 = vpop.f32.mrf.mxu0
        %v3778 = vadd.f32 %v3726, %v3777
        %v3779 = vpop.f32.mrf.mxu0
        %v3780 = vadd.f32 %v3728, %v3779
        %3781 = vdwg.mxu0
        %v3786 = vunpack.c.l.b16 %v3197
        %v3787 = vunpack.c.h.b16 %v3197
        %v3788 = vunpack.c.l.b16 %v3198
        %v3789 = vunpack.c.l.b16 %v3199
        %v3790 = vunpack.c.h.b16 %v3199
        %v3791 = vunpack.c.l.b16 %v3200
        %v3792 = vpack.c.b16 %v3789, %v3786
        %v3793 = vpack.c.b16 %v3790, %v3787
        %v3794 = vpack.c.b16 %v3791, %v3788
        %v3846 = vunpack.c.l.b16 %v3241
        %v3847 = vunpack.c.l.b16 %v3242
        %v3848 = vunpack.c.l.b16 %v3243
        %v3849 = vunpack.c.l.b16 %v3244
        %v3850 = vunpack.c.l.b16 %v3245
        %v3851 = vunpack.c.l.b16 %v3246
        %v3852 = vunpack.c.l.b16 %v3247
        %v3853 = vunpack.c.l.b16 %v3248
        %v3854 = vunpack.c.l.b16 %v3249
        %v3855 = vunpack.c.l.b16 %v3250
        %v3856 = vunpack.c.l.b16 %v3251
        %v3857 = vunpack.c.l.b16 %v3252
        %v3858 = vunpack.c.l.b16 %v3253
        %v3859 = vunpack.c.l.b16 %v3254
        %v3860 = vunpack.c.l.b16 %v3255
        %v3861 = vunpack.c.l.b16 %v3256
        %v3862 = vunpack.c.l.b16 %v3257
        %v3863 = vunpack.c.l.b16 %v3258
        %v3864 = vunpack.c.l.b16 %v3259
        %v3865 = vunpack.c.l.b16 %v3260
        %v3866 = vunpack.c.l.b16 %v3261
        %v3867 = vunpack.c.l.b16 %v3262
        %v3868 = vunpack.c.l.b16 %v3263
        %v3869 = vunpack.c.l.b16 %v3264
        %v3870 = vunpack.c.l.b16 %v3265
        %v3871 = vunpack.c.l.b16 %v3266
        %v3872 = vunpack.c.l.b16 %v3267
        %v3873 = vunpack.c.l.b16 %v3268
        %v3874 = vunpack.c.l.b16 %v3269
        %v3875 = vunpack.c.l.b16 %v3270
        %v3876 = vunpack.c.l.b16 %v3271
        %v3877 = vunpack.c.l.b16 %v3272
        %v3878 = vunpack.c.l.b16 %v3273
        %v3879 = vunpack.c.l.b16 %v3274
        %v3880 = vunpack.c.l.b16 %v3275
        %v3881 = vunpack.c.l.b16 %v3276
        %v3882 = vunpack.c.l.b16 %v3277
        %v3883 = vunpack.c.l.b16 %v3278
        %v3884 = vunpack.c.l.b16 %v3279
        %v3885 = vunpack.c.l.b16 %v3280
        %v3886 = vunpack.c.l.b16 %v3281
        %v3887 = vunpack.c.l.b16 %v3282
        %v3888 = vunpack.c.l.b16 %v3283
        %v3889 = vunpack.c.l.b16 %v3284
        %v3890 = vunpack.c.l.b16 %v3285
        %v3891 = vunpack.c.l.b16 %v3286
        %v3892 = vunpack.c.l.b16 %v3287
        %v3893 = vunpack.c.l.b16 %v3288
        %v3894 = vpack.c.b16 %v3847, %v3846
        %v3895 = vpack.c.b16 %v3849, %v3848
        %v3896 = vpack.c.b16 %v3851, %v3850
        %v3897 = vpack.c.b16 %v3853, %v3852
        %v3898 = vpack.c.b16 %v3855, %v3854
        %v3899 = vpack.c.b16 %v3857, %v3856
        %v3900 = vpack.c.b16 %v3859, %v3858
        %v3901 = vpack.c.b16 %v3861, %v3860
        %v3902 = vpack.c.b16 %v3863, %v3862
        %v3903 = vpack.c.b16 %v3865, %v3864
        %v3904 = vpack.c.b16 %v3867, %v3866
        %v3905 = vpack.c.b16 %v3869, %v3868
        %v3906 = vpack.c.b16 %v3871, %v3870
        %v3907 = vpack.c.b16 %v3873, %v3872
        %v3908 = vpack.c.b16 %v3875, %v3874
        %v3909 = vpack.c.b16 %v3877, %v3876
        %v3910 = vpack.c.b16 %v3879, %v3878
        %v3911 = vpack.c.b16 %v3881, %v3880
        %v3912 = vpack.c.b16 %v3883, %v3882
        %v3913 = vpack.c.b16 %v3885, %v3884
        %v3914 = vpack.c.b16 %v3887, %v3886
        %v3915 = vpack.c.b16 %v3889, %v3888
        %v3916 = vpack.c.b16 %v3891, %v3890
        %v3917 = vpack.c.b16 %v3893, %v3892
        %3942 = vmatpush.bf16.msra.mxu0 %v3901
        %3943 = vmatpush.bf16.msra.mxu0 %v3900
        %3944 = vmatpush.bf16.msra.mxu0 %v3899
        %3945 = vmatpush.bf16.msra.mxu0 %v3898
        %3946 = vmatpush.bf16.msra.mxu0 %v3897
        %3947 = vmatpush.bf16.msra.mxu0 %v3896
        %3948 = vmatpush.bf16.msra.mxu0 %v3895
        %3949 = vmatpush.bf16.msra.mxu0 %v3894
        %3950 = vmatmul.bf16.gmra.mxu0 %v3792
        %v3951 = vpop.f32.mrf.mxu0
        %v3952 = vpop.f32.mrf.mxu0
        %3953 = vmatmul.bf16.gmra.mxu0 %v3428
        %v3954 = vpop.f32.mrf.mxu0
        %v3955 = vadd.f32 %v3743, %v3954
        %v3956 = vpop.f32.mrf.mxu0
        %v3957 = vadd.f32 %v3745, %v3956
        %3958 = vmatmul.bf16.gmra.mxu0 %v3431
        %v3959 = vpop.f32.mrf.mxu0
        %v3960 = vadd.f32 %v3748, %v3959
        %v3961 = vpop.f32.mrf.mxu0
        %v3962 = vadd.f32 %v3750, %v3961
        %3963 = vmatmul.bf16.gmra.mxu0 %v3434
        %v3964 = vpop.f32.mrf.mxu0
        %v3965 = vadd.f32 %v3753, %v3964
        %v3966 = vpop.f32.mrf.mxu0
        %v3967 = vadd.f32 %v3755, %v3966
        %3968 = vmatmul.bf16.gmra.mxu0 %v3437
        %v3969 = vpop.f32.mrf.mxu0
        %v3970 = vadd.f32 %v3758, %v3969
        %v3971 = vpop.f32.mrf.mxu0
        %v3972 = vadd.f32 %v3760, %v3971
        %3973 = vmatmul.bf16.gmra.mxu0 %v3440
        %v3974 = vpop.f32.mrf.mxu0
        %v3975 = vadd.f32 %v3763, %v3974
        %v3976 = vpop.f32.mrf.mxu0
        %v3977 = vadd.f32 %v3765, %v3976
        %3978 = vmatmul.bf16.gmra.mxu0 %v3443
        %v3979 = vpop.f32.mrf.mxu0
        %v3980 = vadd.f32 %v3768, %v3979
        %v3981 = vpop.f32.mrf.mxu0
        %v3982 = vadd.f32 %v3770, %v3981
        %3983 = vmatmul.bf16.gmra.mxu0 %v3446
        %v3984 = vpop.f32.mrf.mxu0
        %v3985 = vadd.f32 %v3773, %v3984
        %v3986 = vpop.f32.mrf.mxu0
        %v3987 = vadd.f32 %v3775, %v3986
        %3988 = vmatmul.bf16.gmra.mxu0 %v3449
        %v3989 = vpop.f32.mrf.mxu0
        %v3990 = vadd.f32 %v3778, %v3989
        %v3991 = vpop.f32.mrf.mxu0
        %v3992 = vadd.f32 %v3780, %v3991
        %3993 = vdwg.mxu0
        %3994 = vmatpush.bf16.msra.mxu0 %v3909
        %3995 = vmatpush.bf16.msra.mxu0 %v3908
        %3996 = vmatpush.bf16.msra.mxu0 %v3907
        %3997 = vmatpush.bf16.msra.mxu0 %v3906
        %3998 = vmatpush.bf16.msra.mxu0 %v3905
        %3999 = vmatpush.bf16.msra.mxu0 %v3904
        %4000 = vmatpush.bf16.msra.mxu0 %v3903
        %4001 = vmatpush.bf16.msra.mxu0 %v3902
        %4002 = vmatmul.bf16.gmra.mxu0 %v3793
        %v4003 = vpop.f32.mrf.mxu0
        %v4004 = vpop.f32.mrf.mxu0
        %4005 = vmatmul.bf16.gmra.mxu0 %v3429
        %v4006 = vpop.f32.mrf.mxu0
        %v4007 = vadd.f32 %v3955, %v4006
        %v4008 = vpop.f32.mrf.mxu0
        %v4009 = vadd.f32 %v3957, %v4008
        %4010 = vmatmul.bf16.gmra.mxu0 %v3432
        %v4011 = vpop.f32.mrf.mxu0
        %v4012 = vadd.f32 %v3960, %v4011
        %v4013 = vpop.f32.mrf.mxu0
        %v4014 = vadd.f32 %v3962, %v4013
        %4015 = vmatmul.bf16.gmra.mxu0 %v3435
        %v4016 = vpop.f32.mrf.mxu0
        %v4017 = vadd.f32 %v3965, %v4016
        %v4018 = vpop.f32.mrf.mxu0
        %v4019 = vadd.f32 %v3967, %v4018
        %4020 = vmatmul.bf16.gmra.mxu0 %v3438
        %v4021 = vpop.f32.mrf.mxu0
        %v4022 = vadd.f32 %v3970, %v4021
        %v4023 = vpop.f32.mrf.mxu0
        %v4024 = vadd.f32 %v3972, %v4023
        %4025 = vmatmul.bf16.gmra.mxu0 %v3441
        %v4026 = vpop.f32.mrf.mxu0
        %v4027 = vadd.f32 %v3975, %v4026
        %v4028 = vpop.f32.mrf.mxu0
        %v4029 = vadd.f32 %v3977, %v4028
        %4030 = vmatmul.bf16.gmra.mxu0 %v3444
        %v4031 = vpop.f32.mrf.mxu0
        %v4032 = vadd.f32 %v3980, %v4031
        %v4033 = vpop.f32.mrf.mxu0
        %v4034 = vadd.f32 %v3982, %v4033
        %4035 = vmatmul.bf16.gmra.mxu0 %v3447
        %v4036 = vpop.f32.mrf.mxu0
        %v4037 = vadd.f32 %v3985, %v4036
        %v4038 = vpop.f32.mrf.mxu0
        %v4039 = vadd.f32 %v3987, %v4038
        %4040 = vmatmul.bf16.gmra.mxu0 %v3450
        %v4041 = vpop.f32.mrf.mxu0
        %v4042 = vadd.f32 %v3990, %v4041
        %v4043 = vpop.f32.mrf.mxu0
        %v4044 = vadd.f32 %v3992, %v4043
        %4045 = vdwg.mxu0
        %4046 = vmatpush.bf16.msra.mxu0 %v3917
        %4047 = vmatpush.bf16.msra.mxu0 %v3916
        %4048 = vmatpush.bf16.msra.mxu0 %v3915
        %4049 = vmatpush.bf16.msra.mxu0 %v3914
        %4050 = vmatpush.bf16.msra.mxu0 %v3913
        %4051 = vmatpush.bf16.msra.mxu0 %v3912
        %4052 = vmatpush.bf16.msra.mxu0 %v3911
        %4053 = vmatpush.bf16.msra.mxu0 %v3910
        %4054 = vmatmul.bf16.gmra.mxu0 %v3794
        %v4055 = vpop.f32.mrf.mxu0
        %v4056 = vpop.f32.mrf.mxu0
        %4057 = vmatmul.bf16.gmra.mxu0 %v3430
        %v4058 = vpop.f32.mrf.mxu0
        %v4059 = vadd.f32 %v4007, %v4058
        %v4060 = vpop.f32.mrf.mxu0
        %v4061 = vadd.f32 %v4009, %v4060
        %4062 = vmatmul.bf16.gmra.mxu0 %v3433
        %v4063 = vpop.f32.mrf.mxu0
        %v4064 = vadd.f32 %v4012, %v4063
        %v4065 = vpop.f32.mrf.mxu0
        %v4066 = vadd.f32 %v4014, %v4065
        %4067 = vmatmul.bf16.gmra.mxu0 %v3436
        %v4068 = vpop.f32.mrf.mxu0
        %v4069 = vadd.f32 %v4017, %v4068
        %v4070 = vpop.f32.mrf.mxu0
        %v4071 = vadd.f32 %v4019, %v4070
        %4072 = vmatmul.bf16.gmra.mxu0 %v3439
        %v4073 = vpop.f32.mrf.mxu0
        %v4074 = vadd.f32 %v4022, %v4073
        %v4075 = vpop.f32.mrf.mxu0
        %v4076 = vadd.f32 %v4024, %v4075
        %4077 = vmatmul.bf16.gmra.mxu0 %v3442
        %v4078 = vpop.f32.mrf.mxu0
        %v4079 = vadd.f32 %v4027, %v4078
        %v4080 = vpop.f32.mrf.mxu0
        %v4081 = vadd.f32 %v4029, %v4080
        %4082 = vmatmul.bf16.gmra.mxu0 %v3445
        %v4083 = vpop.f32.mrf.mxu0
        %v4084 = vadd.f32 %v4032, %v4083
        %v4085 = vpop.f32.mrf.mxu0
        %v4086 = vadd.f32 %v4034, %v4085
        %4087 = vmatmul.bf16.gmra.mxu0 %v3448
        %v4088 = vpop.f32.mrf.mxu0
        %v4089 = vadd.f32 %v4037, %v4088
        %v4090 = vpop.f32.mrf.mxu0
        %v4091 = vadd.f32 %v4039, %v4090
        %4092 = vmatmul.bf16.gmra.mxu0 %v3451
        %v4093 = vpop.f32.mrf.mxu0
        %v4094 = vadd.f32 %v4042, %v4093
        %v4095 = vpop.f32.mrf.mxu0
        %v4096 = vadd.f32 %v4044, %v4095
        %4097 = vdwg.mxu0
        %s4098 = scalar_lea.vmem %s7, 384
        %v4099 = vld [vmem:[%s4098] sm:$0xf]
        %v4100 = vld [vmem:[%s4098 + $0x4] sm:$0xf]
        %v4101 = vld [vmem:[%s4098 + $0x8] sm:$0xf]
        %v4102 = vld [vmem:[%s4098 + $0xc] sm:$0xf]
        %v4103 = vld [vmem:[%s4098 + $0x10] sm:$0xf]
        %v4104 = vld [vmem:[%s4098 + $0x14] sm:$0xf]
        %v4105 = vld [vmem:[%s4098 + $0x18] sm:$0xf]
        %v4106 = vld [vmem:[%s4098 + $0x1c] sm:$0xf]
        %v4107 = vld [vmem:[%s4098 + $0x20] sm:$0xf]
        %v4108 = vld [vmem:[%s4098 + $0x24] sm:$0xf]
        %v4109 = vld [vmem:[%s4098 + $0x28] sm:$0xf]
        %v4110 = vld [vmem:[%s4098 + $0x2c] sm:$0xf]
        %v4111 = vld [vmem:[%s4098 + $0x30] sm:$0xf]
        %v4112 = vld [vmem:[%s4098 + $0x34] sm:$0xf]
        %v4113 = vld [vmem:[%s4098 + $0x38] sm:$0xf]
        %v4114 = vld [vmem:[%s4098 + $0x3c] sm:$0xf]
        %v4115 = vld [vmem:[%s4098 + $0x40] sm:$0xf]
        %v4116 = vld [vmem:[%s4098 + $0x44] sm:$0xf]
        %v4117 = vld [vmem:[%s4098 + $0x48] sm:$0xf]
        %v4118 = vld [vmem:[%s4098 + $0x4c] sm:$0xf]
        %v4119 = vld [vmem:[%s4098 + $0x50] sm:$0xf]
        %v4120 = vld [vmem:[%s4098 + $0x54] sm:$0xf]
        %v4121 = vld [vmem:[%s4098 + $0x58] sm:$0xf]
        %v4122 = vld [vmem:[%s4098 + $0x5c] sm:$0xf]
        %v4123 = vld [vmem:[%s4098 + $0x60] sm:$0xf]
        %v4124 = vld [vmem:[%s4098 + $0x64] sm:$0xf]
        %v4125 = vld [vmem:[%s4098 + $0x68] sm:$0xf]
        %v4126 = vld [vmem:[%s4098 + $0x6c] sm:$0xf]
        %v4127 = vld [vmem:[%s4098 + $0x70] sm:$0xf]
        %v4128 = vld [vmem:[%s4098 + $0x74] sm:$0xf]
        %v4129 = vld [vmem:[%s4098 + $0x78] sm:$0xf]
        %v4130 = vld [vmem:[%s4098 + $0x7c] sm:$0xf]
        %v4131 = vld [vmem:[%s4098 + $0x80] sm:$0xf]
        %v4132 = vld [vmem:[%s4098 + $0x84] sm:$0xf]
        %v4133 = vld [vmem:[%s4098 + $0x88] sm:$0xf]
        %v4134 = vld [vmem:[%s4098 + $0x8c] sm:$0xf]
        %v4135 = vld [vmem:[%s4098 + $0x90] sm:$0xf]
        %v4136 = vld [vmem:[%s4098 + $0x94] sm:$0xf]
        %v4137 = vld [vmem:[%s4098 + $0x98] sm:$0xf]
        %v4138 = vld [vmem:[%s4098 + $0x9c] sm:$0xf]
        %v4139 = vld [vmem:[%s4098 + $0xa0] sm:$0xf]
        %v4140 = vld [vmem:[%s4098 + $0xa4] sm:$0xf]
        %v4141 = vld [vmem:[%s4098 + $0xa8] sm:$0xf]
        %v4142 = vld [vmem:[%s4098 + $0xac] sm:$0xf]
        %v4143 = vld [vmem:[%s4098 + $0xb0] sm:$0xf]
        %v4144 = vld [vmem:[%s4098 + $0xb4] sm:$0xf]
        %v4145 = vld [vmem:[%s4098 + $0xb8] sm:$0xf]
        %v4146 = vld [vmem:[%s4098 + $0xbc] sm:$0xf]
        %v4151 = vunpack.c.l.b16 %v3237
        %v4152 = vunpack.c.h.b16 %v3237
        %v4153 = vunpack.c.l.b16 %v3238
        %v4154 = vunpack.c.l.b16 %v3239
        %v4155 = vunpack.c.h.b16 %v3239
        %v4156 = vunpack.c.l.b16 %v3240
        %v4157 = vpack.c.b16 %v4154, %v4151
        %v4158 = vpack.c.b16 %v4155, %v4152
        %v4159 = vpack.c.b16 %v4156, %v4153
        %v4211 = vunpack.c.l.b16 %v4099
        %v4212 = vunpack.c.l.b16 %v4100
        %v4213 = vunpack.c.l.b16 %v4101
        %v4214 = vunpack.c.l.b16 %v4102
        %v4215 = vunpack.c.l.b16 %v4103
        %v4216 = vunpack.c.l.b16 %v4104
        %v4217 = vunpack.c.l.b16 %v4105
        %v4218 = vunpack.c.l.b16 %v4106
        %v4219 = vunpack.c.l.b16 %v4107
        %v4220 = vunpack.c.l.b16 %v4108
        %v4221 = vunpack.c.l.b16 %v4109
        %v4222 = vunpack.c.l.b16 %v4110
        %v4223 = vunpack.c.l.b16 %v4111
        %v4224 = vunpack.c.l.b16 %v4112
        %v4225 = vunpack.c.l.b16 %v4113
        %v4226 = vunpack.c.l.b16 %v4114
        %v4227 = vunpack.c.l.b16 %v4115
        %v4228 = vunpack.c.l.b16 %v4116
        %v4229 = vunpack.c.l.b16 %v4117
        %v4230 = vunpack.c.l.b16 %v4118
        %v4231 = vunpack.c.l.b16 %v4119
        %v4232 = vunpack.c.l.b16 %v4120
        %v4233 = vunpack.c.l.b16 %v4121
        %v4234 = vunpack.c.l.b16 %v4122
        %v4235 = vunpack.c.l.b16 %v4123
        %v4236 = vunpack.c.l.b16 %v4124
        %v4237 = vunpack.c.l.b16 %v4125
        %v4238 = vunpack.c.l.b16 %v4126
        %v4239 = vunpack.c.l.b16 %v4127
        %v4240 = vunpack.c.l.b16 %v4128
        %v4241 = vunpack.c.l.b16 %v4129
        %v4242 = vunpack.c.l.b16 %v4130
        %v4243 = vunpack.c.l.b16 %v4131
        %v4244 = vunpack.c.l.b16 %v4132
        %v4245 = vunpack.c.l.b16 %v4133
        %v4246 = vunpack.c.l.b16 %v4134
        %v4247 = vunpack.c.l.b16 %v4135
        %v4248 = vunpack.c.l.b16 %v4136
        %v4249 = vunpack.c.l.b16 %v4137
        %v4250 = vunpack.c.l.b16 %v4138
        %v4251 = vunpack.c.l.b16 %v4139
        %v4252 = vunpack.c.l.b16 %v4140
        %v4253 = vunpack.c.l.b16 %v4141
        %v4254 = vunpack.c.l.b16 %v4142
        %v4255 = vunpack.c.l.b16 %v4143
        %v4256 = vunpack.c.l.b16 %v4144
        %v4257 = vunpack.c.l.b16 %v4145
        %v4258 = vunpack.c.l.b16 %v4146
        %v4259 = vpack.c.b16 %v4212, %v4211
        %v4260 = vpack.c.b16 %v4214, %v4213
        %v4261 = vpack.c.b16 %v4216, %v4215
        %v4262 = vpack.c.b16 %v4218, %v4217
        %v4263 = vpack.c.b16 %v4220, %v4219
        %v4264 = vpack.c.b16 %v4222, %v4221
        %v4265 = vpack.c.b16 %v4224, %v4223
        %v4266 = vpack.c.b16 %v4226, %v4225
        %v4267 = vpack.c.b16 %v4228, %v4227
        %v4268 = vpack.c.b16 %v4230, %v4229
        %v4269 = vpack.c.b16 %v4232, %v4231
        %v4270 = vpack.c.b16 %v4234, %v4233
        %v4271 = vpack.c.b16 %v4236, %v4235
        %v4272 = vpack.c.b16 %v4238, %v4237
        %v4273 = vpack.c.b16 %v4240, %v4239
        %v4274 = vpack.c.b16 %v4242, %v4241
        %v4275 = vpack.c.b16 %v4244, %v4243
        %v4276 = vpack.c.b16 %v4246, %v4245
        %v4277 = vpack.c.b16 %v4248, %v4247
        %v4278 = vpack.c.b16 %v4250, %v4249
        %v4279 = vpack.c.b16 %v4252, %v4251
        %v4280 = vpack.c.b16 %v4254, %v4253
        %v4281 = vpack.c.b16 %v4256, %v4255
        %v4282 = vpack.c.b16 %v4258, %v4257
        %4307 = vmatpush.bf16.msra.mxu0 %v4266
        %4308 = vmatpush.bf16.msra.mxu0 %v4265
        %4309 = vmatpush.bf16.msra.mxu0 %v4264
        %4310 = vmatpush.bf16.msra.mxu0 %v4263
        %4311 = vmatpush.bf16.msra.mxu0 %v4262
        %4312 = vmatpush.bf16.msra.mxu0 %v4261
        %4313 = vmatpush.bf16.msra.mxu0 %v4260
        %4314 = vmatpush.bf16.msra.mxu0 %v4259
        %4315 = vmatmul.bf16.gmra.mxu0 %v3431
        %v4316 = vpop.f32.mrf.mxu0
        %v4317 = vpop.f32.mrf.mxu0
        %4318 = vmatmul.bf16.gmra.mxu0 %v3434
        %v4319 = vpop.f32.mrf.mxu0
        %v4320 = vadd.f32 0.0, %v4319
        %v4321 = vpop.f32.mrf.mxu0
        %v4322 = vadd.f32 0.0, %v4321
        %4323 = vmatmul.bf16.gmra.mxu0 %v3437
        %v4324 = vpop.f32.mrf.mxu0
        %v4325 = vadd.f32 0.0, %v4324
        %v4326 = vpop.f32.mrf.mxu0
        %v4327 = vadd.f32 0.0, %v4326
        %4328 = vmatmul.bf16.gmra.mxu0 %v3440
        %v4329 = vpop.f32.mrf.mxu0
        %v4330 = vadd.f32 0.0, %v4329
        %v4331 = vpop.f32.mrf.mxu0
        %v4332 = vadd.f32 0.0, %v4331
        %4333 = vmatmul.bf16.gmra.mxu0 %v3443
        %v4334 = vpop.f32.mrf.mxu0
        %v4335 = vadd.f32 0.0, %v4334
        %v4336 = vpop.f32.mrf.mxu0
        %v4337 = vadd.f32 0.0, %v4336
        %4338 = vmatmul.bf16.gmra.mxu0 %v3446
        %v4339 = vpop.f32.mrf.mxu0
        %v4340 = vadd.f32 0.0, %v4339
        %v4341 = vpop.f32.mrf.mxu0
        %v4342 = vadd.f32 0.0, %v4341
        %4343 = vmatmul.bf16.gmra.mxu0 %v3449
        %v4344 = vpop.f32.mrf.mxu0
        %v4345 = vadd.f32 0.0, %v4344
        %v4346 = vpop.f32.mrf.mxu0
        %v4347 = vadd.f32 0.0, %v4346
        %4348 = vmatmul.bf16.gmra.mxu0 %v3452
        %v4349 = vpop.f32.mrf.mxu0
        %v4350 = vadd.f32 0.0, %v4349
        %v4351 = vpop.f32.mrf.mxu0
        %v4352 = vadd.f32 0.0, %v4351
        %4353 = vmatmul.bf16.gmra.mxu0 %v4157
        %v4354 = vpop.f32.mrf.mxu0
        %v4355 = vadd.f32 0.0, %v4354
        %v4356 = vpop.f32.mrf.mxu0
        %v4357 = vadd.f32 0.0, %v4356
        %4358 = vdwg.mxu0
        %4359 = vmatpush.bf16.msra.mxu0 %v4274
        %4360 = vmatpush.bf16.msra.mxu0 %v4273
        %4361 = vmatpush.bf16.msra.mxu0 %v4272
        %4362 = vmatpush.bf16.msra.mxu0 %v4271
        %4363 = vmatpush.bf16.msra.mxu0 %v4270
        %4364 = vmatpush.bf16.msra.mxu0 %v4269
        %4365 = vmatpush.bf16.msra.mxu0 %v4268
        %4366 = vmatpush.bf16.msra.mxu0 %v4267
        %4367 = vmatmul.bf16.gmra.mxu0 %v3432
        %v4368 = vpop.f32.mrf.mxu0
        %v4369 = vpop.f32.mrf.mxu0
        %4370 = vmatmul.bf16.gmra.mxu0 %v3435
        %v4371 = vpop.f32.mrf.mxu0
        %v4372 = vadd.f32 %v4320, %v4371
        %v4373 = vpop.f32.mrf.mxu0
        %v4374 = vadd.f32 %v4322, %v4373
        %4375 = vmatmul.bf16.gmra.mxu0 %v3438
        %v4376 = vpop.f32.mrf.mxu0
        %v4377 = vadd.f32 %v4325, %v4376
        %v4378 = vpop.f32.mrf.mxu0
        %v4379 = vadd.f32 %v4327, %v4378
        %4380 = vmatmul.bf16.gmra.mxu0 %v3441
        %v4381 = vpop.f32.mrf.mxu0
        %v4382 = vadd.f32 %v4330, %v4381
        %v4383 = vpop.f32.mrf.mxu0
        %v4384 = vadd.f32 %v4332, %v4383
        %4385 = vmatmul.bf16.gmra.mxu0 %v3444
        %v4386 = vpop.f32.mrf.mxu0
        %v4387 = vadd.f32 %v4335, %v4386
        %v4388 = vpop.f32.mrf.mxu0
        %v4389 = vadd.f32 %v4337, %v4388
        %4390 = vmatmul.bf16.gmra.mxu0 %v3447
        %v4391 = vpop.f32.mrf.mxu0
        %v4392 = vadd.f32 %v4340, %v4391
        %v4393 = vpop.f32.mrf.mxu0
        %v4394 = vadd.f32 %v4342, %v4393
        %4395 = vmatmul.bf16.gmra.mxu0 %v3450
        %v4396 = vpop.f32.mrf.mxu0
        %v4397 = vadd.f32 %v4345, %v4396
        %v4398 = vpop.f32.mrf.mxu0
        %v4399 = vadd.f32 %v4347, %v4398
        %4400 = vmatmul.bf16.gmra.mxu0 %v3453
        %v4401 = vpop.f32.mrf.mxu0
        %v4402 = vadd.f32 %v4350, %v4401
        %v4403 = vpop.f32.mrf.mxu0
        %v4404 = vadd.f32 %v4352, %v4403
        %4405 = vmatmul.bf16.gmra.mxu0 %v4158
        %v4406 = vpop.f32.mrf.mxu0
        %v4407 = vadd.f32 %v4355, %v4406
        %v4408 = vpop.f32.mrf.mxu0
        %v4409 = vadd.f32 %v4357, %v4408
        %4410 = vdwg.mxu0
        %4411 = vmatpush.bf16.msra.mxu0 %v4282
        %4412 = vmatpush.bf16.msra.mxu0 %v4281
        %4413 = vmatpush.bf16.msra.mxu0 %v4280
        %4414 = vmatpush.bf16.msra.mxu0 %v4279
        %4415 = vmatpush.bf16.msra.mxu0 %v4278
        %4416 = vmatpush.bf16.msra.mxu0 %v4277
        %4417 = vmatpush.bf16.msra.mxu0 %v4276
        %4418 = vmatpush.bf16.msra.mxu0 %v4275
        %4419 = vmatmul.bf16.gmra.mxu0 %v3433
        %v4420 = vpop.f32.mrf.mxu0
        %v4421 = vpop.f32.mrf.mxu0
        %4422 = vmatmul.bf16.gmra.mxu0 %v3436
        %v4423 = vpop.f32.mrf.mxu0
        %v4424 = vadd.f32 %v4372, %v4423
        %v4425 = vpop.f32.mrf.mxu0
        %v4426 = vadd.f32 %v4374, %v4425
        %4427 = vmatmul.bf16.gmra.mxu0 %v3439
        %v4428 = vpop.f32.mrf.mxu0
        %v4429 = vadd.f32 %v4377, %v4428
        %v4430 = vpop.f32.mrf.mxu0
        %v4431 = vadd.f32 %v4379, %v4430
        %4432 = vmatmul.bf16.gmra.mxu0 %v3442
        %v4433 = vpop.f32.mrf.mxu0
        %v4434 = vadd.f32 %v4382, %v4433
        %v4435 = vpop.f32.mrf.mxu0
        %v4436 = vadd.f32 %v4384, %v4435
        %4437 = vmatmul.bf16.gmra.mxu0 %v3445
        %v4438 = vpop.f32.mrf.mxu0
        %v4439 = vadd.f32 %v4387, %v4438
        %v4440 = vpop.f32.mrf.mxu0
        %v4441 = vadd.f32 %v4389, %v4440
        %4442 = vmatmul.bf16.gmra.mxu0 %v3448
        %v4443 = vpop.f32.mrf.mxu0
        %v4444 = vadd.f32 %v4392, %v4443
        %v4445 = vpop.f32.mrf.mxu0
        %v4446 = vadd.f32 %v4394, %v4445
        %4447 = vmatmul.bf16.gmra.mxu0 %v3451
        %v4448 = vpop.f32.mrf.mxu0
        %v4449 = vadd.f32 %v4397, %v4448
        %v4450 = vpop.f32.mrf.mxu0
        %v4451 = vadd.f32 %v4399, %v4450
        %4452 = vmatmul.bf16.gmra.mxu0 %v3454
        %v4453 = vpop.f32.mrf.mxu0
        %v4454 = vadd.f32 %v4402, %v4453
        %v4455 = vpop.f32.mrf.mxu0
        %v4456 = vadd.f32 %v4404, %v4455
        %4457 = vmatmul.bf16.gmra.mxu0 %v4159
        %v4458 = vpop.f32.mrf.mxu0
        %v4459 = vadd.f32 %v4407, %v4458
        %v4460 = vpop.f32.mrf.mxu0
        %v4461 = vadd.f32 %v4409, %v4460
        %4462 = vdwg.mxu0
        %v4463 = vadd.f32 %v4059, %v4424
        %v4464 = vadd.f32 %v4061, %v4426
        %v4465 = vadd.f32 %v4064, %v4429
        %v4466 = vadd.f32 %v4066, %v4431
        %v4467 = vadd.f32 %v4069, %v4434
        %v4468 = vadd.f32 %v4071, %v4436
        %v4469 = vadd.f32 %v4074, %v4439
        %v4470 = vadd.f32 %v4076, %v4441
        %v4471 = vadd.f32 %v4079, %v4444
        %v4472 = vadd.f32 %v4081, %v4446
        %v4473 = vadd.f32 %v4084, %v4449
        %v4474 = vadd.f32 %v4086, %v4451
        %v4475 = vadd.f32 %v4089, %v4454
        %v4476 = vadd.f32 %v4091, %v4456
        %v4477 = vadd.f32 %v4094, %v4459
        %v4478 = vadd.f32 %v4096, %v4461
        %v4479 = vld [vmem:[%s8] sm:$0x1]
        %v4481 = vperm.slane %v4479, 0
        %v4483 = vadd.f32 %v4463, %v4481
        %v4484 = vadd.f32 %v4464, %v4481
        %v4485 = vadd.f32 %v4465, %v4481
        %v4486 = vadd.f32 %v4466, %v4481
        %v4487 = vadd.f32 %v4467, %v4481
        %v4488 = vadd.f32 %v4468, %v4481
        %v4489 = vadd.f32 %v4469, %v4481
        %v4490 = vadd.f32 %v4470, %v4481
        %v4491 = vadd.f32 %v4471, %v4481
        %v4492 = vadd.f32 %v4472, %v4481
        %v4493 = vadd.f32 %v4473, %v4481
        %v4494 = vadd.f32 %v4474, %v4481
        %v4495 = vadd.f32 %v4475, %v4481
        %v4496 = vadd.f32 %v4476, %v4481
        %v4497 = vadd.f32 %v4477, %v4481
        %v4498 = vadd.f32 %v4478, %v4481
        %v4499 = vmax.f32 %v4483, 0.0
        %v4500 = vmax.f32 %v4484, 0.0
        %v4501 = vmax.f32 %v4485, 0.0
        %v4502 = vmax.f32 %v4486, 0.0
        %v4503 = vmax.f32 %v4487, 0.0
        %v4504 = vmax.f32 %v4488, 0.0
        %v4505 = vmax.f32 %v4489, 0.0
        %v4506 = vmax.f32 %v4490, 0.0
        %v4507 = vmax.f32 %v4491, 0.0
        %v4508 = vmax.f32 %v4492, 0.0
        %v4509 = vmax.f32 %v4493, 0.0
        %v4510 = vmax.f32 %v4494, 0.0
        %v4511 = vmax.f32 %v4495, 0.0
        %v4512 = vmax.f32 %v4496, 0.0
        %v4513 = vmax.f32 %v4497, 0.0
        %v4514 = vmax.f32 %v4498, 0.0
        %v4515 = vpack.c.bf16 %v4499, %v4499
        %v4516 = vpack.c.bf16 %v4500, %v4500
        %v4517 = vpack.c.bf16 %v4501, %v4501
        %v4518 = vpack.c.bf16 %v4502, %v4502
        %v4519 = vpack.c.bf16 %v4503, %v4503
        %v4520 = vpack.c.bf16 %v4504, %v4504
        %v4521 = vpack.c.bf16 %v4505, %v4505
        %v4522 = vpack.c.bf16 %v4506, %v4506
        %v4523 = vpack.c.bf16 %v4507, %v4507
        %v4524 = vpack.c.bf16 %v4508, %v4508
        %v4525 = vpack.c.bf16 %v4509, %v4509
        %v4526 = vpack.c.bf16 %v4510, %v4510
        %v4527 = vpack.c.bf16 %v4511, %v4511
        %v4528 = vpack.c.bf16 %v4512, %v4512
        %v4529 = vpack.c.bf16 %v4513, %v4513
        %v4530 = vpack.c.bf16 %v4514, %v4514
        %4531 = vst [vmem:[%s526] sm:$0xf] %v4515
        %4532 = vst [vmem:[%s526 + $0x4] sm:$0xf] %v4516
        %4533 = vst [vmem:[%s526 + $0x8] sm:$0xf] %v4517
        %4534 = vst [vmem:[%s526 + $0xc] sm:$0xf] %v4518
        %4535 = vst [vmem:[%s526 + $0x10] sm:$0xf] %v4519
        %4536 = vst [vmem:[%s526 + $0x14] sm:$0xf] %v4520
        %4537 = vst [vmem:[%s526 + $0x18] sm:$0xf] %v4521
        %4538 = vst [vmem:[%s526 + $0x1c] sm:$0xf] %v4522
        %4539 = vst [vmem:[%s526 + $0x20] sm:$0xf] %v4523
        %4540 = vst [vmem:[%s526 + $0x24] sm:$0xf] %v4524
        %4541 = vst [vmem:[%s526 + $0x28] sm:$0xf] %v4525
        %4542 = vst [vmem:[%s526 + $0x2c] sm:$0xf] %v4526
        %4543 = vst [vmem:[%s526 + $0x30] sm:$0xf] %v4527
        %4544 = vst [vmem:[%s526 + $0x34] sm:$0xf] %v4528
        %4545 = vst [vmem:[%s526 + $0x38] sm:$0xf] %v4529
        %4546 = vst [vmem:[%s526 + $0x3c] sm:$0xf] %v4530
        %v4547 = vld [vmem:[%s9] sm:$0xf]
        %v4548 = vld [vmem:[%s9 + $0x4] sm:$0xf]
        %v4549 = vld [vmem:[%s9 + $0x8] sm:$0xf]
        %v4550 = vld [vmem:[%s9 + $0xc] sm:$0xf]
        %v4551 = vld [vmem:[%s9 + $0x10] sm:$0xf]
        %v4552 = vld [vmem:[%s9 + $0x14] sm:$0xf]
        %v4553 = vld [vmem:[%s9 + $0x18] sm:$0xf]
        %v4554 = vld [vmem:[%s9 + $0x1c] sm:$0xf]
        %v4555 = vld [vmem:[%s9 + $0x20] sm:$0xf]
        %v4556 = vld [vmem:[%s9 + $0x24] sm:$0xf]
        %v4557 = vld [vmem:[%s9 + $0x28] sm:$0xf]
        %v4558 = vld [vmem:[%s9 + $0x2c] sm:$0xf]
        %v4559 = vld [vmem:[%s9 + $0x30] sm:$0xf]
        %v4560 = vld [vmem:[%s9 + $0x34] sm:$0xf]
        %v4561 = vld [vmem:[%s9 + $0x38] sm:$0xf]
        %v4562 = vld [vmem:[%s9 + $0x3c] sm:$0xf]
        %v4563 = vld [vmem:[%s10] sm:$0x1]
        %v4565 = vperm.slane %v4563, 0
        %v4583 = vunpack.c.l.b16 %v4515
        %v4584 = vunpack.c.l.b16 %v4516
        %v4585 = vunpack.c.l.b16 %v4517
        %v4586 = vunpack.c.l.b16 %v4518
        %v4587 = vunpack.c.l.b16 %v4519
        %v4588 = vunpack.c.l.b16 %v4520
        %v4589 = vunpack.c.l.b16 %v4521
        %v4590 = vunpack.c.l.b16 %v4522
        %v4591 = vunpack.c.l.b16 %v4523
        %v4592 = vunpack.c.l.b16 %v4524
        %v4593 = vunpack.c.l.b16 %v4525
        %v4594 = vunpack.c.l.b16 %v4526
        %v4595 = vunpack.c.l.b16 %v4527
        %v4596 = vunpack.c.l.b16 %v4528
        %v4597 = vunpack.c.l.b16 %v4529
        %v4598 = vunpack.c.l.b16 %v4530
        %v4599 = vpack.c.b16 %v4584, %v4583
        %v4600 = vpack.c.b16 %v4586, %v4585
        %v4601 = vpack.c.b16 %v4588, %v4587
        %v4602 = vpack.c.b16 %v4590, %v4589
        %v4603 = vpack.c.b16 %v4592, %v4591
        %v4604 = vpack.c.b16 %v4594, %v4593
        %v4605 = vpack.c.b16 %v4596, %v4595
        %v4606 = vpack.c.b16 %v4598, %v4597
        %v4631 = vunpack.c.l.b16 %v4547
        %v4632 = vunpack.c.l.b16 %v4548
        %v4633 = vunpack.c.l.b16 %v4549
        %v4634 = vunpack.c.l.b16 %v4550
        %v4635 = vunpack.c.l.b16 %v4551
        %v4636 = vunpack.c.l.b16 %v4552
        %v4637 = vunpack.c.l.b16 %v4553
        %v4638 = vunpack.c.l.b16 %v4554
        %v4639 = vunpack.c.l.b16 %v4555
        %v4640 = vunpack.c.l.b16 %v4556
        %v4641 = vunpack.c.l.b16 %v4557
        %v4642 = vunpack.c.l.b16 %v4558
        %v4643 = vunpack.c.l.b16 %v4559
        %v4644 = vunpack.c.l.b16 %v4560
        %v4645 = vunpack.c.l.b16 %v4561
        %v4646 = vunpack.c.l.b16 %v4562
        %v4647 = vpack.c.b16 %v4632, %v4631
        %v4648 = vpack.c.b16 %v4634, %v4633
        %v4649 = vpack.c.b16 %v4636, %v4635
        %v4650 = vpack.c.b16 %v4638, %v4637
        %v4651 = vpack.c.b16 %v4640, %v4639
        %v4652 = vpack.c.b16 %v4642, %v4641
        %v4653 = vpack.c.b16 %v4644, %v4643
        %v4654 = vpack.c.b16 %v4646, %v4645
        %4663 = vmatpush.bf16.msra.mxu0 %v4654
        %4664 = vmatpush.bf16.msra.mxu0 %v4653
        %4665 = vmatpush.bf16.msra.mxu0 %v4652
        %4666 = vmatpush.bf16.msra.mxu0 %v4651
        %4667 = vmatpush.bf16.msra.mxu0 %v4650
        %4668 = vmatpush.bf16.msra.mxu0 %v4649
        %4669 = vmatpush.bf16.msra.mxu0 %v4648
        %4670 = vmatpush.bf16.msra.mxu0 %v4647
        %4671 = vmatmul.bf16.gmra.mxu0 %v4599
        %v4672 = vpop.f32.mrf.mxu0
        %v4673 = vadd.f32 %v4565, %v4672
        %v4674 = vpop.f32.mrf.mxu0
        %v4675 = vadd.f32 %v4565, %v4674
        %4676 = vmatmul.bf16.gmra.mxu0 %v4600
        %v4677 = vpop.f32.mrf.mxu0
        %v4678 = vadd.f32 %v4565, %v4677
        %v4679 = vpop.f32.mrf.mxu0
        %v4680 = vadd.f32 %v4565, %v4679
        %4681 = vmatmul.bf16.gmra.mxu0 %v4601
        %v4682 = vpop.f32.mrf.mxu0
        %v4683 = vadd.f32 %v4565, %v4682
        %v4684 = vpop.f32.mrf.mxu0
        %v4685 = vadd.f32 %v4565, %v4684
        %4686 = vmatmul.bf16.gmra.mxu0 %v4602
        %v4687 = vpop.f32.mrf.mxu0
        %v4688 = vadd.f32 %v4565, %v4687
        %v4689 = vpop.f32.mrf.mxu0
        %v4690 = vadd.f32 %v4565, %v4689
        %4691 = vmatmul.bf16.gmra.mxu0 %v4603
        %v4692 = vpop.f32.mrf.mxu0
        %v4693 = vadd.f32 %v4565, %v4692
        %v4694 = vpop.f32.mrf.mxu0
        %v4695 = vadd.f32 %v4565, %v4694
        %4696 = vmatmul.bf16.gmra.mxu0 %v4604
        %v4697 = vpop.f32.mrf.mxu0
        %v4698 = vadd.f32 %v4565, %v4697
        %v4699 = vpop.f32.mrf.mxu0
        %v4700 = vadd.f32 %v4565, %v4699
        %4701 = vmatmul.bf16.gmra.mxu0 %v4605
        %v4702 = vpop.f32.mrf.mxu0
        %v4703 = vadd.f32 %v4565, %v4702
        %v4704 = vpop.f32.mrf.mxu0
        %v4705 = vadd.f32 %v4565, %v4704
        %4706 = vmatmul.bf16.gmra.mxu0 %v4606
        %v4707 = vpop.f32.mrf.mxu0
        %v4708 = vadd.f32 %v4565, %v4707
        %v4709 = vpop.f32.mrf.mxu0
        %v4710 = vadd.f32 %v4565, %v4709
        %4711 = vdwg.mxu0
        %vm4712 = vcmask 261120
        %4713 = vst.msk [vmem:[%s593] sm:$0xff] %vm4712, %v4673
        %4714 = vst.msk [vmem:[%s593 + $0x8] sm:$0xff] %vm4712, %v4675
        %4715 = vst.msk [vmem:[%s593 + $0x10] sm:$0xff] %vm4712, %v4678
        %4716 = vst.msk [vmem:[%s593 + $0x18] sm:$0xff] %vm4712, %v4680
        %4717 = vst.msk [vmem:[%s593 + $0x20] sm:$0xff] %vm4712, %v4683
        %4718 = vst.msk [vmem:[%s593 + $0x28] sm:$0xff] %vm4712, %v4685
        %4719 = vst.msk [vmem:[%s593 + $0x30] sm:$0xff] %vm4712, %v4688
        %4720 = vst.msk [vmem:[%s593 + $0x38] sm:$0xff] %vm4712, %v4690
        %4721 = vst.msk [vmem:[%s593 + $0x40] sm:$0xff] %vm4712, %v4693
        %4722 = vst.msk [vmem:[%s593 + $0x48] sm:$0xff] %vm4712, %v4695
        %4723 = vst.msk [vmem:[%s593 + $0x50] sm:$0xff] %vm4712, %v4698
        %4724 = vst.msk [vmem:[%s593 + $0x58] sm:$0xff] %vm4712, %v4700
        %4725 = vst.msk [vmem:[%s593 + $0x60] sm:$0xff] %vm4712, %v4703
        %4726 = vst.msk [vmem:[%s593 + $0x68] sm:$0xff] %vm4712, %v4705
        %4727 = vst.msk [vmem:[%s593 + $0x70] sm:$0xff] %vm4712, %v4708
        %4728 = vst.msk [vmem:[%s593 + $0x78] sm:$0xff] %vm4712, %v4710
        %s4729 = sand.u32 %s317, 1
        %s4730 = scalar_lea.sflag [#allocation3], %s4729
        %s4731 = sand.u32 %s317, 1
        %s4732 = smul.addr %s4731, 64
        %s4733 = scalar_lea.vmem [#allocation2], %s4732
        %s4734 = smul.u32 16, %s32
        %p4735 = scmp.lt.s32.totalorder %s31, 1
        %s4736 = scalar_select %p4735, %s31, 1
        %p4737 = scmp.lt.s32.totalorder %s4734, 31
        %s4738 = scalar_select %p4737, %s4734, 31
        %s4739 = smul.addr %s4736, 32
        %s4740 = sadd.s32 %s4738, %s4739
        %s4741 = smul.addr %s4740, 8
        %s4742 = scalar_lea.vmem %s12, %s4741
        // Predicated region
        $region65: #{detector3d_forward.3} parent=63 // pred_check
          %p4743 = pneg %p327
        $region66: #{detector3d_forward.3} parent=63 // pred_check_branch
          %4745 = sbr.rel (%p4743) target = $region68
        $region67: #{detector3d_forward.3} parent=63 // pred_region
          %s4746 = smul.u32 16, %s32
          %4748 = vsyncadd %s4730, 0
          %s4749 = smul.addr %s31, 32
          %s4750 = sadd.s32 %s4746, %s4749
          %s4751 = smul.addr %s4750, 4
          %s4752 = scalar_lea.hbm %s11, %s4751
          %s4753 = sshll.u32 %s4733, 4
          %s4754 = int_to_ptr.vmem [resolvable:$true] %s4753
          %s4755 = sshll.u32 %s4752, 4
          %s4756 = int_to_ptr.hbm [resolvable:$true] %s4755
          %4761 = dma.vmem_to_hbm [thread:$0]  %s4754, 1024, %s4756, %s4730, 64, 64, 4
        $region68: #{detector3d_forward.3} parent=63 // pred_fallthru
          _
        // Predicated region
        $region69: #{detector3d_forward.3} parent=63 // pred_check
          %p4762 = pneg %p355
        $region70: #{detector3d_forward.3} parent=63 // pred_check_branch
          %4764 = sbr.rel (%p4762) target = $region72
        $region71: #{detector3d_forward.3} parent=63 // pred_region
          %s4765 = smul.u32 16, %s32
        $region72: #{detector3d_forward.3} parent=63 // pred_fallthru
          _
      $region64: #{detector3d_forward.3} parent=5 // pred_fallthru
        _
      %p4766 = scmp.le.s32.totalorder 2, %s22
      // Predicated region
      $region73: #{detector3d_forward.3} parent=5 // pred_check
        %p4767 = pneg %p4766
      $region74: #{detector3d_forward.3} parent=5 // pred_check_branch
        %4769 = sbr.rel (%p4767) target = $region76
      $region75: #{detector3d_forward.3} parent=5 // pred_region
        %s4770 = ssub.s32 %s22, 2
        // Predicated region
        $region77: #{detector3d_forward.3} parent=75 // pred_check
          %p4771 = pneg %p333
        $region78: #{detector3d_forward.3} parent=75 // pred_check_branch
          %4773 = sbr.rel (%p4771) target = $region80
        $region79: #{detector3d_forward.3} parent=75 // pred_region
          %s4774 = sand.u32 %s318, 1
          %s4775 = scalar_lea.sflag [#allocation3], %s4774
          %s4776 = sand.u32 %s318, 1
          %s4777 = smul.addr %s4776, 64
          %s4778 = scalar_lea.vmem [#allocation2], %s4777
          %4780 = dma.done %s4775, 1024
        $region80: #{detector3d_forward.3} parent=75 // pred_fallthru
          _
        // Predicated region
        $region81: #{detector3d_forward.3} parent=75 // pred_check
          %p4781 = pneg %p361
        $region82: #{detector3d_forward.3} parent=75 // pred_check_branch
          %4783 = sbr.rel (%p4781) target = $region84
        $region83: #{detector3d_forward.3} parent=75 // pred_region
          %s4784 = smul.u32 16, %s34
          %p4785 = scmp.lt.s32.totalorder %s33, 1
          %s4786 = scalar_select %p4785, %s33, 1
          %p4787 = scmp.lt.s32.totalorder %s4784, 31
          %s4788 = scalar_select %p4787, %s4784, 31
          %s4789 = smul.addr %s4786, 32
          %s4790 = sadd.s32 %s4788, %s4789
          %s4791 = smul.addr %s4790, 8
          %s4792 = scalar_lea.vmem %s12, %s4791
        $region84: #{detector3d_forward.3} parent=75 // pred_fallthru
          _
      $region76: #{detector3d_forward.3} parent=5 // pred_fallthru
        _
    $region6: #{detector3d_forward.3} parent=1 // loop_footer
      %s26 = sadd.s32 1, %s22
    $region7: #{detector3d_forward.3} parent=1 // loop_footer_branch
      %21 = sbr.rel target = $region3
    $region8: #{detector3d_forward.3} parent=1 // loop_exit
      _
    %4793 = vsyncpa [#allocation3], 1
    %s4794 = scalar_lea.sflag [#allocation3], 1
    %4795 = vsyncpa %s4794, 1

</llo_original>
